<compile_context>
chip_gen: v7x
topology: tpu7x:2x2x1
jax: 0.10.0
libtpu: 0.0.40
codegen_flags: <defaults>
</compile_context>

<pallas_src>
import math
import jax
import jax.numpy as jnp
from jax.experimental import pallas as pl
from jax.experimental.pallas import tpu as pltpu


def autoencoder_kernel(x_ref,
                       w1_ref, b1_ref, w2_ref, b2_ref, w3_ref, b3_ref,
                       w4_ref, b4_ref, w5_ref, b5_ref, w6_ref, b6_ref,
                       o_ref):
    # x already streamed as bf16 by the wrapper; accumulate / elementwise in f32.
    h = x_ref[...]

    def linear_relu(h_bf16, w_ref, b_ref):
        acc = jnp.dot(h_bf16, w_ref[...], preferred_element_type=jnp.float32)
        acc = acc + b_ref[...]                       # f32 bias add (VPU)
        return jnp.maximum(acc, 0.0).astype(jnp.bfloat16)

    # encoder: Linear -> ReLU  (x3)
    h = linear_relu(h, w1_ref, b1_ref)
    h = linear_relu(h, w2_ref, b2_ref)
    h = linear_relu(h, w3_ref, b3_ref)

    # decoder: Linear -> ReLU (x2), Linear -> Sigmoid
    h = linear_relu(h, w4_ref, b4_ref)
    h = linear_relu(h, w5_ref, b5_ref)
    acc = jnp.dot(h, w6_ref[...], preferred_element_type=jnp.float32) + b6_ref[...]
    # sigmoid: exp on EUP, divide via approx reciprocal on EUP (co-issues with MXU/VPU)
    out = pl.reciprocal(1.0 + jnp.exp(-acc), approx=True)

    # Output kept f32 (lane-dense store).  Emitting bf16 would halve writeback DMA
    # if downstream tolerates it.
    o_ref[...] = out.astype(o_ref.dtype)


def init_autoencoder_params(key, timestep, hidden_dim):
    """Deterministic init mimicking nn.Linear default (uniform(-1/sqrt(fan_in), +))."""
    d = timestep * hidden_dim
    dims = [(d, 1024), (1024, 512), (512, 64),      # encoder
            (64, 512), (512, 1024), (1024, d)]      # decoder
    params = []
    for (fan_in, fan_out) in dims:
        key, kw, kb = jax.random.split(key, 3)
        bound = 1.0 / math.sqrt(fan_in)
        # Stored as (in, out) so the kernel computes x @ W  (== PyTorch x @ W.T).
        w = jax.random.uniform(kw, (fan_in, fan_out), jnp.float32, -bound, bound)
        b = jax.random.uniform(kb, (1, fan_out), jnp.float32, -bound, bound)
        params.append((w, b))
    return params


def _round_up(x, m):
    return ((x + m - 1) // m) * m


def _tpu_vmem_capacity_bytes():
    """Physical VMEM per TensorCore, if queryable (v5e/v6e: 128 MiB, v7x: 64 MiB)."""
    try:
        info = pltpu.get_tpu_info()
        cap = getattr(info, "vmem_capacity_bytes", None)
        if cap:
            return int(cap)
    except Exception:
        pass
    return None


def _prepare_kernel_params(params, d_pad):
    """bf16 weights / f32 biases; pad bottleneck 64->128 and D->d_pad (all exact)."""
    (w1, b1), (w2, b2), (w3, b3), (w4, b4), (w5, b5), (w6, b6) = params
    d = w1.shape[0]
    # Layer-3 output / layer-4 input 64 -> 128 with zeros (ReLU(0)=0, zero rows of
    # w4 contribute nothing, so the math is unchanged).  Keep exactly 128 (MXU K fit).
    w3 = jnp.pad(w3, ((0, 0), (0, 64)))
    b3 = jnp.pad(b3, ((0, 0), (0, 64)))
    w4 = jnp.pad(w4, ((0, 64), (0, 0)))
    if d_pad != d:
        w1 = jnp.pad(w1, ((0, d_pad - d), (0, 0)))   # extra x columns are zero
        w6 = jnp.pad(w6, ((0, 0), (0, d_pad - d)))   # extra output cols sliced off
        b6 = jnp.pad(b6, ((0, 0), (0, d_pad - d)))
    prepared = [(w1, b1), (w2, b2), (w3, b3), (w4, b4), (w5, b5), (w6, b6)]
    return [(w.astype(jnp.bfloat16), b.astype(jnp.float32)) for (w, b) in prepared]


def _choose_tiling(B, vmem_cap_bytes):
    """Batch tile + padded batch.  Bigger tiles on 128 MiB parts, >=2 grid steps."""
    if vmem_cap_bytes is not None and vmem_cap_bytes >= 96 * 1024 * 1024:
        tm_cap = 512        # v5e / v6e: plenty of VMEM, amortize per-step overhead
    else:
        tm_cap = 256        # v7x (64 MiB) or unknown: stay conservative
    # Round to 16 (bf16 sublane packing); aim for >=2 grid steps so the batch axis
    # can occupy both TensorCores on v7x.
    tm = min(tm_cap, _round_up(max(pl.cdiv(B, 2), 1), 16))
    bp = _round_up(B, tm)
    if bp // tm < 2:
        bp = 2 * tm
    return tm, bp


def _vmem_limit_bytes(kparams, tm, d_pad, single_buffer_weights, vmem_cap_bytes):
    """VMEM budget from the post-Buffered(1) layout, capped below physical VMEM."""
    wmult = 1 if single_buffer_weights else 2
    weight_bytes = wmult * sum(int(w.size) * w.dtype.itemsize +
                               int(b.size) * b.dtype.itemsize for (w, b) in kparams)
    io_bytes = 2 * tm * d_pad * (2 + 4)              # double-buffered bf16 in + f32 out
    widths = (1024, 512, 128, 512, 1024, d_pad)
    inter_bytes = 2 * tm * sum(widths) * (4 + 2)     # f32 acc + bf16 copy, 2x margin
    need = int(1.25 * (weight_bytes + io_bytes + inter_bytes))
    cap = int(0.75 * vmem_cap_bytes) if vmem_cap_bytes else 48 * 1024 * 1024
    return max(16 * 1024 * 1024, min(need, cap))


def _param_spec(shape, single_buffer):
    """Grid-invariant weight/bias spec; single-buffered when supported."""
    if single_buffer and hasattr(pl, "Buffered"):
        return pl.BlockSpec(shape, lambda i: (0, 0), pipeline_mode=pl.Buffered(1))
    return pl.BlockSpec(shape, lambda i: (0, 0))


def autoencoder_forward(x, params):
    """x: (B, 1, T, F) float32 -> (B, 1, T, F) float32."""
    B, C, T, F = x.shape
    assert C == 1
    d = T * F
    d_pad = _round_up(d, 128)          # lane-dense tiles even when T*F % 128 != 0

    x_flat = x.reshape(B, d)           # torch.flatten(1)
    if d_pad != d:
        x_flat = jnp.pad(x_flat, ((0, 0), (0, d_pad - d)))

    vmem_cap = _tpu_vmem_capacity_bytes()
    tm, bp = _choose_tiling(B, vmem_cap)
    if bp != B:
        x_flat = jnp.pad(x_flat, ((0, bp - B), (0, 0)))

    # Stream activations as bf16 (halves input DMA + double-buffered input VMEM).
    x_flat = x_flat.astype(jnp.bfloat16)

    kparams = _prepare_kernel_params(params, d_pad)
    flat_params = []
    for (w, b) in kparams:
        flat_params.extend([w, b])

    def run(single_buffer_weights):
        param_specs = []
        for (w, b) in kparams:
            param_specs.append(_param_spec(w.shape, single_buffer_weights))
            param_specs.append(_param_spec(b.shape, single_buffer_weights))
        in_specs = [pl.BlockSpec((tm, d_pad), lambda i: (i, 0))] + param_specs
        out_spec = pl.BlockSpec((tm, d_pad), lambda i: (i, 0))

        out = pl.pallas_call(
            autoencoder_kernel,
            out_shape=jax.ShapeDtypeStruct((bp, d_pad), jnp.float32),
            grid=(bp // tm,),
            in_specs=in_specs,
            out_specs=out_spec,
            compiler_params=pltpu.CompilerParams(
                # "parallel" lets the batch axis shard across TCs on v7x; switch to
                # pltpu.CORE_PARALLEL if profiling ever shows one TC idle.
                dimension_semantics=("parallel",),
                vmem_limit_bytes=_vmem_limit_bytes(
                    kparams, tm, d_pad, single_buffer_weights, vmem_cap),
            ),
        )(x_flat, *flat_params)
        return jax.block_until_ready(out)

    try:
        out_flat = run(single_buffer_weights=True)
    except Exception:
        # Fallback for jax versions without BlockSpec pipeline_mode / Buffered(1).
        out_flat = run(single_buffer_weights=False)

    return out_flat[:B, :d].reshape(B, 1, T, F)


def autoencoder_reference(x, params):
    """Plain-JAX f32 reference of the PyTorch forward, for correctness checking."""
    B, _, T, F = x.shape
    h = x.reshape(B, T * F)
    (w1, b1), (w2, b2), (w3, b3), (w4, b4), (w5, b5), (w6, b6) = params
    h = jnp.maximum(h @ w1 + b1, 0.0)
    h = jnp.maximum(h @ w2 + b2, 0.0)
    h = jnp.maximum(h @ w3 + b3, 0.0)
    h = jnp.maximum(h @ w4 + b4, 0.0)
    h = jnp.maximum(h @ w5 + b5, 0.0)
    h = jax.nn.sigmoid(h @ w6 + b6)
    return h.reshape(B, 1, T, F)


if __name__ == "__main__":
    # Small shapes consistent with the module: timestep*hidden_dim is the first
    # Linear's input dim. Use timestep=8, hidden_dim=16 -> D = 128, batch = 2.
    TIMESTEP, HIDDEN_DIM, BATCH = 8, 16, 2

    key = jax.random.PRNGKey(0)
    key_params, key_x = jax.random.split(key)
    params = init_autoencoder_params(key_params, TIMESTEP, HIDDEN_DIM)

    x = jax.random.normal(key_x, (BATCH, 1, TIMESTEP, HIDDEN_DIM), jnp.float32)

    out = autoencoder_forward(x, params)
    out = jax.block_until_ready(out)

    ref = autoencoder_reference(x, params)
    assert out.shape == (BATCH, 1, TIMESTEP, HIDDEN_DIM)
    # bf16 weights/activations + approx reciprocal: compare against the f32
    # reference with a tolerance appropriate for bf16 (outputs are in [0, 1]).
    assert jnp.allclose(out, ref, atol=2e-2, rtol=2e-2), "mismatch vs reference"

    print("KERNEL_OK")
</pallas_src>

<mosaic_0001>
module attributes {stable_mosaic.version = 11 : i64} {
  func.func @autoencoder_kernel(%arg0: i32, %arg1: memref<16x128xbf16, #tpu.memory_space<vmem>>, %arg2: memref<128x1024xbf16, #tpu.memory_space<vmem>>, %arg3: memref<1x1024xf32, #tpu.memory_space<vmem>>, %arg4: memref<1024x512xbf16, #tpu.memory_space<vmem>>, %arg5: memref<1x512xf32, #tpu.memory_space<vmem>>, %arg6: memref<512x128xbf16, #tpu.memory_space<vmem>>, %arg7: memref<1x128xf32, #tpu.memory_space<vmem>>, %arg8: memref<128x512xbf16, #tpu.memory_space<vmem>>, %arg9: memref<1x512xf32, #tpu.memory_space<vmem>>, %arg10: memref<512x1024xbf16, #tpu.memory_space<vmem>>, %arg11: memref<1x1024xf32, #tpu.memory_space<vmem>>, %arg12: memref<1024x128xbf16, #tpu.memory_space<vmem>>, %arg13: memref<1x128xf32, #tpu.memory_space<vmem>>, %arg14: memref<16x128xf32, #tpu.memory_space<vmem>>) attributes {dimension_semantics = [#tpu.dimension_semantics<parallel>], iteration_bounds = array<i64: 2>, scalar_prefetch = 0 : i64, scratch_operands = 0 : i64, tpu.core_type = #tpu.core_type<tc>, window_params = [{transform_indices = @transform_0, window_bounds = array<i64: 16, 128>}, {pipeline_mode = #tpu.pipeline_mode<synchronous>, transform_indices = @transform_1, window_bounds = array<i64: 128, 1024>}, {pipeline_mode = #tpu.pipeline_mode<synchronous>, transform_indices = @transform_2, window_bounds = array<i64: 1, 1024>}, {pipeline_mode = #tpu.pipeline_mode<synchronous>, transform_indices = @transform_3, window_bounds = array<i64: 1024, 512>}, {pipeline_mode = #tpu.pipeline_mode<synchronous>, transform_indices = @transform_4, window_bounds = array<i64: 1, 512>}, {pipeline_mode = #tpu.pipeline_mode<synchronous>, transform_indices = @transform_5, window_bounds = array<i64: 512, 128>}, {pipeline_mode = #tpu.pipeline_mode<synchronous>, transform_indices = @transform_6, window_bounds = array<i64: 1, 128>}, {pipeline_mode = #tpu.pipeline_mode<synchronous>, transform_indices = @transform_7, window_bounds = array<i64: 128, 512>}, {pipeline_mode = #tpu.pipeline_mode<synchronous>, transform_indices = @transform_8, window_bounds = array<i64: 1, 512>}, {pipeline_mode = #tpu.pipeline_mode<synchronous>, transform_indices = @transform_9, window_bounds = array<i64: 512, 1024>}, {pipeline_mode = #tpu.pipeline_mode<synchronous>, transform_indices = @transform_10, window_bounds = array<i64: 1, 1024>}, {pipeline_mode = #tpu.pipeline_mode<synchronous>, transform_indices = @transform_11, window_bounds = array<i64: 1024, 128>}, {pipeline_mode = #tpu.pipeline_mode<synchronous>, transform_indices = @transform_12, window_bounds = array<i64: 1, 128>}, {transform_indices = @transform_13, window_bounds = array<i64: 16, 128>}]} {
    %c0 = arith.constant 0 : index
    %c0_0 = arith.constant 0 : index
    %0 = vector.load %arg1[%c0, %c0_0] : memref<16x128xbf16, #tpu.memory_space<vmem>>, vector<16x128xbf16>
    %c0_1 = arith.constant 0 : index
    %c0_2 = arith.constant 0 : index
    %1 = vector.load %arg2[%c0_1, %c0_2] : memref<128x1024xbf16, #tpu.memory_space<vmem>>, vector<128x1024xbf16>
    %cst = arith.constant dense<0.000000e+00> : vector<16x1024xf32>
    %2 = tpu.matmul %0, %1, %cst {dimension_numbers = #tpu.dot_dimension_numbers<[1], [0], [0], [1], [0, 0, 1, 1], [], []>} : vector<16x128xbf16>, vector<128x1024xbf16>, vector<16x1024xf32> -> vector<16x1024xf32>
    %c0_3 = arith.constant 0 : index
    %c0_4 = arith.constant 0 : index
    %3 = vector.load %arg3[%c0_3, %c0_4] : memref<1x1024xf32, #tpu.memory_space<vmem>>, vector<1x1024xf32>
    %4 = vector.broadcast %3 : vector<1x1024xf32> to vector<16x1024xf32>
    %5 = arith.addf %2, %4 : vector<16x1024xf32>
    %cst_5 = arith.constant 0.000000e+00 : f32
    %6 = vector.broadcast %cst_5 : f32 to vector<16x1024xf32>
    %7 = arith.maximumf %5, %6 : vector<16x1024xf32>
    %8 = arith.truncf %7 : vector<16x1024xf32> to vector<16x1024xbf16>
    %c0_6 = arith.constant 0 : index
    %c0_7 = arith.constant 0 : index
    %9 = vector.load %arg4[%c0_6, %c0_7] : memref<1024x512xbf16, #tpu.memory_space<vmem>>, vector<1024x512xbf16>
    %cst_8 = arith.constant dense<0.000000e+00> : vector<16x512xf32>
    %10 = tpu.matmul %8, %9, %cst_8 {dimension_numbers = #tpu.dot_dimension_numbers<[1], [0], [0], [1], [0, 0, 1, 1], [], []>} : vector<16x1024xbf16>, vector<1024x512xbf16>, vector<16x512xf32> -> vector<16x512xf32>
    %c0_9 = arith.constant 0 : index
    %c0_10 = arith.constant 0 : index
    %11 = vector.load %arg5[%c0_9, %c0_10] : memref<1x512xf32, #tpu.memory_space<vmem>>, vector<1x512xf32>
    %12 = vector.broadcast %11 : vector<1x512xf32> to vector<16x512xf32>
    %13 = arith.addf %10, %12 : vector<16x512xf32>
    %cst_11 = arith.constant 0.000000e+00 : f32
    %14 = vector.broadcast %cst_11 : f32 to vector<16x512xf32>
    %15 = arith.maximumf %13, %14 : vector<16x512xf32>
    %16 = arith.truncf %15 : vector<16x512xf32> to vector<16x512xbf16>
    %c0_12 = arith.constant 0 : index
    %c0_13 = arith.constant 0 : index
    %17 = vector.load %arg6[%c0_12, %c0_13] : memref<512x128xbf16, #tpu.memory_space<vmem>>, vector<512x128xbf16>
    %cst_14 = arith.constant dense<0.000000e+00> : vector<16x128xf32>
    %18 = tpu.matmul %16, %17, %cst_14 {dimension_numbers = #tpu.dot_dimension_numbers<[1], [0], [0], [1], [0, 0, 1, 1], [], []>} : vector<16x512xbf16>, vector<512x128xbf16>, vector<16x128xf32> -> vector<16x128xf32>
    %c0_15 = arith.constant 0 : index
    %c0_16 = arith.constant 0 : index
    %19 = vector.load %arg7[%c0_15, %c0_16] : memref<1x128xf32, #tpu.memory_space<vmem>>, vector<1x128xf32>
    %20 = vector.broadcast %19 : vector<1x128xf32> to vector<16x128xf32>
    %21 = arith.addf %18, %20 : vector<16x128xf32>
    %cst_17 = arith.constant 0.000000e+00 : f32
    %22 = vector.broadcast %cst_17 : f32 to vector<16x128xf32>
    %23 = arith.maximumf %21, %22 : vector<16x128xf32>
    %24 = arith.truncf %23 : vector<16x128xf32> to vector<16x128xbf16>
    %c0_18 = arith.constant 0 : index
    %c0_19 = arith.constant 0 : index
    %25 = vector.load %arg8[%c0_18, %c0_19] : memref<128x512xbf16, #tpu.memory_space<vmem>>, vector<128x512xbf16>
    %cst_20 = arith.constant dense<0.000000e+00> : vector<16x512xf32>
    %26 = tpu.matmul %24, %25, %cst_20 {dimension_numbers = #tpu.dot_dimension_numbers<[1], [0], [0], [1], [0, 0, 1, 1], [], []>} : vector<16x128xbf16>, vector<128x512xbf16>, vector<16x512xf32> -> vector<16x512xf32>
    %c0_21 = arith.constant 0 : index
    %c0_22 = arith.constant 0 : index
    %27 = vector.load %arg9[%c0_21, %c0_22] : memref<1x512xf32, #tpu.memory_space<vmem>>, vector<1x512xf32>
    %28 = vector.broadcast %27 : vector<1x512xf32> to vector<16x512xf32>
    %29 = arith.addf %26, %28 : vector<16x512xf32>
    %cst_23 = arith.constant 0.000000e+00 : f32
    %30 = vector.broadcast %cst_23 : f32 to vector<16x512xf32>
    %31 = arith.maximumf %29, %30 : vector<16x512xf32>
    %32 = arith.truncf %31 : vector<16x512xf32> to vector<16x512xbf16>
    %c0_24 = arith.constant 0 : index
    %c0_25 = arith.constant 0 : index
    %33 = vector.load %arg10[%c0_24, %c0_25] : memref<512x1024xbf16, #tpu.memory_space<vmem>>, vector<512x1024xbf16>
    %cst_26 = arith.constant dense<0.000000e+00> : vector<16x1024xf32>
    %34 = tpu.matmul %32, %33, %cst_26 {dimension_numbers = #tpu.dot_dimension_numbers<[1], [0], [0], [1], [0, 0, 1, 1], [], []>} : vector<16x512xbf16>, vector<512x1024xbf16>, vector<16x1024xf32> -> vector<16x1024xf32>
    %c0_27 = arith.constant 0 : index
    %c0_28 = arith.constant 0 : index
    %35 = vector.load %arg11[%c0_27, %c0_28] : memref<1x1024xf32, #tpu.memory_space<vmem>>, vector<1x1024xf32>
    %36 = vector.broadcast %35 : vector<1x1024xf32> to vector<16x1024xf32>
    %37 = arith.addf %34, %36 : vector<16x1024xf32>
    %cst_29 = arith.constant 0.000000e+00 : f32
    %38 = vector.broadcast %cst_29 : f32 to vector<16x1024xf32>
    %39 = arith.maximumf %37, %38 : vector<16x1024xf32>
    %40 = arith.truncf %39 : vector<16x1024xf32> to vector<16x1024xbf16>
    %c0_30 = arith.constant 0 : index
    %c0_31 = arith.constant 0 : index
    %41 = vector.load %arg12[%c0_30, %c0_31] : memref<1024x128xbf16, #tpu.memory_space<vmem>>, vector<1024x128xbf16>
    %cst_32 = arith.constant dense<0.000000e+00> : vector<16x128xf32>
    %42 = tpu.matmul %40, %41, %cst_32 {dimension_numbers = #tpu.dot_dimension_numbers<[1], [0], [0], [1], [0, 0, 1, 1], [], []>} : vector<16x1024xbf16>, vector<1024x128xbf16>, vector<16x128xf32> -> vector<16x128xf32>
    %c0_33 = arith.constant 0 : index
    %c0_34 = arith.constant 0 : index
    %43 = vector.load %arg13[%c0_33, %c0_34] : memref<1x128xf32, #tpu.memory_space<vmem>>, vector<1x128xf32>
    %44 = vector.broadcast %43 : vector<1x128xf32> to vector<16x128xf32>
    %45 = arith.addf %42, %44 : vector<16x128xf32>
    %cst_35 = arith.constant 0.000000e+00 : f32
    %46 = vector.broadcast %cst_35 : f32 to vector<16x128xf32>
    %47 = arith.subf %46, %45 : vector<16x128xf32>
    %48 = math.exp %47 : vector<16x128xf32>
    %cst_36 = arith.constant 1.000000e+00 : f32
    %49 = vector.broadcast %cst_36 : f32 to vector<16x128xf32>
    %50 = arith.addf %49, %48 : vector<16x128xf32>
    %51 = tpu.reciprocal %50 {approx = true} : vector<16x128xf32> -> vector<16x128xf32>
    %c0_37 = arith.constant 0 : index
    %c0_38 = arith.constant 0 : index
    %52 = vector.load %arg14[%c0_37, %c0_38] : memref<16x128xf32, #tpu.memory_space<vmem>>, vector<16x128xf32>
    tpu.vector_store %arg14[%c0_37, %c0_38], %51 {strides = array<i32>} : memref<16x128xf32, #tpu.memory_space<vmem>>, vector<16x128xf32>,
    return
  }
  func.func @transform_0(%arg0: i32) -> (i32, i32) {
    %c0_i32 = arith.constant 0 : i32
    %c0_i32_0 = arith.constant 0 : i32
    return %arg0, %c0_i32 : i32, i32
  }
  func.func @transform_1(%arg0: i32) -> (i32, i32) {
    %c0_i32 = arith.constant 0 : i32
    %c0_i32_0 = arith.constant 0 : i32
    %c0_i32_1 = arith.constant 0 : i32
    return %c0_i32, %c0_i32_0 : i32, i32
  }
  func.func @transform_2(%arg0: i32) -> (i32, i32) {
    %c0_i32 = arith.constant 0 : i32
    %c0_i32_0 = arith.constant 0 : i32
    %c0_i32_1 = arith.constant 0 : i32
    return %c0_i32, %c0_i32_0 : i32, i32
  }
  func.func @transform_3(%arg0: i32) -> (i32, i32) {
    %c0_i32 = arith.constant 0 : i32
    %c0_i32_0 = arith.constant 0 : i32
    %c0_i32_1 = arith.constant 0 : i32
    return %c0_i32, %c0_i32_0 : i32, i32
  }
  func.func @transform_4(%arg0: i32) -> (i32, i32) {
    %c0_i32 = arith.constant 0 : i32
    %c0_i32_0 = arith.constant 0 : i32
    %c0_i32_1 = arith.constant 0 : i32
    return %c0_i32, %c0_i32_0 : i32, i32
  }
  func.func @transform_5(%arg0: i32) -> (i32, i32) {
    %c0_i32 = arith.constant 0 : i32
    %c0_i32_0 = arith.constant 0 : i32
    %c0_i32_1 = arith.constant 0 : i32
    return %c0_i32, %c0_i32_0 : i32, i32
  }
  func.func @transform_6(%arg0: i32) -> (i32, i32) {
    %c0_i32 = arith.constant 0 : i32
    %c0_i32_0 = arith.constant 0 : i32
    %c0_i32_1 = arith.constant 0 : i32
    return %c0_i32, %c0_i32_0 : i32, i32
  }
  func.func @transform_7(%arg0: i32) -> (i32, i32) {
    %c0_i32 = arith.constant 0 : i32
    %c0_i32_0 = arith.constant 0 : i32
    %c0_i32_1 = arith.constant 0 : i32
    return %c0_i32, %c0_i32_0 : i32, i32
  }
  func.func @transform_8(%arg0: i32) -> (i32, i32) {
    %c0_i32 = arith.constant 0 : i32
    %c0_i32_0 = arith.constant 0 : i32
    %c0_i32_1 = arith.constant 0 : i32
    return %c0_i32, %c0_i32_0 : i32, i32
  }
  func.func @transform_9(%arg0: i32) -> (i32, i32) {
    %c0_i32 = arith.constant 0 : i32
    %c0_i32_0 = arith.constant 0 : i32
    %c0_i32_1 = arith.constant 0 : i32
    return %c0_i32, %c0_i32_0 : i32, i32
  }
  func.func @transform_10(%arg0: i32) -> (i32, i32) {
    %c0_i32 = arith.constant 0 : i32
    %c0_i32_0 = arith.constant 0 : i32
    %c0_i32_1 = arith.constant 0 : i32
    return %c0_i32, %c0_i32_0 : i32, i32
  }
  func.func @transform_11(%arg0: i32) -> (i32, i32) {
    %c0_i32 = arith.constant 0 : i32
    %c0_i32_0 = arith.constant 0 : i32
    %c0_i32_1 = arith.constant 0 : i32
    return %c0_i32, %c0_i32_0 : i32, i32
  }
  func.func @transform_12(%arg0: i32) -> (i32, i32) {
    %c0_i32 = arith.constant 0 : i32
    %c0_i32_0 = arith.constant 0 : i32
    %c0_i32_1 = arith.constant 0 : i32
    return %c0_i32, %c0_i32_0 : i32, i32
  }
  func.func @transform_13(%arg0: i32) -> (i32, i32) {
    %c0_i32 = arith.constant 0 : i32
    %c0_i32_0 = arith.constant 0 : i32
    return %arg0, %c0_i32 : i32, i32
  }
}

module attributes {stable_mosaic.version = 11 : i64} {
  func.func @autoencoder_kernel(%arg0: i32, %arg1: memref<16x128xbf16, #tpu.memory_space<vmem>>, %arg2: memref<128x1024xbf16, #tpu.memory_space<vmem>>, %arg3: memref<1x1024xf32, #tpu.memory_space<vmem>>, %arg4: memref<1024x512xbf16, #tpu.memory_space<vmem>>, %arg5: memref<1x512xf32, #tpu.memory_space<vmem>>, %arg6: memref<512x128xbf16, #tpu.memory_space<vmem>>, %arg7: memref<1x128xf32, #tpu.memory_space<vmem>>, %arg8: memref<128x512xbf16, #tpu.memory_space<vmem>>, %arg9: memref<1x512xf32, #tpu.memory_space<vmem>>, %arg10: memref<512x1024xbf16, #tpu.memory_space<vmem>>, %arg11: memref<1x1024xf32, #tpu.memory_space<vmem>>, %arg12: memref<1024x128xbf16, #tpu.memory_space<vmem>>, %arg13: memref<1x128xf32, #tpu.memory_space<vmem>>, %arg14: memref<16x128xf32, #tpu.memory_space<vmem>>) attributes {dimension_semantics = [#tpu.dimension_semantics<parallel>], iteration_bounds = array<i64: 2>, scalar_prefetch = 0 : i64, scratch_operands = 0 : i64, tpu.core_type = #tpu.core_type<tc>, window_params = [{transform_indices = @transform_0, window_bounds = array<i64: 16, 128>}, {pipeline_mode = #tpu.pipeline_mode<synchronous>, transform_indices = @transform_1, window_bounds = array<i64: 128, 1024>}, {pipeline_mode = #tpu.pipeline_mode<synchronous>, transform_indices = @transform_2, window_bounds = array<i64: 1, 1024>}, {pipeline_mode = #tpu.pipeline_mode<synchronous>, transform_indices = @transform_3, window_bounds = array<i64: 1024, 512>}, {pipeline_mode = #tpu.pipeline_mode<synchronous>, transform_indices = @transform_4, window_bounds = array<i64: 1, 512>}, {pipeline_mode = #tpu.pipeline_mode<synchronous>, transform_indices = @transform_5, window_bounds = array<i64: 512, 128>}, {pipeline_mode = #tpu.pipeline_mode<synchronous>, transform_indices = @transform_6, window_bounds = array<i64: 1, 128>}, {pipeline_mode = #tpu.pipeline_mode<synchronous>, transform_indices = @transform_7, window_bounds = array<i64: 128, 512>}, {pipeline_mode = #tpu.pipeline_mode<synchronous>, transform_indices = @transform_8, window_bounds = array<i64: 1, 512>}, {pipeline_mode = #tpu.pipeline_mode<synchronous>, transform_indices = @transform_9, window_bounds = array<i64: 512, 1024>}, {pipeline_mode = #tpu.pipeline_mode<synchronous>, transform_indices = @transform_10, window_bounds = array<i64: 1, 1024>}, {pipeline_mode = #tpu.pipeline_mode<synchronous>, transform_indices = @transform_11, window_bounds = array<i64: 1024, 128>}, {pipeline_mode = #tpu.pipeline_mode<synchronous>, transform_indices = @transform_12, window_bounds = array<i64: 1, 128>}, {transform_indices = @transform_13, window_bounds = array<i64: 16, 128>}]} {
    %c0 = arith.constant 0 : index
    %c0_0 = arith.constant 0 : index
    %0 = vector.load %arg1[%c0, %c0_0] : memref<16x128xbf16, #tpu.memory_space<vmem>>, vector<16x128xbf16>
    %c0_1 = arith.constant 0 : index
    %c0_2 = arith.constant 0 : index
    %1 = vector.load %arg2[%c0_1, %c0_2] : memref<128x1024xbf16, #tpu.memory_space<vmem>>, vector<128x1024xbf16>
    %cst = arith.constant dense<0.000000e+00> : vector<16x1024xf32>
    %2 = tpu.matmul %0, %1, %cst {dimension_numbers = #tpu.dot_dimension_numbers<[1], [0], [0], [1], [0, 0, 1, 1], [], []>} : vector<16x128xbf16>, vector<128x1024xbf16>, vector<16x1024xf32> -> vector<16x1024xf32>
    %c0_3 = arith.constant 0 : index
    %c0_4 = arith.constant 0 : index
    %3 = vector.load %arg3[%c0_3, %c0_4] : memref<1x1024xf32, #tpu.memory_space<vmem>>, vector<1x1024xf32>
    %4 = vector.broadcast %3 : vector<1x1024xf32> to vector<16x1024xf32>
    %5 = arith.addf %2, %4 : vector<16x1024xf32>
    %cst_5 = arith.constant 0.000000e+00 : f32
    %6 = vector.broadcast %cst_5 : f32 to vector<16x1024xf32>
    %7 = arith.maximumf %5, %6 : vector<16x1024xf32>
    %8 = arith.truncf %7 : vector<16x1024xf32> to vector<16x1024xbf16>
    %c0_6 = arith.constant 0 : index
    %c0_7 = arith.constant 0 : index
    %9 = vector.load %arg4[%c0_6, %c0_7] : memref<1024x512xbf16, #tpu.memory_space<vmem>>, vector<1024x512xbf16>
    %cst_8 = arith.constant dense<0.000000e+00> : vector<16x512xf32>
    %10 = tpu.matmul %8, %9, %cst_8 {dimension_numbers = #tpu.dot_dimension_numbers<[1], [0], [0], [1], [0, 0, 1, 1], [], []>} : vector<16x1024xbf16>, vector<1024x512xbf16>, vector<16x512xf32> -> vector<16x512xf32>
    %c0_9 = arith.constant 0 : index
    %c0_10 = arith.constant 0 : index
    %11 = vector.load %arg5[%c0_9, %c0_10] : memref<1x512xf32, #tpu.memory_space<vmem>>, vector<1x512xf32>
    %12 = vector.broadcast %11 : vector<1x512xf32> to vector<16x512xf32>
    %13 = arith.addf %10, %12 : vector<16x512xf32>
    %cst_11 = arith.constant 0.000000e+00 : f32
    %14 = vector.broadcast %cst_11 : f32 to vector<16x512xf32>
    %15 = arith.maximumf %13, %14 : vector<16x512xf32>
    %16 = arith.truncf %15 : vector<16x512xf32> to vector<16x512xbf16>
    %c0_12 = arith.constant 0 : index
    %c0_13 = arith.constant 0 : index
    %17 = vector.load %arg6[%c0_12, %c0_13] : memref<512x128xbf16, #tpu.memory_space<vmem>>, vector<512x128xbf16>
    %cst_14 = arith.constant dense<0.000000e+00> : vector<16x128xf32>
    %18 = tpu.matmul %16, %17, %cst_14 {dimension_numbers = #tpu.dot_dimension_numbers<[1], [0], [0], [1], [0, 0, 1, 1], [], []>} : vector<16x512xbf16>, vector<512x128xbf16>, vector<16x128xf32> -> vector<16x128xf32>
    %c0_15 = arith.constant 0 : index
    %c0_16 = arith.constant 0 : index
    %19 = vector.load %arg7[%c0_15, %c0_16] : memref<1x128xf32, #tpu.memory_space<vmem>>, vector<1x128xf32>
    %20 = vector.broadcast %19 : vector<1x128xf32> to vector<16x128xf32>
    %21 = arith.addf %18, %20 : vector<16x128xf32>
    %cst_17 = arith.constant 0.000000e+00 : f32
    %22 = vector.broadcast %cst_17 : f32 to vector<16x128xf32>
    %23 = arith.maximumf %21, %22 : vector<16x128xf32>
    %24 = arith.truncf %23 : vector<16x128xf32> to vector<16x128xbf16>
    %c0_18 = arith.constant 0 : index
    %c0_19 = arith.constant 0 : index
    %25 = vector.load %arg8[%c0_18, %c0_19] : memref<128x512xbf16, #tpu.memory_space<vmem>>, vector<128x512xbf16>
    %cst_20 = arith.constant dense<0.000000e+00> : vector<16x512xf32>
    %26 = tpu.matmul %24, %25, %cst_20 {dimension_numbers = #tpu.dot_dimension_numbers<[1], [0], [0], [1], [0, 0, 1, 1], [], []>} : vector<16x128xbf16>, vector<128x512xbf16>, vector<16x512xf32> -> vector<16x512xf32>
    %c0_21 = arith.constant 0 : index
    %c0_22 = arith.constant 0 : index
    %27 = vector.load %arg9[%c0_21, %c0_22] : memref<1x512xf32, #tpu.memory_space<vmem>>, vector<1x512xf32>
    %28 = vector.broadcast %27 : vector<1x512xf32> to vector<16x512xf32>
    %29 = arith.addf %26, %28 : vector<16x512xf32>
    %cst_23 = arith.constant 0.000000e+00 : f32
    %30 = vector.broadcast %cst_23 : f32 to vector<16x512xf32>
    %31 = arith.maximumf %29, %30 : vector<16x512xf32>
    %32 = arith.truncf %31 : vector<16x512xf32> to vector<16x512xbf16>
    %c0_24 = arith.constant 0 : index
    %c0_25 = arith.constant 0 : index
    %33 = vector.load %arg10[%c0_24, %c0_25] : memref<512x1024xbf16, #tpu.memory_space<vmem>>, vector<512x1024xbf16>
    %cst_26 = arith.constant dense<0.000000e+00> : vector<16x1024xf32>
    %34 = tpu.matmul %32, %33, %cst_26 {dimension_numbers = #tpu.dot_dimension_numbers<[1], [0], [0], [1], [0, 0, 1, 1], [], []>} : vector<16x512xbf16>, vector<512x1024xbf16>, vector<16x1024xf32> -> vector<16x1024xf32>
    %c0_27 = arith.constant 0 : index
    %c0_28 = arith.constant 0 : index
    %35 = vector.load %arg11[%c0_27, %c0_28] : memref<1x1024xf32, #tpu.memory_space<vmem>>, vector<1x1024xf32>
    %36 = vector.broadcast %35 : vector<1x1024xf32> to vector<16x1024xf32>
    %37 = arith.addf %34, %36 : vector<16x1024xf32>
    %cst_29 = arith.constant 0.000000e+00 : f32
    %38 = vector.broadcast %cst_29 : f32 to vector<16x1024xf32>
    %39 = arith.maximumf %37, %38 : vector<16x1024xf32>
    %40 = arith.truncf %39 : vector<16x1024xf32> to vector<16x1024xbf16>
    %c0_30 = arith.constant 0 : index
    %c0_31 = arith.constant 0 : index
    %41 = vector.load %arg12[%c0_30, %c0_31] : memref<1024x128xbf16, #tpu.memory_space<vmem>>, vector<1024x128xbf16>
    %cst_32 = arith.constant dense<0.000000e+00> : vector<16x128xf32>
    %42 = tpu.matmul %40, %41, %cst_32 {dimension_numbers = #tpu.dot_dimension_numbers<[1], [0], [0], [1], [0, 0, 1, 1], [], []>} : vector<16x1024xbf16>, vector<1024x128xbf16>, vector<16x128xf32> -> vector<16x128xf32>
    %c0_33 = arith.constant 0 : index
    %c0_34 = arith.constant 0 : index
    %43 = vector.load %arg13[%c0_33, %c0_34] : memref<1x128xf32, #tpu.memory_space<vmem>>, vector<1x128xf32>
    %44 = vector.broadcast %43 : vector<1x128xf32> to vector<16x128xf32>
    %45 = arith.addf %42, %44 : vector<16x128xf32>
    %cst_35 = arith.constant 0.000000e+00 : f32
    %46 = vector.broadcast %cst_35 : f32 to vector<16x128xf32>
    %47 = arith.subf %46, %45 : vector<16x128xf32>
    %48 = math.exp %47 : vector<16x128xf32>
    %cst_36 = arith.constant 1.000000e+00 : f32
    %49 = vector.broadcast %cst_36 : f32 to vector<16x128xf32>
    %50 = arith.addf %49, %48 : vector<16x128xf32>
    %51 = tpu.reciprocal %50 {approx = true} : vector<16x128xf32> -> vector<16x128xf32>
    %c0_37 = arith.constant 0 : index
    %c0_38 = arith.constant 0 : index
    %52 = vector.load %arg14[%c0_37, %c0_38] : memref<16x128xf32, #tpu.memory_space<vmem>>, vector<16x128xf32>
    tpu.vector_store %arg14[%c0_37, %c0_38], %51 {strides = array<i32>} : memref<16x128xf32, #tpu.memory_space<vmem>>, vector<16x128xf32>,
    return
  }
  func.func @transform_0(%arg0: i32) -> (i32, i32) {
    %c0_i32 = arith.constant 0 : i32
    %c0_i32_0 = arith.constant 0 : i32
    return %arg0, %c0_i32 : i32, i32
  }
  func.func @transform_1(%arg0: i32) -> (i32, i32) {
    %c0_i32 = arith.constant 0 : i32
    %c0_i32_0 = arith.constant 0 : i32
    %c0_i32_1 = arith.constant 0 : i32
    return %c0_i32, %c0_i32_0 : i32, i32
  }
  func.func @transform_2(%arg0: i32) -> (i32, i32) {
    %c0_i32 = arith.constant 0 : i32
    %c0_i32_0 = arith.constant 0 : i32
    %c0_i32_1 = arith.constant 0 : i32
    return %c0_i32, %c0_i32_0 : i32, i32
  }
  func.func @transform_3(%arg0: i32) -> (i32, i32) {
    %c0_i32 = arith.constant 0 : i32
    %c0_i32_0 = arith.constant 0 : i32
    %c0_i32_1 = arith.constant 0 : i32
    return %c0_i32, %c0_i32_0 : i32, i32
  }
  func.func @transform_4(%arg0: i32) -> (i32, i32) {
    %c0_i32 = arith.constant 0 : i32
    %c0_i32_0 = arith.constant 0 : i32
    %c0_i32_1 = arith.constant 0 : i32
    return %c0_i32, %c0_i32_0 : i32, i32
  }
  func.func @transform_5(%arg0: i32) -> (i32, i32) {
    %c0_i32 = arith.constant 0 : i32
    %c0_i32_0 = arith.constant 0 : i32
    %c0_i32_1 = arith.constant 0 : i32
    return %c0_i32, %c0_i32_0 : i32, i32
  }
  func.func @transform_6(%arg0: i32) -> (i32, i32) {
    %c0_i32 = arith.constant 0 : i32
    %c0_i32_0 = arith.constant 0 : i32
    %c0_i32_1 = arith.constant 0 : i32
    return %c0_i32, %c0_i32_0 : i32, i32
  }
  func.func @transform_7(%arg0: i32) -> (i32, i32) {
    %c0_i32 = arith.constant 0 : i32
    %c0_i32_0 = arith.constant 0 : i32
    %c0_i32_1 = arith.constant 0 : i32
    return %c0_i32, %c0_i32_0 : i32, i32
  }
  func.func @transform_8(%arg0: i32) -> (i32, i32) {
    %c0_i32 = arith.constant 0 : i32
    %c0_i32_0 = arith.constant 0 : i32
    %c0_i32_1 = arith.constant 0 : i32
    return %c0_i32, %c0_i32_0 : i32, i32
  }
  func.func @transform_9(%arg0: i32) -> (i32, i32) {
    %c0_i32 = arith.constant 0 : i32
    %c0_i32_0 = arith.constant 0 : i32
    %c0_i32_1 = arith.constant 0 : i32
    return %c0_i32, %c0_i32_0 : i32, i32
  }
  func.func @transform_10(%arg0: i32) -> (i32, i32) {
    %c0_i32 = arith.constant 0 : i32
    %c0_i32_0 = arith.constant 0 : i32
    %c0_i32_1 = arith.constant 0 : i32
    return %c0_i32, %c0_i32_0 : i32, i32
  }
  func.func @transform_11(%arg0: i32) -> (i32, i32) {
    %c0_i32 = arith.constant 0 : i32
    %c0_i32_0 = arith.constant 0 : i32
    %c0_i32_1 = arith.constant 0 : i32
    return %c0_i32, %c0_i32_0 : i32, i32
  }
  func.func @transform_12(%arg0: i32) -> (i32, i32) {
    %c0_i32 = arith.constant 0 : i32
    %c0_i32_0 = arith.constant 0 : i32
    %c0_i32_1 = arith.constant 0 : i32
    return %c0_i32, %c0_i32_0 : i32, i32
  }
  func.func @transform_13(%arg0: i32) -> (i32, i32) {
    %c0_i32 = arith.constant 0 : i32
    %c0_i32_0 = arith.constant 0 : i32
    return %arg0, %c0_i32 : i32, i32
  }
}

</mosaic_0001>

<llo_original>
// kernel: tpu_custom_call.1
$region0: #{tpu_custom_call.1}
  #allocation0 [shape = 'u32[]', space=smem, size = 0x4, offset = 0x4, fixed_abs, tag = 'smem constant byte address 0x4 - core index']
  #allocation1 [shape = 'u32[144,128]{1,0:T(1,128)}', space=vmem, size = 0x12000, scoped, tag = 'internal scratch']
  %s0 = inlined_call_operand.hbm [shape: bf16[32,128], index: 0, kind: input, shape index: {}]
  %s1 = inlined_call_operand.hbm [shape: bf16[128,1024], index: 1, kind: input, shape index: {}]
  %s2 = inlined_call_operand.hbm [shape: f32[1,1024], index: 2, kind: input, shape index: {}]
  %s3 = inlined_call_operand.hbm [shape: bf16[1024,512], index: 3, kind: input, shape index: {}]
  %s4 = inlined_call_operand.vmem [shape: f32[1,512], index: 4, kind: input, shape index: {}]
  %s5 = inlined_call_operand.hbm [shape: bf16[512,128], index: 5, kind: input, shape index: {}]
  %s6 = inlined_call_operand.vmem [shape: f32[1,128], index: 6, kind: input, shape index: {}]
  %s7 = inlined_call_operand.hbm [shape: bf16[128,512], index: 7, kind: input, shape index: {}]
  %s8 = inlined_call_operand.vmem [shape: f32[1,512], index: 8, kind: input, shape index: {}]
  %s9 = inlined_call_operand.hbm [shape: bf16[512,1024], index: 9, kind: input, shape index: {}]
  %s10 = inlined_call_operand.vmem [shape: f32[1,1024], index: 10, kind: input, shape index: {}]
  %s11 = inlined_call_operand.hbm [shape: bf16[1024,128], index: 11, kind: input, shape index: {}]
  %s12 = inlined_call_operand.vmem [shape: f32[1,128], index: 12, kind: input, shape index: {}]
  %s13 = inlined_call_operand.hbm [shape: f32[32,128], index: 13, kind: output, shape index: {}]
  %s14 = sld [smem:[#allocation0]]
  $region117: #{tpu_custom_call.1} parent=0
    _
  %s16 = ssub.s32 1, %s14
  %s17 = scalar_select 0, %s16, %s14
  $region1: #{tpu_custom_call.1} parent=0
    #allocation2 [shape = 'u8[8192]{0}', space=vmem, size = 0x2000, scoped, tag = 'input window, operand 0']
    #allocation3 [shape = 's32[2]{0}', space=sflag, size = 0x8, scoped, tag = 'scoped memory for tpu_custom_call.1']
    #allocation4 [shape = 's32[2]{0}', space=sflag, size = 0x8, scoped, tag = 'scoped memory for tpu_custom_call.1']
    #allocation5 [shape = 'u8[262144]{0}', space=vmem, size = 0x40000, scoped, tag = 'input window, operand 1, single buffered']
    #allocation6 [shape = 's32[1]{0}', space=sflag, size = 0x4, scoped, tag = 'scoped memory for tpu_custom_call.1']
    #allocation7 [shape = 'u8[4096]{0}', space=vmem, size = 0x1000, scoped, tag = 'input window, operand 2, single buffered']
    #allocation8 [shape = 'u8[1048576]{0}', space=vmem, size = 0x100000, scoped, tag = 'input window, operand 3, single buffered']
    #allocation9 [shape = 's32[1]{0}', space=sflag, size = 0x4, scoped, tag = 'scoped memory for tpu_custom_call.1']
    #allocation10 [shape = 'u8[131072]{0}', space=vmem, size = 0x20000, scoped, tag = 'input window, operand 5, single buffered']
    #allocation11 [shape = 'u8[131072]{0}', space=vmem, size = 0x20000, scoped, tag = 'input window, operand 7, single buffered']
    #allocation12 [shape = 's32[1]{0}', space=sflag, size = 0x4, scoped, tag = 'scoped memory for tpu_custom_call.1']
    #allocation13 [shape = 'u8[1048576]{0}', space=vmem, size = 0x100000, scoped, tag = 'input window, operand 9, single buffered']
    #allocation14 [shape = 'u8[262144]{0}', space=vmem, size = 0x40000, scoped, tag = 'input window, operand 11, single buffered']
    #allocation15 [shape = 's32[1]{0}', space=sflag, size = 0x4, scoped, tag = 'scoped memory for tpu_custom_call.1']
    #allocation16 [shape = 'u8[16384]{0}', space=vmem, size = 0x4000, scoped, tag = 'output window, operand 0']
    %18 = vsyncpa [#allocation3], 0
    %s19 = scalar_lea.sflag [#allocation3], 1
    %20 = vsyncpa %s19, 0
    %21 = vsyncpa [#allocation6], 0
    %22 = vsyncpa [#allocation9], 0
    %23 = vsyncpa [#allocation12], 0
    %24 = vsyncpa [#allocation15], 0
    %25 = vsyncpa [#allocation4], 0
    %s26 = scalar_lea.sflag [#allocation4], 1
    %27 = vsyncpa %s26, 0
    loop: start=0, step=1, limit=4
    $region2: #{tpu_custom_call.1} parent=1 // loop_pre_header
      _
    $region3: #{tpu_custom_call.1} parent=1 // loop_header
      %s29 = sphi 0, %s33
      %p30 = scmp.ge.s32.totalorder %s29, 4
      %s39 = sphi 0, %s41
      %s42 = sphi 0, %s39
      %s43 = sphi 0, %s42
      %s59 = sphi 0, %s43
      %s63 = sphi 0, %s63
      %s65 = sphi 0, %s63
      %s66 = sphi 0, %s65
      %s80 = sphi 0, %s66
      %s84 = sphi 0, %s84
      %s86 = sphi 0, %s84
      %s87 = sphi 0, %s86
      %s101 = sphi 0, %s87
      %s105 = sphi 0, %s105
      %s107 = sphi 0, %s105
      %s108 = sphi 0, %s107
      %s122 = sphi 0, %s108
      %s126 = sphi 0, %s126
      %s128 = sphi 0, %s126
      %s129 = sphi 0, %s128
      %s143 = sphi 0, %s129
      %s147 = sphi 0, %s147
      %s149 = sphi 0, %s147
      %s150 = sphi 0, %s149
      %s164 = sphi 0, %s150
      %s168 = sphi 0, %s168
      %s170 = sphi 0, %s168
      %s171 = sphi 0, %s170
      %s185 = sphi 0, %s171
      %s189 = sphi 0, %s189
      %s191 = sphi 0, %s189
      %s192 = sphi 0, %s191
      %s206 = sphi 0, %s192
      %s210 = sphi 0, %s210
      %s212 = sphi 0, %s210
      %s213 = sphi 0, %s212
      %s227 = sphi 0, %s213
      %s231 = sphi 0, %s231
      %s233 = sphi 0, %s231
      %s234 = sphi 0, %s233
      %s248 = sphi 0, %s234
      %s252 = sphi 0, %s252
      %s254 = sphi 0, %s252
      %s255 = sphi 0, %s254
      %s269 = sphi 0, %s255
      %s273 = sphi 0, %s273
      %s275 = sphi 0, %s273
      %s276 = sphi 0, %s275
      %s290 = sphi 0, %s276
      %s294 = sphi 0, %s294
      %s296 = sphi 0, %s294
      %s297 = sphi 0, %s296
      %s311 = sphi 0, %s297
      %s317 = sphi 0, %s319
      %s320 = sphi 0, %s317
      %s321 = sphi 0, %s320
      %s337 = sphi 0, %s321
    $region4: #{tpu_custom_call.1} parent=1 // loop_header_branch
      %32 = sbr.rel (%p30) target = $region8
    $region5: #{tpu_custom_call.1} parent=1 // loop_body
      %s34 = ssub.s32 %s29, 1
      %s35 = ssub.s32 %s29, 2
      %s36 = sadd.s32 %s29, 1
      %s37 = ssub.s32 %s29, %s36
      %p38 = scmp.eq.s32.totalorder %s37, 0
      %s40 = sadd.s32 %s39, 1
      %s41 = scalar_select %p38, %s39, %s40
      %p44 = pneg %p38
      %p45 = scmp.eq.s32.totalorder %s29, 1
      %p46 = por %p44, %p45
      %p47 = scmp.ne.s32.totalorder %s39, %s42
      %p48 = scmp.eq.s32.totalorder %s29, 0
      %p49 = por %p47, %p48
      %p50 = scmp.ne.s32.totalorder %s39, %s42
      %p51 = scmp.eq.s32.totalorder %s34, 1
      %p52 = por %p50, %p51
      %p53 = scmp.ne.s32.totalorder %s42, %s43
      %p54 = scmp.eq.s32.totalorder %s34, 0
      %p55 = por %p53, %p54
      %p56 = scmp.ne.s32.totalorder %s42, %s43
      %p57 = scmp.eq.s32.totalorder %s35, 1
      %p58 = por %p56, %p57
      %p60 = scmp.ne.s32.totalorder %s43, %s59
      %p61 = scmp.eq.s32.totalorder %s35, 0
      %p62 = por %p60, %p61
      %s64 = sadd.s32 %s63, 1
      %p67 = scmp.eq.s32.totalorder %s29, 1
      %p68 = scmp.ne.s32.totalorder %s63, %s65
      %p69 = scmp.eq.s32.totalorder %s29, 0
      %p70 = por %p68, %p69
      %p71 = scmp.ne.s32.totalorder %s63, %s65
      %p72 = scmp.eq.s32.totalorder %s34, 1
      %p73 = por %p71, %p72
      %p74 = scmp.ne.s32.totalorder %s65, %s66
      %p75 = scmp.eq.s32.totalorder %s34, 0
      %p76 = por %p74, %p75
      %p77 = scmp.ne.s32.totalorder %s65, %s66
      %p78 = scmp.eq.s32.totalorder %s35, 1
      %p79 = por %p77, %p78
      %p81 = scmp.ne.s32.totalorder %s66, %s80
      %p82 = scmp.eq.s32.totalorder %s35, 0
      %p83 = por %p81, %p82
      %s85 = sadd.s32 %s84, 1
      %p88 = scmp.eq.s32.totalorder %s29, 1
      %p89 = scmp.ne.s32.totalorder %s84, %s86
      %p90 = scmp.eq.s32.totalorder %s29, 0
      %p91 = por %p89, %p90
      %p92 = scmp.ne.s32.totalorder %s84, %s86
      %p93 = scmp.eq.s32.totalorder %s34, 1
      %p94 = por %p92, %p93
      %p95 = scmp.ne.s32.totalorder %s86, %s87
      %p96 = scmp.eq.s32.totalorder %s34, 0
      %p97 = por %p95, %p96
      %p98 = scmp.ne.s32.totalorder %s86, %s87
      %p99 = scmp.eq.s32.totalorder %s35, 1
      %p100 = por %p98, %p99
      %p102 = scmp.ne.s32.totalorder %s87, %s101
      %p103 = scmp.eq.s32.totalorder %s35, 0
      %p104 = por %p102, %p103
      %s106 = sadd.s32 %s105, 1
      %p109 = scmp.eq.s32.totalorder %s29, 1
      %p110 = scmp.ne.s32.totalorder %s105, %s107
      %p111 = scmp.eq.s32.totalorder %s29, 0
      %p112 = por %p110, %p111
      %p113 = scmp.ne.s32.totalorder %s105, %s107
      %p114 = scmp.eq.s32.totalorder %s34, 1
      %p115 = por %p113, %p114
      %p116 = scmp.ne.s32.totalorder %s107, %s108
      %p117 = scmp.eq.s32.totalorder %s34, 0
      %p118 = por %p116, %p117
      %p119 = scmp.ne.s32.totalorder %s107, %s108
      %p120 = scmp.eq.s32.totalorder %s35, 1
      %p121 = por %p119, %p120
      %p123 = scmp.ne.s32.totalorder %s108, %s122
      %p124 = scmp.eq.s32.totalorder %s35, 0
      %p125 = por %p123, %p124
      %s127 = sadd.s32 %s126, 1
      %p130 = scmp.eq.s32.totalorder %s29, 1
      %p131 = scmp.ne.s32.totalorder %s126, %s128
      %p132 = scmp.eq.s32.totalorder %s29, 0
      %p133 = por %p131, %p132
      %p134 = scmp.ne.s32.totalorder %s126, %s128
      %p135 = scmp.eq.s32.totalorder %s34, 1
      %p136 = por %p134, %p135
      %p137 = scmp.ne.s32.totalorder %s128, %s129
      %p138 = scmp.eq.s32.totalorder %s34, 0
      %p139 = por %p137, %p138
      %p140 = scmp.ne.s32.totalorder %s128, %s129
      %p141 = scmp.eq.s32.totalorder %s35, 1
      %p142 = por %p140, %p141
      %p144 = scmp.ne.s32.totalorder %s129, %s143
      %p145 = scmp.eq.s32.totalorder %s35, 0
      %p146 = por %p144, %p145
      %s148 = sadd.s32 %s147, 1
      %p151 = scmp.eq.s32.totalorder %s29, 1
      %p152 = scmp.ne.s32.totalorder %s147, %s149
      %p153 = scmp.eq.s32.totalorder %s29, 0
      %p154 = por %p152, %p153
      %p155 = scmp.ne.s32.totalorder %s147, %s149
      %p156 = scmp.eq.s32.totalorder %s34, 1
      %p157 = por %p155, %p156
      %p158 = scmp.ne.s32.totalorder %s149, %s150
      %p159 = scmp.eq.s32.totalorder %s34, 0
      %p160 = por %p158, %p159
      %p161 = scmp.ne.s32.totalorder %s149, %s150
      %p162 = scmp.eq.s32.totalorder %s35, 1
      %p163 = por %p161, %p162
      %p165 = scmp.ne.s32.totalorder %s150, %s164
      %p166 = scmp.eq.s32.totalorder %s35, 0
      %p167 = por %p165, %p166
      %s169 = sadd.s32 %s168, 1
      %p172 = scmp.eq.s32.totalorder %s29, 1
      %p173 = scmp.ne.s32.totalorder %s168, %s170
      %p174 = scmp.eq.s32.totalorder %s29, 0
      %p175 = por %p173, %p174
      %p176 = scmp.ne.s32.totalorder %s168, %s170
      %p177 = scmp.eq.s32.totalorder %s34, 1
      %p178 = por %p176, %p177
      %p179 = scmp.ne.s32.totalorder %s170, %s171
      %p180 = scmp.eq.s32.totalorder %s34, 0
      %p181 = por %p179, %p180
      %p182 = scmp.ne.s32.totalorder %s170, %s171
      %p183 = scmp.eq.s32.totalorder %s35, 1
      %p184 = por %p182, %p183
      %p186 = scmp.ne.s32.totalorder %s171, %s185
      %p187 = scmp.eq.s32.totalorder %s35, 0
      %p188 = por %p186, %p187
      %s190 = sadd.s32 %s189, 1
      %p193 = scmp.eq.s32.totalorder %s29, 1
      %p194 = scmp.ne.s32.totalorder %s189, %s191
      %p195 = scmp.eq.s32.totalorder %s29, 0
      %p196 = por %p194, %p195
      %p197 = scmp.ne.s32.totalorder %s189, %s191
      %p198 = scmp.eq.s32.totalorder %s34, 1
      %p199 = por %p197, %p198
      %p200 = scmp.ne.s32.totalorder %s191, %s192
      %p201 = scmp.eq.s32.totalorder %s34, 0
      %p202 = por %p200, %p201
      %p203 = scmp.ne.s32.totalorder %s191, %s192
      %p204 = scmp.eq.s32.totalorder %s35, 1
      %p205 = por %p203, %p204
      %p207 = scmp.ne.s32.totalorder %s192, %s206
      %p208 = scmp.eq.s32.totalorder %s35, 0
      %p209 = por %p207, %p208
      %s211 = sadd.s32 %s210, 1
      %p214 = scmp.eq.s32.totalorder %s29, 1
      %p215 = scmp.ne.s32.totalorder %s210, %s212
      %p216 = scmp.eq.s32.totalorder %s29, 0
      %p217 = por %p215, %p216
      %p218 = scmp.ne.s32.totalorder %s210, %s212
      %p219 = scmp.eq.s32.totalorder %s34, 1
      %p220 = por %p218, %p219
      %p221 = scmp.ne.s32.totalorder %s212, %s213
      %p222 = scmp.eq.s32.totalorder %s34, 0
      %p223 = por %p221, %p222
      %p224 = scmp.ne.s32.totalorder %s212, %s213
      %p225 = scmp.eq.s32.totalorder %s35, 1
      %p226 = por %p224, %p225
      %p228 = scmp.ne.s32.totalorder %s213, %s227
      %p229 = scmp.eq.s32.totalorder %s35, 0
      %p230 = por %p228, %p229
      %s232 = sadd.s32 %s231, 1
      %p235 = scmp.eq.s32.totalorder %s29, 1
      %p236 = scmp.ne.s32.totalorder %s231, %s233
      %p237 = scmp.eq.s32.totalorder %s29, 0
      %p238 = por %p236, %p237
      %p239 = scmp.ne.s32.totalorder %s231, %s233
      %p240 = scmp.eq.s32.totalorder %s34, 1
      %p241 = por %p239, %p240
      %p242 = scmp.ne.s32.totalorder %s233, %s234
      %p243 = scmp.eq.s32.totalorder %s34, 0
      %p244 = por %p242, %p243
      %p245 = scmp.ne.s32.totalorder %s233, %s234
      %p246 = scmp.eq.s32.totalorder %s35, 1
      %p247 = por %p245, %p246
      %p249 = scmp.ne.s32.totalorder %s234, %s248
      %p250 = scmp.eq.s32.totalorder %s35, 0
      %p251 = por %p249, %p250
      %s253 = sadd.s32 %s252, 1
      %p256 = scmp.eq.s32.totalorder %s29, 1
      %p257 = scmp.ne.s32.totalorder %s252, %s254
      %p258 = scmp.eq.s32.totalorder %s29, 0
      %p259 = por %p257, %p258
      %p260 = scmp.ne.s32.totalorder %s252, %s254
      %p261 = scmp.eq.s32.totalorder %s34, 1
      %p262 = por %p260, %p261
      %p263 = scmp.ne.s32.totalorder %s254, %s255
      %p264 = scmp.eq.s32.totalorder %s34, 0
      %p265 = por %p263, %p264
      %p266 = scmp.ne.s32.totalorder %s254, %s255
      %p267 = scmp.eq.s32.totalorder %s35, 1
      %p268 = por %p266, %p267
      %p270 = scmp.ne.s32.totalorder %s255, %s269
      %p271 = scmp.eq.s32.totalorder %s35, 0
      %p272 = por %p270, %p271
      %s274 = sadd.s32 %s273, 1
      %p277 = scmp.eq.s32.totalorder %s29, 1
      %p278 = scmp.ne.s32.totalorder %s273, %s275
      %p279 = scmp.eq.s32.totalorder %s29, 0
      %p280 = por %p278, %p279
      %p281 = scmp.ne.s32.totalorder %s273, %s275
      %p282 = scmp.eq.s32.totalorder %s34, 1
      %p283 = por %p281, %p282
      %p284 = scmp.ne.s32.totalorder %s275, %s276
      %p285 = scmp.eq.s32.totalorder %s34, 0
      %p286 = por %p284, %p285
      %p287 = scmp.ne.s32.totalorder %s275, %s276
      %p288 = scmp.eq.s32.totalorder %s35, 1
      %p289 = por %p287, %p288
      %p291 = scmp.ne.s32.totalorder %s276, %s290
      %p292 = scmp.eq.s32.totalorder %s35, 0
      %p293 = por %p291, %p292
      %s295 = sadd.s32 %s294, 1
      %p298 = scmp.eq.s32.totalorder %s29, 1
      %p299 = scmp.ne.s32.totalorder %s294, %s296
      %p300 = scmp.eq.s32.totalorder %s29, 0
      %p301 = por %p299, %p300
      %p302 = scmp.ne.s32.totalorder %s294, %s296
      %p303 = scmp.eq.s32.totalorder %s34, 1
      %p304 = por %p302, %p303
      %p305 = scmp.ne.s32.totalorder %s296, %s297
      %p306 = scmp.eq.s32.totalorder %s34, 0
      %p307 = por %p305, %p306
      %p308 = scmp.ne.s32.totalorder %s296, %s297
      %p309 = scmp.eq.s32.totalorder %s35, 1
      %p310 = por %p308, %p309
      %p312 = scmp.ne.s32.totalorder %s297, %s311
      %p313 = scmp.eq.s32.totalorder %s35, 0
      %p314 = por %p312, %p313
      %s315 = ssub.s32 %s29, %s36
      %p316 = scmp.eq.s32.totalorder %s315, 0
      %s318 = sadd.s32 %s317, 1
      %s319 = scalar_select %p316, %s317, %s318
      %p322 = pneg %p316
      %p323 = scmp.eq.s32.totalorder %s29, 1
      %p324 = por %p322, %p323
      %p325 = scmp.ne.s32.totalorder %s317, %s320
      %p326 = scmp.eq.s32.totalorder %s29, 0
      %p327 = por %p325, %p326
      %p328 = scmp.ne.s32.totalorder %s317, %s320
      %p329 = scmp.eq.s32.totalorder %s34, 1
      %p330 = por %p328, %p329
      %p331 = scmp.ne.s32.totalorder %s320, %s321
      %p332 = scmp.eq.s32.totalorder %s34, 0
      %p333 = por %p331, %p332
      %p334 = scmp.ne.s32.totalorder %s320, %s321
      %p335 = scmp.eq.s32.totalorder %s35, 1
      %p336 = por %p334, %p335
      %p338 = scmp.ne.s32.totalorder %s321, %s337
      %p339 = scmp.eq.s32.totalorder %s35, 0
      %p340 = por %p338, %p339
      %p341 = scmp.le.s32.totalorder 1, %s29
      %p342 = scmp.lt.s32.totalorder %s29, 3
      %p343 = pnand %p341, %p342
      %p344 = pneg %p343
      // Predicated region
      $region9: #{tpu_custom_call.1} parent=5 // pred_check
        _
      $region10: #{tpu_custom_call.1} parent=5 // pred_check_branch
        %346 = sbr.rel (%p343) target = $region12
      $region11: #{tpu_custom_call.1} parent=5 // pred_region
        %s347 = ssub.s32 %s29, 1
        // Predicated region
        $region13: #{tpu_custom_call.1} parent=11 // pred_check
          %p348 = pneg %p76
        $region14: #{tpu_custom_call.1} parent=11 // pred_check_branch
          %350 = sbr.rel (%p348) target = $region16
        $region15: #{tpu_custom_call.1} parent=11 // pred_region
          %s352 = ssub.s32 8192, 8192
          %353 = vsyncadd [#allocation6], %s352
          %s354 = sshll.u32 [#allocation5], 4
          %s355 = int_to_ptr.vmem [resolvable:$true] %s354
          %360 = dma.hbm_to_vmem [thread:$0]  %s1, 8192, %s355, [#allocation6], 512, 512, 32
        $region16: #{tpu_custom_call.1} parent=11 // pred_fallthru
          _
        // Predicated region
        $region17: #{tpu_custom_call.1} parent=11 // pred_check
          %p361 = pneg %p97
        $region18: #{tpu_custom_call.1} parent=11 // pred_check_branch
          %363 = sbr.rel (%p361) target = $region20
        $region19: #{tpu_custom_call.1} parent=11 // pred_region
          %s365 = ssub.s32 128, 128
          %366 = vsyncadd [#allocation6], %s365
          %s368 = sshll.u32 [#allocation7], 4
          %s369 = int_to_ptr.vmem [resolvable:$true] %s368
          %371 = dma.hbm_to_vmem [thread:$0]  %s2, 128, %s369, [#allocation6]
        $region20: #{tpu_custom_call.1} parent=11 // pred_fallthru
          _
        // Predicated region
        $region21: #{tpu_custom_call.1} parent=11 // pred_check
          %p372 = pneg %p118
        $region22: #{tpu_custom_call.1} parent=11 // pred_check_branch
          %374 = sbr.rel (%p372) target = $region24
        $region23: #{tpu_custom_call.1} parent=11 // pred_region
          %s376 = ssub.s32 32768, 32768
          %377 = vsyncadd [#allocation9], %s376
          %s378 = sshll.u32 [#allocation8], 4
          %s379 = int_to_ptr.vmem [resolvable:$true] %s378
          %384 = dma.hbm_to_vmem [thread:$0]  %s3, 32768, %s379, [#allocation9], 256, 256, 16
        $region24: #{tpu_custom_call.1} parent=11 // pred_fallthru
          _
        // Predicated region
        $region25: #{tpu_custom_call.1} parent=11 // pred_check
          %p385 = pneg %p139
        $region26: #{tpu_custom_call.1} parent=11 // pred_check_branch
          %387 = sbr.rel (%p385) target = $region28
        $region27: #{tpu_custom_call.1} parent=11 // pred_region
          _
        $region28: #{tpu_custom_call.1} parent=11 // pred_fallthru
          _
        // Predicated region
        $region29: #{tpu_custom_call.1} parent=11 // pred_check
          %p388 = pneg %p160
        $region30: #{tpu_custom_call.1} parent=11 // pred_check_branch
          %390 = sbr.rel (%p388) target = $region32
        $region31: #{tpu_custom_call.1} parent=11 // pred_region
          %s392 = ssub.s32 4096, 4096
          %393 = vsyncadd [#allocation9], %s392
          %s394 = sshll.u32 [#allocation10], 4
          %s395 = int_to_ptr.vmem [resolvable:$true] %s394
          %400 = dma.hbm_to_vmem [thread:$0]  %s5, 4096, %s395, [#allocation9], 64, 64, 4
        $region32: #{tpu_custom_call.1} parent=11 // pred_fallthru
          _
        // Predicated region
        $region33: #{tpu_custom_call.1} parent=11 // pred_check
          %p401 = pneg %p181
        $region34: #{tpu_custom_call.1} parent=11 // pred_check_branch
          %403 = sbr.rel (%p401) target = $region36
        $region35: #{tpu_custom_call.1} parent=11 // pred_region
          _
        $region36: #{tpu_custom_call.1} parent=11 // pred_fallthru
          _
        // Predicated region
        $region37: #{tpu_custom_call.1} parent=11 // pred_check
          %p404 = pneg %p202
        $region38: #{tpu_custom_call.1} parent=11 // pred_check_branch
          %406 = sbr.rel (%p404) target = $region40
        $region39: #{tpu_custom_call.1} parent=11 // pred_region
          %s408 = ssub.s32 4096, 4096
          %409 = vsyncadd [#allocation12], %s408
          %s410 = sshll.u32 [#allocation11], 4
          %s411 = int_to_ptr.vmem [resolvable:$true] %s410
          %416 = dma.hbm_to_vmem [thread:$0]  %s7, 4096, %s411, [#allocation12], 256, 256, 16
        $region40: #{tpu_custom_call.1} parent=11 // pred_fallthru
          _
        // Predicated region
        $region41: #{tpu_custom_call.1} parent=11 // pred_check
          %p417 = pneg %p223
        $region42: #{tpu_custom_call.1} parent=11 // pred_check_branch
          %419 = sbr.rel (%p417) target = $region44
        $region43: #{tpu_custom_call.1} parent=11 // pred_region
          _
        $region44: #{tpu_custom_call.1} parent=11 // pred_fallthru
          _
        // Predicated region
        $region45: #{tpu_custom_call.1} parent=11 // pred_check
          %p420 = pneg %p244
        $region46: #{tpu_custom_call.1} parent=11 // pred_check_branch
          %422 = sbr.rel (%p420) target = $region48
        $region47: #{tpu_custom_call.1} parent=11 // pred_region
          %s424 = ssub.s32 32768, 32768
          %425 = vsyncadd [#allocation12], %s424
          %s426 = sshll.u32 [#allocation13], 4
          %s427 = int_to_ptr.vmem [resolvable:$true] %s426
          %432 = dma.hbm_to_vmem [thread:$0]  %s9, 32768, %s427, [#allocation12], 512, 512, 32
        $region48: #{tpu_custom_call.1} parent=11 // pred_fallthru
          _
        // Predicated region
        $region49: #{tpu_custom_call.1} parent=11 // pred_check
          %p433 = pneg %p265
        $region50: #{tpu_custom_call.1} parent=11 // pred_check_branch
          %435 = sbr.rel (%p433) target = $region52
        $region51: #{tpu_custom_call.1} parent=11 // pred_region
          _
        $region52: #{tpu_custom_call.1} parent=11 // pred_fallthru
          _
        // Predicated region
        $region53: #{tpu_custom_call.1} parent=11 // pred_check
          %p436 = pneg %p286
        $region54: #{tpu_custom_call.1} parent=11 // pred_check_branch
          %438 = sbr.rel (%p436) target = $region56
        $region55: #{tpu_custom_call.1} parent=11 // pred_region
          %s440 = ssub.s32 8192, 8192
          %441 = vsyncadd [#allocation15], %s440
          %s442 = sshll.u32 [#allocation14], 4
          %s443 = int_to_ptr.vmem [resolvable:$true] %s442
          %448 = dma.hbm_to_vmem [thread:$0]  %s11, 8192, %s443, [#allocation15], 64, 64, 4
        $region56: #{tpu_custom_call.1} parent=11 // pred_fallthru
          _
        // Predicated region
        $region57: #{tpu_custom_call.1} parent=11 // pred_check
          %p449 = pneg %p307
        $region58: #{tpu_custom_call.1} parent=11 // pred_check_branch
          %451 = sbr.rel (%p449) target = $region60
        $region59: #{tpu_custom_call.1} parent=11 // pred_region
          _
        $region60: #{tpu_custom_call.1} parent=11 // pred_fallthru
          _
      $region12: #{tpu_custom_call.1} parent=5 // pred_fallthru
        _
      %p452 = scmp.lt.s32.totalorder %s29, 2
      // Predicated region
      $region61: #{tpu_custom_call.1} parent=5 // pred_check
        %p453 = pneg %p452
      $region62: #{tpu_custom_call.1} parent=5 // pred_check_branch
        %455 = sbr.rel (%p453) target = $region64
      $region63: #{tpu_custom_call.1} parent=5 // pred_region
        // Predicated region
        $region65: #{tpu_custom_call.1} parent=63 // pred_check
          %p456 = pneg %p49
        $region66: #{tpu_custom_call.1} parent=63 // pred_check_branch
          %458 = sbr.rel (%p456) target = $region68
        $region67: #{tpu_custom_call.1} parent=63 // pred_region
          %s459 = sand.u32 %s39, 1
          %s460 = scalar_lea.sflag [#allocation3], %s459
          %s461 = sand.u32 %s39, 1
          %s462 = smul.addr %s461, 8
          %s463 = scalar_lea.vmem [#allocation2], %s462
          %s464 = smul.u32 2, %s29
          %s466 = ssub.s32 128, 128
          %467 = vsyncadd %s460, %s466
          %s468 = smul.addr %s464, 64
          %s469 = scalar_lea.hbm %s0, %s468
          %s470 = sshll.u32 %s463, 4
          %s471 = int_to_ptr.vmem [resolvable:$true] %s470
          %476 = dma.hbm_to_vmem [thread:$0]  %s469, 128, %s471, %s460, 64, 64, 4
        $region68: #{tpu_custom_call.1} parent=63 // pred_fallthru
          _
      $region64: #{tpu_custom_call.1} parent=5 // pred_fallthru
        _
      %p477 = scmp.le.s32.totalorder 1, %s29
      %p478 = scmp.lt.s32.totalorder %s29, 3
      %p479 = pnand %p477, %p478
      %p480 = pneg %p479
      // Predicated region
      $region69: #{tpu_custom_call.1} parent=5 // pred_check
        _
      $region70: #{tpu_custom_call.1} parent=5 // pred_check_branch
        %482 = sbr.rel (%p479) target = $region72
      $region71: #{tpu_custom_call.1} parent=5 // pred_region
        %s483 = ssub.s32 %s29, 1
        %s484 = sand.u32 %s42, 1
        %s485 = scalar_lea.sflag [#allocation3], %s484
        %s486 = sand.u32 %s42, 1
        %s487 = smul.addr %s486, 8
        %s488 = scalar_lea.vmem [#allocation2], %s487
        // Predicated region
        $region73: #{tpu_custom_call.1} parent=71 // pred_check
          %p489 = pneg %p55
        $region74: #{tpu_custom_call.1} parent=71 // pred_check_branch
          %491 = sbr.rel (%p489) target = $region76
        $region75: #{tpu_custom_call.1} parent=71 // pred_region
          %492 = dma.done %s485, 128
        $region76: #{tpu_custom_call.1} parent=71 // pred_fallthru
          _
        // Predicated region
        $region77: #{tpu_custom_call.1} parent=71 // pred_check
          %p493 = pneg %p76
        $region78: #{tpu_custom_call.1} parent=71 // pred_check_branch
          %495 = sbr.rel (%p493) target = $region80
        $region79: #{tpu_custom_call.1} parent=71 // pred_region
          %496 = dma.done [#allocation6], 8192
        $region80: #{tpu_custom_call.1} parent=71 // pred_fallthru
          _
        // Predicated region
        $region81: #{tpu_custom_call.1} parent=71 // pred_check
          %p497 = pneg %p97
        $region82: #{tpu_custom_call.1} parent=71 // pred_check_branch
          %499 = sbr.rel (%p497) target = $region84
        $region83: #{tpu_custom_call.1} parent=71 // pred_region
          %500 = dma.done [#allocation6], 128
        $region84: #{tpu_custom_call.1} parent=71 // pred_fallthru
          _
        // Predicated region
        $region85: #{tpu_custom_call.1} parent=71 // pred_check
          %p501 = pneg %p118
        $region86: #{tpu_custom_call.1} parent=71 // pred_check_branch
          %503 = sbr.rel (%p501) target = $region88
        $region87: #{tpu_custom_call.1} parent=71 // pred_region
          %504 = dma.done [#allocation9], 32768
        $region88: #{tpu_custom_call.1} parent=71 // pred_fallthru
          _
        // Predicated region
        $region89: #{tpu_custom_call.1} parent=71 // pred_check
          %p505 = pneg %p160
        $region90: #{tpu_custom_call.1} parent=71 // pred_check_branch
          %507 = sbr.rel (%p505) target = $region92
        $region91: #{tpu_custom_call.1} parent=71 // pred_region
          %508 = dma.done [#allocation9], 4096
        $region92: #{tpu_custom_call.1} parent=71 // pred_fallthru
          _
        // Predicated region
        $region93: #{tpu_custom_call.1} parent=71 // pred_check
          %p509 = pneg %p202
        $region94: #{tpu_custom_call.1} parent=71 // pred_check_branch
          %511 = sbr.rel (%p509) target = $region96
        $region95: #{tpu_custom_call.1} parent=71 // pred_region
          %512 = dma.done [#allocation12], 4096
        $region96: #{tpu_custom_call.1} parent=71 // pred_fallthru
          _
        // Predicated region
        $region97: #{tpu_custom_call.1} parent=71 // pred_check
          %p513 = pneg %p244
        $region98: #{tpu_custom_call.1} parent=71 // pred_check_branch
          %515 = sbr.rel (%p513) target = $region100
        $region99: #{tpu_custom_call.1} parent=71 // pred_region
          %516 = dma.done [#allocation12], 32768
        $region100: #{tpu_custom_call.1} parent=71 // pred_fallthru
          _
        // Predicated region
        $region101: #{tpu_custom_call.1} parent=71 // pred_check
          %p517 = pneg %p286
        $region102: #{tpu_custom_call.1} parent=71 // pred_check_branch
          %519 = sbr.rel (%p517) target = $region104
        $region103: #{tpu_custom_call.1} parent=71 // pred_region
          %520 = dma.done [#allocation15], 8192
        $region104: #{tpu_custom_call.1} parent=71 // pred_fallthru
          _
        %s521 = sand.u32 %s42, 1
        %s522 = scalar_lea.sflag [#allocation3], %s521
        %s523 = sand.u32 %s42, 1
        %s524 = smul.addr %s523, 8
        %s525 = scalar_lea.vmem [#allocation2], %s524
        %p526 = pneg %p55
        %p527 = pneg %p52
        %p528 = pneg %p76
        %p529 = pneg %p73
        %p530 = pneg %p97
        %p531 = pneg %p94
        %p532 = pneg %p118
        %p533 = pneg %p115
        %p534 = pneg %p139
        %p535 = pneg %p136
        %p536 = pneg %p160
        %p537 = pneg %p157
        %p538 = pneg %p181
        %p539 = pneg %p178
        %p540 = pneg %p202
        %p541 = pneg %p199
        %p542 = pneg %p223
        %p543 = pneg %p220
        %p544 = pneg %p244
        %p545 = pneg %p241
        %p546 = pneg %p265
        %p547 = pneg %p262
        %p548 = pneg %p286
        %p549 = pneg %p283
        %p550 = pneg %p307
        %p551 = pneg %p304
        %p552 = pneg %p333
        %p553 = pneg %p330
        %s554 = sand.u32 %s320, 1
        %s555 = scalar_lea.sflag [#allocation4], %s554
        %s556 = sand.u32 %s320, 1
        %s557 = smul.addr %s556, 16
        %s558 = scalar_lea.vmem [#allocation16], %s557
        %s559 = smul.u32 2, %s34
        %s560 = smul.u32 2, %s34
        %v562 = vld [vmem:[%s488] sm:$0xf]
        %v563 = vld [vmem:[%s488 + $0x4] sm:$0xf]
        %v564 = vld [vmem:[#allocation5] sm:$0xff]
        %v565 = vld [vmem:[#allocation5 + $0x8] sm:$0xff]
        %v566 = vld [vmem:[#allocation5 + $0x10] sm:$0xff]
        %v567 = vld [vmem:[#allocation5 + $0x18] sm:$0xff]
        %v568 = vld [vmem:[#allocation5 + $0x20] sm:$0xff]
        %v569 = vld [vmem:[#allocation5 + $0x28] sm:$0xff]
        %v570 = vld [vmem:[#allocation5 + $0x30] sm:$0xff]
        %v571 = vld [vmem:[#allocation5 + $0x38] sm:$0xff]
        %v572 = vld [vmem:[#allocation5 + $0x40] sm:$0xff]
        %v573 = vld [vmem:[#allocation5 + $0x48] sm:$0xff]
        %v574 = vld [vmem:[#allocation5 + $0x50] sm:$0xff]
        %v575 = vld [vmem:[#allocation5 + $0x58] sm:$0xff]
        %v576 = vld [vmem:[#allocation5 + $0x60] sm:$0xff]
        %v577 = vld [vmem:[#allocation5 + $0x68] sm:$0xff]
        %v578 = vld [vmem:[#allocation5 + $0x70] sm:$0xff]
        %v579 = vld [vmem:[#allocation5 + $0x78] sm:$0xff]
        %v580 = vld [vmem:[#allocation5 + $0x80] sm:$0xff]
        %v581 = vld [vmem:[#allocation5 + $0x88] sm:$0xff]
        %v582 = vld [vmem:[#allocation5 + $0x90] sm:$0xff]
        %v583 = vld [vmem:[#allocation5 + $0x98] sm:$0xff]
        %v584 = vld [vmem:[#allocation5 + $0xa0] sm:$0xff]
        %v585 = vld [vmem:[#allocation5 + $0xa8] sm:$0xff]
        %v586 = vld [vmem:[#allocation5 + $0xb0] sm:$0xff]
        %v587 = vld [vmem:[#allocation5 + $0xb8] sm:$0xff]
        %v588 = vld [vmem:[#allocation5 + $0xc0] sm:$0xff]
        %v589 = vld [vmem:[#allocation5 + $0xc8] sm:$0xff]
        %v590 = vld [vmem:[#allocation5 + $0xd0] sm:$0xff]
        %v591 = vld [vmem:[#allocation5 + $0xd8] sm:$0xff]
        %v592 = vld [vmem:[#allocation5 + $0xe0] sm:$0xff]
        %v593 = vld [vmem:[#allocation5 + $0xe8] sm:$0xff]
        %v594 = vld [vmem:[#allocation5 + $0xf0] sm:$0xff]
        %v595 = vld [vmem:[#allocation5 + $0xf8] sm:$0xff]
        %v596 = vld [vmem:[#allocation5 + $0x100] sm:$0xff]
        %v597 = vld [vmem:[#allocation5 + $0x108] sm:$0xff]
        %v598 = vld [vmem:[#allocation5 + $0x110] sm:$0xff]
        %v599 = vld [vmem:[#allocation5 + $0x118] sm:$0xff]
        %v600 = vld [vmem:[#allocation5 + $0x120] sm:$0xff]
        %v601 = vld [vmem:[#allocation5 + $0x128] sm:$0xff]
        %v602 = vld [vmem:[#allocation5 + $0x130] sm:$0xff]
        %v603 = vld [vmem:[#allocation5 + $0x138] sm:$0xff]
        %v604 = vld [vmem:[#allocation5 + $0x140] sm:$0xff]
        %v605 = vld [vmem:[#allocation5 + $0x148] sm:$0xff]
        %v606 = vld [vmem:[#allocation5 + $0x150] sm:$0xff]
        %v607 = vld [vmem:[#allocation5 + $0x158] sm:$0xff]
        %v608 = vld [vmem:[#allocation5 + $0x160] sm:$0xff]
        %v609 = vld [vmem:[#allocation5 + $0x168] sm:$0xff]
        %v610 = vld [vmem:[#allocation5 + $0x170] sm:$0xff]
        %v611 = vld [vmem:[#allocation5 + $0x178] sm:$0xff]
        %v612 = vld [vmem:[#allocation5 + $0x180] sm:$0xff]
        %v613 = vld [vmem:[#allocation5 + $0x188] sm:$0xff]
        %v614 = vld [vmem:[#allocation5 + $0x190] sm:$0xff]
        %v615 = vld [vmem:[#allocation5 + $0x198] sm:$0xff]
        %v616 = vld [vmem:[#allocation5 + $0x1a0] sm:$0xff]
        %v617 = vld [vmem:[#allocation5 + $0x1a8] sm:$0xff]
        %v618 = vld [vmem:[#allocation5 + $0x1b0] sm:$0xff]
        %v619 = vld [vmem:[#allocation5 + $0x1b8] sm:$0xff]
        %v620 = vld [vmem:[#allocation5 + $0x1c0] sm:$0xff]
        %v621 = vld [vmem:[#allocation5 + $0x1c8] sm:$0xff]
        %v622 = vld [vmem:[#allocation5 + $0x1d0] sm:$0xff]
        %v623 = vld [vmem:[#allocation5 + $0x1d8] sm:$0xff]
        %v624 = vld [vmem:[#allocation5 + $0x1e0] sm:$0xff]
        %v625 = vld [vmem:[#allocation5 + $0x1e8] sm:$0xff]
        %v626 = vld [vmem:[#allocation5 + $0x1f0] sm:$0xff]
        %v627 = vld [vmem:[#allocation5 + $0x1f8] sm:$0xff]
        %v628 = vld [vmem:[#allocation7] sm:$0xff]
        %v630 = vlaneseq
        %v631 = vshrl.u32 %v630, 7
        %v632 = vsub.s32 0, %v631
        %v633 = vrot.slane %v628, %v632
        %v634 = vlaneseq
        %v635 = vshrl.u32 %v634, 7
        %v636 = vsub.s32 1, %v635
        %v637 = vrot.slane %v628, %v636
        %v638 = vlaneseq
        %v639 = vshrl.u32 %v638, 7
        %v640 = vsub.s32 2, %v639
        %v641 = vrot.slane %v628, %v640
        %v642 = vlaneseq
        %v643 = vshrl.u32 %v642, 7
        %v644 = vsub.s32 3, %v643
        %v645 = vrot.slane %v628, %v644
        %v646 = vlaneseq
        %v647 = vshrl.u32 %v646, 7
        %v648 = vsub.s32 4, %v647
        %v649 = vrot.slane %v628, %v648
        %v650 = vlaneseq
        %v651 = vshrl.u32 %v650, 7
        %v652 = vsub.s32 5, %v651
        %v653 = vrot.slane %v628, %v652
        %v654 = vlaneseq
        %v655 = vshrl.u32 %v654, 7
        %v656 = vsub.s32 6, %v655
        %v657 = vrot.slane %v628, %v656
        %v658 = vlaneseq
        %v659 = vshrl.u32 %v658, 7
        %v660 = vsub.s32 7, %v659
        %v661 = vrot.slane %v628, %v660
        %v672 = vunpack.c.l.b16 %v562
        %v673 = vunpack.c.l.b16 %v563
        %v674 = vpack.c.b16 %v673, %v672
        %v740 = vunpack.c.l.b16 %v564
        %v741 = vunpack.c.h.b16 %v564
        %v742 = vunpack.c.l.b16 %v565
        %v743 = vunpack.c.h.b16 %v565
        %v744 = vunpack.c.l.b16 %v566
        %v745 = vunpack.c.h.b16 %v566
        %v746 = vunpack.c.l.b16 %v567
        %v747 = vunpack.c.h.b16 %v567
        %v748 = vunpack.c.l.b16 %v568
        %v749 = vunpack.c.h.b16 %v568
        %v750 = vunpack.c.l.b16 %v569
        %v751 = vunpack.c.h.b16 %v569
        %v752 = vunpack.c.l.b16 %v570
        %v753 = vunpack.c.h.b16 %v570
        %v754 = vunpack.c.l.b16 %v571
        %v755 = vunpack.c.h.b16 %v571
        %v756 = vunpack.c.l.b16 %v572
        %v757 = vunpack.c.h.b16 %v572
        %v758 = vunpack.c.l.b16 %v573
        %v759 = vunpack.c.h.b16 %v573
        %v760 = vunpack.c.l.b16 %v574
        %v761 = vunpack.c.h.b16 %v574
        %v762 = vunpack.c.l.b16 %v575
        %v763 = vunpack.c.h.b16 %v575
        %v764 = vunpack.c.l.b16 %v576
        %v765 = vunpack.c.h.b16 %v576
        %v766 = vunpack.c.l.b16 %v577
        %v767 = vunpack.c.h.b16 %v577
        %v768 = vunpack.c.l.b16 %v578
        %v769 = vunpack.c.h.b16 %v578
        %v770 = vunpack.c.l.b16 %v579
        %v771 = vunpack.c.h.b16 %v579
        %v772 = vunpack.c.l.b16 %v580
        %v773 = vunpack.c.h.b16 %v580
        %v774 = vunpack.c.l.b16 %v581
        %v775 = vunpack.c.h.b16 %v581
        %v776 = vunpack.c.l.b16 %v582
        %v777 = vunpack.c.h.b16 %v582
        %v778 = vunpack.c.l.b16 %v583
        %v779 = vunpack.c.h.b16 %v583
        %v780 = vunpack.c.l.b16 %v584
        %v781 = vunpack.c.h.b16 %v584
        %v782 = vunpack.c.l.b16 %v585
        %v783 = vunpack.c.h.b16 %v585
        %v784 = vunpack.c.l.b16 %v586
        %v785 = vunpack.c.h.b16 %v586
        %v786 = vunpack.c.l.b16 %v587
        %v787 = vunpack.c.h.b16 %v587
        %v788 = vunpack.c.l.b16 %v588
        %v789 = vunpack.c.h.b16 %v588
        %v790 = vunpack.c.l.b16 %v589
        %v791 = vunpack.c.h.b16 %v589
        %v792 = vunpack.c.l.b16 %v590
        %v793 = vunpack.c.h.b16 %v590
        %v794 = vunpack.c.l.b16 %v591
        %v795 = vunpack.c.h.b16 %v591
        %v796 = vunpack.c.l.b16 %v592
        %v797 = vunpack.c.h.b16 %v592
        %v798 = vunpack.c.l.b16 %v593
        %v799 = vunpack.c.h.b16 %v593
        %v800 = vunpack.c.l.b16 %v594
        %v801 = vunpack.c.h.b16 %v594
        %v802 = vunpack.c.l.b16 %v595
        %v803 = vunpack.c.h.b16 %v595
        %v804 = vunpack.c.l.b16 %v596
        %v805 = vunpack.c.h.b16 %v596
        %v806 = vunpack.c.l.b16 %v597
        %v807 = vunpack.c.h.b16 %v597
        %v808 = vunpack.c.l.b16 %v598
        %v809 = vunpack.c.h.b16 %v598
        %v810 = vunpack.c.l.b16 %v599
        %v811 = vunpack.c.h.b16 %v599
        %v812 = vunpack.c.l.b16 %v600
        %v813 = vunpack.c.h.b16 %v600
        %v814 = vunpack.c.l.b16 %v601
        %v815 = vunpack.c.h.b16 %v601
        %v816 = vunpack.c.l.b16 %v602
        %v817 = vunpack.c.h.b16 %v602
        %v818 = vunpack.c.l.b16 %v603
        %v819 = vunpack.c.h.b16 %v603
        %v820 = vunpack.c.l.b16 %v604
        %v821 = vunpack.c.h.b16 %v604
        %v822 = vunpack.c.l.b16 %v605
        %v823 = vunpack.c.h.b16 %v605
        %v824 = vunpack.c.l.b16 %v606
        %v825 = vunpack.c.h.b16 %v606
        %v826 = vunpack.c.l.b16 %v607
        %v827 = vunpack.c.h.b16 %v607
        %v828 = vunpack.c.l.b16 %v608
        %v829 = vunpack.c.h.b16 %v608
        %v830 = vunpack.c.l.b16 %v609
        %v831 = vunpack.c.h.b16 %v609
        %v832 = vunpack.c.l.b16 %v610
        %v833 = vunpack.c.h.b16 %v610
        %v834 = vunpack.c.l.b16 %v611
        %v835 = vunpack.c.h.b16 %v611
        %v836 = vunpack.c.l.b16 %v612
        %v837 = vunpack.c.h.b16 %v612
        %v838 = vunpack.c.l.b16 %v613
        %v839 = vunpack.c.h.b16 %v613
        %v840 = vunpack.c.l.b16 %v614
        %v841 = vunpack.c.h.b16 %v614
        %v842 = vunpack.c.l.b16 %v615
        %v843 = vunpack.c.h.b16 %v615
        %v844 = vunpack.c.l.b16 %v616
        %v845 = vunpack.c.h.b16 %v616
        %v846 = vunpack.c.l.b16 %v617
        %v847 = vunpack.c.h.b16 %v617
        %v848 = vunpack.c.l.b16 %v618
        %v849 = vunpack.c.h.b16 %v618
        %v850 = vunpack.c.l.b16 %v619
        %v851 = vunpack.c.h.b16 %v619
        %v852 = vunpack.c.l.b16 %v620
        %v853 = vunpack.c.h.b16 %v620
        %v854 = vunpack.c.l.b16 %v621
        %v855 = vunpack.c.h.b16 %v621
        %v856 = vunpack.c.l.b16 %v622
        %v857 = vunpack.c.h.b16 %v622
        %v858 = vunpack.c.l.b16 %v623
        %v859 = vunpack.c.h.b16 %v623
        %v860 = vunpack.c.l.b16 %v624
        %v861 = vunpack.c.h.b16 %v624
        %v862 = vunpack.c.l.b16 %v625
        %v863 = vunpack.c.h.b16 %v625
        %v864 = vunpack.c.l.b16 %v626
        %v865 = vunpack.c.h.b16 %v626
        %v866 = vunpack.c.l.b16 %v627
        %v867 = vunpack.c.h.b16 %v627
        %v868 = vpack.c.b16 %v748, %v740
        %v869 = vpack.c.b16 %v749, %v741
        %v870 = vpack.c.b16 %v750, %v742
        %v871 = vpack.c.b16 %v751, %v743
        %v872 = vpack.c.b16 %v752, %v744
        %v873 = vpack.c.b16 %v753, %v745
        %v874 = vpack.c.b16 %v754, %v746
        %v875 = vpack.c.b16 %v755, %v747
        %v876 = vpack.c.b16 %v764, %v756
        %v877 = vpack.c.b16 %v765, %v757
        %v878 = vpack.c.b16 %v766, %v758
        %v879 = vpack.c.b16 %v767, %v759
        %v880 = vpack.c.b16 %v768, %v760
        %v881 = vpack.c.b16 %v769, %v761
        %v882 = vpack.c.b16 %v770, %v762
        %v883 = vpack.c.b16 %v771, %v763
        %v884 = vpack.c.b16 %v780, %v772
        %v885 = vpack.c.b16 %v781, %v773
        %v886 = vpack.c.b16 %v782, %v774
        %v887 = vpack.c.b16 %v783, %v775
        %v888 = vpack.c.b16 %v784, %v776
        %v889 = vpack.c.b16 %v785, %v777
        %v890 = vpack.c.b16 %v786, %v778
        %v891 = vpack.c.b16 %v787, %v779
        %v892 = vpack.c.b16 %v796, %v788
        %v893 = vpack.c.b16 %v797, %v789
        %v894 = vpack.c.b16 %v798, %v790
        %v895 = vpack.c.b16 %v799, %v791
        %v896 = vpack.c.b16 %v800, %v792
        %v897 = vpack.c.b16 %v801, %v793
        %v898 = vpack.c.b16 %v802, %v794
        %v899 = vpack.c.b16 %v803, %v795
        %v900 = vpack.c.b16 %v812, %v804
        %v901 = vpack.c.b16 %v813, %v805
        %v902 = vpack.c.b16 %v814, %v806
        %v903 = vpack.c.b16 %v815, %v807
        %v904 = vpack.c.b16 %v816, %v808
        %v905 = vpack.c.b16 %v817, %v809
        %v906 = vpack.c.b16 %v818, %v810
        %v907 = vpack.c.b16 %v819, %v811
        %v908 = vpack.c.b16 %v828, %v820
        %v909 = vpack.c.b16 %v829, %v821
        %v910 = vpack.c.b16 %v830, %v822
        %v911 = vpack.c.b16 %v831, %v823
        %v912 = vpack.c.b16 %v832, %v824
        %v913 = vpack.c.b16 %v833, %v825
        %v914 = vpack.c.b16 %v834, %v826
        %v915 = vpack.c.b16 %v835, %v827
        %v916 = vpack.c.b16 %v844, %v836
        %v917 = vpack.c.b16 %v845, %v837
        %v918 = vpack.c.b16 %v846, %v838
        %v919 = vpack.c.b16 %v847, %v839
        %v920 = vpack.c.b16 %v848, %v840
        %v921 = vpack.c.b16 %v849, %v841
        %v922 = vpack.c.b16 %v850, %v842
        %v923 = vpack.c.b16 %v851, %v843
        %v924 = vpack.c.b16 %v860, %v852
        %v925 = vpack.c.b16 %v861, %v853
        %v926 = vpack.c.b16 %v862, %v854
        %v927 = vpack.c.b16 %v863, %v855
        %v928 = vpack.c.b16 %v864, %v856
        %v929 = vpack.c.b16 %v865, %v857
        %v930 = vpack.c.b16 %v866, %v858
        %v931 = vpack.c.b16 %v867, %v859
        %996 = vmatprep.subr.bf16.mxu0 %v869
        %997 = vmatpush1.bf16.msra.mxu0 %v868
        %998 = vmatprep.subr.bf16.mxu0 %v877
        %999 = vmatpush1.bf16.msra.mxu0 %v876
        %1000 = vmatprep.subr.bf16.mxu0 %v885
        %1001 = vmatpush1.bf16.msra.mxu0 %v884
        %1002 = vmatprep.subr.bf16.mxu0 %v893
        %1003 = vmatpush1.bf16.msra.mxu0 %v892
        %1004 = vmatprep.subr.bf16.mxu0 %v901
        %1005 = vmatpush1.bf16.msra.mxu0 %v900
        %1006 = vmatprep.subr.bf16.mxu0 %v909
        %1007 = vmatpush1.bf16.msra.mxu0 %v908
        %1008 = vmatprep.subr.bf16.mxu0 %v917
        %1009 = vmatpush1.bf16.msra.mxu0 %v916
        %1010 = vmatprep.subr.bf16.mxu0 %v925
        %1011 = vmatpush1.bf16.msra.mxu0 %v924
        %1012 = vmatprep.subr.bf16.mxu0 0
        %1013 = vmatpush1.bf16.msra.mxu0 0
        %1014 = vmatprep.subr.bf16.mxu0 0
        %1015 = vmatpush1.bf16.msra.mxu0 0
        %1016 = vmatprep.subr.bf16.mxu0 0
        %1017 = vmatpush1.bf16.msra.mxu0 0
        %1018 = vmatprep.subr.bf16.mxu0 0
        %1019 = vmatpush1.bf16.msra.mxu0 0
        %1020 = vmatprep.subr.bf16.mxu0 0
        %1021 = vmatpush1.bf16.msra.mxu0 0
        %1022 = vmatprep.subr.bf16.mxu0 0
        %1023 = vmatpush1.bf16.msra.mxu0 0
        %1024 = vmatprep.subr.bf16.mxu0 0
        %1025 = vmatpush1.bf16.msra.mxu0 0
        %1026 = vmatprep.subr.bf16.mxu0 0
        %1027 = vmatpush1.bf16.msra.mxu0 0
        %1028 = vmatprep.mubr.bf16.mxu0 0
        %1029 = vmatmul.mubr.bf16.gmra.mrb[0].mxu0 %v674
        %v1030 = vpop.f32.mrb[0].mxu0
        %v1031 = vadd.f32 %v633, %v1030
        %v1032 = vpop.f32.mrb[0].mxu0
        %v1033 = vadd.f32 %v637, %v1032
        %v1034 = vpop.f32.mrb[0].mxu0
        %v1035 = vadd.f32 %v633, %v1034
        %v1036 = vpop.f32.mrb[0].mxu0
        %v1037 = vadd.f32 %v637, %v1036
        %1038 = vdwg.mxu0
        %1039 = vmatprep.subr.bf16.mxu0 %v871
        %1040 = vmatpush1.bf16.msra.mxu0 %v870
        %1041 = vmatprep.subr.bf16.mxu0 %v879
        %1042 = vmatpush1.bf16.msra.mxu0 %v878
        %1043 = vmatprep.subr.bf16.mxu0 %v887
        %1044 = vmatpush1.bf16.msra.mxu0 %v886
        %1045 = vmatprep.subr.bf16.mxu0 %v895
        %1046 = vmatpush1.bf16.msra.mxu0 %v894
        %1047 = vmatprep.subr.bf16.mxu0 %v903
        %1048 = vmatpush1.bf16.msra.mxu0 %v902
        %1049 = vmatprep.subr.bf16.mxu0 %v911
        %1050 = vmatpush1.bf16.msra.mxu0 %v910
        %1051 = vmatprep.subr.bf16.mxu0 %v919
        %1052 = vmatpush1.bf16.msra.mxu0 %v918
        %1053 = vmatprep.subr.bf16.mxu0 %v927
        %1054 = vmatpush1.bf16.msra.mxu0 %v926
        %1055 = vmatprep.subr.bf16.mxu0 0
        %1056 = vmatpush1.bf16.msra.mxu0 0
        %1057 = vmatprep.subr.bf16.mxu0 0
        %1058 = vmatpush1.bf16.msra.mxu0 0
        %1059 = vmatprep.subr.bf16.mxu0 0
        %1060 = vmatpush1.bf16.msra.mxu0 0
        %1061 = vmatprep.subr.bf16.mxu0 0
        %1062 = vmatpush1.bf16.msra.mxu0 0
        %1063 = vmatprep.subr.bf16.mxu0 0
        %1064 = vmatpush1.bf16.msra.mxu0 0
        %1065 = vmatprep.subr.bf16.mxu0 0
        %1066 = vmatpush1.bf16.msra.mxu0 0
        %1067 = vmatprep.subr.bf16.mxu0 0
        %1068 = vmatpush1.bf16.msra.mxu0 0
        %1069 = vmatprep.subr.bf16.mxu0 0
        %1070 = vmatpush1.bf16.msra.mxu0 0
        %1071 = vmatprep.mubr.bf16.mxu0 0
        %1072 = vmatmul.mubr.bf16.gmra.mrb[0].mxu0 %v674
        %v1073 = vpop.f32.mrb[0].mxu0
        %v1074 = vadd.f32 %v641, %v1073
        %v1075 = vpop.f32.mrb[0].mxu0
        %v1076 = vadd.f32 %v645, %v1075
        %v1077 = vpop.f32.mrb[0].mxu0
        %v1078 = vadd.f32 %v641, %v1077
        %v1079 = vpop.f32.mrb[0].mxu0
        %v1080 = vadd.f32 %v645, %v1079
        %1081 = vdwg.mxu0
        %1082 = vmatprep.subr.bf16.mxu0 %v873
        %1083 = vmatpush1.bf16.msra.mxu0 %v872
        %1084 = vmatprep.subr.bf16.mxu0 %v881
        %1085 = vmatpush1.bf16.msra.mxu0 %v880
        %1086 = vmatprep.subr.bf16.mxu0 %v889
        %1087 = vmatpush1.bf16.msra.mxu0 %v888
        %1088 = vmatprep.subr.bf16.mxu0 %v897
        %1089 = vmatpush1.bf16.msra.mxu0 %v896
        %1090 = vmatprep.subr.bf16.mxu0 %v905
        %1091 = vmatpush1.bf16.msra.mxu0 %v904
        %1092 = vmatprep.subr.bf16.mxu0 %v913
        %1093 = vmatpush1.bf16.msra.mxu0 %v912
        %1094 = vmatprep.subr.bf16.mxu0 %v921
        %1095 = vmatpush1.bf16.msra.mxu0 %v920
        %1096 = vmatprep.subr.bf16.mxu0 %v929
        %1097 = vmatpush1.bf16.msra.mxu0 %v928
        %1098 = vmatprep.subr.bf16.mxu0 0
        %1099 = vmatpush1.bf16.msra.mxu0 0
        %1100 = vmatprep.subr.bf16.mxu0 0
        %1101 = vmatpush1.bf16.msra.mxu0 0
        %1102 = vmatprep.subr.bf16.mxu0 0
        %1103 = vmatpush1.bf16.msra.mxu0 0
        %1104 = vmatprep.subr.bf16.mxu0 0
        %1105 = vmatpush1.bf16.msra.mxu0 0
        %1106 = vmatprep.subr.bf16.mxu0 0
        %1107 = vmatpush1.bf16.msra.mxu0 0
        %1108 = vmatprep.subr.bf16.mxu0 0
        %1109 = vmatpush1.bf16.msra.mxu0 0
        %1110 = vmatprep.subr.bf16.mxu0 0
        %1111 = vmatpush1.bf16.msra.mxu0 0
        %1112 = vmatprep.subr.bf16.mxu0 0
        %1113 = vmatpush1.bf16.msra.mxu0 0
        %1114 = vmatprep.mubr.bf16.mxu0 0
        %1115 = vmatmul.mubr.bf16.gmra.mrb[0].mxu0 %v674
        %v1116 = vpop.f32.mrb[0].mxu0
        %v1117 = vadd.f32 %v649, %v1116
        %v1118 = vpop.f32.mrb[0].mxu0
        %v1119 = vadd.f32 %v653, %v1118
        %v1120 = vpop.f32.mrb[0].mxu0
        %v1121 = vadd.f32 %v649, %v1120
        %v1122 = vpop.f32.mrb[0].mxu0
        %v1123 = vadd.f32 %v653, %v1122
        %1124 = vdwg.mxu0
        %1125 = vmatprep.subr.bf16.mxu0 %v875
        %1126 = vmatpush1.bf16.msra.mxu0 %v874
        %1127 = vmatprep.subr.bf16.mxu0 %v883
        %1128 = vmatpush1.bf16.msra.mxu0 %v882
        %1129 = vmatprep.subr.bf16.mxu0 %v891
        %1130 = vmatpush1.bf16.msra.mxu0 %v890
        %1131 = vmatprep.subr.bf16.mxu0 %v899
        %1132 = vmatpush1.bf16.msra.mxu0 %v898
        %1133 = vmatprep.subr.bf16.mxu0 %v907
        %1134 = vmatpush1.bf16.msra.mxu0 %v906
        %1135 = vmatprep.subr.bf16.mxu0 %v915
        %1136 = vmatpush1.bf16.msra.mxu0 %v914
        %1137 = vmatprep.subr.bf16.mxu0 %v923
        %1138 = vmatpush1.bf16.msra.mxu0 %v922
        %1139 = vmatprep.subr.bf16.mxu0 %v931
        %1140 = vmatpush1.bf16.msra.mxu0 %v930
        %1141 = vmatprep.subr.bf16.mxu0 0
        %1142 = vmatpush1.bf16.msra.mxu0 0
        %1143 = vmatprep.subr.bf16.mxu0 0
        %1144 = vmatpush1.bf16.msra.mxu0 0
        %1145 = vmatprep.subr.bf16.mxu0 0
        %1146 = vmatpush1.bf16.msra.mxu0 0
        %1147 = vmatprep.subr.bf16.mxu0 0
        %1148 = vmatpush1.bf16.msra.mxu0 0
        %1149 = vmatprep.subr.bf16.mxu0 0
        %1150 = vmatpush1.bf16.msra.mxu0 0
        %1151 = vmatprep.subr.bf16.mxu0 0
        %1152 = vmatpush1.bf16.msra.mxu0 0
        %1153 = vmatprep.subr.bf16.mxu0 0
        %1154 = vmatpush1.bf16.msra.mxu0 0
        %1155 = vmatprep.subr.bf16.mxu0 0
        %1156 = vmatpush1.bf16.msra.mxu0 0
        %1157 = vmatprep.mubr.bf16.mxu0 0
        %1158 = vmatmul.mubr.bf16.gmra.mrb[0].mxu0 %v674
        %v1159 = vpop.f32.mrb[0].mxu0
        %v1160 = vadd.f32 %v657, %v1159
        %v1161 = vpop.f32.mrb[0].mxu0
        %v1162 = vadd.f32 %v661, %v1161
        %v1163 = vpop.f32.mrb[0].mxu0
        %v1164 = vadd.f32 %v657, %v1163
        %v1165 = vpop.f32.mrb[0].mxu0
        %v1166 = vadd.f32 %v661, %v1165
        %1167 = vdwg.mxu0
        %v1168 = vmax.f32 %v1031, 0.0
        %v1169 = vmax.f32 %v1033, 0.0
        %v1170 = vmax.f32 %v1074, 0.0
        %v1171 = vmax.f32 %v1076, 0.0
        %v1172 = vmax.f32 %v1117, 0.0
        %v1173 = vmax.f32 %v1119, 0.0
        %v1174 = vmax.f32 %v1160, 0.0
        %v1175 = vmax.f32 %v1162, 0.0
        %v1176 = vmax.f32 %v1035, 0.0
        %v1177 = vmax.f32 %v1037, 0.0
        %v1178 = vmax.f32 %v1078, 0.0
        %v1179 = vmax.f32 %v1080, 0.0
        %v1180 = vmax.f32 %v1121, 0.0
        %v1181 = vmax.f32 %v1123, 0.0
        %v1182 = vmax.f32 %v1164, 0.0
        %v1183 = vmax.f32 %v1166, 0.0
        %v1184 = vpack.c.bf16 %v1176, %v1168
        %v1185 = vpack.c.bf16 %v1177, %v1169
        %v1186 = vpack.c.bf16 %v1178, %v1170
        %v1187 = vpack.c.bf16 %v1179, %v1171
        %v1188 = vpack.c.bf16 %v1180, %v1172
        %v1189 = vpack.c.bf16 %v1181, %v1173
        %v1190 = vpack.c.bf16 %v1182, %v1174
        %v1191 = vpack.c.bf16 %v1183, %v1175
        %v1192 = vld [vmem:[#allocation8] sm:$0xff]
        %v1193 = vld [vmem:[#allocation8 + $0x8] sm:$0xff]
        %v1194 = vld [vmem:[#allocation8 + $0x10] sm:$0xff]
        %v1195 = vld [vmem:[#allocation8 + $0x18] sm:$0xff]
        %v1196 = vld [vmem:[#allocation8 + $0x20] sm:$0xff]
        %v1197 = vld [vmem:[#allocation8 + $0x28] sm:$0xff]
        %v1198 = vld [vmem:[#allocation8 + $0x30] sm:$0xff]
        %v1199 = vld [vmem:[#allocation8 + $0x38] sm:$0xff]
        %v1200 = vld [vmem:[#allocation8 + $0x40] sm:$0xff]
        %v1201 = vld [vmem:[#allocation8 + $0x48] sm:$0xff]
        %v1202 = vld [vmem:[#allocation8 + $0x50] sm:$0xff]
        %v1203 = vld [vmem:[#allocation8 + $0x58] sm:$0xff]
        %v1204 = vld [vmem:[#allocation8 + $0x60] sm:$0xff]
        %v1205 = vld [vmem:[#allocation8 + $0x68] sm:$0xff]
        %v1206 = vld [vmem:[#allocation8 + $0x70] sm:$0xff]
        %v1207 = vld [vmem:[#allocation8 + $0x78] sm:$0xff]
        %v1208 = vld [vmem:[#allocation8 + $0x80] sm:$0xff]
        %v1209 = vld [vmem:[#allocation8 + $0x88] sm:$0xff]
        %v1210 = vld [vmem:[#allocation8 + $0x90] sm:$0xff]
        %v1211 = vld [vmem:[#allocation8 + $0x98] sm:$0xff]
        %v1212 = vld [vmem:[#allocation8 + $0xa0] sm:$0xff]
        %v1213 = vld [vmem:[#allocation8 + $0xa8] sm:$0xff]
        %v1214 = vld [vmem:[#allocation8 + $0xb0] sm:$0xff]
        %v1215 = vld [vmem:[#allocation8 + $0xb8] sm:$0xff]
        %v1216 = vld [vmem:[#allocation8 + $0xc0] sm:$0xff]
        %v1217 = vld [vmem:[#allocation8 + $0xc8] sm:$0xff]
        %v1218 = vld [vmem:[#allocation8 + $0xd0] sm:$0xff]
        %v1219 = vld [vmem:[#allocation8 + $0xd8] sm:$0xff]
        %v1220 = vld [vmem:[#allocation8 + $0xe0] sm:$0xff]
        %v1221 = vld [vmem:[#allocation8 + $0xe8] sm:$0xff]
        %v1222 = vld [vmem:[#allocation8 + $0xf0] sm:$0xff]
        %v1223 = vld [vmem:[#allocation8 + $0xf8] sm:$0xff]
        %v1224 = vld [vmem:[#allocation8 + $0x100] sm:$0xff]
        %v1225 = vld [vmem:[#allocation8 + $0x108] sm:$0xff]
        %v1226 = vld [vmem:[#allocation8 + $0x110] sm:$0xff]
        %v1227 = vld [vmem:[#allocation8 + $0x118] sm:$0xff]
        %v1228 = vld [vmem:[#allocation8 + $0x120] sm:$0xff]
        %v1229 = vld [vmem:[#allocation8 + $0x128] sm:$0xff]
        %v1230 = vld [vmem:[#allocation8 + $0x130] sm:$0xff]
        %v1231 = vld [vmem:[#allocation8 + $0x138] sm:$0xff]
        %v1232 = vld [vmem:[#allocation8 + $0x140] sm:$0xff]
        %v1233 = vld [vmem:[#allocation8 + $0x148] sm:$0xff]
        %v1234 = vld [vmem:[#allocation8 + $0x150] sm:$0xff]
        %v1235 = vld [vmem:[#allocation8 + $0x158] sm:$0xff]
        %v1236 = vld [vmem:[#allocation8 + $0x160] sm:$0xff]
        %v1237 = vld [vmem:[#allocation8 + $0x168] sm:$0xff]
        %v1238 = vld [vmem:[#allocation8 + $0x170] sm:$0xff]
        %v1239 = vld [vmem:[#allocation8 + $0x178] sm:$0xff]
        %v1240 = vld [vmem:[#allocation8 + $0x180] sm:$0xff]
        %v1241 = vld [vmem:[#allocation8 + $0x188] sm:$0xff]
        %v1242 = vld [vmem:[#allocation8 + $0x190] sm:$0xff]
        %v1243 = vld [vmem:[#allocation8 + $0x198] sm:$0xff]
        %v1244 = vld [vmem:[#allocation8 + $0x1a0] sm:$0xff]
        %v1245 = vld [vmem:[#allocation8 + $0x1a8] sm:$0xff]
        %v1246 = vld [vmem:[#allocation8 + $0x1b0] sm:$0xff]
        %v1247 = vld [vmem:[#allocation8 + $0x1b8] sm:$0xff]
        %v1248 = vld [vmem:[#allocation8 + $0x1c0] sm:$0xff]
        %v1249 = vld [vmem:[#allocation8 + $0x1c8] sm:$0xff]
        %v1250 = vld [vmem:[#allocation8 + $0x1d0] sm:$0xff]
        %v1251 = vld [vmem:[#allocation8 + $0x1d8] sm:$0xff]
        %v1252 = vld [vmem:[#allocation8 + $0x1e0] sm:$0xff]
        %v1253 = vld [vmem:[#allocation8 + $0x1e8] sm:$0xff]
        %v1254 = vld [vmem:[#allocation8 + $0x1f0] sm:$0xff]
        %v1255 = vld [vmem:[#allocation8 + $0x1f8] sm:$0xff]
        %v1256 = vld [vmem:[#allocation8 + $0x200] sm:$0xff]
        %v1257 = vld [vmem:[#allocation8 + $0x208] sm:$0xff]
        %v1258 = vld [vmem:[#allocation8 + $0x210] sm:$0xff]
        %v1259 = vld [vmem:[#allocation8 + $0x218] sm:$0xff]
        %v1260 = vld [vmem:[#allocation8 + $0x220] sm:$0xff]
        %v1261 = vld [vmem:[#allocation8 + $0x228] sm:$0xff]
        %v1262 = vld [vmem:[#allocation8 + $0x230] sm:$0xff]
        %v1263 = vld [vmem:[#allocation8 + $0x238] sm:$0xff]
        %v1264 = vld [vmem:[#allocation8 + $0x240] sm:$0xff]
        %v1265 = vld [vmem:[#allocation8 + $0x248] sm:$0xff]
        %v1266 = vld [vmem:[#allocation8 + $0x250] sm:$0xff]
        %v1267 = vld [vmem:[#allocation8 + $0x258] sm:$0xff]
        %v1268 = vld [vmem:[#allocation8 + $0x260] sm:$0xff]
        %v1269 = vld [vmem:[#allocation8 + $0x268] sm:$0xff]
        %v1270 = vld [vmem:[#allocation8 + $0x270] sm:$0xff]
        %v1271 = vld [vmem:[#allocation8 + $0x278] sm:$0xff]
        %v1272 = vld [vmem:[#allocation8 + $0x280] sm:$0xff]
        %v1273 = vld [vmem:[#allocation8 + $0x288] sm:$0xff]
        %v1274 = vld [vmem:[#allocation8 + $0x290] sm:$0xff]
        %v1275 = vld [vmem:[#allocation8 + $0x298] sm:$0xff]
        %v1276 = vld [vmem:[#allocation8 + $0x2a0] sm:$0xff]
        %v1277 = vld [vmem:[#allocation8 + $0x2a8] sm:$0xff]
        %v1278 = vld [vmem:[#allocation8 + $0x2b0] sm:$0xff]
        %v1279 = vld [vmem:[#allocation8 + $0x2b8] sm:$0xff]
        %v1280 = vld [vmem:[#allocation8 + $0x2c0] sm:$0xff]
        %v1281 = vld [vmem:[#allocation8 + $0x2c8] sm:$0xff]
        %v1282 = vld [vmem:[#allocation8 + $0x2d0] sm:$0xff]
        %v1283 = vld [vmem:[#allocation8 + $0x2d8] sm:$0xff]
        %v1284 = vld [vmem:[#allocation8 + $0x2e0] sm:$0xff]
        %v1285 = vld [vmem:[#allocation8 + $0x2e8] sm:$0xff]
        %v1286 = vld [vmem:[#allocation8 + $0x2f0] sm:$0xff]
        %v1287 = vld [vmem:[#allocation8 + $0x2f8] sm:$0xff]
        %v1288 = vld [vmem:[#allocation8 + $0x300] sm:$0xff]
        %v1289 = vld [vmem:[#allocation8 + $0x308] sm:$0xff]
        %v1290 = vld [vmem:[#allocation8 + $0x310] sm:$0xff]
        %v1291 = vld [vmem:[#allocation8 + $0x318] sm:$0xff]
        %v1292 = vld [vmem:[#allocation8 + $0x320] sm:$0xff]
        %v1293 = vld [vmem:[#allocation8 + $0x328] sm:$0xff]
        %v1294 = vld [vmem:[#allocation8 + $0x330] sm:$0xff]
        %v1295 = vld [vmem:[#allocation8 + $0x338] sm:$0xff]
        %v1296 = vld [vmem:[#allocation8 + $0x340] sm:$0xff]
        %v1297 = vld [vmem:[#allocation8 + $0x348] sm:$0xff]
        %v1298 = vld [vmem:[#allocation8 + $0x350] sm:$0xff]
        %v1299 = vld [vmem:[#allocation8 + $0x358] sm:$0xff]
        %v1300 = vld [vmem:[#allocation8 + $0x360] sm:$0xff]
        %v1301 = vld [vmem:[#allocation8 + $0x368] sm:$0xff]
        %v1302 = vld [vmem:[#allocation8 + $0x370] sm:$0xff]
        %v1303 = vld [vmem:[#allocation8 + $0x378] sm:$0xff]
        %v1304 = vld [vmem:[#allocation8 + $0x380] sm:$0xff]
        %v1305 = vld [vmem:[#allocation8 + $0x388] sm:$0xff]
        %v1306 = vld [vmem:[#allocation8 + $0x390] sm:$0xff]
        %v1307 = vld [vmem:[#allocation8 + $0x398] sm:$0xff]
        %v1308 = vld [vmem:[#allocation8 + $0x3a0] sm:$0xff]
        %v1309 = vld [vmem:[#allocation8 + $0x3a8] sm:$0xff]
        %v1310 = vld [vmem:[#allocation8 + $0x3b0] sm:$0xff]
        %v1311 = vld [vmem:[#allocation8 + $0x3b8] sm:$0xff]
        %v1312 = vld [vmem:[#allocation8 + $0x3c0] sm:$0xff]
        %v1313 = vld [vmem:[#allocation8 + $0x3c8] sm:$0xff]
        %v1314 = vld [vmem:[#allocation8 + $0x3d0] sm:$0xff]
        %v1315 = vld [vmem:[#allocation8 + $0x3d8] sm:$0xff]
        %v1316 = vld [vmem:[#allocation8 + $0x3e0] sm:$0xff]
        %v1317 = vld [vmem:[#allocation8 + $0x3e8] sm:$0xff]
        %v1318 = vld [vmem:[#allocation8 + $0x3f0] sm:$0xff]
        %v1319 = vld [vmem:[#allocation8 + $0x3f8] sm:$0xff]
        %v1320 = vld [vmem:[#allocation8 + $0x400] sm:$0xff]
        %v1321 = vld [vmem:[#allocation8 + $0x408] sm:$0xff]
        %v1322 = vld [vmem:[#allocation8 + $0x410] sm:$0xff]
        %v1323 = vld [vmem:[#allocation8 + $0x418] sm:$0xff]
        %v1324 = vld [vmem:[#allocation8 + $0x420] sm:$0xff]
        %v1325 = vld [vmem:[#allocation8 + $0x428] sm:$0xff]
        %v1326 = vld [vmem:[#allocation8 + $0x430] sm:$0xff]
        %v1327 = vld [vmem:[#allocation8 + $0x438] sm:$0xff]
        %v1328 = vld [vmem:[#allocation8 + $0x440] sm:$0xff]
        %v1329 = vld [vmem:[#allocation8 + $0x448] sm:$0xff]
        %v1330 = vld [vmem:[#allocation8 + $0x450] sm:$0xff]
        %v1331 = vld [vmem:[#allocation8 + $0x458] sm:$0xff]
        %v1332 = vld [vmem:[#allocation8 + $0x460] sm:$0xff]
        %v1333 = vld [vmem:[#allocation8 + $0x468] sm:$0xff]
        %v1334 = vld [vmem:[#allocation8 + $0x470] sm:$0xff]
        %v1335 = vld [vmem:[#allocation8 + $0x478] sm:$0xff]
        %v1336 = vld [vmem:[#allocation8 + $0x480] sm:$0xff]
        %v1337 = vld [vmem:[#allocation8 + $0x488] sm:$0xff]
        %v1338 = vld [vmem:[#allocation8 + $0x490] sm:$0xff]
        %v1339 = vld [vmem:[#allocation8 + $0x498] sm:$0xff]
        %v1340 = vld [vmem:[#allocation8 + $0x4a0] sm:$0xff]
        %v1341 = vld [vmem:[#allocation8 + $0x4a8] sm:$0xff]
        %v1342 = vld [vmem:[#allocation8 + $0x4b0] sm:$0xff]
        %v1343 = vld [vmem:[#allocation8 + $0x4b8] sm:$0xff]
        %v1344 = vld [vmem:[#allocation8 + $0x4c0] sm:$0xff]
        %v1345 = vld [vmem:[#allocation8 + $0x4c8] sm:$0xff]
        %v1346 = vld [vmem:[#allocation8 + $0x4d0] sm:$0xff]
        %v1347 = vld [vmem:[#allocation8 + $0x4d8] sm:$0xff]
        %v1348 = vld [vmem:[#allocation8 + $0x4e0] sm:$0xff]
        %v1349 = vld [vmem:[#allocation8 + $0x4e8] sm:$0xff]
        %v1350 = vld [vmem:[#allocation8 + $0x4f0] sm:$0xff]
        %v1351 = vld [vmem:[#allocation8 + $0x4f8] sm:$0xff]
        %v1352 = vld [vmem:[#allocation8 + $0x500] sm:$0xff]
        %v1353 = vld [vmem:[#allocation8 + $0x508] sm:$0xff]
        %v1354 = vld [vmem:[#allocation8 + $0x510] sm:$0xff]
        %v1355 = vld [vmem:[#allocation8 + $0x518] sm:$0xff]
        %v1356 = vld [vmem:[#allocation8 + $0x520] sm:$0xff]
        %v1357 = vld [vmem:[#allocation8 + $0x528] sm:$0xff]
        %v1358 = vld [vmem:[#allocation8 + $0x530] sm:$0xff]
        %v1359 = vld [vmem:[#allocation8 + $0x538] sm:$0xff]
        %v1360 = vld [vmem:[#allocation8 + $0x540] sm:$0xff]
        %v1361 = vld [vmem:[#allocation8 + $0x548] sm:$0xff]
        %v1362 = vld [vmem:[#allocation8 + $0x550] sm:$0xff]
        %v1363 = vld [vmem:[#allocation8 + $0x558] sm:$0xff]
        %v1364 = vld [vmem:[#allocation8 + $0x560] sm:$0xff]
        %v1365 = vld [vmem:[#allocation8 + $0x568] sm:$0xff]
        %v1366 = vld [vmem:[#allocation8 + $0x570] sm:$0xff]
        %v1367 = vld [vmem:[#allocation8 + $0x578] sm:$0xff]
        %v1368 = vld [vmem:[#allocation8 + $0x580] sm:$0xff]
        %v1369 = vld [vmem:[#allocation8 + $0x588] sm:$0xff]
        %v1370 = vld [vmem:[#allocation8 + $0x590] sm:$0xff]
        %v1371 = vld [vmem:[#allocation8 + $0x598] sm:$0xff]
        %v1372 = vld [vmem:[#allocation8 + $0x5a0] sm:$0xff]
        %v1373 = vld [vmem:[#allocation8 + $0x5a8] sm:$0xff]
        %v1374 = vld [vmem:[#allocation8 + $0x5b0] sm:$0xff]
        %v1375 = vld [vmem:[#allocation8 + $0x5b8] sm:$0xff]
        %v1376 = vld [vmem:[#allocation8 + $0x5c0] sm:$0xff]
        %v1377 = vld [vmem:[#allocation8 + $0x5c8] sm:$0xff]
        %v1378 = vld [vmem:[#allocation8 + $0x5d0] sm:$0xff]
        %v1379 = vld [vmem:[#allocation8 + $0x5d8] sm:$0xff]
        %v1380 = vld [vmem:[#allocation8 + $0x5e0] sm:$0xff]
        %v1381 = vld [vmem:[#allocation8 + $0x5e8] sm:$0xff]
        %v1382 = vld [vmem:[#allocation8 + $0x5f0] sm:$0xff]
        %v1383 = vld [vmem:[#allocation8 + $0x5f8] sm:$0xff]
        %v1384 = vld [vmem:[#allocation8 + $0x600] sm:$0xff]
        %v1385 = vld [vmem:[#allocation8 + $0x608] sm:$0xff]
        %v1386 = vld [vmem:[#allocation8 + $0x610] sm:$0xff]
        %v1387 = vld [vmem:[#allocation8 + $0x618] sm:$0xff]
        %v1388 = vld [vmem:[#allocation8 + $0x620] sm:$0xff]
        %v1389 = vld [vmem:[#allocation8 + $0x628] sm:$0xff]
        %v1390 = vld [vmem:[#allocation8 + $0x630] sm:$0xff]
        %v1391 = vld [vmem:[#allocation8 + $0x638] sm:$0xff]
        %v1392 = vld [vmem:[#allocation8 + $0x640] sm:$0xff]
        %v1393 = vld [vmem:[#allocation8 + $0x648] sm:$0xff]
        %v1394 = vld [vmem:[#allocation8 + $0x650] sm:$0xff]
        %v1395 = vld [vmem:[#allocation8 + $0x658] sm:$0xff]
        %v1396 = vld [vmem:[#allocation8 + $0x660] sm:$0xff]
        %v1397 = vld [vmem:[#allocation8 + $0x668] sm:$0xff]
        %v1398 = vld [vmem:[#allocation8 + $0x670] sm:$0xff]
        %v1399 = vld [vmem:[#allocation8 + $0x678] sm:$0xff]
        %v1400 = vld [vmem:[#allocation8 + $0x680] sm:$0xff]
        %v1401 = vld [vmem:[#allocation8 + $0x688] sm:$0xff]
        %v1402 = vld [vmem:[#allocation8 + $0x690] sm:$0xff]
        %v1403 = vld [vmem:[#allocation8 + $0x698] sm:$0xff]
        %v1404 = vld [vmem:[#allocation8 + $0x6a0] sm:$0xff]
        %v1405 = vld [vmem:[#allocation8 + $0x6a8] sm:$0xff]
        %v1406 = vld [vmem:[#allocation8 + $0x6b0] sm:$0xff]
        %v1407 = vld [vmem:[#allocation8 + $0x6b8] sm:$0xff]
        %v1408 = vld [vmem:[#allocation8 + $0x6c0] sm:$0xff]
        %v1409 = vld [vmem:[#allocation8 + $0x6c8] sm:$0xff]
        %v1410 = vld [vmem:[#allocation8 + $0x6d0] sm:$0xff]
        %v1411 = vld [vmem:[#allocation8 + $0x6d8] sm:$0xff]
        %v1412 = vld [vmem:[#allocation8 + $0x6e0] sm:$0xff]
        %v1413 = vld [vmem:[#allocation8 + $0x6e8] sm:$0xff]
        %v1414 = vld [vmem:[#allocation8 + $0x6f0] sm:$0xff]
        %v1415 = vld [vmem:[#allocation8 + $0x6f8] sm:$0xff]
        %v1416 = vld [vmem:[#allocation8 + $0x700] sm:$0xff]
        %v1417 = vld [vmem:[#allocation8 + $0x708] sm:$0xff]
        %v1418 = vld [vmem:[#allocation8 + $0x710] sm:$0xff]
        %v1419 = vld [vmem:[#allocation8 + $0x718] sm:$0xff]
        %v1420 = vld [vmem:[#allocation8 + $0x720] sm:$0xff]
        %v1421 = vld [vmem:[#allocation8 + $0x728] sm:$0xff]
        %v1422 = vld [vmem:[#allocation8 + $0x730] sm:$0xff]
        %v1423 = vld [vmem:[#allocation8 + $0x738] sm:$0xff]
        %v1424 = vld [vmem:[#allocation8 + $0x740] sm:$0xff]
        %v1425 = vld [vmem:[#allocation8 + $0x748] sm:$0xff]
        %v1426 = vld [vmem:[#allocation8 + $0x750] sm:$0xff]
        %v1427 = vld [vmem:[#allocation8 + $0x758] sm:$0xff]
        %v1428 = vld [vmem:[#allocation8 + $0x760] sm:$0xff]
        %v1429 = vld [vmem:[#allocation8 + $0x768] sm:$0xff]
        %v1430 = vld [vmem:[#allocation8 + $0x770] sm:$0xff]
        %v1431 = vld [vmem:[#allocation8 + $0x778] sm:$0xff]
        %v1432 = vld [vmem:[#allocation8 + $0x780] sm:$0xff]
        %v1433 = vld [vmem:[#allocation8 + $0x788] sm:$0xff]
        %v1434 = vld [vmem:[#allocation8 + $0x790] sm:$0xff]
        %v1435 = vld [vmem:[#allocation8 + $0x798] sm:$0xff]
        %v1436 = vld [vmem:[#allocation8 + $0x7a0] sm:$0xff]
        %v1437 = vld [vmem:[#allocation8 + $0x7a8] sm:$0xff]
        %v1438 = vld [vmem:[#allocation8 + $0x7b0] sm:$0xff]
        %v1439 = vld [vmem:[#allocation8 + $0x7b8] sm:$0xff]
        %v1440 = vld [vmem:[#allocation8 + $0x7c0] sm:$0xff]
        %v1441 = vld [vmem:[#allocation8 + $0x7c8] sm:$0xff]
        %v1442 = vld [vmem:[#allocation8 + $0x7d0] sm:$0xff]
        %v1443 = vld [vmem:[#allocation8 + $0x7d8] sm:$0xff]
        %v1444 = vld [vmem:[#allocation8 + $0x7e0] sm:$0xff]
        %v1445 = vld [vmem:[#allocation8 + $0x7e8] sm:$0xff]
        %v1446 = vld [vmem:[#allocation8 + $0x7f0] sm:$0xff]
        %v1447 = vld [vmem:[#allocation8 + $0x7f8] sm:$0xff]
        %v1448 = vld [vmem:[%s4] sm:$0xf]
        %v1450 = vlaneseq
        %v1451 = vshrl.u32 %v1450, 7
        %v1452 = vsub.s32 0, %v1451
        %v1453 = vrot.slane %v1448, %v1452
        %v1454 = vlaneseq
        %v1455 = vshrl.u32 %v1454, 7
        %v1456 = vsub.s32 1, %v1455
        %v1457 = vrot.slane %v1448, %v1456
        %v1458 = vlaneseq
        %v1459 = vshrl.u32 %v1458, 7
        %v1460 = vsub.s32 2, %v1459
        %v1461 = vrot.slane %v1448, %v1460
        %v1462 = vlaneseq
        %v1463 = vshrl.u32 %v1462, 7
        %v1464 = vsub.s32 3, %v1463
        %v1465 = vrot.slane %v1448, %v1464
        %v1726 = vunpack.c.l.b16 %v1192
        %v1727 = vunpack.c.h.b16 %v1192
        %v1728 = vunpack.c.l.b16 %v1193
        %v1729 = vunpack.c.h.b16 %v1193
        %v1730 = vunpack.c.l.b16 %v1194
        %v1731 = vunpack.c.h.b16 %v1194
        %v1732 = vunpack.c.l.b16 %v1195
        %v1733 = vunpack.c.h.b16 %v1195
        %v1734 = vunpack.c.l.b16 %v1196
        %v1735 = vunpack.c.h.b16 %v1196
        %v1736 = vunpack.c.l.b16 %v1197
        %v1737 = vunpack.c.h.b16 %v1197
        %v1738 = vunpack.c.l.b16 %v1198
        %v1739 = vunpack.c.h.b16 %v1198
        %v1740 = vunpack.c.l.b16 %v1199
        %v1741 = vunpack.c.h.b16 %v1199
        %v1742 = vunpack.c.l.b16 %v1200
        %v1743 = vunpack.c.h.b16 %v1200
        %v1744 = vunpack.c.l.b16 %v1201
        %v1745 = vunpack.c.h.b16 %v1201
        %v1746 = vunpack.c.l.b16 %v1202
        %v1747 = vunpack.c.h.b16 %v1202
        %v1748 = vunpack.c.l.b16 %v1203
        %v1749 = vunpack.c.h.b16 %v1203
        %v1750 = vunpack.c.l.b16 %v1204
        %v1751 = vunpack.c.h.b16 %v1204
        %v1752 = vunpack.c.l.b16 %v1205
        %v1753 = vunpack.c.h.b16 %v1205
        %v1754 = vunpack.c.l.b16 %v1206
        %v1755 = vunpack.c.h.b16 %v1206
        %v1756 = vunpack.c.l.b16 %v1207
        %v1757 = vunpack.c.h.b16 %v1207
        %v1758 = vunpack.c.l.b16 %v1208
        %v1759 = vunpack.c.h.b16 %v1208
        %v1760 = vunpack.c.l.b16 %v1209
        %v1761 = vunpack.c.h.b16 %v1209
        %v1762 = vunpack.c.l.b16 %v1210
        %v1763 = vunpack.c.h.b16 %v1210
        %v1764 = vunpack.c.l.b16 %v1211
        %v1765 = vunpack.c.h.b16 %v1211
        %v1766 = vunpack.c.l.b16 %v1212
        %v1767 = vunpack.c.h.b16 %v1212
        %v1768 = vunpack.c.l.b16 %v1213
        %v1769 = vunpack.c.h.b16 %v1213
        %v1770 = vunpack.c.l.b16 %v1214
        %v1771 = vunpack.c.h.b16 %v1214
        %v1772 = vunpack.c.l.b16 %v1215
        %v1773 = vunpack.c.h.b16 %v1215
        %v1774 = vunpack.c.l.b16 %v1216
        %v1775 = vunpack.c.h.b16 %v1216
        %v1776 = vunpack.c.l.b16 %v1217
        %v1777 = vunpack.c.h.b16 %v1217
        %v1778 = vunpack.c.l.b16 %v1218
        %v1779 = vunpack.c.h.b16 %v1218
        %v1780 = vunpack.c.l.b16 %v1219
        %v1781 = vunpack.c.h.b16 %v1219
        %v1782 = vunpack.c.l.b16 %v1220
        %v1783 = vunpack.c.h.b16 %v1220
        %v1784 = vunpack.c.l.b16 %v1221
        %v1785 = vunpack.c.h.b16 %v1221
        %v1786 = vunpack.c.l.b16 %v1222
        %v1787 = vunpack.c.h.b16 %v1222
        %v1788 = vunpack.c.l.b16 %v1223
        %v1789 = vunpack.c.h.b16 %v1223
        %v1790 = vunpack.c.l.b16 %v1224
        %v1791 = vunpack.c.h.b16 %v1224
        %v1792 = vunpack.c.l.b16 %v1225
        %v1793 = vunpack.c.h.b16 %v1225
        %v1794 = vunpack.c.l.b16 %v1226
        %v1795 = vunpack.c.h.b16 %v1226
        %v1796 = vunpack.c.l.b16 %v1227
        %v1797 = vunpack.c.h.b16 %v1227
        %v1798 = vunpack.c.l.b16 %v1228
        %v1799 = vunpack.c.h.b16 %v1228
        %v1800 = vunpack.c.l.b16 %v1229
        %v1801 = vunpack.c.h.b16 %v1229
        %v1802 = vunpack.c.l.b16 %v1230
        %v1803 = vunpack.c.h.b16 %v1230
        %v1804 = vunpack.c.l.b16 %v1231
        %v1805 = vunpack.c.h.b16 %v1231
        %v1806 = vunpack.c.l.b16 %v1232
        %v1807 = vunpack.c.h.b16 %v1232
        %v1808 = vunpack.c.l.b16 %v1233
        %v1809 = vunpack.c.h.b16 %v1233
        %v1810 = vunpack.c.l.b16 %v1234
        %v1811 = vunpack.c.h.b16 %v1234
        %v1812 = vunpack.c.l.b16 %v1235
        %v1813 = vunpack.c.h.b16 %v1235
        %v1814 = vunpack.c.l.b16 %v1236
        %v1815 = vunpack.c.h.b16 %v1236
        %v1816 = vunpack.c.l.b16 %v1237
        %v1817 = vunpack.c.h.b16 %v1237
        %v1818 = vunpack.c.l.b16 %v1238
        %v1819 = vunpack.c.h.b16 %v1238
        %v1820 = vunpack.c.l.b16 %v1239
        %v1821 = vunpack.c.h.b16 %v1239
        %v1822 = vunpack.c.l.b16 %v1240
        %v1823 = vunpack.c.h.b16 %v1240
        %v1824 = vunpack.c.l.b16 %v1241
        %v1825 = vunpack.c.h.b16 %v1241
        %v1826 = vunpack.c.l.b16 %v1242
        %v1827 = vunpack.c.h.b16 %v1242
        %v1828 = vunpack.c.l.b16 %v1243
        %v1829 = vunpack.c.h.b16 %v1243
        %v1830 = vunpack.c.l.b16 %v1244
        %v1831 = vunpack.c.h.b16 %v1244
        %v1832 = vunpack.c.l.b16 %v1245
        %v1833 = vunpack.c.h.b16 %v1245
        %v1834 = vunpack.c.l.b16 %v1246
        %v1835 = vunpack.c.h.b16 %v1246
        %v1836 = vunpack.c.l.b16 %v1247
        %v1837 = vunpack.c.h.b16 %v1247
        %v1838 = vunpack.c.l.b16 %v1248
        %v1839 = vunpack.c.h.b16 %v1248
        %v1840 = vunpack.c.l.b16 %v1249
        %v1841 = vunpack.c.h.b16 %v1249
        %v1842 = vunpack.c.l.b16 %v1250
        %v1843 = vunpack.c.h.b16 %v1250
        %v1844 = vunpack.c.l.b16 %v1251
        %v1845 = vunpack.c.h.b16 %v1251
        %v1846 = vunpack.c.l.b16 %v1252
        %v1847 = vunpack.c.h.b16 %v1252
        %v1848 = vunpack.c.l.b16 %v1253
        %v1849 = vunpack.c.h.b16 %v1253
        %v1850 = vunpack.c.l.b16 %v1254
        %v1851 = vunpack.c.h.b16 %v1254
        %v1852 = vunpack.c.l.b16 %v1255
        %v1853 = vunpack.c.h.b16 %v1255
        %v1854 = vunpack.c.l.b16 %v1256
        %v1855 = vunpack.c.h.b16 %v1256
        %v1856 = vunpack.c.l.b16 %v1257
        %v1857 = vunpack.c.h.b16 %v1257
        %v1858 = vunpack.c.l.b16 %v1258
        %v1859 = vunpack.c.h.b16 %v1258
        %v1860 = vunpack.c.l.b16 %v1259
        %v1861 = vunpack.c.h.b16 %v1259
        %v1862 = vunpack.c.l.b16 %v1260
        %v1863 = vunpack.c.h.b16 %v1260
        %v1864 = vunpack.c.l.b16 %v1261
        %v1865 = vunpack.c.h.b16 %v1261
        %v1866 = vunpack.c.l.b16 %v1262
        %v1867 = vunpack.c.h.b16 %v1262
        %v1868 = vunpack.c.l.b16 %v1263
        %v1869 = vunpack.c.h.b16 %v1263
        %v1870 = vunpack.c.l.b16 %v1264
        %v1871 = vunpack.c.h.b16 %v1264
        %v1872 = vunpack.c.l.b16 %v1265
        %v1873 = vunpack.c.h.b16 %v1265
        %v1874 = vunpack.c.l.b16 %v1266
        %v1875 = vunpack.c.h.b16 %v1266
        %v1876 = vunpack.c.l.b16 %v1267
        %v1877 = vunpack.c.h.b16 %v1267
        %v1878 = vunpack.c.l.b16 %v1268
        %v1879 = vunpack.c.h.b16 %v1268
        %v1880 = vunpack.c.l.b16 %v1269
        %v1881 = vunpack.c.h.b16 %v1269
        %v1882 = vunpack.c.l.b16 %v1270
        %v1883 = vunpack.c.h.b16 %v1270
        %v1884 = vunpack.c.l.b16 %v1271
        %v1885 = vunpack.c.h.b16 %v1271
        %v1886 = vunpack.c.l.b16 %v1272
        %v1887 = vunpack.c.h.b16 %v1272
        %v1888 = vunpack.c.l.b16 %v1273
        %v1889 = vunpack.c.h.b16 %v1273
        %v1890 = vunpack.c.l.b16 %v1274
        %v1891 = vunpack.c.h.b16 %v1274
        %v1892 = vunpack.c.l.b16 %v1275
        %v1893 = vunpack.c.h.b16 %v1275
        %v1894 = vunpack.c.l.b16 %v1276
        %v1895 = vunpack.c.h.b16 %v1276
        %v1896 = vunpack.c.l.b16 %v1277
        %v1897 = vunpack.c.h.b16 %v1277
        %v1898 = vunpack.c.l.b16 %v1278
        %v1899 = vunpack.c.h.b16 %v1278
        %v1900 = vunpack.c.l.b16 %v1279
        %v1901 = vunpack.c.h.b16 %v1279
        %v1902 = vunpack.c.l.b16 %v1280
        %v1903 = vunpack.c.h.b16 %v1280
        %v1904 = vunpack.c.l.b16 %v1281
        %v1905 = vunpack.c.h.b16 %v1281
        %v1906 = vunpack.c.l.b16 %v1282
        %v1907 = vunpack.c.h.b16 %v1282
        %v1908 = vunpack.c.l.b16 %v1283
        %v1909 = vunpack.c.h.b16 %v1283
        %v1910 = vunpack.c.l.b16 %v1284
        %v1911 = vunpack.c.h.b16 %v1284
        %v1912 = vunpack.c.l.b16 %v1285
        %v1913 = vunpack.c.h.b16 %v1285
        %v1914 = vunpack.c.l.b16 %v1286
        %v1915 = vunpack.c.h.b16 %v1286
        %v1916 = vunpack.c.l.b16 %v1287
        %v1917 = vunpack.c.h.b16 %v1287
        %v1918 = vunpack.c.l.b16 %v1288
        %v1919 = vunpack.c.h.b16 %v1288
        %v1920 = vunpack.c.l.b16 %v1289
        %v1921 = vunpack.c.h.b16 %v1289
        %v1922 = vunpack.c.l.b16 %v1290
        %v1923 = vunpack.c.h.b16 %v1290
        %v1924 = vunpack.c.l.b16 %v1291
        %v1925 = vunpack.c.h.b16 %v1291
        %v1926 = vunpack.c.l.b16 %v1292
        %v1927 = vunpack.c.h.b16 %v1292
        %v1928 = vunpack.c.l.b16 %v1293
        %v1929 = vunpack.c.h.b16 %v1293
        %v1930 = vunpack.c.l.b16 %v1294
        %v1931 = vunpack.c.h.b16 %v1294
        %v1932 = vunpack.c.l.b16 %v1295
        %v1933 = vunpack.c.h.b16 %v1295
        %v1934 = vunpack.c.l.b16 %v1296
        %v1935 = vunpack.c.h.b16 %v1296
        %v1936 = vunpack.c.l.b16 %v1297
        %v1937 = vunpack.c.h.b16 %v1297
        %v1938 = vunpack.c.l.b16 %v1298
        %v1939 = vunpack.c.h.b16 %v1298
        %v1940 = vunpack.c.l.b16 %v1299
        %v1941 = vunpack.c.h.b16 %v1299
        %v1942 = vunpack.c.l.b16 %v1300
        %v1943 = vunpack.c.h.b16 %v1300
        %v1944 = vunpack.c.l.b16 %v1301
        %v1945 = vunpack.c.h.b16 %v1301
        %v1946 = vunpack.c.l.b16 %v1302
        %v1947 = vunpack.c.h.b16 %v1302
        %v1948 = vunpack.c.l.b16 %v1303
        %v1949 = vunpack.c.h.b16 %v1303
        %v1950 = vunpack.c.l.b16 %v1304
        %v1951 = vunpack.c.h.b16 %v1304
        %v1952 = vunpack.c.l.b16 %v1305
        %v1953 = vunpack.c.h.b16 %v1305
        %v1954 = vunpack.c.l.b16 %v1306
        %v1955 = vunpack.c.h.b16 %v1306
        %v1956 = vunpack.c.l.b16 %v1307
        %v1957 = vunpack.c.h.b16 %v1307
        %v1958 = vunpack.c.l.b16 %v1308
        %v1959 = vunpack.c.h.b16 %v1308
        %v1960 = vunpack.c.l.b16 %v1309
        %v1961 = vunpack.c.h.b16 %v1309
        %v1962 = vunpack.c.l.b16 %v1310
        %v1963 = vunpack.c.h.b16 %v1310
        %v1964 = vunpack.c.l.b16 %v1311
        %v1965 = vunpack.c.h.b16 %v1311
        %v1966 = vunpack.c.l.b16 %v1312
        %v1967 = vunpack.c.h.b16 %v1312
        %v1968 = vunpack.c.l.b16 %v1313
        %v1969 = vunpack.c.h.b16 %v1313
        %v1970 = vunpack.c.l.b16 %v1314
        %v1971 = vunpack.c.h.b16 %v1314
        %v1972 = vunpack.c.l.b16 %v1315
        %v1973 = vunpack.c.h.b16 %v1315
        %v1974 = vunpack.c.l.b16 %v1316
        %v1975 = vunpack.c.h.b16 %v1316
        %v1976 = vunpack.c.l.b16 %v1317
        %v1977 = vunpack.c.h.b16 %v1317
        %v1978 = vunpack.c.l.b16 %v1318
        %v1979 = vunpack.c.h.b16 %v1318
        %v1980 = vunpack.c.l.b16 %v1319
        %v1981 = vunpack.c.h.b16 %v1319
        %v1982 = vunpack.c.l.b16 %v1320
        %v1983 = vunpack.c.h.b16 %v1320
        %v1984 = vunpack.c.l.b16 %v1321
        %v1985 = vunpack.c.h.b16 %v1321
        %v1986 = vunpack.c.l.b16 %v1322
        %v1987 = vunpack.c.h.b16 %v1322
        %v1988 = vunpack.c.l.b16 %v1323
        %v1989 = vunpack.c.h.b16 %v1323
        %v1990 = vunpack.c.l.b16 %v1324
        %v1991 = vunpack.c.h.b16 %v1324
        %v1992 = vunpack.c.l.b16 %v1325
        %v1993 = vunpack.c.h.b16 %v1325
        %v1994 = vunpack.c.l.b16 %v1326
        %v1995 = vunpack.c.h.b16 %v1326
        %v1996 = vunpack.c.l.b16 %v1327
        %v1997 = vunpack.c.h.b16 %v1327
        %v1998 = vunpack.c.l.b16 %v1328
        %v1999 = vunpack.c.h.b16 %v1328
        %v2000 = vunpack.c.l.b16 %v1329
        %v2001 = vunpack.c.h.b16 %v1329
        %v2002 = vunpack.c.l.b16 %v1330
        %v2003 = vunpack.c.h.b16 %v1330
        %v2004 = vunpack.c.l.b16 %v1331
        %v2005 = vunpack.c.h.b16 %v1331
        %v2006 = vunpack.c.l.b16 %v1332
        %v2007 = vunpack.c.h.b16 %v1332
        %v2008 = vunpack.c.l.b16 %v1333
        %v2009 = vunpack.c.h.b16 %v1333
        %v2010 = vunpack.c.l.b16 %v1334
        %v2011 = vunpack.c.h.b16 %v1334
        %v2012 = vunpack.c.l.b16 %v1335
        %v2013 = vunpack.c.h.b16 %v1335
        %v2014 = vunpack.c.l.b16 %v1336
        %v2015 = vunpack.c.h.b16 %v1336
        %v2016 = vunpack.c.l.b16 %v1337
        %v2017 = vunpack.c.h.b16 %v1337
        %v2018 = vunpack.c.l.b16 %v1338
        %v2019 = vunpack.c.h.b16 %v1338
        %v2020 = vunpack.c.l.b16 %v1339
        %v2021 = vunpack.c.h.b16 %v1339
        %v2022 = vunpack.c.l.b16 %v1340
        %v2023 = vunpack.c.h.b16 %v1340
        %v2024 = vunpack.c.l.b16 %v1341
        %v2025 = vunpack.c.h.b16 %v1341
        %v2026 = vunpack.c.l.b16 %v1342
        %v2027 = vunpack.c.h.b16 %v1342
        %v2028 = vunpack.c.l.b16 %v1343
        %v2029 = vunpack.c.h.b16 %v1343
        %v2030 = vunpack.c.l.b16 %v1344
        %v2031 = vunpack.c.h.b16 %v1344
        %v2032 = vunpack.c.l.b16 %v1345
        %v2033 = vunpack.c.h.b16 %v1345
        %v2034 = vunpack.c.l.b16 %v1346
        %v2035 = vunpack.c.h.b16 %v1346
        %v2036 = vunpack.c.l.b16 %v1347
        %v2037 = vunpack.c.h.b16 %v1347
        %v2038 = vunpack.c.l.b16 %v1348
        %v2039 = vunpack.c.h.b16 %v1348
        %v2040 = vunpack.c.l.b16 %v1349
        %v2041 = vunpack.c.h.b16 %v1349
        %v2042 = vunpack.c.l.b16 %v1350
        %v2043 = vunpack.c.h.b16 %v1350
        %v2044 = vunpack.c.l.b16 %v1351
        %v2045 = vunpack.c.h.b16 %v1351
        %v2046 = vunpack.c.l.b16 %v1352
        %v2047 = vunpack.c.h.b16 %v1352
        %v2048 = vunpack.c.l.b16 %v1353
        %v2049 = vunpack.c.h.b16 %v1353
        %v2050 = vunpack.c.l.b16 %v1354
        %v2051 = vunpack.c.h.b16 %v1354
        %v2052 = vunpack.c.l.b16 %v1355
        %v2053 = vunpack.c.h.b16 %v1355
        %v2054 = vunpack.c.l.b16 %v1356
        %v2055 = vunpack.c.h.b16 %v1356
        %v2056 = vunpack.c.l.b16 %v1357
        %v2057 = vunpack.c.h.b16 %v1357
        %v2058 = vunpack.c.l.b16 %v1358
        %v2059 = vunpack.c.h.b16 %v1358
        %v2060 = vunpack.c.l.b16 %v1359
        %v2061 = vunpack.c.h.b16 %v1359
        %v2062 = vunpack.c.l.b16 %v1360
        %v2063 = vunpack.c.h.b16 %v1360
        %v2064 = vunpack.c.l.b16 %v1361
        %v2065 = vunpack.c.h.b16 %v1361
        %v2066 = vunpack.c.l.b16 %v1362
        %v2067 = vunpack.c.h.b16 %v1362
        %v2068 = vunpack.c.l.b16 %v1363
        %v2069 = vunpack.c.h.b16 %v1363
        %v2070 = vunpack.c.l.b16 %v1364
        %v2071 = vunpack.c.h.b16 %v1364
        %v2072 = vunpack.c.l.b16 %v1365
        %v2073 = vunpack.c.h.b16 %v1365
        %v2074 = vunpack.c.l.b16 %v1366
        %v2075 = vunpack.c.h.b16 %v1366
        %v2076 = vunpack.c.l.b16 %v1367
        %v2077 = vunpack.c.h.b16 %v1367
        %v2078 = vunpack.c.l.b16 %v1368
        %v2079 = vunpack.c.h.b16 %v1368
        %v2080 = vunpack.c.l.b16 %v1369
        %v2081 = vunpack.c.h.b16 %v1369
        %v2082 = vunpack.c.l.b16 %v1370
        %v2083 = vunpack.c.h.b16 %v1370
        %v2084 = vunpack.c.l.b16 %v1371
        %v2085 = vunpack.c.h.b16 %v1371
        %v2086 = vunpack.c.l.b16 %v1372
        %v2087 = vunpack.c.h.b16 %v1372
        %v2088 = vunpack.c.l.b16 %v1373
        %v2089 = vunpack.c.h.b16 %v1373
        %v2090 = vunpack.c.l.b16 %v1374
        %v2091 = vunpack.c.h.b16 %v1374
        %v2092 = vunpack.c.l.b16 %v1375
        %v2093 = vunpack.c.h.b16 %v1375
        %v2094 = vunpack.c.l.b16 %v1376
        %v2095 = vunpack.c.h.b16 %v1376
        %v2096 = vunpack.c.l.b16 %v1377
        %v2097 = vunpack.c.h.b16 %v1377
        %v2098 = vunpack.c.l.b16 %v1378
        %v2099 = vunpack.c.h.b16 %v1378
        %v2100 = vunpack.c.l.b16 %v1379
        %v2101 = vunpack.c.h.b16 %v1379
        %v2102 = vunpack.c.l.b16 %v1380
        %v2103 = vunpack.c.h.b16 %v1380
        %v2104 = vunpack.c.l.b16 %v1381
        %v2105 = vunpack.c.h.b16 %v1381
        %v2106 = vunpack.c.l.b16 %v1382
        %v2107 = vunpack.c.h.b16 %v1382
        %v2108 = vunpack.c.l.b16 %v1383
        %v2109 = vunpack.c.h.b16 %v1383
        %v2110 = vunpack.c.l.b16 %v1384
        %v2111 = vunpack.c.h.b16 %v1384
        %v2112 = vunpack.c.l.b16 %v1385
        %v2113 = vunpack.c.h.b16 %v1385
        %v2114 = vunpack.c.l.b16 %v1386
        %v2115 = vunpack.c.h.b16 %v1386
        %v2116 = vunpack.c.l.b16 %v1387
        %v2117 = vunpack.c.h.b16 %v1387
        %v2118 = vunpack.c.l.b16 %v1388
        %v2119 = vunpack.c.h.b16 %v1388
        %v2120 = vunpack.c.l.b16 %v1389
        %v2121 = vunpack.c.h.b16 %v1389
        %v2122 = vunpack.c.l.b16 %v1390
        %v2123 = vunpack.c.h.b16 %v1390
        %v2124 = vunpack.c.l.b16 %v1391
        %v2125 = vunpack.c.h.b16 %v1391
        %v2126 = vunpack.c.l.b16 %v1392
        %v2127 = vunpack.c.h.b16 %v1392
        %v2128 = vunpack.c.l.b16 %v1393
        %v2129 = vunpack.c.h.b16 %v1393
        %v2130 = vunpack.c.l.b16 %v1394
        %v2131 = vunpack.c.h.b16 %v1394
        %v2132 = vunpack.c.l.b16 %v1395
        %v2133 = vunpack.c.h.b16 %v1395
        %v2134 = vunpack.c.l.b16 %v1396
        %v2135 = vunpack.c.h.b16 %v1396
        %v2136 = vunpack.c.l.b16 %v1397
        %v2137 = vunpack.c.h.b16 %v1397
        %v2138 = vunpack.c.l.b16 %v1398
        %v2139 = vunpack.c.h.b16 %v1398
        %v2140 = vunpack.c.l.b16 %v1399
        %v2141 = vunpack.c.h.b16 %v1399
        %v2142 = vunpack.c.l.b16 %v1400
        %v2143 = vunpack.c.h.b16 %v1400
        %v2144 = vunpack.c.l.b16 %v1401
        %v2145 = vunpack.c.h.b16 %v1401
        %v2146 = vunpack.c.l.b16 %v1402
        %v2147 = vunpack.c.h.b16 %v1402
        %v2148 = vunpack.c.l.b16 %v1403
        %v2149 = vunpack.c.h.b16 %v1403
        %v2150 = vunpack.c.l.b16 %v1404
        %v2151 = vunpack.c.h.b16 %v1404
        %v2152 = vunpack.c.l.b16 %v1405
        %v2153 = vunpack.c.h.b16 %v1405
        %v2154 = vunpack.c.l.b16 %v1406
        %v2155 = vunpack.c.h.b16 %v1406
        %v2156 = vunpack.c.l.b16 %v1407
        %v2157 = vunpack.c.h.b16 %v1407
        %v2158 = vunpack.c.l.b16 %v1408
        %v2159 = vunpack.c.h.b16 %v1408
        %v2160 = vunpack.c.l.b16 %v1409
        %v2161 = vunpack.c.h.b16 %v1409
        %v2162 = vunpack.c.l.b16 %v1410
        %v2163 = vunpack.c.h.b16 %v1410
        %v2164 = vunpack.c.l.b16 %v1411
        %v2165 = vunpack.c.h.b16 %v1411
        %v2166 = vunpack.c.l.b16 %v1412
        %v2167 = vunpack.c.h.b16 %v1412
        %v2168 = vunpack.c.l.b16 %v1413
        %v2169 = vunpack.c.h.b16 %v1413
        %v2170 = vunpack.c.l.b16 %v1414
        %v2171 = vunpack.c.h.b16 %v1414
        %v2172 = vunpack.c.l.b16 %v1415
        %v2173 = vunpack.c.h.b16 %v1415
        %v2174 = vunpack.c.l.b16 %v1416
        %v2175 = vunpack.c.h.b16 %v1416
        %v2176 = vunpack.c.l.b16 %v1417
        %v2177 = vunpack.c.h.b16 %v1417
        %v2178 = vunpack.c.l.b16 %v1418
        %v2179 = vunpack.c.h.b16 %v1418
        %v2180 = vunpack.c.l.b16 %v1419
        %v2181 = vunpack.c.h.b16 %v1419
        %v2182 = vunpack.c.l.b16 %v1420
        %v2183 = vunpack.c.h.b16 %v1420
        %v2184 = vunpack.c.l.b16 %v1421
        %v2185 = vunpack.c.h.b16 %v1421
        %v2186 = vunpack.c.l.b16 %v1422
        %v2187 = vunpack.c.h.b16 %v1422
        %v2188 = vunpack.c.l.b16 %v1423
        %v2189 = vunpack.c.h.b16 %v1423
        %v2190 = vunpack.c.l.b16 %v1424
        %v2191 = vunpack.c.h.b16 %v1424
        %v2192 = vunpack.c.l.b16 %v1425
        %v2193 = vunpack.c.h.b16 %v1425
        %v2194 = vunpack.c.l.b16 %v1426
        %v2195 = vunpack.c.h.b16 %v1426
        %v2196 = vunpack.c.l.b16 %v1427
        %v2197 = vunpack.c.h.b16 %v1427
        %v2198 = vunpack.c.l.b16 %v1428
        %v2199 = vunpack.c.h.b16 %v1428
        %v2200 = vunpack.c.l.b16 %v1429
        %v2201 = vunpack.c.h.b16 %v1429
        %v2202 = vunpack.c.l.b16 %v1430
        %v2203 = vunpack.c.h.b16 %v1430
        %v2204 = vunpack.c.l.b16 %v1431
        %v2205 = vunpack.c.h.b16 %v1431
        %v2206 = vunpack.c.l.b16 %v1432
        %v2207 = vunpack.c.h.b16 %v1432
        %v2208 = vunpack.c.l.b16 %v1433
        %v2209 = vunpack.c.h.b16 %v1433
        %v2210 = vunpack.c.l.b16 %v1434
        %v2211 = vunpack.c.h.b16 %v1434
        %v2212 = vunpack.c.l.b16 %v1435
        %v2213 = vunpack.c.h.b16 %v1435
        %v2214 = vunpack.c.l.b16 %v1436
        %v2215 = vunpack.c.h.b16 %v1436
        %v2216 = vunpack.c.l.b16 %v1437
        %v2217 = vunpack.c.h.b16 %v1437
        %v2218 = vunpack.c.l.b16 %v1438
        %v2219 = vunpack.c.h.b16 %v1438
        %v2220 = vunpack.c.l.b16 %v1439
        %v2221 = vunpack.c.h.b16 %v1439
        %v2222 = vunpack.c.l.b16 %v1440
        %v2223 = vunpack.c.h.b16 %v1440
        %v2224 = vunpack.c.l.b16 %v1441
        %v2225 = vunpack.c.h.b16 %v1441
        %v2226 = vunpack.c.l.b16 %v1442
        %v2227 = vunpack.c.h.b16 %v1442
        %v2228 = vunpack.c.l.b16 %v1443
        %v2229 = vunpack.c.h.b16 %v1443
        %v2230 = vunpack.c.l.b16 %v1444
        %v2231 = vunpack.c.h.b16 %v1444
        %v2232 = vunpack.c.l.b16 %v1445
        %v2233 = vunpack.c.h.b16 %v1445
        %v2234 = vunpack.c.l.b16 %v1446
        %v2235 = vunpack.c.h.b16 %v1446
        %v2236 = vunpack.c.l.b16 %v1447
        %v2237 = vunpack.c.h.b16 %v1447
        %v2238 = vpack.c.b16 %v1730, %v1726
        %v2239 = vpack.c.b16 %v1731, %v1727
        %v2240 = vpack.c.b16 %v1732, %v1728
        %v2241 = vpack.c.b16 %v1733, %v1729
        %v2242 = vpack.c.b16 %v1738, %v1734
        %v2243 = vpack.c.b16 %v1739, %v1735
        %v2244 = vpack.c.b16 %v1740, %v1736
        %v2245 = vpack.c.b16 %v1741, %v1737
        %v2246 = vpack.c.b16 %v1746, %v1742
        %v2247 = vpack.c.b16 %v1747, %v1743
        %v2248 = vpack.c.b16 %v1748, %v1744
        %v2249 = vpack.c.b16 %v1749, %v1745
        %v2250 = vpack.c.b16 %v1754, %v1750
        %v2251 = vpack.c.b16 %v1755, %v1751
        %v2252 = vpack.c.b16 %v1756, %v1752
        %v2253 = vpack.c.b16 %v1757, %v1753
        %v2254 = vpack.c.b16 %v1762, %v1758
        %v2255 = vpack.c.b16 %v1763, %v1759
        %v2256 = vpack.c.b16 %v1764, %v1760
        %v2257 = vpack.c.b16 %v1765, %v1761
        %v2258 = vpack.c.b16 %v1770, %v1766
        %v2259 = vpack.c.b16 %v1771, %v1767
        %v2260 = vpack.c.b16 %v1772, %v1768
        %v2261 = vpack.c.b16 %v1773, %v1769
        %v2262 = vpack.c.b16 %v1778, %v1774
        %v2263 = vpack.c.b16 %v1779, %v1775
        %v2264 = vpack.c.b16 %v1780, %v1776
        %v2265 = vpack.c.b16 %v1781, %v1777
        %v2266 = vpack.c.b16 %v1786, %v1782
        %v2267 = vpack.c.b16 %v1787, %v1783
        %v2268 = vpack.c.b16 %v1788, %v1784
        %v2269 = vpack.c.b16 %v1789, %v1785
        %v2270 = vpack.c.b16 %v1794, %v1790
        %v2271 = vpack.c.b16 %v1795, %v1791
        %v2272 = vpack.c.b16 %v1796, %v1792
        %v2273 = vpack.c.b16 %v1797, %v1793
        %v2274 = vpack.c.b16 %v1802, %v1798
        %v2275 = vpack.c.b16 %v1803, %v1799
        %v2276 = vpack.c.b16 %v1804, %v1800
        %v2277 = vpack.c.b16 %v1805, %v1801
        %v2278 = vpack.c.b16 %v1810, %v1806
        %v2279 = vpack.c.b16 %v1811, %v1807
        %v2280 = vpack.c.b16 %v1812, %v1808
        %v2281 = vpack.c.b16 %v1813, %v1809
        %v2282 = vpack.c.b16 %v1818, %v1814
        %v2283 = vpack.c.b16 %v1819, %v1815
        %v2284 = vpack.c.b16 %v1820, %v1816
        %v2285 = vpack.c.b16 %v1821, %v1817
        %v2286 = vpack.c.b16 %v1826, %v1822
        %v2287 = vpack.c.b16 %v1827, %v1823
        %v2288 = vpack.c.b16 %v1828, %v1824
        %v2289 = vpack.c.b16 %v1829, %v1825
        %v2290 = vpack.c.b16 %v1834, %v1830
        %v2291 = vpack.c.b16 %v1835, %v1831
        %v2292 = vpack.c.b16 %v1836, %v1832
        %v2293 = vpack.c.b16 %v1837, %v1833
        %v2294 = vpack.c.b16 %v1842, %v1838
        %v2295 = vpack.c.b16 %v1843, %v1839
        %v2296 = vpack.c.b16 %v1844, %v1840
        %v2297 = vpack.c.b16 %v1845, %v1841
        %v2298 = vpack.c.b16 %v1850, %v1846
        %v2299 = vpack.c.b16 %v1851, %v1847
        %v2300 = vpack.c.b16 %v1852, %v1848
        %v2301 = vpack.c.b16 %v1853, %v1849
        %v2302 = vpack.c.b16 %v1858, %v1854
        %v2303 = vpack.c.b16 %v1859, %v1855
        %v2304 = vpack.c.b16 %v1860, %v1856
        %v2305 = vpack.c.b16 %v1861, %v1857
        %v2306 = vpack.c.b16 %v1866, %v1862
        %v2307 = vpack.c.b16 %v1867, %v1863
        %v2308 = vpack.c.b16 %v1868, %v1864
        %v2309 = vpack.c.b16 %v1869, %v1865
        %v2310 = vpack.c.b16 %v1874, %v1870
        %v2311 = vpack.c.b16 %v1875, %v1871
        %v2312 = vpack.c.b16 %v1876, %v1872
        %v2313 = vpack.c.b16 %v1877, %v1873
        %v2314 = vpack.c.b16 %v1882, %v1878
        %v2315 = vpack.c.b16 %v1883, %v1879
        %v2316 = vpack.c.b16 %v1884, %v1880
        %v2317 = vpack.c.b16 %v1885, %v1881
        %v2318 = vpack.c.b16 %v1890, %v1886
        %v2319 = vpack.c.b16 %v1891, %v1887
        %v2320 = vpack.c.b16 %v1892, %v1888
        %v2321 = vpack.c.b16 %v1893, %v1889
        %v2322 = vpack.c.b16 %v1898, %v1894
        %v2323 = vpack.c.b16 %v1899, %v1895
        %v2324 = vpack.c.b16 %v1900, %v1896
        %v2325 = vpack.c.b16 %v1901, %v1897
        %v2326 = vpack.c.b16 %v1906, %v1902
        %v2327 = vpack.c.b16 %v1907, %v1903
        %v2328 = vpack.c.b16 %v1908, %v1904
        %v2329 = vpack.c.b16 %v1909, %v1905
        %v2330 = vpack.c.b16 %v1914, %v1910
        %v2331 = vpack.c.b16 %v1915, %v1911
        %v2332 = vpack.c.b16 %v1916, %v1912
        %v2333 = vpack.c.b16 %v1917, %v1913
        %v2334 = vpack.c.b16 %v1922, %v1918
        %v2335 = vpack.c.b16 %v1923, %v1919
        %v2336 = vpack.c.b16 %v1924, %v1920
        %v2337 = vpack.c.b16 %v1925, %v1921
        %v2338 = vpack.c.b16 %v1930, %v1926
        %v2339 = vpack.c.b16 %v1931, %v1927
        %v2340 = vpack.c.b16 %v1932, %v1928
        %v2341 = vpack.c.b16 %v1933, %v1929
        %v2342 = vpack.c.b16 %v1938, %v1934
        %v2343 = vpack.c.b16 %v1939, %v1935
        %v2344 = vpack.c.b16 %v1940, %v1936
        %v2345 = vpack.c.b16 %v1941, %v1937
        %v2346 = vpack.c.b16 %v1946, %v1942
        %v2347 = vpack.c.b16 %v1947, %v1943
        %v2348 = vpack.c.b16 %v1948, %v1944
        %v2349 = vpack.c.b16 %v1949, %v1945
        %v2350 = vpack.c.b16 %v1954, %v1950
        %v2351 = vpack.c.b16 %v1955, %v1951
        %v2352 = vpack.c.b16 %v1956, %v1952
        %v2353 = vpack.c.b16 %v1957, %v1953
        %v2354 = vpack.c.b16 %v1962, %v1958
        %v2355 = vpack.c.b16 %v1963, %v1959
        %v2356 = vpack.c.b16 %v1964, %v1960
        %v2357 = vpack.c.b16 %v1965, %v1961
        %v2358 = vpack.c.b16 %v1970, %v1966
        %v2359 = vpack.c.b16 %v1971, %v1967
        %v2360 = vpack.c.b16 %v1972, %v1968
        %v2361 = vpack.c.b16 %v1973, %v1969
        %v2362 = vpack.c.b16 %v1978, %v1974
        %v2363 = vpack.c.b16 %v1979, %v1975
        %v2364 = vpack.c.b16 %v1980, %v1976
        %v2365 = vpack.c.b16 %v1981, %v1977
        %v2366 = vpack.c.b16 %v1986, %v1982
        %v2367 = vpack.c.b16 %v1987, %v1983
        %v2368 = vpack.c.b16 %v1988, %v1984
        %v2369 = vpack.c.b16 %v1989, %v1985
        %v2370 = vpack.c.b16 %v1994, %v1990
        %v2371 = vpack.c.b16 %v1995, %v1991
        %v2372 = vpack.c.b16 %v1996, %v1992
        %v2373 = vpack.c.b16 %v1997, %v1993
        %v2374 = vpack.c.b16 %v2002, %v1998
        %v2375 = vpack.c.b16 %v2003, %v1999
        %v2376 = vpack.c.b16 %v2004, %v2000
        %v2377 = vpack.c.b16 %v2005, %v2001
        %v2378 = vpack.c.b16 %v2010, %v2006
        %v2379 = vpack.c.b16 %v2011, %v2007
        %v2380 = vpack.c.b16 %v2012, %v2008
        %v2381 = vpack.c.b16 %v2013, %v2009
        %v2382 = vpack.c.b16 %v2018, %v2014
        %v2383 = vpack.c.b16 %v2019, %v2015
        %v2384 = vpack.c.b16 %v2020, %v2016
        %v2385 = vpack.c.b16 %v2021, %v2017
        %v2386 = vpack.c.b16 %v2026, %v2022
        %v2387 = vpack.c.b16 %v2027, %v2023
        %v2388 = vpack.c.b16 %v2028, %v2024
        %v2389 = vpack.c.b16 %v2029, %v2025
        %v2390 = vpack.c.b16 %v2034, %v2030
        %v2391 = vpack.c.b16 %v2035, %v2031
        %v2392 = vpack.c.b16 %v2036, %v2032
        %v2393 = vpack.c.b16 %v2037, %v2033
        %v2394 = vpack.c.b16 %v2042, %v2038
        %v2395 = vpack.c.b16 %v2043, %v2039
        %v2396 = vpack.c.b16 %v2044, %v2040
        %v2397 = vpack.c.b16 %v2045, %v2041
        %v2398 = vpack.c.b16 %v2050, %v2046
        %v2399 = vpack.c.b16 %v2051, %v2047
        %v2400 = vpack.c.b16 %v2052, %v2048
        %v2401 = vpack.c.b16 %v2053, %v2049
        %v2402 = vpack.c.b16 %v2058, %v2054
        %v2403 = vpack.c.b16 %v2059, %v2055
        %v2404 = vpack.c.b16 %v2060, %v2056
        %v2405 = vpack.c.b16 %v2061, %v2057
        %v2406 = vpack.c.b16 %v2066, %v2062
        %v2407 = vpack.c.b16 %v2067, %v2063
        %v2408 = vpack.c.b16 %v2068, %v2064
        %v2409 = vpack.c.b16 %v2069, %v2065
        %v2410 = vpack.c.b16 %v2074, %v2070
        %v2411 = vpack.c.b16 %v2075, %v2071
        %v2412 = vpack.c.b16 %v2076, %v2072
        %v2413 = vpack.c.b16 %v2077, %v2073
        %v2414 = vpack.c.b16 %v2082, %v2078
        %v2415 = vpack.c.b16 %v2083, %v2079
        %v2416 = vpack.c.b16 %v2084, %v2080
        %v2417 = vpack.c.b16 %v2085, %v2081
        %v2418 = vpack.c.b16 %v2090, %v2086
        %v2419 = vpack.c.b16 %v2091, %v2087
        %v2420 = vpack.c.b16 %v2092, %v2088
        %v2421 = vpack.c.b16 %v2093, %v2089
        %v2422 = vpack.c.b16 %v2098, %v2094
        %v2423 = vpack.c.b16 %v2099, %v2095
        %v2424 = vpack.c.b16 %v2100, %v2096
        %v2425 = vpack.c.b16 %v2101, %v2097
        %v2426 = vpack.c.b16 %v2106, %v2102
        %v2427 = vpack.c.b16 %v2107, %v2103
        %v2428 = vpack.c.b16 %v2108, %v2104
        %v2429 = vpack.c.b16 %v2109, %v2105
        %v2430 = vpack.c.b16 %v2114, %v2110
        %v2431 = vpack.c.b16 %v2115, %v2111
        %v2432 = vpack.c.b16 %v2116, %v2112
        %v2433 = vpack.c.b16 %v2117, %v2113
        %v2434 = vpack.c.b16 %v2122, %v2118
        %v2435 = vpack.c.b16 %v2123, %v2119
        %v2436 = vpack.c.b16 %v2124, %v2120
        %v2437 = vpack.c.b16 %v2125, %v2121
        %v2438 = vpack.c.b16 %v2130, %v2126
        %v2439 = vpack.c.b16 %v2131, %v2127
        %v2440 = vpack.c.b16 %v2132, %v2128
        %v2441 = vpack.c.b16 %v2133, %v2129
        %v2442 = vpack.c.b16 %v2138, %v2134
        %v2443 = vpack.c.b16 %v2139, %v2135
        %v2444 = vpack.c.b16 %v2140, %v2136
        %v2445 = vpack.c.b16 %v2141, %v2137
        %v2446 = vpack.c.b16 %v2146, %v2142
        %v2447 = vpack.c.b16 %v2147, %v2143
        %v2448 = vpack.c.b16 %v2148, %v2144
        %v2449 = vpack.c.b16 %v2149, %v2145
        %v2450 = vpack.c.b16 %v2154, %v2150
        %v2451 = vpack.c.b16 %v2155, %v2151
        %v2452 = vpack.c.b16 %v2156, %v2152
        %v2453 = vpack.c.b16 %v2157, %v2153
        %v2454 = vpack.c.b16 %v2162, %v2158
        %v2455 = vpack.c.b16 %v2163, %v2159
        %v2456 = vpack.c.b16 %v2164, %v2160
        %v2457 = vpack.c.b16 %v2165, %v2161
        %v2458 = vpack.c.b16 %v2170, %v2166
        %v2459 = vpack.c.b16 %v2171, %v2167
        %v2460 = vpack.c.b16 %v2172, %v2168
        %v2461 = vpack.c.b16 %v2173, %v2169
        %v2462 = vpack.c.b16 %v2178, %v2174
        %v2463 = vpack.c.b16 %v2179, %v2175
        %v2464 = vpack.c.b16 %v2180, %v2176
        %v2465 = vpack.c.b16 %v2181, %v2177
        %v2466 = vpack.c.b16 %v2186, %v2182
        %v2467 = vpack.c.b16 %v2187, %v2183
        %v2468 = vpack.c.b16 %v2188, %v2184
        %v2469 = vpack.c.b16 %v2189, %v2185
        %v2470 = vpack.c.b16 %v2194, %v2190
        %v2471 = vpack.c.b16 %v2195, %v2191
        %v2472 = vpack.c.b16 %v2196, %v2192
        %v2473 = vpack.c.b16 %v2197, %v2193
        %v2474 = vpack.c.b16 %v2202, %v2198
        %v2475 = vpack.c.b16 %v2203, %v2199
        %v2476 = vpack.c.b16 %v2204, %v2200
        %v2477 = vpack.c.b16 %v2205, %v2201
        %v2478 = vpack.c.b16 %v2210, %v2206
        %v2479 = vpack.c.b16 %v2211, %v2207
        %v2480 = vpack.c.b16 %v2212, %v2208
        %v2481 = vpack.c.b16 %v2213, %v2209
        %v2482 = vpack.c.b16 %v2218, %v2214
        %v2483 = vpack.c.b16 %v2219, %v2215
        %v2484 = vpack.c.b16 %v2220, %v2216
        %v2485 = vpack.c.b16 %v2221, %v2217
        %v2486 = vpack.c.b16 %v2226, %v2222
        %v2487 = vpack.c.b16 %v2227, %v2223
        %v2488 = vpack.c.b16 %v2228, %v2224
        %v2489 = vpack.c.b16 %v2229, %v2225
        %v2490 = vpack.c.b16 %v2234, %v2230
        %v2491 = vpack.c.b16 %v2235, %v2231
        %v2492 = vpack.c.b16 %v2236, %v2232
        %v2493 = vpack.c.b16 %v2237, %v2233
        %2750 = vmatprep.subr.bf16.mxu0 %v2239
        %2751 = vmatpush1.bf16.msra.mxu0 %v2238
        %2752 = vmatprep.subr.bf16.mxu0 %v2243
        %2753 = vmatpush1.bf16.msra.mxu0 %v2242
        %2754 = vmatprep.subr.bf16.mxu0 %v2247
        %2755 = vmatpush1.bf16.msra.mxu0 %v2246
        %2756 = vmatprep.subr.bf16.mxu0 %v2251
        %2757 = vmatpush1.bf16.msra.mxu0 %v2250
        %2758 = vmatprep.subr.bf16.mxu0 %v2255
        %2759 = vmatpush1.bf16.msra.mxu0 %v2254
        %2760 = vmatprep.subr.bf16.mxu0 %v2259
        %2761 = vmatpush1.bf16.msra.mxu0 %v2258
        %2762 = vmatprep.subr.bf16.mxu0 %v2263
        %2763 = vmatpush1.bf16.msra.mxu0 %v2262
        %2764 = vmatprep.subr.bf16.mxu0 %v2267
        %2765 = vmatpush1.bf16.msra.mxu0 %v2266
        %2766 = vmatprep.subr.bf16.mxu0 %v2271
        %2767 = vmatpush1.bf16.msra.mxu0 %v2270
        %2768 = vmatprep.subr.bf16.mxu0 %v2275
        %2769 = vmatpush1.bf16.msra.mxu0 %v2274
        %2770 = vmatprep.subr.bf16.mxu0 %v2279
        %2771 = vmatpush1.bf16.msra.mxu0 %v2278
        %2772 = vmatprep.subr.bf16.mxu0 %v2283
        %2773 = vmatpush1.bf16.msra.mxu0 %v2282
        %2774 = vmatprep.subr.bf16.mxu0 %v2287
        %2775 = vmatpush1.bf16.msra.mxu0 %v2286
        %2776 = vmatprep.subr.bf16.mxu0 %v2291
        %2777 = vmatpush1.bf16.msra.mxu0 %v2290
        %2778 = vmatprep.subr.bf16.mxu0 %v2295
        %2779 = vmatpush1.bf16.msra.mxu0 %v2294
        %2780 = vmatprep.subr.bf16.mxu0 %v2299
        %2781 = vmatpush1.bf16.msra.mxu0 %v2298
        %2782 = vmatprep.mubr.bf16.mxu0 %v1185
        %2783 = vmatmul.mubr.bf16.gmra.mrb[0].mxu0 %v1184
        %v2784 = vpop.f32.mrb[0].mxu0
        %v2785 = vadd.f32 %v1453, %v2784
        %v2786 = vpop.f32.mrb[0].mxu0
        %v2787 = vadd.f32 %v1457, %v2786
        %v2788 = vpop.f32.mrb[0].mxu0
        %v2789 = vadd.f32 %v1453, %v2788
        %v2790 = vpop.f32.mrb[0].mxu0
        %v2791 = vadd.f32 %v1457, %v2790
        %2792 = vdwg.mxu0
        %2793 = vmatprep.subr.bf16.mxu0 %v2303
        %2794 = vmatpush1.bf16.msra.mxu0 %v2302
        %2795 = vmatprep.subr.bf16.mxu0 %v2307
        %2796 = vmatpush1.bf16.msra.mxu0 %v2306
        %2797 = vmatprep.subr.bf16.mxu0 %v2311
        %2798 = vmatpush1.bf16.msra.mxu0 %v2310
        %2799 = vmatprep.subr.bf16.mxu0 %v2315
        %2800 = vmatpush1.bf16.msra.mxu0 %v2314
        %2801 = vmatprep.subr.bf16.mxu0 %v2319
        %2802 = vmatpush1.bf16.msra.mxu0 %v2318
        %2803 = vmatprep.subr.bf16.mxu0 %v2323
        %2804 = vmatpush1.bf16.msra.mxu0 %v2322
        %2805 = vmatprep.subr.bf16.mxu0 %v2327
        %2806 = vmatpush1.bf16.msra.mxu0 %v2326
        %2807 = vmatprep.subr.bf16.mxu0 %v2331
        %2808 = vmatpush1.bf16.msra.mxu0 %v2330
        %2809 = vmatprep.subr.bf16.mxu0 %v2335
        %2810 = vmatpush1.bf16.msra.mxu0 %v2334
        %2811 = vmatprep.subr.bf16.mxu0 %v2339
        %2812 = vmatpush1.bf16.msra.mxu0 %v2338
        %2813 = vmatprep.subr.bf16.mxu0 %v2343
        %2814 = vmatpush1.bf16.msra.mxu0 %v2342
        %2815 = vmatprep.subr.bf16.mxu0 %v2347
        %2816 = vmatpush1.bf16.msra.mxu0 %v2346
        %2817 = vmatprep.subr.bf16.mxu0 %v2351
        %2818 = vmatpush1.bf16.msra.mxu0 %v2350
        %2819 = vmatprep.subr.bf16.mxu0 %v2355
        %2820 = vmatpush1.bf16.msra.mxu0 %v2354
        %2821 = vmatprep.subr.bf16.mxu0 %v2359
        %2822 = vmatpush1.bf16.msra.mxu0 %v2358
        %2823 = vmatprep.subr.bf16.mxu0 %v2363
        %2824 = vmatpush1.bf16.msra.mxu0 %v2362
        %2825 = vmatprep.mubr.bf16.mxu0 %v1187
        %2826 = vmatmul.mubr.bf16.gmra.mrb[0].mxu0 %v1186
        %v2827 = vpop.f32.mrb[0].mxu0
        %v2828 = vadd.f32 %v2785, %v2827
        %v2829 = vpop.f32.mrb[0].mxu0
        %v2830 = vadd.f32 %v2787, %v2829
        %v2831 = vpop.f32.mrb[0].mxu0
        %v2832 = vadd.f32 %v2789, %v2831
        %v2833 = vpop.f32.mrb[0].mxu0
        %v2834 = vadd.f32 %v2791, %v2833
        %2835 = vdwg.mxu0
        %2836 = vmatprep.subr.bf16.mxu0 %v2367
        %2837 = vmatpush1.bf16.msra.mxu0 %v2366
        %2838 = vmatprep.subr.bf16.mxu0 %v2371
        %2839 = vmatpush1.bf16.msra.mxu0 %v2370
        %2840 = vmatprep.subr.bf16.mxu0 %v2375
        %2841 = vmatpush1.bf16.msra.mxu0 %v2374
        %2842 = vmatprep.subr.bf16.mxu0 %v2379
        %2843 = vmatpush1.bf16.msra.mxu0 %v2378
        %2844 = vmatprep.subr.bf16.mxu0 %v2383
        %2845 = vmatpush1.bf16.msra.mxu0 %v2382
        %2846 = vmatprep.subr.bf16.mxu0 %v2387
        %2847 = vmatpush1.bf16.msra.mxu0 %v2386
        %2848 = vmatprep.subr.bf16.mxu0 %v2391
        %2849 = vmatpush1.bf16.msra.mxu0 %v2390
        %2850 = vmatprep.subr.bf16.mxu0 %v2395
        %2851 = vmatpush1.bf16.msra.mxu0 %v2394
        %2852 = vmatprep.subr.bf16.mxu0 %v2399
        %2853 = vmatpush1.bf16.msra.mxu0 %v2398
        %2854 = vmatprep.subr.bf16.mxu0 %v2403
        %2855 = vmatpush1.bf16.msra.mxu0 %v2402
        %2856 = vmatprep.subr.bf16.mxu0 %v2407
        %2857 = vmatpush1.bf16.msra.mxu0 %v2406
        %2858 = vmatprep.subr.bf16.mxu0 %v2411
        %2859 = vmatpush1.bf16.msra.mxu0 %v2410
        %2860 = vmatprep.subr.bf16.mxu0 %v2415
        %2861 = vmatpush1.bf16.msra.mxu0 %v2414
        %2862 = vmatprep.subr.bf16.mxu0 %v2419
        %2863 = vmatpush1.bf16.msra.mxu0 %v2418
        %2864 = vmatprep.subr.bf16.mxu0 %v2423
        %2865 = vmatpush1.bf16.msra.mxu0 %v2422
        %2866 = vmatprep.subr.bf16.mxu0 %v2427
        %2867 = vmatpush1.bf16.msra.mxu0 %v2426
        %2868 = vmatprep.mubr.bf16.mxu0 %v1189
        %2869 = vmatmul.mubr.bf16.gmra.mrb[0].mxu0 %v1188
        %v2870 = vpop.f32.mrb[0].mxu0
        %v2871 = vadd.f32 %v2828, %v2870
        %v2872 = vpop.f32.mrb[0].mxu0
        %v2873 = vadd.f32 %v2830, %v2872
        %v2874 = vpop.f32.mrb[0].mxu0
        %v2875 = vadd.f32 %v2832, %v2874
        %v2876 = vpop.f32.mrb[0].mxu0
        %v2877 = vadd.f32 %v2834, %v2876
        %2878 = vdwg.mxu0
        %2879 = vmatprep.subr.bf16.mxu0 %v2431
        %2880 = vmatpush1.bf16.msra.mxu0 %v2430
        %2881 = vmatprep.subr.bf16.mxu0 %v2435
        %2882 = vmatpush1.bf16.msra.mxu0 %v2434
        %2883 = vmatprep.subr.bf16.mxu0 %v2439
        %2884 = vmatpush1.bf16.msra.mxu0 %v2438
        %2885 = vmatprep.subr.bf16.mxu0 %v2443
        %2886 = vmatpush1.bf16.msra.mxu0 %v2442
        %2887 = vmatprep.subr.bf16.mxu0 %v2447
        %2888 = vmatpush1.bf16.msra.mxu0 %v2446
        %2889 = vmatprep.subr.bf16.mxu0 %v2451
        %2890 = vmatpush1.bf16.msra.mxu0 %v2450
        %2891 = vmatprep.subr.bf16.mxu0 %v2455
        %2892 = vmatpush1.bf16.msra.mxu0 %v2454
        %2893 = vmatprep.subr.bf16.mxu0 %v2459
        %2894 = vmatpush1.bf16.msra.mxu0 %v2458
        %2895 = vmatprep.subr.bf16.mxu0 %v2463
        %2896 = vmatpush1.bf16.msra.mxu0 %v2462
        %2897 = vmatprep.subr.bf16.mxu0 %v2467
        %2898 = vmatpush1.bf16.msra.mxu0 %v2466
        %2899 = vmatprep.subr.bf16.mxu0 %v2471
        %2900 = vmatpush1.bf16.msra.mxu0 %v2470
        %2901 = vmatprep.subr.bf16.mxu0 %v2475
        %2902 = vmatpush1.bf16.msra.mxu0 %v2474
        %2903 = vmatprep.subr.bf16.mxu0 %v2479
        %2904 = vmatpush1.bf16.msra.mxu0 %v2478
        %2905 = vmatprep.subr.bf16.mxu0 %v2483
        %2906 = vmatpush1.bf16.msra.mxu0 %v2482
        %2907 = vmatprep.subr.bf16.mxu0 %v2487
        %2908 = vmatpush1.bf16.msra.mxu0 %v2486
        %2909 = vmatprep.subr.bf16.mxu0 %v2491
        %2910 = vmatpush1.bf16.msra.mxu0 %v2490
        %2911 = vmatprep.mubr.bf16.mxu0 %v1191
        %2912 = vmatmul.mubr.bf16.gmra.mrb[0].mxu0 %v1190
        %v2913 = vpop.f32.mrb[0].mxu0
        %v2914 = vadd.f32 %v2871, %v2913
        %v2915 = vpop.f32.mrb[0].mxu0
        %v2916 = vadd.f32 %v2873, %v2915
        %v2917 = vpop.f32.mrb[0].mxu0
        %v2918 = vadd.f32 %v2875, %v2917
        %v2919 = vpop.f32.mrb[0].mxu0
        %v2920 = vadd.f32 %v2877, %v2919
        %2921 = vdwg.mxu0
        %2922 = vmatprep.subr.bf16.mxu0 %v2241
        %2923 = vmatpush1.bf16.msra.mxu0 %v2240
        %2924 = vmatprep.subr.bf16.mxu0 %v2245
        %2925 = vmatpush1.bf16.msra.mxu0 %v2244
        %2926 = vmatprep.subr.bf16.mxu0 %v2249
        %2927 = vmatpush1.bf16.msra.mxu0 %v2248
        %2928 = vmatprep.subr.bf16.mxu0 %v2253
        %2929 = vmatpush1.bf16.msra.mxu0 %v2252
        %2930 = vmatprep.subr.bf16.mxu0 %v2257
        %2931 = vmatpush1.bf16.msra.mxu0 %v2256
        %2932 = vmatprep.subr.bf16.mxu0 %v2261
        %2933 = vmatpush1.bf16.msra.mxu0 %v2260
        %2934 = vmatprep.subr.bf16.mxu0 %v2265
        %2935 = vmatpush1.bf16.msra.mxu0 %v2264
        %2936 = vmatprep.subr.bf16.mxu0 %v2269
        %2937 = vmatpush1.bf16.msra.mxu0 %v2268
        %2938 = vmatprep.subr.bf16.mxu0 %v2273
        %2939 = vmatpush1.bf16.msra.mxu0 %v2272
        %2940 = vmatprep.subr.bf16.mxu0 %v2277
        %2941 = vmatpush1.bf16.msra.mxu0 %v2276
        %2942 = vmatprep.subr.bf16.mxu0 %v2281
        %2943 = vmatpush1.bf16.msra.mxu0 %v2280
        %2944 = vmatprep.subr.bf16.mxu0 %v2285
        %2945 = vmatpush1.bf16.msra.mxu0 %v2284
        %2946 = vmatprep.subr.bf16.mxu0 %v2289
        %2947 = vmatpush1.bf16.msra.mxu0 %v2288
        %2948 = vmatprep.subr.bf16.mxu0 %v2293
        %2949 = vmatpush1.bf16.msra.mxu0 %v2292
        %2950 = vmatprep.subr.bf16.mxu0 %v2297
        %2951 = vmatpush1.bf16.msra.mxu0 %v2296
        %2952 = vmatprep.subr.bf16.mxu0 %v2301
        %2953 = vmatpush1.bf16.msra.mxu0 %v2300
        %2954 = vmatprep.mubr.bf16.mxu0 %v1185
        %2955 = vmatmul.mubr.bf16.gmra.mrb[0].mxu0 %v1184
        %v2956 = vpop.f32.mrb[0].mxu0
        %v2957 = vadd.f32 %v1461, %v2956
        %v2958 = vpop.f32.mrb[0].mxu0
        %v2959 = vadd.f32 %v1465, %v2958
        %v2960 = vpop.f32.mrb[0].mxu0
        %v2961 = vadd.f32 %v1461, %v2960
        %v2962 = vpop.f32.mrb[0].mxu0
        %v2963 = vadd.f32 %v1465, %v2962
        %2964 = vdwg.mxu0
        %2965 = vmatprep.subr.bf16.mxu0 %v2305
        %2966 = vmatpush1.bf16.msra.mxu0 %v2304
        %2967 = vmatprep.subr.bf16.mxu0 %v2309
        %2968 = vmatpush1.bf16.msra.mxu0 %v2308
        %2969 = vmatprep.subr.bf16.mxu0 %v2313
        %2970 = vmatpush1.bf16.msra.mxu0 %v2312
        %2971 = vmatprep.subr.bf16.mxu0 %v2317
        %2972 = vmatpush1.bf16.msra.mxu0 %v2316
        %2973 = vmatprep.subr.bf16.mxu0 %v2321
        %2974 = vmatpush1.bf16.msra.mxu0 %v2320
        %2975 = vmatprep.subr.bf16.mxu0 %v2325
        %2976 = vmatpush1.bf16.msra.mxu0 %v2324
        %2977 = vmatprep.subr.bf16.mxu0 %v2329
        %2978 = vmatpush1.bf16.msra.mxu0 %v2328
        %2979 = vmatprep.subr.bf16.mxu0 %v2333
        %2980 = vmatpush1.bf16.msra.mxu0 %v2332
        %2981 = vmatprep.subr.bf16.mxu0 %v2337
        %2982 = vmatpush1.bf16.msra.mxu0 %v2336
        %2983 = vmatprep.subr.bf16.mxu0 %v2341
        %2984 = vmatpush1.bf16.msra.mxu0 %v2340
        %2985 = vmatprep.subr.bf16.mxu0 %v2345
        %2986 = vmatpush1.bf16.msra.mxu0 %v2344
        %2987 = vmatprep.subr.bf16.mxu0 %v2349
        %2988 = vmatpush1.bf16.msra.mxu0 %v2348
        %2989 = vmatprep.subr.bf16.mxu0 %v2353
        %2990 = vmatpush1.bf16.msra.mxu0 %v2352
        %2991 = vmatprep.subr.bf16.mxu0 %v2357
        %2992 = vmatpush1.bf16.msra.mxu0 %v2356
        %2993 = vmatprep.subr.bf16.mxu0 %v2361
        %2994 = vmatpush1.bf16.msra.mxu0 %v2360
        %2995 = vmatprep.subr.bf16.mxu0 %v2365
        %2996 = vmatpush1.bf16.msra.mxu0 %v2364
        %2997 = vmatprep.mubr.bf16.mxu0 %v1187
        %2998 = vmatmul.mubr.bf16.gmra.mrb[0].mxu0 %v1186
        %v2999 = vpop.f32.mrb[0].mxu0
        %v3000 = vadd.f32 %v2957, %v2999
        %v3001 = vpop.f32.mrb[0].mxu0
        %v3002 = vadd.f32 %v2959, %v3001
        %v3003 = vpop.f32.mrb[0].mxu0
        %v3004 = vadd.f32 %v2961, %v3003
        %v3005 = vpop.f32.mrb[0].mxu0
        %v3006 = vadd.f32 %v2963, %v3005
        %3007 = vdwg.mxu0
        %3008 = vmatprep.subr.bf16.mxu0 %v2369
        %3009 = vmatpush1.bf16.msra.mxu0 %v2368
        %3010 = vmatprep.subr.bf16.mxu0 %v2373
        %3011 = vmatpush1.bf16.msra.mxu0 %v2372
        %3012 = vmatprep.subr.bf16.mxu0 %v2377
        %3013 = vmatpush1.bf16.msra.mxu0 %v2376
        %3014 = vmatprep.subr.bf16.mxu0 %v2381
        %3015 = vmatpush1.bf16.msra.mxu0 %v2380
        %3016 = vmatprep.subr.bf16.mxu0 %v2385
        %3017 = vmatpush1.bf16.msra.mxu0 %v2384
        %3018 = vmatprep.subr.bf16.mxu0 %v2389
        %3019 = vmatpush1.bf16.msra.mxu0 %v2388
        %3020 = vmatprep.subr.bf16.mxu0 %v2393
        %3021 = vmatpush1.bf16.msra.mxu0 %v2392
        %3022 = vmatprep.subr.bf16.mxu0 %v2397
        %3023 = vmatpush1.bf16.msra.mxu0 %v2396
        %3024 = vmatprep.subr.bf16.mxu0 %v2401
        %3025 = vmatpush1.bf16.msra.mxu0 %v2400
        %3026 = vmatprep.subr.bf16.mxu0 %v2405
        %3027 = vmatpush1.bf16.msra.mxu0 %v2404
        %3028 = vmatprep.subr.bf16.mxu0 %v2409
        %3029 = vmatpush1.bf16.msra.mxu0 %v2408
        %3030 = vmatprep.subr.bf16.mxu0 %v2413
        %3031 = vmatpush1.bf16.msra.mxu0 %v2412
        %3032 = vmatprep.subr.bf16.mxu0 %v2417
        %3033 = vmatpush1.bf16.msra.mxu0 %v2416
        %3034 = vmatprep.subr.bf16.mxu0 %v2421
        %3035 = vmatpush1.bf16.msra.mxu0 %v2420
        %3036 = vmatprep.subr.bf16.mxu0 %v2425
        %3037 = vmatpush1.bf16.msra.mxu0 %v2424
        %3038 = vmatprep.subr.bf16.mxu0 %v2429
        %3039 = vmatpush1.bf16.msra.mxu0 %v2428
        %3040 = vmatprep.mubr.bf16.mxu0 %v1189
        %3041 = vmatmul.mubr.bf16.gmra.mrb[0].mxu0 %v1188
        %v3042 = vpop.f32.mrb[0].mxu0
        %v3043 = vadd.f32 %v3000, %v3042
        %v3044 = vpop.f32.mrb[0].mxu0
        %v3045 = vadd.f32 %v3002, %v3044
        %v3046 = vpop.f32.mrb[0].mxu0
        %v3047 = vadd.f32 %v3004, %v3046
        %v3048 = vpop.f32.mrb[0].mxu0
        %v3049 = vadd.f32 %v3006, %v3048
        %3050 = vdwg.mxu0
        %3051 = vmatprep.subr.bf16.mxu0 %v2433
        %3052 = vmatpush1.bf16.msra.mxu0 %v2432
        %3053 = vmatprep.subr.bf16.mxu0 %v2437
        %3054 = vmatpush1.bf16.msra.mxu0 %v2436
        %3055 = vmatprep.subr.bf16.mxu0 %v2441
        %3056 = vmatpush1.bf16.msra.mxu0 %v2440
        %3057 = vmatprep.subr.bf16.mxu0 %v2445
        %3058 = vmatpush1.bf16.msra.mxu0 %v2444
        %3059 = vmatprep.subr.bf16.mxu0 %v2449
        %3060 = vmatpush1.bf16.msra.mxu0 %v2448
        %3061 = vmatprep.subr.bf16.mxu0 %v2453
        %3062 = vmatpush1.bf16.msra.mxu0 %v2452
        %3063 = vmatprep.subr.bf16.mxu0 %v2457
        %3064 = vmatpush1.bf16.msra.mxu0 %v2456
        %3065 = vmatprep.subr.bf16.mxu0 %v2461
        %3066 = vmatpush1.bf16.msra.mxu0 %v2460
        %3067 = vmatprep.subr.bf16.mxu0 %v2465
        %3068 = vmatpush1.bf16.msra.mxu0 %v2464
        %3069 = vmatprep.subr.bf16.mxu0 %v2469
        %3070 = vmatpush1.bf16.msra.mxu0 %v2468
        %3071 = vmatprep.subr.bf16.mxu0 %v2473
        %3072 = vmatpush1.bf16.msra.mxu0 %v2472
        %3073 = vmatprep.subr.bf16.mxu0 %v2477
        %3074 = vmatpush1.bf16.msra.mxu0 %v2476
        %3075 = vmatprep.subr.bf16.mxu0 %v2481
        %3076 = vmatpush1.bf16.msra.mxu0 %v2480
        %3077 = vmatprep.subr.bf16.mxu0 %v2485
        %3078 = vmatpush1.bf16.msra.mxu0 %v2484
        %3079 = vmatprep.subr.bf16.mxu0 %v2489
        %3080 = vmatpush1.bf16.msra.mxu0 %v2488
        %3081 = vmatprep.subr.bf16.mxu0 %v2493
        %3082 = vmatpush1.bf16.msra.mxu0 %v2492
        %3083 = vmatprep.mubr.bf16.mxu0 %v1191
        %3084 = vmatmul.mubr.bf16.gmra.mrb[0].mxu0 %v1190
        %v3085 = vpop.f32.mrb[0].mxu0
        %v3086 = vadd.f32 %v3043, %v3085
        %v3087 = vpop.f32.mrb[0].mxu0
        %v3088 = vadd.f32 %v3045, %v3087
        %v3089 = vpop.f32.mrb[0].mxu0
        %v3090 = vadd.f32 %v3047, %v3089
        %v3091 = vpop.f32.mrb[0].mxu0
        %v3092 = vadd.f32 %v3049, %v3091
        %3093 = vdwg.mxu0
        %v3094 = vmax.f32 %v2914, 0.0
        %v3095 = vmax.f32 %v2916, 0.0
        %v3096 = vmax.f32 %v3086, 0.0
        %v3097 = vmax.f32 %v3088, 0.0
        %v3098 = vmax.f32 %v2918, 0.0
        %v3099 = vmax.f32 %v2920, 0.0
        %v3100 = vmax.f32 %v3090, 0.0
        %v3101 = vmax.f32 %v3092, 0.0
        %v3102 = vpack.c.bf16 %v3098, %v3094
        %v3103 = vpack.c.bf16 %v3099, %v3095
        %v3104 = vpack.c.bf16 %v3100, %v3096
        %v3105 = vpack.c.bf16 %v3101, %v3097
        %v3106 = vld [vmem:[#allocation10] sm:$0xf]
        %v3107 = vld [vmem:[#allocation10 + $0x4] sm:$0xf]
        %v3108 = vld [vmem:[#allocation10 + $0x8] sm:$0xf]
        %v3109 = vld [vmem:[#allocation10 + $0xc] sm:$0xf]
        %v3110 = vld [vmem:[#allocation10 + $0x10] sm:$0xf]
        %v3111 = vld [vmem:[#allocation10 + $0x14] sm:$0xf]
        %v3112 = vld [vmem:[#allocation10 + $0x18] sm:$0xf]
        %v3113 = vld [vmem:[#allocation10 + $0x1c] sm:$0xf]
        %v3114 = vld [vmem:[#allocation10 + $0x20] sm:$0xf]
        %v3115 = vld [vmem:[#allocation10 + $0x24] sm:$0xf]
        %v3116 = vld [vmem:[#allocation10 + $0x28] sm:$0xf]
        %v3117 = vld [vmem:[#allocation10 + $0x2c] sm:$0xf]
        %v3118 = vld [vmem:[#allocation10 + $0x30] sm:$0xf]
        %v3119 = vld [vmem:[#allocation10 + $0x34] sm:$0xf]
        %v3120 = vld [vmem:[#allocation10 + $0x38] sm:$0xf]
        %v3121 = vld [vmem:[#allocation10 + $0x3c] sm:$0xf]
        %v3122 = vld [vmem:[#allocation10 + $0x40] sm:$0xf]
        %v3123 = vld [vmem:[#allocation10 + $0x44] sm:$0xf]
        %v3124 = vld [vmem:[#allocation10 + $0x48] sm:$0xf]
        %v3125 = vld [vmem:[#allocation10 + $0x4c] sm:$0xf]
        %v3126 = vld [vmem:[#allocation10 + $0x50] sm:$0xf]
        %v3127 = vld [vmem:[#allocation10 + $0x54] sm:$0xf]
        %v3128 = vld [vmem:[#allocation10 + $0x58] sm:$0xf]
        %v3129 = vld [vmem:[#allocation10 + $0x5c] sm:$0xf]
        %v3130 = vld [vmem:[#allocation10 + $0x60] sm:$0xf]
        %v3131 = vld [vmem:[#allocation10 + $0x64] sm:$0xf]
        %v3132 = vld [vmem:[#allocation10 + $0x68] sm:$0xf]
        %v3133 = vld [vmem:[#allocation10 + $0x6c] sm:$0xf]
        %v3134 = vld [vmem:[#allocation10 + $0x70] sm:$0xf]
        %v3135 = vld [vmem:[#allocation10 + $0x74] sm:$0xf]
        %v3136 = vld [vmem:[#allocation10 + $0x78] sm:$0xf]
        %v3137 = vld [vmem:[#allocation10 + $0x7c] sm:$0xf]
        %v3138 = vld [vmem:[#allocation10 + $0x80] sm:$0xf]
        %v3139 = vld [vmem:[#allocation10 + $0x84] sm:$0xf]
        %v3140 = vld [vmem:[#allocation10 + $0x88] sm:$0xf]
        %v3141 = vld [vmem:[#allocation10 + $0x8c] sm:$0xf]
        %v3142 = vld [vmem:[#allocation10 + $0x90] sm:$0xf]
        %v3143 = vld [vmem:[#allocation10 + $0x94] sm:$0xf]
        %v3144 = vld [vmem:[#allocation10 + $0x98] sm:$0xf]
        %v3145 = vld [vmem:[#allocation10 + $0x9c] sm:$0xf]
        %v3146 = vld [vmem:[#allocation10 + $0xa0] sm:$0xf]
        %v3147 = vld [vmem:[#allocation10 + $0xa4] sm:$0xf]
        %v3148 = vld [vmem:[#allocation10 + $0xa8] sm:$0xf]
        %v3149 = vld [vmem:[#allocation10 + $0xac] sm:$0xf]
        %v3150 = vld [vmem:[#allocation10 + $0xb0] sm:$0xf]
        %v3151 = vld [vmem:[#allocation10 + $0xb4] sm:$0xf]
        %v3152 = vld [vmem:[#allocation10 + $0xb8] sm:$0xf]
        %v3153 = vld [vmem:[#allocation10 + $0xbc] sm:$0xf]
        %v3154 = vld [vmem:[#allocation10 + $0xc0] sm:$0xf]
        %v3155 = vld [vmem:[#allocation10 + $0xc4] sm:$0xf]
        %v3156 = vld [vmem:[#allocation10 + $0xc8] sm:$0xf]
        %v3157 = vld [vmem:[#allocation10 + $0xcc] sm:$0xf]
        %v3158 = vld [vmem:[#allocation10 + $0xd0] sm:$0xf]
        %v3159 = vld [vmem:[#allocation10 + $0xd4] sm:$0xf]
        %v3160 = vld [vmem:[#allocation10 + $0xd8] sm:$0xf]
        %v3161 = vld [vmem:[#allocation10 + $0xdc] sm:$0xf]
        %v3162 = vld [vmem:[#allocation10 + $0xe0] sm:$0xf]
        %v3163 = vld [vmem:[#allocation10 + $0xe4] sm:$0xf]
        %v3164 = vld [vmem:[#allocation10 + $0xe8] sm:$0xf]
        %v3165 = vld [vmem:[#allocation10 + $0xec] sm:$0xf]
        %v3166 = vld [vmem:[#allocation10 + $0xf0] sm:$0xf]
        %v3167 = vld [vmem:[#allocation10 + $0xf4] sm:$0xf]
        %v3168 = vld [vmem:[#allocation10 + $0xf8] sm:$0xf]
        %v3169 = vld [vmem:[#allocation10 + $0xfc] sm:$0xf]
        %v3170 = vld [vmem:[%s6] sm:$0x1]
        %v3172 = vlaneseq
        %v3173 = vshrl.u32 %v3172, 7
        %v3174 = vsub.s32 0, %v3173
        %v3175 = vrot.slane %v3170, %v3174
        %v3241 = vunpack.c.l.b16 %v3106
        %v3242 = vunpack.c.l.b16 %v3107
        %v3243 = vunpack.c.l.b16 %v3108
        %v3244 = vunpack.c.l.b16 %v3109
        %v3245 = vunpack.c.l.b16 %v3110
        %v3246 = vunpack.c.l.b16 %v3111
        %v3247 = vunpack.c.l.b16 %v3112
        %v3248 = vunpack.c.l.b16 %v3113
        %v3249 = vunpack.c.l.b16 %v3114
        %v3250 = vunpack.c.l.b16 %v3115
        %v3251 = vunpack.c.l.b16 %v3116
        %v3252 = vunpack.c.l.b16 %v3117
        %v3253 = vunpack.c.l.b16 %v3118
        %v3254 = vunpack.c.l.b16 %v3119
        %v3255 = vunpack.c.l.b16 %v3120
        %v3256 = vunpack.c.l.b16 %v3121
        %v3257 = vunpack.c.l.b16 %v3122
        %v3258 = vunpack.c.l.b16 %v3123
        %v3259 = vunpack.c.l.b16 %v3124
        %v3260 = vunpack.c.l.b16 %v3125
        %v3261 = vunpack.c.l.b16 %v3126
        %v3262 = vunpack.c.l.b16 %v3127
        %v3263 = vunpack.c.l.b16 %v3128
        %v3264 = vunpack.c.l.b16 %v3129
        %v3265 = vunpack.c.l.b16 %v3130
        %v3266 = vunpack.c.l.b16 %v3131
        %v3267 = vunpack.c.l.b16 %v3132
        %v3268 = vunpack.c.l.b16 %v3133
        %v3269 = vunpack.c.l.b16 %v3134
        %v3270 = vunpack.c.l.b16 %v3135
        %v3271 = vunpack.c.l.b16 %v3136
        %v3272 = vunpack.c.l.b16 %v3137
        %v3273 = vunpack.c.l.b16 %v3138
        %v3274 = vunpack.c.l.b16 %v3139
        %v3275 = vunpack.c.l.b16 %v3140
        %v3276 = vunpack.c.l.b16 %v3141
        %v3277 = vunpack.c.l.b16 %v3142
        %v3278 = vunpack.c.l.b16 %v3143
        %v3279 = vunpack.c.l.b16 %v3144
        %v3280 = vunpack.c.l.b16 %v3145
        %v3281 = vunpack.c.l.b16 %v3146
        %v3282 = vunpack.c.l.b16 %v3147
        %v3283 = vunpack.c.l.b16 %v3148
        %v3284 = vunpack.c.l.b16 %v3149
        %v3285 = vunpack.c.l.b16 %v3150
        %v3286 = vunpack.c.l.b16 %v3151
        %v3287 = vunpack.c.l.b16 %v3152
        %v3288 = vunpack.c.l.b16 %v3153
        %v3289 = vunpack.c.l.b16 %v3154
        %v3290 = vunpack.c.l.b16 %v3155
        %v3291 = vunpack.c.l.b16 %v3156
        %v3292 = vunpack.c.l.b16 %v3157
        %v3293 = vunpack.c.l.b16 %v3158
        %v3294 = vunpack.c.l.b16 %v3159
        %v3295 = vunpack.c.l.b16 %v3160
        %v3296 = vunpack.c.l.b16 %v3161
        %v3297 = vunpack.c.l.b16 %v3162
        %v3298 = vunpack.c.l.b16 %v3163
        %v3299 = vunpack.c.l.b16 %v3164
        %v3300 = vunpack.c.l.b16 %v3165
        %v3301 = vunpack.c.l.b16 %v3166
        %v3302 = vunpack.c.l.b16 %v3167
        %v3303 = vunpack.c.l.b16 %v3168
        %v3304 = vunpack.c.l.b16 %v3169
        %v3305 = vpack.c.b16 %v3242, %v3241
        %v3306 = vpack.c.b16 %v3244, %v3243
        %v3307 = vpack.c.b16 %v3246, %v3245
        %v3308 = vpack.c.b16 %v3248, %v3247
        %v3309 = vpack.c.b16 %v3250, %v3249
        %v3310 = vpack.c.b16 %v3252, %v3251
        %v3311 = vpack.c.b16 %v3254, %v3253
        %v3312 = vpack.c.b16 %v3256, %v3255
        %v3313 = vpack.c.b16 %v3258, %v3257
        %v3314 = vpack.c.b16 %v3260, %v3259
        %v3315 = vpack.c.b16 %v3262, %v3261
        %v3316 = vpack.c.b16 %v3264, %v3263
        %v3317 = vpack.c.b16 %v3266, %v3265
        %v3318 = vpack.c.b16 %v3268, %v3267
        %v3319 = vpack.c.b16 %v3270, %v3269
        %v3320 = vpack.c.b16 %v3272, %v3271
        %v3321 = vpack.c.b16 %v3274, %v3273
        %v3322 = vpack.c.b16 %v3276, %v3275
        %v3323 = vpack.c.b16 %v3278, %v3277
        %v3324 = vpack.c.b16 %v3280, %v3279
        %v3325 = vpack.c.b16 %v3282, %v3281
        %v3326 = vpack.c.b16 %v3284, %v3283
        %v3327 = vpack.c.b16 %v3286, %v3285
        %v3328 = vpack.c.b16 %v3288, %v3287
        %v3329 = vpack.c.b16 %v3290, %v3289
        %v3330 = vpack.c.b16 %v3292, %v3291
        %v3331 = vpack.c.b16 %v3294, %v3293
        %v3332 = vpack.c.b16 %v3296, %v3295
        %v3333 = vpack.c.b16 %v3298, %v3297
        %v3334 = vpack.c.b16 %v3300, %v3299
        %v3335 = vpack.c.b16 %v3302, %v3301
        %v3336 = vpack.c.b16 %v3304, %v3303
        %3369 = vmatprep.subr.bf16.mxu0 0
        %3370 = vmatpush1.bf16.msra.mxu0 %v3305
        %3371 = vmatprep.subr.bf16.mxu0 0
        %3372 = vmatpush1.bf16.msra.mxu0 %v3306
        %3373 = vmatprep.subr.bf16.mxu0 0
        %3374 = vmatpush1.bf16.msra.mxu0 %v3307
        %3375 = vmatprep.subr.bf16.mxu0 0
        %3376 = vmatpush1.bf16.msra.mxu0 %v3308
        %3377 = vmatprep.subr.bf16.mxu0 0
        %3378 = vmatpush1.bf16.msra.mxu0 %v3309
        %3379 = vmatprep.subr.bf16.mxu0 0
        %3380 = vmatpush1.bf16.msra.mxu0 %v3310
        %3381 = vmatprep.subr.bf16.mxu0 0
        %3382 = vmatpush1.bf16.msra.mxu0 %v3311
        %3383 = vmatprep.subr.bf16.mxu0 0
        %3384 = vmatpush1.bf16.msra.mxu0 %v3312
        %3385 = vmatprep.subr.bf16.mxu0 0
        %3386 = vmatpush1.bf16.msra.mxu0 %v3313
        %3387 = vmatprep.subr.bf16.mxu0 0
        %3388 = vmatpush1.bf16.msra.mxu0 %v3314
        %3389 = vmatprep.subr.bf16.mxu0 0
        %3390 = vmatpush1.bf16.msra.mxu0 %v3315
        %3391 = vmatprep.subr.bf16.mxu0 0
        %3392 = vmatpush1.bf16.msra.mxu0 %v3316
        %3393 = vmatprep.subr.bf16.mxu0 0
        %3394 = vmatpush1.bf16.msra.mxu0 %v3317
        %3395 = vmatprep.subr.bf16.mxu0 0
        %3396 = vmatpush1.bf16.msra.mxu0 %v3318
        %3397 = vmatprep.subr.bf16.mxu0 0
        %3398 = vmatpush1.bf16.msra.mxu0 %v3319
        %3399 = vmatprep.subr.bf16.mxu0 0
        %3400 = vmatpush1.bf16.msra.mxu0 %v3320
        %3401 = vmatprep.mubr.bf16.mxu0 %v3103
        %3402 = vmatmul.mubr.bf16.gmra.mrb[0].mxu0 %v3102
        %v3403 = vpop.f32.mrb[0].mxu0
        %v3404 = vadd.f32 %v3175, %v3403
        %v3405 = vpop.f32.mrb[0].mxu0
        %v3406 = vpop.f32.mrb[0].mxu0
        %v3407 = vadd.f32 %v3175, %v3406
        %v3408 = vpop.f32.mrb[0].mxu0
        %3409 = vdwg.mxu0
        %3410 = vmatprep.subr.bf16.mxu0 0
        %3411 = vmatpush1.bf16.msra.mxu0 %v3321
        %3412 = vmatprep.subr.bf16.mxu0 0
        %3413 = vmatpush1.bf16.msra.mxu0 %v3322
        %3414 = vmatprep.subr.bf16.mxu0 0
        %3415 = vmatpush1.bf16.msra.mxu0 %v3323
        %3416 = vmatprep.subr.bf16.mxu0 0
        %3417 = vmatpush1.bf16.msra.mxu0 %v3324
        %3418 = vmatprep.subr.bf16.mxu0 0
        %3419 = vmatpush1.bf16.msra.mxu0 %v3325
        %3420 = vmatprep.subr.bf16.mxu0 0
        %3421 = vmatpush1.bf16.msra.mxu0 %v3326
        %3422 = vmatprep.subr.bf16.mxu0 0
        %3423 = vmatpush1.bf16.msra.mxu0 %v3327
        %3424 = vmatprep.subr.bf16.mxu0 0
        %3425 = vmatpush1.bf16.msra.mxu0 %v3328
        %3426 = vmatprep.subr.bf16.mxu0 0
        %3427 = vmatpush1.bf16.msra.mxu0 %v3329
        %3428 = vmatprep.subr.bf16.mxu0 0
        %3429 = vmatpush1.bf16.msra.mxu0 %v3330
        %3430 = vmatprep.subr.bf16.mxu0 0
        %3431 = vmatpush1.bf16.msra.mxu0 %v3331
        %3432 = vmatprep.subr.bf16.mxu0 0
        %3433 = vmatpush1.bf16.msra.mxu0 %v3332
        %3434 = vmatprep.subr.bf16.mxu0 0
        %3435 = vmatpush1.bf16.msra.mxu0 %v3333
        %3436 = vmatprep.subr.bf16.mxu0 0
        %3437 = vmatpush1.bf16.msra.mxu0 %v3334
        %3438 = vmatprep.subr.bf16.mxu0 0
        %3439 = vmatpush1.bf16.msra.mxu0 %v3335
        %3440 = vmatprep.subr.bf16.mxu0 0
        %3441 = vmatpush1.bf16.msra.mxu0 %v3336
        %3442 = vmatprep.mubr.bf16.mxu0 %v3105
        %3443 = vmatmul.mubr.bf16.gmra.mrb[0].mxu0 %v3104
        %v3444 = vpop.f32.mrb[0].mxu0
        %v3445 = vadd.f32 %v3404, %v3444
        %v3446 = vpop.f32.mrb[0].mxu0
        %v3447 = vpop.f32.mrb[0].mxu0
        %v3448 = vadd.f32 %v3407, %v3447
        %v3449 = vpop.f32.mrb[0].mxu0
        %3450 = vdwg.mxu0
        %v3451 = vmax.f32 %v3445, 0.0
        %v3452 = vmax.f32 %v3448, 0.0
        %v3453 = vpack.c.bf16 %v3452, %v3451
        %v3454 = vld [vmem:[#allocation11] sm:$0xff]
        %v3455 = vld [vmem:[#allocation11 + $0x8] sm:$0xff]
        %v3456 = vld [vmem:[#allocation11 + $0x10] sm:$0xff]
        %v3457 = vld [vmem:[#allocation11 + $0x18] sm:$0xff]
        %v3458 = vld [vmem:[#allocation11 + $0x20] sm:$0xff]
        %v3459 = vld [vmem:[#allocation11 + $0x28] sm:$0xff]
        %v3460 = vld [vmem:[#allocation11 + $0x30] sm:$0xff]
        %v3461 = vld [vmem:[#allocation11 + $0x38] sm:$0xff]
        %v3462 = vld [vmem:[#allocation11 + $0x40] sm:$0xff]
        %v3463 = vld [vmem:[#allocation11 + $0x48] sm:$0xff]
        %v3464 = vld [vmem:[#allocation11 + $0x50] sm:$0xff]
        %v3465 = vld [vmem:[#allocation11 + $0x58] sm:$0xff]
        %v3466 = vld [vmem:[#allocation11 + $0x60] sm:$0xff]
        %v3467 = vld [vmem:[#allocation11 + $0x68] sm:$0xff]
        %v3468 = vld [vmem:[#allocation11 + $0x70] sm:$0xff]
        %v3469 = vld [vmem:[#allocation11 + $0x78] sm:$0xff]
        %v3470 = vld [vmem:[#allocation11 + $0x80] sm:$0xff]
        %v3471 = vld [vmem:[#allocation11 + $0x88] sm:$0xff]
        %v3472 = vld [vmem:[#allocation11 + $0x90] sm:$0xff]
        %v3473 = vld [vmem:[#allocation11 + $0x98] sm:$0xff]
        %v3474 = vld [vmem:[#allocation11 + $0xa0] sm:$0xff]
        %v3475 = vld [vmem:[#allocation11 + $0xa8] sm:$0xff]
        %v3476 = vld [vmem:[#allocation11 + $0xb0] sm:$0xff]
        %v3477 = vld [vmem:[#allocation11 + $0xb8] sm:$0xff]
        %v3478 = vld [vmem:[#allocation11 + $0xc0] sm:$0xff]
        %v3479 = vld [vmem:[#allocation11 + $0xc8] sm:$0xff]
        %v3480 = vld [vmem:[#allocation11 + $0xd0] sm:$0xff]
        %v3481 = vld [vmem:[#allocation11 + $0xd8] sm:$0xff]
        %v3482 = vld [vmem:[#allocation11 + $0xe0] sm:$0xff]
        %v3483 = vld [vmem:[#allocation11 + $0xe8] sm:$0xff]
        %v3484 = vld [vmem:[#allocation11 + $0xf0] sm:$0xff]
        %v3485 = vld [vmem:[#allocation11 + $0xf8] sm:$0xff]
        %v3486 = vld [vmem:[%s8] sm:$0xf]
        %v3488 = vlaneseq
        %v3489 = vshrl.u32 %v3488, 7
        %v3490 = vsub.s32 0, %v3489
        %v3491 = vrot.slane %v3486, %v3490
        %v3492 = vlaneseq
        %v3493 = vshrl.u32 %v3492, 7
        %v3494 = vsub.s32 1, %v3493
        %v3495 = vrot.slane %v3486, %v3494
        %v3496 = vlaneseq
        %v3497 = vshrl.u32 %v3496, 7
        %v3498 = vsub.s32 2, %v3497
        %v3499 = vrot.slane %v3486, %v3498
        %v3500 = vlaneseq
        %v3501 = vshrl.u32 %v3500, 7
        %v3502 = vsub.s32 3, %v3501
        %v3503 = vrot.slane %v3486, %v3502
        %v3540 = vunpack.c.l.b16 %v3454
        %v3541 = vunpack.c.h.b16 %v3454
        %v3542 = vunpack.c.l.b16 %v3455
        %v3543 = vunpack.c.h.b16 %v3455
        %v3544 = vunpack.c.l.b16 %v3456
        %v3545 = vunpack.c.h.b16 %v3456
        %v3546 = vunpack.c.l.b16 %v3457
        %v3547 = vunpack.c.h.b16 %v3457
        %v3548 = vunpack.c.l.b16 %v3458
        %v3549 = vunpack.c.h.b16 %v3458
        %v3550 = vunpack.c.l.b16 %v3459
        %v3551 = vunpack.c.h.b16 %v3459
        %v3552 = vunpack.c.l.b16 %v3460
        %v3553 = vunpack.c.h.b16 %v3460
        %v3554 = vunpack.c.l.b16 %v3461
        %v3555 = vunpack.c.h.b16 %v3461
        %v3556 = vunpack.c.l.b16 %v3462
        %v3557 = vunpack.c.h.b16 %v3462
        %v3558 = vunpack.c.l.b16 %v3463
        %v3559 = vunpack.c.h.b16 %v3463
        %v3560 = vunpack.c.l.b16 %v3464
        %v3561 = vunpack.c.h.b16 %v3464
        %v3562 = vunpack.c.l.b16 %v3465
        %v3563 = vunpack.c.h.b16 %v3465
        %v3564 = vunpack.c.l.b16 %v3466
        %v3565 = vunpack.c.h.b16 %v3466
        %v3566 = vunpack.c.l.b16 %v3467
        %v3567 = vunpack.c.h.b16 %v3467
        %v3568 = vunpack.c.l.b16 %v3468
        %v3569 = vunpack.c.h.b16 %v3468
        %v3570 = vunpack.c.l.b16 %v3469
        %v3571 = vunpack.c.h.b16 %v3469
        %v3572 = vunpack.c.l.b16 %v3470
        %v3573 = vunpack.c.h.b16 %v3470
        %v3574 = vunpack.c.l.b16 %v3471
        %v3575 = vunpack.c.h.b16 %v3471
        %v3576 = vunpack.c.l.b16 %v3472
        %v3577 = vunpack.c.h.b16 %v3472
        %v3578 = vunpack.c.l.b16 %v3473
        %v3579 = vunpack.c.h.b16 %v3473
        %v3580 = vunpack.c.l.b16 %v3474
        %v3581 = vunpack.c.h.b16 %v3474
        %v3582 = vunpack.c.l.b16 %v3475
        %v3583 = vunpack.c.h.b16 %v3475
        %v3584 = vunpack.c.l.b16 %v3476
        %v3585 = vunpack.c.h.b16 %v3476
        %v3586 = vunpack.c.l.b16 %v3477
        %v3587 = vunpack.c.h.b16 %v3477
        %v3588 = vunpack.c.l.b16 %v3478
        %v3589 = vunpack.c.h.b16 %v3478
        %v3590 = vunpack.c.l.b16 %v3479
        %v3591 = vunpack.c.h.b16 %v3479
        %v3592 = vunpack.c.l.b16 %v3480
        %v3593 = vunpack.c.h.b16 %v3480
        %v3594 = vunpack.c.l.b16 %v3481
        %v3595 = vunpack.c.h.b16 %v3481
        %v3596 = vunpack.c.l.b16 %v3482
        %v3597 = vunpack.c.h.b16 %v3482
        %v3598 = vunpack.c.l.b16 %v3483
        %v3599 = vunpack.c.h.b16 %v3483
        %v3600 = vunpack.c.l.b16 %v3484
        %v3601 = vunpack.c.h.b16 %v3484
        %v3602 = vunpack.c.l.b16 %v3485
        %v3603 = vunpack.c.h.b16 %v3485
        %v3604 = vpack.c.b16 %v3544, %v3540
        %v3605 = vpack.c.b16 %v3545, %v3541
        %v3606 = vpack.c.b16 %v3546, %v3542
        %v3607 = vpack.c.b16 %v3547, %v3543
        %v3608 = vpack.c.b16 %v3552, %v3548
        %v3609 = vpack.c.b16 %v3553, %v3549
        %v3610 = vpack.c.b16 %v3554, %v3550
        %v3611 = vpack.c.b16 %v3555, %v3551
        %v3612 = vpack.c.b16 %v3560, %v3556
        %v3613 = vpack.c.b16 %v3561, %v3557
        %v3614 = vpack.c.b16 %v3562, %v3558
        %v3615 = vpack.c.b16 %v3563, %v3559
        %v3616 = vpack.c.b16 %v3568, %v3564
        %v3617 = vpack.c.b16 %v3569, %v3565
        %v3618 = vpack.c.b16 %v3570, %v3566
        %v3619 = vpack.c.b16 %v3571, %v3567
        %v3620 = vpack.c.b16 %v3576, %v3572
        %v3621 = vpack.c.b16 %v3577, %v3573
        %v3622 = vpack.c.b16 %v3578, %v3574
        %v3623 = vpack.c.b16 %v3579, %v3575
        %v3624 = vpack.c.b16 %v3584, %v3580
        %v3625 = vpack.c.b16 %v3585, %v3581
        %v3626 = vpack.c.b16 %v3586, %v3582
        %v3627 = vpack.c.b16 %v3587, %v3583
        %v3628 = vpack.c.b16 %v3592, %v3588
        %v3629 = vpack.c.b16 %v3593, %v3589
        %v3630 = vpack.c.b16 %v3594, %v3590
        %v3631 = vpack.c.b16 %v3595, %v3591
        %v3632 = vpack.c.b16 %v3600, %v3596
        %v3633 = vpack.c.b16 %v3601, %v3597
        %v3634 = vpack.c.b16 %v3602, %v3598
        %v3635 = vpack.c.b16 %v3603, %v3599
        %3668 = vmatprep.subr.bf16.mxu0 %v3605
        %3669 = vmatpush1.bf16.msra.mxu0 %v3604
        %3670 = vmatprep.subr.bf16.mxu0 %v3609
        %3671 = vmatpush1.bf16.msra.mxu0 %v3608
        %3672 = vmatprep.subr.bf16.mxu0 %v3613
        %3673 = vmatpush1.bf16.msra.mxu0 %v3612
        %3674 = vmatprep.subr.bf16.mxu0 %v3617
        %3675 = vmatpush1.bf16.msra.mxu0 %v3616
        %3676 = vmatprep.subr.bf16.mxu0 %v3621
        %3677 = vmatpush1.bf16.msra.mxu0 %v3620
        %3678 = vmatprep.subr.bf16.mxu0 %v3625
        %3679 = vmatpush1.bf16.msra.mxu0 %v3624
        %3680 = vmatprep.subr.bf16.mxu0 %v3629
        %3681 = vmatpush1.bf16.msra.mxu0 %v3628
        %3682 = vmatprep.subr.bf16.mxu0 %v3633
        %3683 = vmatpush1.bf16.msra.mxu0 %v3632
        %3684 = vmatprep.subr.bf16.mxu0 0
        %3685 = vmatpush1.bf16.msra.mxu0 0
        %3686 = vmatprep.subr.bf16.mxu0 0
        %3687 = vmatpush1.bf16.msra.mxu0 0
        %3688 = vmatprep.subr.bf16.mxu0 0
        %3689 = vmatpush1.bf16.msra.mxu0 0
        %3690 = vmatprep.subr.bf16.mxu0 0
        %3691 = vmatpush1.bf16.msra.mxu0 0
        %3692 = vmatprep.subr.bf16.mxu0 0
        %3693 = vmatpush1.bf16.msra.mxu0 0
        %3694 = vmatprep.subr.bf16.mxu0 0
        %3695 = vmatpush1.bf16.msra.mxu0 0
        %3696 = vmatprep.subr.bf16.mxu0 0
        %3697 = vmatpush1.bf16.msra.mxu0 0
        %3698 = vmatprep.subr.bf16.mxu0 0
        %3699 = vmatpush1.bf16.msra.mxu0 0
        %3700 = vmatprep.mubr.bf16.mxu0 0
        %3701 = vmatmul.mubr.bf16.gmra.mrb[0].mxu0 %v3453
        %v3702 = vpop.f32.mrb[0].mxu0
        %v3703 = vadd.f32 %v3491, %v3702
        %v3704 = vpop.f32.mrb[0].mxu0
        %v3705 = vadd.f32 %v3495, %v3704
        %v3706 = vpop.f32.mrb[0].mxu0
        %v3707 = vadd.f32 %v3491, %v3706
        %v3708 = vpop.f32.mrb[0].mxu0
        %v3709 = vadd.f32 %v3495, %v3708
        %3710 = vdwg.mxu0
        %3711 = vmatprep.subr.bf16.mxu0 %v3607
        %3712 = vmatpush1.bf16.msra.mxu0 %v3606
        %3713 = vmatprep.subr.bf16.mxu0 %v3611
        %3714 = vmatpush1.bf16.msra.mxu0 %v3610
        %3715 = vmatprep.subr.bf16.mxu0 %v3615
        %3716 = vmatpush1.bf16.msra.mxu0 %v3614
        %3717 = vmatprep.subr.bf16.mxu0 %v3619
        %3718 = vmatpush1.bf16.msra.mxu0 %v3618
        %3719 = vmatprep.subr.bf16.mxu0 %v3623
        %3720 = vmatpush1.bf16.msra.mxu0 %v3622
        %3721 = vmatprep.subr.bf16.mxu0 %v3627
        %3722 = vmatpush1.bf16.msra.mxu0 %v3626
        %3723 = vmatprep.subr.bf16.mxu0 %v3631
        %3724 = vmatpush1.bf16.msra.mxu0 %v3630
        %3725 = vmatprep.subr.bf16.mxu0 %v3635
        %3726 = vmatpush1.bf16.msra.mxu0 %v3634
        %3727 = vmatprep.subr.bf16.mxu0 0
        %3728 = vmatpush1.bf16.msra.mxu0 0
        %3729 = vmatprep.subr.bf16.mxu0 0
        %3730 = vmatpush1.bf16.msra.mxu0 0
        %3731 = vmatprep.subr.bf16.mxu0 0
        %3732 = vmatpush1.bf16.msra.mxu0 0
        %3733 = vmatprep.subr.bf16.mxu0 0
        %3734 = vmatpush1.bf16.msra.mxu0 0
        %3735 = vmatprep.subr.bf16.mxu0 0
        %3736 = vmatpush1.bf16.msra.mxu0 0
        %3737 = vmatprep.subr.bf16.mxu0 0
        %3738 = vmatpush1.bf16.msra.mxu0 0
        %3739 = vmatprep.subr.bf16.mxu0 0
        %3740 = vmatpush1.bf16.msra.mxu0 0
        %3741 = vmatprep.subr.bf16.mxu0 0
        %3742 = vmatpush1.bf16.msra.mxu0 0
        %3743 = vmatprep.mubr.bf16.mxu0 0
        %3744 = vmatmul.mubr.bf16.gmra.mrb[0].mxu0 %v3453
        %v3745 = vpop.f32.mrb[0].mxu0
        %v3746 = vadd.f32 %v3499, %v3745
        %v3747 = vpop.f32.mrb[0].mxu0
        %v3748 = vadd.f32 %v3503, %v3747
        %v3749 = vpop.f32.mrb[0].mxu0
        %v3750 = vadd.f32 %v3499, %v3749
        %v3751 = vpop.f32.mrb[0].mxu0
        %v3752 = vadd.f32 %v3503, %v3751
        %3753 = vdwg.mxu0
        %v3754 = vmax.f32 %v3703, 0.0
        %v3755 = vmax.f32 %v3705, 0.0
        %v3756 = vmax.f32 %v3746, 0.0
        %v3757 = vmax.f32 %v3748, 0.0
        %v3758 = vmax.f32 %v3707, 0.0
        %v3759 = vmax.f32 %v3709, 0.0
        %v3760 = vmax.f32 %v3750, 0.0
        %v3761 = vmax.f32 %v3752, 0.0
        %v3762 = vpack.c.bf16 %v3758, %v3754
        %v3763 = vpack.c.bf16 %v3759, %v3755
        %v3764 = vpack.c.bf16 %v3760, %v3756
        %v3765 = vpack.c.bf16 %v3761, %v3757
        %v3766 = vld [vmem:[#allocation13] sm:$0xff]
        %v3767 = vld [vmem:[#allocation13 + $0x8] sm:$0xff]
        %v3768 = vld [vmem:[#allocation13 + $0x10] sm:$0xff]
        %v3769 = vld [vmem:[#allocation13 + $0x18] sm:$0xff]
        %v3770 = vld [vmem:[#allocation13 + $0x20] sm:$0xff]
        %v3771 = vld [vmem:[#allocation13 + $0x28] sm:$0xff]
        %v3772 = vld [vmem:[#allocation13 + $0x30] sm:$0xff]
        %v3773 = vld [vmem:[#allocation13 + $0x38] sm:$0xff]
        %v3774 = vld [vmem:[#allocation13 + $0x40] sm:$0xff]
        %v3775 = vld [vmem:[#allocation13 + $0x48] sm:$0xff]
        %v3776 = vld [vmem:[#allocation13 + $0x50] sm:$0xff]
        %v3777 = vld [vmem:[#allocation13 + $0x58] sm:$0xff]
        %v3778 = vld [vmem:[#allocation13 + $0x60] sm:$0xff]
        %v3779 = vld [vmem:[#allocation13 + $0x68] sm:$0xff]
        %v3780 = vld [vmem:[#allocation13 + $0x70] sm:$0xff]
        %v3781 = vld [vmem:[#allocation13 + $0x78] sm:$0xff]
        %v3782 = vld [vmem:[#allocation13 + $0x80] sm:$0xff]
        %v3783 = vld [vmem:[#allocation13 + $0x88] sm:$0xff]
        %v3784 = vld [vmem:[#allocation13 + $0x90] sm:$0xff]
        %v3785 = vld [vmem:[#allocation13 + $0x98] sm:$0xff]
        %v3786 = vld [vmem:[#allocation13 + $0xa0] sm:$0xff]
        %v3787 = vld [vmem:[#allocation13 + $0xa8] sm:$0xff]
        %v3788 = vld [vmem:[#allocation13 + $0xb0] sm:$0xff]
        %v3789 = vld [vmem:[#allocation13 + $0xb8] sm:$0xff]
        %v3790 = vld [vmem:[#allocation13 + $0xc0] sm:$0xff]
        %v3791 = vld [vmem:[#allocation13 + $0xc8] sm:$0xff]
        %v3792 = vld [vmem:[#allocation13 + $0xd0] sm:$0xff]
        %v3793 = vld [vmem:[#allocation13 + $0xd8] sm:$0xff]
        %v3794 = vld [vmem:[#allocation13 + $0xe0] sm:$0xff]
        %v3795 = vld [vmem:[#allocation13 + $0xe8] sm:$0xff]
        %v3796 = vld [vmem:[#allocation13 + $0xf0] sm:$0xff]
        %v3797 = vld [vmem:[#allocation13 + $0xf8] sm:$0xff]
        %v3798 = vld [vmem:[#allocation13 + $0x100] sm:$0xff]
        %v3799 = vld [vmem:[#allocation13 + $0x108] sm:$0xff]
        %v3800 = vld [vmem:[#allocation13 + $0x110] sm:$0xff]
        %v3801 = vld [vmem:[#allocation13 + $0x118] sm:$0xff]
        %v3802 = vld [vmem:[#allocation13 + $0x120] sm:$0xff]
        %v3803 = vld [vmem:[#allocation13 + $0x128] sm:$0xff]
        %v3804 = vld [vmem:[#allocation13 + $0x130] sm:$0xff]
        %v3805 = vld [vmem:[#allocation13 + $0x138] sm:$0xff]
        %v3806 = vld [vmem:[#allocation13 + $0x140] sm:$0xff]
        %v3807 = vld [vmem:[#allocation13 + $0x148] sm:$0xff]
        %v3808 = vld [vmem:[#allocation13 + $0x150] sm:$0xff]
        %v3809 = vld [vmem:[#allocation13 + $0x158] sm:$0xff]
        %v3810 = vld [vmem:[#allocation13 + $0x160] sm:$0xff]
        %v3811 = vld [vmem:[#allocation13 + $0x168] sm:$0xff]
        %v3812 = vld [vmem:[#allocation13 + $0x170] sm:$0xff]
        %v3813 = vld [vmem:[#allocation13 + $0x178] sm:$0xff]
        %v3814 = vld [vmem:[#allocation13 + $0x180] sm:$0xff]
        %v3815 = vld [vmem:[#allocation13 + $0x188] sm:$0xff]
        %v3816 = vld [vmem:[#allocation13 + $0x190] sm:$0xff]
        %v3817 = vld [vmem:[#allocation13 + $0x198] sm:$0xff]
        %v3818 = vld [vmem:[#allocation13 + $0x1a0] sm:$0xff]
        %v3819 = vld [vmem:[#allocation13 + $0x1a8] sm:$0xff]
        %v3820 = vld [vmem:[#allocation13 + $0x1b0] sm:$0xff]
        %v3821 = vld [vmem:[#allocation13 + $0x1b8] sm:$0xff]
        %v3822 = vld [vmem:[#allocation13 + $0x1c0] sm:$0xff]
        %v3823 = vld [vmem:[#allocation13 + $0x1c8] sm:$0xff]
        %v3824 = vld [vmem:[#allocation13 + $0x1d0] sm:$0xff]
        %v3825 = vld [vmem:[#allocation13 + $0x1d8] sm:$0xff]
        %v3826 = vld [vmem:[#allocation13 + $0x1e0] sm:$0xff]
        %v3827 = vld [vmem:[#allocation13 + $0x1e8] sm:$0xff]
        %v3828 = vld [vmem:[#allocation13 + $0x1f0] sm:$0xff]
        %v3829 = vld [vmem:[#allocation13 + $0x1f8] sm:$0xff]
        %v3830 = vld [vmem:[#allocation13 + $0x200] sm:$0xff]
        %v3831 = vld [vmem:[#allocation13 + $0x208] sm:$0xff]
        %v3832 = vld [vmem:[#allocation13 + $0x210] sm:$0xff]
        %v3833 = vld [vmem:[#allocation13 + $0x218] sm:$0xff]
        %v3834 = vld [vmem:[#allocation13 + $0x220] sm:$0xff]
        %v3835 = vld [vmem:[#allocation13 + $0x228] sm:$0xff]
        %v3836 = vld [vmem:[#allocation13 + $0x230] sm:$0xff]
        %v3837 = vld [vmem:[#allocation13 + $0x238] sm:$0xff]
        %v3838 = vld [vmem:[#allocation13 + $0x240] sm:$0xff]
        %v3839 = vld [vmem:[#allocation13 + $0x248] sm:$0xff]
        %v3840 = vld [vmem:[#allocation13 + $0x250] sm:$0xff]
        %v3841 = vld [vmem:[#allocation13 + $0x258] sm:$0xff]
        %v3842 = vld [vmem:[#allocation13 + $0x260] sm:$0xff]
        %v3843 = vld [vmem:[#allocation13 + $0x268] sm:$0xff]
        %v3844 = vld [vmem:[#allocation13 + $0x270] sm:$0xff]
        %v3845 = vld [vmem:[#allocation13 + $0x278] sm:$0xff]
        %v3846 = vld [vmem:[#allocation13 + $0x280] sm:$0xff]
        %v3847 = vld [vmem:[#allocation13 + $0x288] sm:$0xff]
        %v3848 = vld [vmem:[#allocation13 + $0x290] sm:$0xff]
        %v3849 = vld [vmem:[#allocation13 + $0x298] sm:$0xff]
        %v3850 = vld [vmem:[#allocation13 + $0x2a0] sm:$0xff]
        %v3851 = vld [vmem:[#allocation13 + $0x2a8] sm:$0xff]
        %v3852 = vld [vmem:[#allocation13 + $0x2b0] sm:$0xff]
        %v3853 = vld [vmem:[#allocation13 + $0x2b8] sm:$0xff]
        %v3854 = vld [vmem:[#allocation13 + $0x2c0] sm:$0xff]
        %v3855 = vld [vmem:[#allocation13 + $0x2c8] sm:$0xff]
        %v3856 = vld [vmem:[#allocation13 + $0x2d0] sm:$0xff]
        %v3857 = vld [vmem:[#allocation13 + $0x2d8] sm:$0xff]
        %v3858 = vld [vmem:[#allocation13 + $0x2e0] sm:$0xff]
        %v3859 = vld [vmem:[#allocation13 + $0x2e8] sm:$0xff]
        %v3860 = vld [vmem:[#allocation13 + $0x2f0] sm:$0xff]
        %v3861 = vld [vmem:[#allocation13 + $0x2f8] sm:$0xff]
        %v3862 = vld [vmem:[#allocation13 + $0x300] sm:$0xff]
        %v3863 = vld [vmem:[#allocation13 + $0x308] sm:$0xff]
        %v3864 = vld [vmem:[#allocation13 + $0x310] sm:$0xff]
        %v3865 = vld [vmem:[#allocation13 + $0x318] sm:$0xff]
        %v3866 = vld [vmem:[#allocation13 + $0x320] sm:$0xff]
        %v3867 = vld [vmem:[#allocation13 + $0x328] sm:$0xff]
        %v3868 = vld [vmem:[#allocation13 + $0x330] sm:$0xff]
        %v3869 = vld [vmem:[#allocation13 + $0x338] sm:$0xff]
        %v3870 = vld [vmem:[#allocation13 + $0x340] sm:$0xff]
        %v3871 = vld [vmem:[#allocation13 + $0x348] sm:$0xff]
        %v3872 = vld [vmem:[#allocation13 + $0x350] sm:$0xff]
        %v3873 = vld [vmem:[#allocation13 + $0x358] sm:$0xff]
        %v3874 = vld [vmem:[#allocation13 + $0x360] sm:$0xff]
        %v3875 = vld [vmem:[#allocation13 + $0x368] sm:$0xff]
        %v3876 = vld [vmem:[#allocation13 + $0x370] sm:$0xff]
        %v3877 = vld [vmem:[#allocation13 + $0x378] sm:$0xff]
        %v3878 = vld [vmem:[#allocation13 + $0x380] sm:$0xff]
        %v3879 = vld [vmem:[#allocation13 + $0x388] sm:$0xff]
        %v3880 = vld [vmem:[#allocation13 + $0x390] sm:$0xff]
        %v3881 = vld [vmem:[#allocation13 + $0x398] sm:$0xff]
        %v3882 = vld [vmem:[#allocation13 + $0x3a0] sm:$0xff]
        %v3883 = vld [vmem:[#allocation13 + $0x3a8] sm:$0xff]
        %v3884 = vld [vmem:[#allocation13 + $0x3b0] sm:$0xff]
        %v3885 = vld [vmem:[#allocation13 + $0x3b8] sm:$0xff]
        %v3886 = vld [vmem:[#allocation13 + $0x3c0] sm:$0xff]
        %v3887 = vld [vmem:[#allocation13 + $0x3c8] sm:$0xff]
        %v3888 = vld [vmem:[#allocation13 + $0x3d0] sm:$0xff]
        %v3889 = vld [vmem:[#allocation13 + $0x3d8] sm:$0xff]
        %v3890 = vld [vmem:[#allocation13 + $0x3e0] sm:$0xff]
        %v3891 = vld [vmem:[#allocation13 + $0x3e8] sm:$0xff]
        %v3892 = vld [vmem:[#allocation13 + $0x3f0] sm:$0xff]
        %v3893 = vld [vmem:[#allocation13 + $0x3f8] sm:$0xff]
        %v3894 = vld [vmem:[#allocation13 + $0x400] sm:$0xff]
        %v3895 = vld [vmem:[#allocation13 + $0x408] sm:$0xff]
        %v3896 = vld [vmem:[#allocation13 + $0x410] sm:$0xff]
        %v3897 = vld [vmem:[#allocation13 + $0x418] sm:$0xff]
        %v3898 = vld [vmem:[#allocation13 + $0x420] sm:$0xff]
        %v3899 = vld [vmem:[#allocation13 + $0x428] sm:$0xff]
        %v3900 = vld [vmem:[#allocation13 + $0x430] sm:$0xff]
        %v3901 = vld [vmem:[#allocation13 + $0x438] sm:$0xff]
        %v3902 = vld [vmem:[#allocation13 + $0x440] sm:$0xff]
        %v3903 = vld [vmem:[#allocation13 + $0x448] sm:$0xff]
        %v3904 = vld [vmem:[#allocation13 + $0x450] sm:$0xff]
        %v3905 = vld [vmem:[#allocation13 + $0x458] sm:$0xff]
        %v3906 = vld [vmem:[#allocation13 + $0x460] sm:$0xff]
        %v3907 = vld [vmem:[#allocation13 + $0x468] sm:$0xff]
        %v3908 = vld [vmem:[#allocation13 + $0x470] sm:$0xff]
        %v3909 = vld [vmem:[#allocation13 + $0x478] sm:$0xff]
        %v3910 = vld [vmem:[#allocation13 + $0x480] sm:$0xff]
        %v3911 = vld [vmem:[#allocation13 + $0x488] sm:$0xff]
        %v3912 = vld [vmem:[#allocation13 + $0x490] sm:$0xff]
        %v3913 = vld [vmem:[#allocation13 + $0x498] sm:$0xff]
        %v3914 = vld [vmem:[#allocation13 + $0x4a0] sm:$0xff]
        %v3915 = vld [vmem:[#allocation13 + $0x4a8] sm:$0xff]
        %v3916 = vld [vmem:[#allocation13 + $0x4b0] sm:$0xff]
        %v3917 = vld [vmem:[#allocation13 + $0x4b8] sm:$0xff]
        %v3918 = vld [vmem:[#allocation13 + $0x4c0] sm:$0xff]
        %v3919 = vld [vmem:[#allocation13 + $0x4c8] sm:$0xff]
        %v3920 = vld [vmem:[#allocation13 + $0x4d0] sm:$0xff]
        %v3921 = vld [vmem:[#allocation13 + $0x4d8] sm:$0xff]
        %v3922 = vld [vmem:[#allocation13 + $0x4e0] sm:$0xff]
        %v3923 = vld [vmem:[#allocation13 + $0x4e8] sm:$0xff]
        %v3924 = vld [vmem:[#allocation13 + $0x4f0] sm:$0xff]
        %v3925 = vld [vmem:[#allocation13 + $0x4f8] sm:$0xff]
        %v3926 = vld [vmem:[#allocation13 + $0x500] sm:$0xff]
        %v3927 = vld [vmem:[#allocation13 + $0x508] sm:$0xff]
        %v3928 = vld [vmem:[#allocation13 + $0x510] sm:$0xff]
        %v3929 = vld [vmem:[#allocation13 + $0x518] sm:$0xff]
        %v3930 = vld [vmem:[#allocation13 + $0x520] sm:$0xff]
        %v3931 = vld [vmem:[#allocation13 + $0x528] sm:$0xff]
        %v3932 = vld [vmem:[#allocation13 + $0x530] sm:$0xff]
        %v3933 = vld [vmem:[#allocation13 + $0x538] sm:$0xff]
        %v3934 = vld [vmem:[#allocation13 + $0x540] sm:$0xff]
        %v3935 = vld [vmem:[#allocation13 + $0x548] sm:$0xff]
        %v3936 = vld [vmem:[#allocation13 + $0x550] sm:$0xff]
        %v3937 = vld [vmem:[#allocation13 + $0x558] sm:$0xff]
        %v3938 = vld [vmem:[#allocation13 + $0x560] sm:$0xff]
        %v3939 = vld [vmem:[#allocation13 + $0x568] sm:$0xff]
        %v3940 = vld [vmem:[#allocation13 + $0x570] sm:$0xff]
        %v3941 = vld [vmem:[#allocation13 + $0x578] sm:$0xff]
        %v3942 = vld [vmem:[#allocation13 + $0x580] sm:$0xff]
        %v3943 = vld [vmem:[#allocation13 + $0x588] sm:$0xff]
        %v3944 = vld [vmem:[#allocation13 + $0x590] sm:$0xff]
        %v3945 = vld [vmem:[#allocation13 + $0x598] sm:$0xff]
        %v3946 = vld [vmem:[#allocation13 + $0x5a0] sm:$0xff]
        %v3947 = vld [vmem:[#allocation13 + $0x5a8] sm:$0xff]
        %v3948 = vld [vmem:[#allocation13 + $0x5b0] sm:$0xff]
        %v3949 = vld [vmem:[#allocation13 + $0x5b8] sm:$0xff]
        %v3950 = vld [vmem:[#allocation13 + $0x5c0] sm:$0xff]
        %v3951 = vld [vmem:[#allocation13 + $0x5c8] sm:$0xff]
        %v3952 = vld [vmem:[#allocation13 + $0x5d0] sm:$0xff]
        %v3953 = vld [vmem:[#allocation13 + $0x5d8] sm:$0xff]
        %v3954 = vld [vmem:[#allocation13 + $0x5e0] sm:$0xff]
        %v3955 = vld [vmem:[#allocation13 + $0x5e8] sm:$0xff]
        %v3956 = vld [vmem:[#allocation13 + $0x5f0] sm:$0xff]
        %v3957 = vld [vmem:[#allocation13 + $0x5f8] sm:$0xff]
        %v3958 = vld [vmem:[#allocation13 + $0x600] sm:$0xff]
        %v3959 = vld [vmem:[#allocation13 + $0x608] sm:$0xff]
        %v3960 = vld [vmem:[#allocation13 + $0x610] sm:$0xff]
        %v3961 = vld [vmem:[#allocation13 + $0x618] sm:$0xff]
        %v3962 = vld [vmem:[#allocation13 + $0x620] sm:$0xff]
        %v3963 = vld [vmem:[#allocation13 + $0x628] sm:$0xff]
        %v3964 = vld [vmem:[#allocation13 + $0x630] sm:$0xff]
        %v3965 = vld [vmem:[#allocation13 + $0x638] sm:$0xff]
        %v3966 = vld [vmem:[#allocation13 + $0x640] sm:$0xff]
        %v3967 = vld [vmem:[#allocation13 + $0x648] sm:$0xff]
        %v3968 = vld [vmem:[#allocation13 + $0x650] sm:$0xff]
        %v3969 = vld [vmem:[#allocation13 + $0x658] sm:$0xff]
        %v3970 = vld [vmem:[#allocation13 + $0x660] sm:$0xff]
        %v3971 = vld [vmem:[#allocation13 + $0x668] sm:$0xff]
        %v3972 = vld [vmem:[#allocation13 + $0x670] sm:$0xff]
        %v3973 = vld [vmem:[#allocation13 + $0x678] sm:$0xff]
        %v3974 = vld [vmem:[#allocation13 + $0x680] sm:$0xff]
        %v3975 = vld [vmem:[#allocation13 + $0x688] sm:$0xff]
        %v3976 = vld [vmem:[#allocation13 + $0x690] sm:$0xff]
        %v3977 = vld [vmem:[#allocation13 + $0x698] sm:$0xff]
        %v3978 = vld [vmem:[#allocation13 + $0x6a0] sm:$0xff]
        %v3979 = vld [vmem:[#allocation13 + $0x6a8] sm:$0xff]
        %v3980 = vld [vmem:[#allocation13 + $0x6b0] sm:$0xff]
        %v3981 = vld [vmem:[#allocation13 + $0x6b8] sm:$0xff]
        %v3982 = vld [vmem:[#allocation13 + $0x6c0] sm:$0xff]
        %v3983 = vld [vmem:[#allocation13 + $0x6c8] sm:$0xff]
        %v3984 = vld [vmem:[#allocation13 + $0x6d0] sm:$0xff]
        %v3985 = vld [vmem:[#allocation13 + $0x6d8] sm:$0xff]
        %v3986 = vld [vmem:[#allocation13 + $0x6e0] sm:$0xff]
        %v3987 = vld [vmem:[#allocation13 + $0x6e8] sm:$0xff]
        %v3988 = vld [vmem:[#allocation13 + $0x6f0] sm:$0xff]
        %v3989 = vld [vmem:[#allocation13 + $0x6f8] sm:$0xff]
        %v3990 = vld [vmem:[#allocation13 + $0x700] sm:$0xff]
        %v3991 = vld [vmem:[#allocation13 + $0x708] sm:$0xff]
        %v3992 = vld [vmem:[#allocation13 + $0x710] sm:$0xff]
        %v3993 = vld [vmem:[#allocation13 + $0x718] sm:$0xff]
        %v3994 = vld [vmem:[#allocation13 + $0x720] sm:$0xff]
        %v3995 = vld [vmem:[#allocation13 + $0x728] sm:$0xff]
        %v3996 = vld [vmem:[#allocation13 + $0x730] sm:$0xff]
        %v3997 = vld [vmem:[#allocation13 + $0x738] sm:$0xff]
        %v3998 = vld [vmem:[#allocation13 + $0x740] sm:$0xff]
        %v3999 = vld [vmem:[#allocation13 + $0x748] sm:$0xff]
        %v4000 = vld [vmem:[#allocation13 + $0x750] sm:$0xff]
        %v4001 = vld [vmem:[#allocation13 + $0x758] sm:$0xff]
        %v4002 = vld [vmem:[#allocation13 + $0x760] sm:$0xff]
        %v4003 = vld [vmem:[#allocation13 + $0x768] sm:$0xff]
        %v4004 = vld [vmem:[#allocation13 + $0x770] sm:$0xff]
        %v4005 = vld [vmem:[#allocation13 + $0x778] sm:$0xff]
        %v4006 = vld [vmem:[#allocation13 + $0x780] sm:$0xff]
        %v4007 = vld [vmem:[#allocation13 + $0x788] sm:$0xff]
        %v4008 = vld [vmem:[#allocation13 + $0x790] sm:$0xff]
        %v4009 = vld [vmem:[#allocation13 + $0x798] sm:$0xff]
        %v4010 = vld [vmem:[#allocation13 + $0x7a0] sm:$0xff]
        %v4011 = vld [vmem:[#allocation13 + $0x7a8] sm:$0xff]
        %v4012 = vld [vmem:[#allocation13 + $0x7b0] sm:$0xff]
        %v4013 = vld [vmem:[#allocation13 + $0x7b8] sm:$0xff]
        %v4014 = vld [vmem:[#allocation13 + $0x7c0] sm:$0xff]
        %v4015 = vld [vmem:[#allocation13 + $0x7c8] sm:$0xff]
        %v4016 = vld [vmem:[#allocation13 + $0x7d0] sm:$0xff]
        %v4017 = vld [vmem:[#allocation13 + $0x7d8] sm:$0xff]
        %v4018 = vld [vmem:[#allocation13 + $0x7e0] sm:$0xff]
        %v4019 = vld [vmem:[#allocation13 + $0x7e8] sm:$0xff]
        %v4020 = vld [vmem:[#allocation13 + $0x7f0] sm:$0xff]
        %v4021 = vld [vmem:[#allocation13 + $0x7f8] sm:$0xff]
        %v4022 = vld [vmem:[%s10] sm:$0xff]
        %v4024 = vlaneseq
        %v4025 = vshrl.u32 %v4024, 7
        %v4026 = vsub.s32 0, %v4025
        %v4027 = vrot.slane %v4022, %v4026
        %v4028 = vlaneseq
        %v4029 = vshrl.u32 %v4028, 7
        %v4030 = vsub.s32 1, %v4029
        %v4031 = vrot.slane %v4022, %v4030
        %v4032 = vlaneseq
        %v4033 = vshrl.u32 %v4032, 7
        %v4034 = vsub.s32 2, %v4033
        %v4035 = vrot.slane %v4022, %v4034
        %v4036 = vlaneseq
        %v4037 = vshrl.u32 %v4036, 7
        %v4038 = vsub.s32 3, %v4037
        %v4039 = vrot.slane %v4022, %v4038
        %v4040 = vlaneseq
        %v4041 = vshrl.u32 %v4040, 7
        %v4042 = vsub.s32 4, %v4041
        %v4043 = vrot.slane %v4022, %v4042
        %v4044 = vlaneseq
        %v4045 = vshrl.u32 %v4044, 7
        %v4046 = vsub.s32 5, %v4045
        %v4047 = vrot.slane %v4022, %v4046
        %v4048 = vlaneseq
        %v4049 = vshrl.u32 %v4048, 7
        %v4050 = vsub.s32 6, %v4049
        %v4051 = vrot.slane %v4022, %v4050
        %v4052 = vlaneseq
        %v4053 = vshrl.u32 %v4052, 7
        %v4054 = vsub.s32 7, %v4053
        %v4055 = vrot.slane %v4022, %v4054
        %v4320 = vunpack.c.l.b16 %v3766
        %v4321 = vunpack.c.h.b16 %v3766
        %v4322 = vunpack.c.l.b16 %v3767
        %v4323 = vunpack.c.h.b16 %v3767
        %v4324 = vunpack.c.l.b16 %v3768
        %v4325 = vunpack.c.h.b16 %v3768
        %v4326 = vunpack.c.l.b16 %v3769
        %v4327 = vunpack.c.h.b16 %v3769
        %v4328 = vunpack.c.l.b16 %v3770
        %v4329 = vunpack.c.h.b16 %v3770
        %v4330 = vunpack.c.l.b16 %v3771
        %v4331 = vunpack.c.h.b16 %v3771
        %v4332 = vunpack.c.l.b16 %v3772
        %v4333 = vunpack.c.h.b16 %v3772
        %v4334 = vunpack.c.l.b16 %v3773
        %v4335 = vunpack.c.h.b16 %v3773
        %v4336 = vunpack.c.l.b16 %v3774
        %v4337 = vunpack.c.h.b16 %v3774
        %v4338 = vunpack.c.l.b16 %v3775
        %v4339 = vunpack.c.h.b16 %v3775
        %v4340 = vunpack.c.l.b16 %v3776
        %v4341 = vunpack.c.h.b16 %v3776
        %v4342 = vunpack.c.l.b16 %v3777
        %v4343 = vunpack.c.h.b16 %v3777
        %v4344 = vunpack.c.l.b16 %v3778
        %v4345 = vunpack.c.h.b16 %v3778
        %v4346 = vunpack.c.l.b16 %v3779
        %v4347 = vunpack.c.h.b16 %v3779
        %v4348 = vunpack.c.l.b16 %v3780
        %v4349 = vunpack.c.h.b16 %v3780
        %v4350 = vunpack.c.l.b16 %v3781
        %v4351 = vunpack.c.h.b16 %v3781
        %v4352 = vunpack.c.l.b16 %v3782
        %v4353 = vunpack.c.h.b16 %v3782
        %v4354 = vunpack.c.l.b16 %v3783
        %v4355 = vunpack.c.h.b16 %v3783
        %v4356 = vunpack.c.l.b16 %v3784
        %v4357 = vunpack.c.h.b16 %v3784
        %v4358 = vunpack.c.l.b16 %v3785
        %v4359 = vunpack.c.h.b16 %v3785
        %v4360 = vunpack.c.l.b16 %v3786
        %v4361 = vunpack.c.h.b16 %v3786
        %v4362 = vunpack.c.l.b16 %v3787
        %v4363 = vunpack.c.h.b16 %v3787
        %v4364 = vunpack.c.l.b16 %v3788
        %v4365 = vunpack.c.h.b16 %v3788
        %v4366 = vunpack.c.l.b16 %v3789
        %v4367 = vunpack.c.h.b16 %v3789
        %v4368 = vunpack.c.l.b16 %v3790
        %v4369 = vunpack.c.h.b16 %v3790
        %v4370 = vunpack.c.l.b16 %v3791
        %v4371 = vunpack.c.h.b16 %v3791
        %v4372 = vunpack.c.l.b16 %v3792
        %v4373 = vunpack.c.h.b16 %v3792
        %v4374 = vunpack.c.l.b16 %v3793
        %v4375 = vunpack.c.h.b16 %v3793
        %v4376 = vunpack.c.l.b16 %v3794
        %v4377 = vunpack.c.h.b16 %v3794
        %v4378 = vunpack.c.l.b16 %v3795
        %v4379 = vunpack.c.h.b16 %v3795
        %v4380 = vunpack.c.l.b16 %v3796
        %v4381 = vunpack.c.h.b16 %v3796
        %v4382 = vunpack.c.l.b16 %v3797
        %v4383 = vunpack.c.h.b16 %v3797
        %v4384 = vunpack.c.l.b16 %v3798
        %v4385 = vunpack.c.h.b16 %v3798
        %v4386 = vunpack.c.l.b16 %v3799
        %v4387 = vunpack.c.h.b16 %v3799
        %v4388 = vunpack.c.l.b16 %v3800
        %v4389 = vunpack.c.h.b16 %v3800
        %v4390 = vunpack.c.l.b16 %v3801
        %v4391 = vunpack.c.h.b16 %v3801
        %v4392 = vunpack.c.l.b16 %v3802
        %v4393 = vunpack.c.h.b16 %v3802
        %v4394 = vunpack.c.l.b16 %v3803
        %v4395 = vunpack.c.h.b16 %v3803
        %v4396 = vunpack.c.l.b16 %v3804
        %v4397 = vunpack.c.h.b16 %v3804
        %v4398 = vunpack.c.l.b16 %v3805
        %v4399 = vunpack.c.h.b16 %v3805
        %v4400 = vunpack.c.l.b16 %v3806
        %v4401 = vunpack.c.h.b16 %v3806
        %v4402 = vunpack.c.l.b16 %v3807
        %v4403 = vunpack.c.h.b16 %v3807
        %v4404 = vunpack.c.l.b16 %v3808
        %v4405 = vunpack.c.h.b16 %v3808
        %v4406 = vunpack.c.l.b16 %v3809
        %v4407 = vunpack.c.h.b16 %v3809
        %v4408 = vunpack.c.l.b16 %v3810
        %v4409 = vunpack.c.h.b16 %v3810
        %v4410 = vunpack.c.l.b16 %v3811
        %v4411 = vunpack.c.h.b16 %v3811
        %v4412 = vunpack.c.l.b16 %v3812
        %v4413 = vunpack.c.h.b16 %v3812
        %v4414 = vunpack.c.l.b16 %v3813
        %v4415 = vunpack.c.h.b16 %v3813
        %v4416 = vunpack.c.l.b16 %v3814
        %v4417 = vunpack.c.h.b16 %v3814
        %v4418 = vunpack.c.l.b16 %v3815
        %v4419 = vunpack.c.h.b16 %v3815
        %v4420 = vunpack.c.l.b16 %v3816
        %v4421 = vunpack.c.h.b16 %v3816
        %v4422 = vunpack.c.l.b16 %v3817
        %v4423 = vunpack.c.h.b16 %v3817
        %v4424 = vunpack.c.l.b16 %v3818
        %v4425 = vunpack.c.h.b16 %v3818
        %v4426 = vunpack.c.l.b16 %v3819
        %v4427 = vunpack.c.h.b16 %v3819
        %v4428 = vunpack.c.l.b16 %v3820
        %v4429 = vunpack.c.h.b16 %v3820
        %v4430 = vunpack.c.l.b16 %v3821
        %v4431 = vunpack.c.h.b16 %v3821
        %v4432 = vunpack.c.l.b16 %v3822
        %v4433 = vunpack.c.h.b16 %v3822
        %v4434 = vunpack.c.l.b16 %v3823
        %v4435 = vunpack.c.h.b16 %v3823
        %v4436 = vunpack.c.l.b16 %v3824
        %v4437 = vunpack.c.h.b16 %v3824
        %v4438 = vunpack.c.l.b16 %v3825
        %v4439 = vunpack.c.h.b16 %v3825
        %v4440 = vunpack.c.l.b16 %v3826
        %v4441 = vunpack.c.h.b16 %v3826
        %v4442 = vunpack.c.l.b16 %v3827
        %v4443 = vunpack.c.h.b16 %v3827
        %v4444 = vunpack.c.l.b16 %v3828
        %v4445 = vunpack.c.h.b16 %v3828
        %v4446 = vunpack.c.l.b16 %v3829
        %v4447 = vunpack.c.h.b16 %v3829
        %v4448 = vunpack.c.l.b16 %v3830
        %v4449 = vunpack.c.h.b16 %v3830
        %v4450 = vunpack.c.l.b16 %v3831
        %v4451 = vunpack.c.h.b16 %v3831
        %v4452 = vunpack.c.l.b16 %v3832
        %v4453 = vunpack.c.h.b16 %v3832
        %v4454 = vunpack.c.l.b16 %v3833
        %v4455 = vunpack.c.h.b16 %v3833
        %v4456 = vunpack.c.l.b16 %v3834
        %v4457 = vunpack.c.h.b16 %v3834
        %v4458 = vunpack.c.l.b16 %v3835
        %v4459 = vunpack.c.h.b16 %v3835
        %v4460 = vunpack.c.l.b16 %v3836
        %v4461 = vunpack.c.h.b16 %v3836
        %v4462 = vunpack.c.l.b16 %v3837
        %v4463 = vunpack.c.h.b16 %v3837
        %v4464 = vunpack.c.l.b16 %v3838
        %v4465 = vunpack.c.h.b16 %v3838
        %v4466 = vunpack.c.l.b16 %v3839
        %v4467 = vunpack.c.h.b16 %v3839
        %v4468 = vunpack.c.l.b16 %v3840
        %v4469 = vunpack.c.h.b16 %v3840
        %v4470 = vunpack.c.l.b16 %v3841
        %v4471 = vunpack.c.h.b16 %v3841
        %v4472 = vunpack.c.l.b16 %v3842
        %v4473 = vunpack.c.h.b16 %v3842
        %v4474 = vunpack.c.l.b16 %v3843
        %v4475 = vunpack.c.h.b16 %v3843
        %v4476 = vunpack.c.l.b16 %v3844
        %v4477 = vunpack.c.h.b16 %v3844
        %v4478 = vunpack.c.l.b16 %v3845
        %v4479 = vunpack.c.h.b16 %v3845
        %v4480 = vunpack.c.l.b16 %v3846
        %v4481 = vunpack.c.h.b16 %v3846
        %v4482 = vunpack.c.l.b16 %v3847
        %v4483 = vunpack.c.h.b16 %v3847
        %v4484 = vunpack.c.l.b16 %v3848
        %v4485 = vunpack.c.h.b16 %v3848
        %v4486 = vunpack.c.l.b16 %v3849
        %v4487 = vunpack.c.h.b16 %v3849
        %v4488 = vunpack.c.l.b16 %v3850
        %v4489 = vunpack.c.h.b16 %v3850
        %v4490 = vunpack.c.l.b16 %v3851
        %v4491 = vunpack.c.h.b16 %v3851
        %v4492 = vunpack.c.l.b16 %v3852
        %v4493 = vunpack.c.h.b16 %v3852
        %v4494 = vunpack.c.l.b16 %v3853
        %v4495 = vunpack.c.h.b16 %v3853
        %v4496 = vunpack.c.l.b16 %v3854
        %v4497 = vunpack.c.h.b16 %v3854
        %v4498 = vunpack.c.l.b16 %v3855
        %v4499 = vunpack.c.h.b16 %v3855
        %v4500 = vunpack.c.l.b16 %v3856
        %v4501 = vunpack.c.h.b16 %v3856
        %v4502 = vunpack.c.l.b16 %v3857
        %v4503 = vunpack.c.h.b16 %v3857
        %v4504 = vunpack.c.l.b16 %v3858
        %v4505 = vunpack.c.h.b16 %v3858
        %v4506 = vunpack.c.l.b16 %v3859
        %v4507 = vunpack.c.h.b16 %v3859
        %v4508 = vunpack.c.l.b16 %v3860
        %v4509 = vunpack.c.h.b16 %v3860
        %v4510 = vunpack.c.l.b16 %v3861
        %v4511 = vunpack.c.h.b16 %v3861
        %v4512 = vunpack.c.l.b16 %v3862
        %v4513 = vunpack.c.h.b16 %v3862
        %v4514 = vunpack.c.l.b16 %v3863
        %v4515 = vunpack.c.h.b16 %v3863
        %v4516 = vunpack.c.l.b16 %v3864
        %v4517 = vunpack.c.h.b16 %v3864
        %v4518 = vunpack.c.l.b16 %v3865
        %v4519 = vunpack.c.h.b16 %v3865
        %v4520 = vunpack.c.l.b16 %v3866
        %v4521 = vunpack.c.h.b16 %v3866
        %v4522 = vunpack.c.l.b16 %v3867
        %v4523 = vunpack.c.h.b16 %v3867
        %v4524 = vunpack.c.l.b16 %v3868
        %v4525 = vunpack.c.h.b16 %v3868
        %v4526 = vunpack.c.l.b16 %v3869
        %v4527 = vunpack.c.h.b16 %v3869
        %v4528 = vunpack.c.l.b16 %v3870
        %v4529 = vunpack.c.h.b16 %v3870
        %v4530 = vunpack.c.l.b16 %v3871
        %v4531 = vunpack.c.h.b16 %v3871
        %v4532 = vunpack.c.l.b16 %v3872
        %v4533 = vunpack.c.h.b16 %v3872
        %v4534 = vunpack.c.l.b16 %v3873
        %v4535 = vunpack.c.h.b16 %v3873
        %v4536 = vunpack.c.l.b16 %v3874
        %v4537 = vunpack.c.h.b16 %v3874
        %v4538 = vunpack.c.l.b16 %v3875
        %v4539 = vunpack.c.h.b16 %v3875
        %v4540 = vunpack.c.l.b16 %v3876
        %v4541 = vunpack.c.h.b16 %v3876
        %v4542 = vunpack.c.l.b16 %v3877
        %v4543 = vunpack.c.h.b16 %v3877
        %v4544 = vunpack.c.l.b16 %v3878
        %v4545 = vunpack.c.h.b16 %v3878
        %v4546 = vunpack.c.l.b16 %v3879
        %v4547 = vunpack.c.h.b16 %v3879
        %v4548 = vunpack.c.l.b16 %v3880
        %v4549 = vunpack.c.h.b16 %v3880
        %v4550 = vunpack.c.l.b16 %v3881
        %v4551 = vunpack.c.h.b16 %v3881
        %v4552 = vunpack.c.l.b16 %v3882
        %v4553 = vunpack.c.h.b16 %v3882
        %v4554 = vunpack.c.l.b16 %v3883
        %v4555 = vunpack.c.h.b16 %v3883
        %v4556 = vunpack.c.l.b16 %v3884
        %v4557 = vunpack.c.h.b16 %v3884
        %v4558 = vunpack.c.l.b16 %v3885
        %v4559 = vunpack.c.h.b16 %v3885
        %v4560 = vunpack.c.l.b16 %v3886
        %v4561 = vunpack.c.h.b16 %v3886
        %v4562 = vunpack.c.l.b16 %v3887
        %v4563 = vunpack.c.h.b16 %v3887
        %v4564 = vunpack.c.l.b16 %v3888
        %v4565 = vunpack.c.h.b16 %v3888
        %v4566 = vunpack.c.l.b16 %v3889
        %v4567 = vunpack.c.h.b16 %v3889
        %v4568 = vunpack.c.l.b16 %v3890
        %v4569 = vunpack.c.h.b16 %v3890
        %v4570 = vunpack.c.l.b16 %v3891
        %v4571 = vunpack.c.h.b16 %v3891
        %v4572 = vunpack.c.l.b16 %v3892
        %v4573 = vunpack.c.h.b16 %v3892
        %v4574 = vunpack.c.l.b16 %v3893
        %v4575 = vunpack.c.h.b16 %v3893
        %v4576 = vunpack.c.l.b16 %v3894
        %v4577 = vunpack.c.h.b16 %v3894
        %v4578 = vunpack.c.l.b16 %v3895
        %v4579 = vunpack.c.h.b16 %v3895
        %v4580 = vunpack.c.l.b16 %v3896
        %v4581 = vunpack.c.h.b16 %v3896
        %v4582 = vunpack.c.l.b16 %v3897
        %v4583 = vunpack.c.h.b16 %v3897
        %v4584 = vunpack.c.l.b16 %v3898
        %v4585 = vunpack.c.h.b16 %v3898
        %v4586 = vunpack.c.l.b16 %v3899
        %v4587 = vunpack.c.h.b16 %v3899
        %v4588 = vunpack.c.l.b16 %v3900
        %v4589 = vunpack.c.h.b16 %v3900
        %v4590 = vunpack.c.l.b16 %v3901
        %v4591 = vunpack.c.h.b16 %v3901
        %v4592 = vunpack.c.l.b16 %v3902
        %v4593 = vunpack.c.h.b16 %v3902
        %v4594 = vunpack.c.l.b16 %v3903
        %v4595 = vunpack.c.h.b16 %v3903
        %v4596 = vunpack.c.l.b16 %v3904
        %v4597 = vunpack.c.h.b16 %v3904
        %v4598 = vunpack.c.l.b16 %v3905
        %v4599 = vunpack.c.h.b16 %v3905
        %v4600 = vunpack.c.l.b16 %v3906
        %v4601 = vunpack.c.h.b16 %v3906
        %v4602 = vunpack.c.l.b16 %v3907
        %v4603 = vunpack.c.h.b16 %v3907
        %v4604 = vunpack.c.l.b16 %v3908
        %v4605 = vunpack.c.h.b16 %v3908
        %v4606 = vunpack.c.l.b16 %v3909
        %v4607 = vunpack.c.h.b16 %v3909
        %v4608 = vunpack.c.l.b16 %v3910
        %v4609 = vunpack.c.h.b16 %v3910
        %v4610 = vunpack.c.l.b16 %v3911
        %v4611 = vunpack.c.h.b16 %v3911
        %v4612 = vunpack.c.l.b16 %v3912
        %v4613 = vunpack.c.h.b16 %v3912
        %v4614 = vunpack.c.l.b16 %v3913
        %v4615 = vunpack.c.h.b16 %v3913
        %v4616 = vunpack.c.l.b16 %v3914
        %v4617 = vunpack.c.h.b16 %v3914
        %v4618 = vunpack.c.l.b16 %v3915
        %v4619 = vunpack.c.h.b16 %v3915
        %v4620 = vunpack.c.l.b16 %v3916
        %v4621 = vunpack.c.h.b16 %v3916
        %v4622 = vunpack.c.l.b16 %v3917
        %v4623 = vunpack.c.h.b16 %v3917
        %v4624 = vunpack.c.l.b16 %v3918
        %v4625 = vunpack.c.h.b16 %v3918
        %v4626 = vunpack.c.l.b16 %v3919
        %v4627 = vunpack.c.h.b16 %v3919
        %v4628 = vunpack.c.l.b16 %v3920
        %v4629 = vunpack.c.h.b16 %v3920
        %v4630 = vunpack.c.l.b16 %v3921
        %v4631 = vunpack.c.h.b16 %v3921
        %v4632 = vunpack.c.l.b16 %v3922
        %v4633 = vunpack.c.h.b16 %v3922
        %v4634 = vunpack.c.l.b16 %v3923
        %v4635 = vunpack.c.h.b16 %v3923
        %v4636 = vunpack.c.l.b16 %v3924
        %v4637 = vunpack.c.h.b16 %v3924
        %v4638 = vunpack.c.l.b16 %v3925
        %v4639 = vunpack.c.h.b16 %v3925
        %v4640 = vunpack.c.l.b16 %v3926
        %v4641 = vunpack.c.h.b16 %v3926
        %v4642 = vunpack.c.l.b16 %v3927
        %v4643 = vunpack.c.h.b16 %v3927
        %v4644 = vunpack.c.l.b16 %v3928
        %v4645 = vunpack.c.h.b16 %v3928
        %v4646 = vunpack.c.l.b16 %v3929
        %v4647 = vunpack.c.h.b16 %v3929
        %v4648 = vunpack.c.l.b16 %v3930
        %v4649 = vunpack.c.h.b16 %v3930
        %v4650 = vunpack.c.l.b16 %v3931
        %v4651 = vunpack.c.h.b16 %v3931
        %v4652 = vunpack.c.l.b16 %v3932
        %v4653 = vunpack.c.h.b16 %v3932
        %v4654 = vunpack.c.l.b16 %v3933
        %v4655 = vunpack.c.h.b16 %v3933
        %v4656 = vunpack.c.l.b16 %v3934
        %v4657 = vunpack.c.h.b16 %v3934
        %v4658 = vunpack.c.l.b16 %v3935
        %v4659 = vunpack.c.h.b16 %v3935
        %v4660 = vunpack.c.l.b16 %v3936
        %v4661 = vunpack.c.h.b16 %v3936
        %v4662 = vunpack.c.l.b16 %v3937
        %v4663 = vunpack.c.h.b16 %v3937
        %v4664 = vunpack.c.l.b16 %v3938
        %v4665 = vunpack.c.h.b16 %v3938
        %v4666 = vunpack.c.l.b16 %v3939
        %v4667 = vunpack.c.h.b16 %v3939
        %v4668 = vunpack.c.l.b16 %v3940
        %v4669 = vunpack.c.h.b16 %v3940
        %v4670 = vunpack.c.l.b16 %v3941
        %v4671 = vunpack.c.h.b16 %v3941
        %v4672 = vunpack.c.l.b16 %v3942
        %v4673 = vunpack.c.h.b16 %v3942
        %v4674 = vunpack.c.l.b16 %v3943
        %v4675 = vunpack.c.h.b16 %v3943
        %v4676 = vunpack.c.l.b16 %v3944
        %v4677 = vunpack.c.h.b16 %v3944
        %v4678 = vunpack.c.l.b16 %v3945
        %v4679 = vunpack.c.h.b16 %v3945
        %v4680 = vunpack.c.l.b16 %v3946
        %v4681 = vunpack.c.h.b16 %v3946
        %v4682 = vunpack.c.l.b16 %v3947
        %v4683 = vunpack.c.h.b16 %v3947
        %v4684 = vunpack.c.l.b16 %v3948
        %v4685 = vunpack.c.h.b16 %v3948
        %v4686 = vunpack.c.l.b16 %v3949
        %v4687 = vunpack.c.h.b16 %v3949
        %v4688 = vunpack.c.l.b16 %v3950
        %v4689 = vunpack.c.h.b16 %v3950
        %v4690 = vunpack.c.l.b16 %v3951
        %v4691 = vunpack.c.h.b16 %v3951
        %v4692 = vunpack.c.l.b16 %v3952
        %v4693 = vunpack.c.h.b16 %v3952
        %v4694 = vunpack.c.l.b16 %v3953
        %v4695 = vunpack.c.h.b16 %v3953
        %v4696 = vunpack.c.l.b16 %v3954
        %v4697 = vunpack.c.h.b16 %v3954
        %v4698 = vunpack.c.l.b16 %v3955
        %v4699 = vunpack.c.h.b16 %v3955
        %v4700 = vunpack.c.l.b16 %v3956
        %v4701 = vunpack.c.h.b16 %v3956
        %v4702 = vunpack.c.l.b16 %v3957
        %v4703 = vunpack.c.h.b16 %v3957
        %v4704 = vunpack.c.l.b16 %v3958
        %v4705 = vunpack.c.h.b16 %v3958
        %v4706 = vunpack.c.l.b16 %v3959
        %v4707 = vunpack.c.h.b16 %v3959
        %v4708 = vunpack.c.l.b16 %v3960
        %v4709 = vunpack.c.h.b16 %v3960
        %v4710 = vunpack.c.l.b16 %v3961
        %v4711 = vunpack.c.h.b16 %v3961
        %v4712 = vunpack.c.l.b16 %v3962
        %v4713 = vunpack.c.h.b16 %v3962
        %v4714 = vunpack.c.l.b16 %v3963
        %v4715 = vunpack.c.h.b16 %v3963
        %v4716 = vunpack.c.l.b16 %v3964
        %v4717 = vunpack.c.h.b16 %v3964
        %v4718 = vunpack.c.l.b16 %v3965
        %v4719 = vunpack.c.h.b16 %v3965
        %v4720 = vunpack.c.l.b16 %v3966
        %v4721 = vunpack.c.h.b16 %v3966
        %v4722 = vunpack.c.l.b16 %v3967
        %v4723 = vunpack.c.h.b16 %v3967
        %v4724 = vunpack.c.l.b16 %v3968
        %v4725 = vunpack.c.h.b16 %v3968
        %v4726 = vunpack.c.l.b16 %v3969
        %v4727 = vunpack.c.h.b16 %v3969
        %v4728 = vunpack.c.l.b16 %v3970
        %v4729 = vunpack.c.h.b16 %v3970
        %v4730 = vunpack.c.l.b16 %v3971
        %v4731 = vunpack.c.h.b16 %v3971
        %v4732 = vunpack.c.l.b16 %v3972
        %v4733 = vunpack.c.h.b16 %v3972
        %v4734 = vunpack.c.l.b16 %v3973
        %v4735 = vunpack.c.h.b16 %v3973
        %v4736 = vunpack.c.l.b16 %v3974
        %v4737 = vunpack.c.h.b16 %v3974
        %v4738 = vunpack.c.l.b16 %v3975
        %v4739 = vunpack.c.h.b16 %v3975
        %v4740 = vunpack.c.l.b16 %v3976
        %v4741 = vunpack.c.h.b16 %v3976
        %v4742 = vunpack.c.l.b16 %v3977
        %v4743 = vunpack.c.h.b16 %v3977
        %v4744 = vunpack.c.l.b16 %v3978
        %v4745 = vunpack.c.h.b16 %v3978
        %v4746 = vunpack.c.l.b16 %v3979
        %v4747 = vunpack.c.h.b16 %v3979
        %v4748 = vunpack.c.l.b16 %v3980
        %v4749 = vunpack.c.h.b16 %v3980
        %v4750 = vunpack.c.l.b16 %v3981
        %v4751 = vunpack.c.h.b16 %v3981
        %v4752 = vunpack.c.l.b16 %v3982
        %v4753 = vunpack.c.h.b16 %v3982
        %v4754 = vunpack.c.l.b16 %v3983
        %v4755 = vunpack.c.h.b16 %v3983
        %v4756 = vunpack.c.l.b16 %v3984
        %v4757 = vunpack.c.h.b16 %v3984
        %v4758 = vunpack.c.l.b16 %v3985
        %v4759 = vunpack.c.h.b16 %v3985
        %v4760 = vunpack.c.l.b16 %v3986
        %v4761 = vunpack.c.h.b16 %v3986
        %v4762 = vunpack.c.l.b16 %v3987
        %v4763 = vunpack.c.h.b16 %v3987
        %v4764 = vunpack.c.l.b16 %v3988
        %v4765 = vunpack.c.h.b16 %v3988
        %v4766 = vunpack.c.l.b16 %v3989
        %v4767 = vunpack.c.h.b16 %v3989
        %v4768 = vunpack.c.l.b16 %v3990
        %v4769 = vunpack.c.h.b16 %v3990
        %v4770 = vunpack.c.l.b16 %v3991
        %v4771 = vunpack.c.h.b16 %v3991
        %v4772 = vunpack.c.l.b16 %v3992
        %v4773 = vunpack.c.h.b16 %v3992
        %v4774 = vunpack.c.l.b16 %v3993
        %v4775 = vunpack.c.h.b16 %v3993
        %v4776 = vunpack.c.l.b16 %v3994
        %v4777 = vunpack.c.h.b16 %v3994
        %v4778 = vunpack.c.l.b16 %v3995
        %v4779 = vunpack.c.h.b16 %v3995
        %v4780 = vunpack.c.l.b16 %v3996
        %v4781 = vunpack.c.h.b16 %v3996
        %v4782 = vunpack.c.l.b16 %v3997
        %v4783 = vunpack.c.h.b16 %v3997
        %v4784 = vunpack.c.l.b16 %v3998
        %v4785 = vunpack.c.h.b16 %v3998
        %v4786 = vunpack.c.l.b16 %v3999
        %v4787 = vunpack.c.h.b16 %v3999
        %v4788 = vunpack.c.l.b16 %v4000
        %v4789 = vunpack.c.h.b16 %v4000
        %v4790 = vunpack.c.l.b16 %v4001
        %v4791 = vunpack.c.h.b16 %v4001
        %v4792 = vunpack.c.l.b16 %v4002
        %v4793 = vunpack.c.h.b16 %v4002
        %v4794 = vunpack.c.l.b16 %v4003
        %v4795 = vunpack.c.h.b16 %v4003
        %v4796 = vunpack.c.l.b16 %v4004
        %v4797 = vunpack.c.h.b16 %v4004
        %v4798 = vunpack.c.l.b16 %v4005
        %v4799 = vunpack.c.h.b16 %v4005
        %v4800 = vunpack.c.l.b16 %v4006
        %v4801 = vunpack.c.h.b16 %v4006
        %v4802 = vunpack.c.l.b16 %v4007
        %v4803 = vunpack.c.h.b16 %v4007
        %v4804 = vunpack.c.l.b16 %v4008
        %v4805 = vunpack.c.h.b16 %v4008
        %v4806 = vunpack.c.l.b16 %v4009
        %v4807 = vunpack.c.h.b16 %v4009
        %v4808 = vunpack.c.l.b16 %v4010
        %v4809 = vunpack.c.h.b16 %v4010
        %v4810 = vunpack.c.l.b16 %v4011
        %v4811 = vunpack.c.h.b16 %v4011
        %v4812 = vunpack.c.l.b16 %v4012
        %v4813 = vunpack.c.h.b16 %v4012
        %v4814 = vunpack.c.l.b16 %v4013
        %v4815 = vunpack.c.h.b16 %v4013
        %v4816 = vunpack.c.l.b16 %v4014
        %v4817 = vunpack.c.h.b16 %v4014
        %v4818 = vunpack.c.l.b16 %v4015
        %v4819 = vunpack.c.h.b16 %v4015
        %v4820 = vunpack.c.l.b16 %v4016
        %v4821 = vunpack.c.h.b16 %v4016
        %v4822 = vunpack.c.l.b16 %v4017
        %v4823 = vunpack.c.h.b16 %v4017
        %v4824 = vunpack.c.l.b16 %v4018
        %v4825 = vunpack.c.h.b16 %v4018
        %v4826 = vunpack.c.l.b16 %v4019
        %v4827 = vunpack.c.h.b16 %v4019
        %v4828 = vunpack.c.l.b16 %v4020
        %v4829 = vunpack.c.h.b16 %v4020
        %v4830 = vunpack.c.l.b16 %v4021
        %v4831 = vunpack.c.h.b16 %v4021
        %v4832 = vpack.c.b16 %v4328, %v4320
        %v4833 = vpack.c.b16 %v4329, %v4321
        %v4834 = vpack.c.b16 %v4330, %v4322
        %v4835 = vpack.c.b16 %v4331, %v4323
        %v4836 = vpack.c.b16 %v4332, %v4324
        %v4837 = vpack.c.b16 %v4333, %v4325
        %v4838 = vpack.c.b16 %v4334, %v4326
        %v4839 = vpack.c.b16 %v4335, %v4327
        %v4840 = vpack.c.b16 %v4344, %v4336
        %v4841 = vpack.c.b16 %v4345, %v4337
        %v4842 = vpack.c.b16 %v4346, %v4338
        %v4843 = vpack.c.b16 %v4347, %v4339
        %v4844 = vpack.c.b16 %v4348, %v4340
        %v4845 = vpack.c.b16 %v4349, %v4341
        %v4846 = vpack.c.b16 %v4350, %v4342
        %v4847 = vpack.c.b16 %v4351, %v4343
        %v4848 = vpack.c.b16 %v4360, %v4352
        %v4849 = vpack.c.b16 %v4361, %v4353
        %v4850 = vpack.c.b16 %v4362, %v4354
        %v4851 = vpack.c.b16 %v4363, %v4355
        %v4852 = vpack.c.b16 %v4364, %v4356
        %v4853 = vpack.c.b16 %v4365, %v4357
        %v4854 = vpack.c.b16 %v4366, %v4358
        %v4855 = vpack.c.b16 %v4367, %v4359
        %v4856 = vpack.c.b16 %v4376, %v4368
        %v4857 = vpack.c.b16 %v4377, %v4369
        %v4858 = vpack.c.b16 %v4378, %v4370
        %v4859 = vpack.c.b16 %v4379, %v4371
        %v4860 = vpack.c.b16 %v4380, %v4372
        %v4861 = vpack.c.b16 %v4381, %v4373
        %v4862 = vpack.c.b16 %v4382, %v4374
        %v4863 = vpack.c.b16 %v4383, %v4375
        %v4864 = vpack.c.b16 %v4392, %v4384
        %v4865 = vpack.c.b16 %v4393, %v4385
        %v4866 = vpack.c.b16 %v4394, %v4386
        %v4867 = vpack.c.b16 %v4395, %v4387
        %v4868 = vpack.c.b16 %v4396, %v4388
        %v4869 = vpack.c.b16 %v4397, %v4389
        %v4870 = vpack.c.b16 %v4398, %v4390
        %v4871 = vpack.c.b16 %v4399, %v4391
        %v4872 = vpack.c.b16 %v4408, %v4400
        %v4873 = vpack.c.b16 %v4409, %v4401
        %v4874 = vpack.c.b16 %v4410, %v4402
        %v4875 = vpack.c.b16 %v4411, %v4403
        %v4876 = vpack.c.b16 %v4412, %v4404
        %v4877 = vpack.c.b16 %v4413, %v4405
        %v4878 = vpack.c.b16 %v4414, %v4406
        %v4879 = vpack.c.b16 %v4415, %v4407
        %v4880 = vpack.c.b16 %v4424, %v4416
        %v4881 = vpack.c.b16 %v4425, %v4417
        %v4882 = vpack.c.b16 %v4426, %v4418
        %v4883 = vpack.c.b16 %v4427, %v4419
        %v4884 = vpack.c.b16 %v4428, %v4420
        %v4885 = vpack.c.b16 %v4429, %v4421
        %v4886 = vpack.c.b16 %v4430, %v4422
        %v4887 = vpack.c.b16 %v4431, %v4423
        %v4888 = vpack.c.b16 %v4440, %v4432
        %v4889 = vpack.c.b16 %v4441, %v4433
        %v4890 = vpack.c.b16 %v4442, %v4434
        %v4891 = vpack.c.b16 %v4443, %v4435
        %v4892 = vpack.c.b16 %v4444, %v4436
        %v4893 = vpack.c.b16 %v4445, %v4437
        %v4894 = vpack.c.b16 %v4446, %v4438
        %v4895 = vpack.c.b16 %v4447, %v4439
        %v4896 = vpack.c.b16 %v4456, %v4448
        %v4897 = vpack.c.b16 %v4457, %v4449
        %v4898 = vpack.c.b16 %v4458, %v4450
        %v4899 = vpack.c.b16 %v4459, %v4451
        %v4900 = vpack.c.b16 %v4460, %v4452
        %v4901 = vpack.c.b16 %v4461, %v4453
        %v4902 = vpack.c.b16 %v4462, %v4454
        %v4903 = vpack.c.b16 %v4463, %v4455
        %v4904 = vpack.c.b16 %v4472, %v4464
        %v4905 = vpack.c.b16 %v4473, %v4465
        %v4906 = vpack.c.b16 %v4474, %v4466
        %v4907 = vpack.c.b16 %v4475, %v4467
        %v4908 = vpack.c.b16 %v4476, %v4468
        %v4909 = vpack.c.b16 %v4477, %v4469
        %v4910 = vpack.c.b16 %v4478, %v4470
        %v4911 = vpack.c.b16 %v4479, %v4471
        %v4912 = vpack.c.b16 %v4488, %v4480
        %v4913 = vpack.c.b16 %v4489, %v4481
        %v4914 = vpack.c.b16 %v4490, %v4482
        %v4915 = vpack.c.b16 %v4491, %v4483
        %v4916 = vpack.c.b16 %v4492, %v4484
        %v4917 = vpack.c.b16 %v4493, %v4485
        %v4918 = vpack.c.b16 %v4494, %v4486
        %v4919 = vpack.c.b16 %v4495, %v4487
        %v4920 = vpack.c.b16 %v4504, %v4496
        %v4921 = vpack.c.b16 %v4505, %v4497
        %v4922 = vpack.c.b16 %v4506, %v4498
        %v4923 = vpack.c.b16 %v4507, %v4499
        %v4924 = vpack.c.b16 %v4508, %v4500
        %v4925 = vpack.c.b16 %v4509, %v4501
        %v4926 = vpack.c.b16 %v4510, %v4502
        %v4927 = vpack.c.b16 %v4511, %v4503
        %v4928 = vpack.c.b16 %v4520, %v4512
        %v4929 = vpack.c.b16 %v4521, %v4513
        %v4930 = vpack.c.b16 %v4522, %v4514
        %v4931 = vpack.c.b16 %v4523, %v4515
        %v4932 = vpack.c.b16 %v4524, %v4516
        %v4933 = vpack.c.b16 %v4525, %v4517
        %v4934 = vpack.c.b16 %v4526, %v4518
        %v4935 = vpack.c.b16 %v4527, %v4519
        %v4936 = vpack.c.b16 %v4536, %v4528
        %v4937 = vpack.c.b16 %v4537, %v4529
        %v4938 = vpack.c.b16 %v4538, %v4530
        %v4939 = vpack.c.b16 %v4539, %v4531
        %v4940 = vpack.c.b16 %v4540, %v4532
        %v4941 = vpack.c.b16 %v4541, %v4533
        %v4942 = vpack.c.b16 %v4542, %v4534
        %v4943 = vpack.c.b16 %v4543, %v4535
        %v4944 = vpack.c.b16 %v4552, %v4544
        %v4945 = vpack.c.b16 %v4553, %v4545
        %v4946 = vpack.c.b16 %v4554, %v4546
        %v4947 = vpack.c.b16 %v4555, %v4547
        %v4948 = vpack.c.b16 %v4556, %v4548
        %v4949 = vpack.c.b16 %v4557, %v4549
        %v4950 = vpack.c.b16 %v4558, %v4550
        %v4951 = vpack.c.b16 %v4559, %v4551
        %v4952 = vpack.c.b16 %v4568, %v4560
        %v4953 = vpack.c.b16 %v4569, %v4561
        %v4954 = vpack.c.b16 %v4570, %v4562
        %v4955 = vpack.c.b16 %v4571, %v4563
        %v4956 = vpack.c.b16 %v4572, %v4564
        %v4957 = vpack.c.b16 %v4573, %v4565
        %v4958 = vpack.c.b16 %v4574, %v4566
        %v4959 = vpack.c.b16 %v4575, %v4567
        %v4960 = vpack.c.b16 %v4584, %v4576
        %v4961 = vpack.c.b16 %v4585, %v4577
        %v4962 = vpack.c.b16 %v4586, %v4578
        %v4963 = vpack.c.b16 %v4587, %v4579
        %v4964 = vpack.c.b16 %v4588, %v4580
        %v4965 = vpack.c.b16 %v4589, %v4581
        %v4966 = vpack.c.b16 %v4590, %v4582
        %v4967 = vpack.c.b16 %v4591, %v4583
        %v4968 = vpack.c.b16 %v4600, %v4592
        %v4969 = vpack.c.b16 %v4601, %v4593
        %v4970 = vpack.c.b16 %v4602, %v4594
        %v4971 = vpack.c.b16 %v4603, %v4595
        %v4972 = vpack.c.b16 %v4604, %v4596
        %v4973 = vpack.c.b16 %v4605, %v4597
        %v4974 = vpack.c.b16 %v4606, %v4598
        %v4975 = vpack.c.b16 %v4607, %v4599
        %v4976 = vpack.c.b16 %v4616, %v4608
        %v4977 = vpack.c.b16 %v4617, %v4609
        %v4978 = vpack.c.b16 %v4618, %v4610
        %v4979 = vpack.c.b16 %v4619, %v4611
        %v4980 = vpack.c.b16 %v4620, %v4612
        %v4981 = vpack.c.b16 %v4621, %v4613
        %v4982 = vpack.c.b16 %v4622, %v4614
        %v4983 = vpack.c.b16 %v4623, %v4615
        %v4984 = vpack.c.b16 %v4632, %v4624
        %v4985 = vpack.c.b16 %v4633, %v4625
        %v4986 = vpack.c.b16 %v4634, %v4626
        %v4987 = vpack.c.b16 %v4635, %v4627
        %v4988 = vpack.c.b16 %v4636, %v4628
        %v4989 = vpack.c.b16 %v4637, %v4629
        %v4990 = vpack.c.b16 %v4638, %v4630
        %v4991 = vpack.c.b16 %v4639, %v4631
        %v4992 = vpack.c.b16 %v4648, %v4640
        %v4993 = vpack.c.b16 %v4649, %v4641
        %v4994 = vpack.c.b16 %v4650, %v4642
        %v4995 = vpack.c.b16 %v4651, %v4643
        %v4996 = vpack.c.b16 %v4652, %v4644
        %v4997 = vpack.c.b16 %v4653, %v4645
        %v4998 = vpack.c.b16 %v4654, %v4646
        %v4999 = vpack.c.b16 %v4655, %v4647
        %v5000 = vpack.c.b16 %v4664, %v4656
        %v5001 = vpack.c.b16 %v4665, %v4657
        %v5002 = vpack.c.b16 %v4666, %v4658
        %v5003 = vpack.c.b16 %v4667, %v4659
        %v5004 = vpack.c.b16 %v4668, %v4660
        %v5005 = vpack.c.b16 %v4669, %v4661
        %v5006 = vpack.c.b16 %v4670, %v4662
        %v5007 = vpack.c.b16 %v4671, %v4663
        %v5008 = vpack.c.b16 %v4680, %v4672
        %v5009 = vpack.c.b16 %v4681, %v4673
        %v5010 = vpack.c.b16 %v4682, %v4674
        %v5011 = vpack.c.b16 %v4683, %v4675
        %v5012 = vpack.c.b16 %v4684, %v4676
        %v5013 = vpack.c.b16 %v4685, %v4677
        %v5014 = vpack.c.b16 %v4686, %v4678
        %v5015 = vpack.c.b16 %v4687, %v4679
        %v5016 = vpack.c.b16 %v4696, %v4688
        %v5017 = vpack.c.b16 %v4697, %v4689
        %v5018 = vpack.c.b16 %v4698, %v4690
        %v5019 = vpack.c.b16 %v4699, %v4691
        %v5020 = vpack.c.b16 %v4700, %v4692
        %v5021 = vpack.c.b16 %v4701, %v4693
        %v5022 = vpack.c.b16 %v4702, %v4694
        %v5023 = vpack.c.b16 %v4703, %v4695
        %v5024 = vpack.c.b16 %v4712, %v4704
        %v5025 = vpack.c.b16 %v4713, %v4705
        %v5026 = vpack.c.b16 %v4714, %v4706
        %v5027 = vpack.c.b16 %v4715, %v4707
        %v5028 = vpack.c.b16 %v4716, %v4708
        %v5029 = vpack.c.b16 %v4717, %v4709
        %v5030 = vpack.c.b16 %v4718, %v4710
        %v5031 = vpack.c.b16 %v4719, %v4711
        %v5032 = vpack.c.b16 %v4728, %v4720
        %v5033 = vpack.c.b16 %v4729, %v4721
        %v5034 = vpack.c.b16 %v4730, %v4722
        %v5035 = vpack.c.b16 %v4731, %v4723
        %v5036 = vpack.c.b16 %v4732, %v4724
        %v5037 = vpack.c.b16 %v4733, %v4725
        %v5038 = vpack.c.b16 %v4734, %v4726
        %v5039 = vpack.c.b16 %v4735, %v4727
        %v5040 = vpack.c.b16 %v4744, %v4736
        %v5041 = vpack.c.b16 %v4745, %v4737
        %v5042 = vpack.c.b16 %v4746, %v4738
        %v5043 = vpack.c.b16 %v4747, %v4739
        %v5044 = vpack.c.b16 %v4748, %v4740
        %v5045 = vpack.c.b16 %v4749, %v4741
        %v5046 = vpack.c.b16 %v4750, %v4742
        %v5047 = vpack.c.b16 %v4751, %v4743
        %v5048 = vpack.c.b16 %v4760, %v4752
        %v5049 = vpack.c.b16 %v4761, %v4753
        %v5050 = vpack.c.b16 %v4762, %v4754
        %v5051 = vpack.c.b16 %v4763, %v4755
        %v5052 = vpack.c.b16 %v4764, %v4756
        %v5053 = vpack.c.b16 %v4765, %v4757
        %v5054 = vpack.c.b16 %v4766, %v4758
        %v5055 = vpack.c.b16 %v4767, %v4759
        %v5056 = vpack.c.b16 %v4776, %v4768
        %v5057 = vpack.c.b16 %v4777, %v4769
        %v5058 = vpack.c.b16 %v4778, %v4770
        %v5059 = vpack.c.b16 %v4779, %v4771
        %v5060 = vpack.c.b16 %v4780, %v4772
        %v5061 = vpack.c.b16 %v4781, %v4773
        %v5062 = vpack.c.b16 %v4782, %v4774
        %v5063 = vpack.c.b16 %v4783, %v4775
        %v5064 = vpack.c.b16 %v4792, %v4784
        %v5065 = vpack.c.b16 %v4793, %v4785
        %v5066 = vpack.c.b16 %v4794, %v4786
        %v5067 = vpack.c.b16 %v4795, %v4787
        %v5068 = vpack.c.b16 %v4796, %v4788
        %v5069 = vpack.c.b16 %v4797, %v4789
        %v5070 = vpack.c.b16 %v4798, %v4790
        %v5071 = vpack.c.b16 %v4799, %v4791
        %v5072 = vpack.c.b16 %v4808, %v4800
        %v5073 = vpack.c.b16 %v4809, %v4801
        %v5074 = vpack.c.b16 %v4810, %v4802
        %v5075 = vpack.c.b16 %v4811, %v4803
        %v5076 = vpack.c.b16 %v4812, %v4804
        %v5077 = vpack.c.b16 %v4813, %v4805
        %v5078 = vpack.c.b16 %v4814, %v4806
        %v5079 = vpack.c.b16 %v4815, %v4807
        %v5080 = vpack.c.b16 %v4824, %v4816
        %v5081 = vpack.c.b16 %v4825, %v4817
        %v5082 = vpack.c.b16 %v4826, %v4818
        %v5083 = vpack.c.b16 %v4827, %v4819
        %v5084 = vpack.c.b16 %v4828, %v4820
        %v5085 = vpack.c.b16 %v4829, %v4821
        %v5086 = vpack.c.b16 %v4830, %v4822
        %v5087 = vpack.c.b16 %v4831, %v4823
        %5344 = vmatprep.subr.bf16.mxu0 %v4833
        %5345 = vmatpush1.bf16.msra.mxu0 %v4832
        %5346 = vmatprep.subr.bf16.mxu0 %v4841
        %5347 = vmatpush1.bf16.msra.mxu0 %v4840
        %5348 = vmatprep.subr.bf16.mxu0 %v4849
        %5349 = vmatpush1.bf16.msra.mxu0 %v4848
        %5350 = vmatprep.subr.bf16.mxu0 %v4857
        %5351 = vmatpush1.bf16.msra.mxu0 %v4856
        %5352 = vmatprep.subr.bf16.mxu0 %v4865
        %5353 = vmatpush1.bf16.msra.mxu0 %v4864
        %5354 = vmatprep.subr.bf16.mxu0 %v4873
        %5355 = vmatpush1.bf16.msra.mxu0 %v4872
        %5356 = vmatprep.subr.bf16.mxu0 %v4881
        %5357 = vmatpush1.bf16.msra.mxu0 %v4880
        %5358 = vmatprep.subr.bf16.mxu0 %v4889
        %5359 = vmatpush1.bf16.msra.mxu0 %v4888
        %5360 = vmatprep.subr.bf16.mxu0 %v4897
        %5361 = vmatpush1.bf16.msra.mxu0 %v4896
        %5362 = vmatprep.subr.bf16.mxu0 %v4905
        %5363 = vmatpush1.bf16.msra.mxu0 %v4904
        %5364 = vmatprep.subr.bf16.mxu0 %v4913
        %5365 = vmatpush1.bf16.msra.mxu0 %v4912
        %5366 = vmatprep.subr.bf16.mxu0 %v4921
        %5367 = vmatpush1.bf16.msra.mxu0 %v4920
        %5368 = vmatprep.subr.bf16.mxu0 %v4929
        %5369 = vmatpush1.bf16.msra.mxu0 %v4928
        %5370 = vmatprep.subr.bf16.mxu0 %v4937
        %5371 = vmatpush1.bf16.msra.mxu0 %v4936
        %5372 = vmatprep.subr.bf16.mxu0 %v4945
        %5373 = vmatpush1.bf16.msra.mxu0 %v4944
        %5374 = vmatprep.subr.bf16.mxu0 %v4953
        %5375 = vmatpush1.bf16.msra.mxu0 %v4952
        %5376 = vmatprep.mubr.bf16.mxu0 %v3763
        %5377 = vmatmul.mubr.bf16.gmra.mrb[0].mxu0 %v3762
        %v5378 = vpop.f32.mrb[0].mxu0
        %v5379 = vadd.f32 %v4027, %v5378
        %v5380 = vpop.f32.mrb[0].mxu0
        %v5381 = vadd.f32 %v4031, %v5380
        %v5382 = vpop.f32.mrb[0].mxu0
        %v5383 = vadd.f32 %v4027, %v5382
        %v5384 = vpop.f32.mrb[0].mxu0
        %v5385 = vadd.f32 %v4031, %v5384
        %5386 = vdwg.mxu0
        %5387 = vmatprep.subr.bf16.mxu0 %v4961
        %5388 = vmatpush1.bf16.msra.mxu0 %v4960
        %5389 = vmatprep.subr.bf16.mxu0 %v4969
        %5390 = vmatpush1.bf16.msra.mxu0 %v4968
        %5391 = vmatprep.subr.bf16.mxu0 %v4977
        %5392 = vmatpush1.bf16.msra.mxu0 %v4976
        %5393 = vmatprep.subr.bf16.mxu0 %v4985
        %5394 = vmatpush1.bf16.msra.mxu0 %v4984
        %5395 = vmatprep.subr.bf16.mxu0 %v4993
        %5396 = vmatpush1.bf16.msra.mxu0 %v4992
        %5397 = vmatprep.subr.bf16.mxu0 %v5001
        %5398 = vmatpush1.bf16.msra.mxu0 %v5000
        %5399 = vmatprep.subr.bf16.mxu0 %v5009
        %5400 = vmatpush1.bf16.msra.mxu0 %v5008
        %5401 = vmatprep.subr.bf16.mxu0 %v5017
        %5402 = vmatpush1.bf16.msra.mxu0 %v5016
        %5403 = vmatprep.subr.bf16.mxu0 %v5025
        %5404 = vmatpush1.bf16.msra.mxu0 %v5024
        %5405 = vmatprep.subr.bf16.mxu0 %v5033
        %5406 = vmatpush1.bf16.msra.mxu0 %v5032
        %5407 = vmatprep.subr.bf16.mxu0 %v5041
        %5408 = vmatpush1.bf16.msra.mxu0 %v5040
        %5409 = vmatprep.subr.bf16.mxu0 %v5049
        %5410 = vmatpush1.bf16.msra.mxu0 %v5048
        %5411 = vmatprep.subr.bf16.mxu0 %v5057
        %5412 = vmatpush1.bf16.msra.mxu0 %v5056
        %5413 = vmatprep.subr.bf16.mxu0 %v5065
        %5414 = vmatpush1.bf16.msra.mxu0 %v5064
        %5415 = vmatprep.subr.bf16.mxu0 %v5073
        %5416 = vmatpush1.bf16.msra.mxu0 %v5072
        %5417 = vmatprep.subr.bf16.mxu0 %v5081
        %5418 = vmatpush1.bf16.msra.mxu0 %v5080
        %5419 = vmatprep.mubr.bf16.mxu0 %v3765
        %5420 = vmatmul.mubr.bf16.gmra.mrb[0].mxu0 %v3764
        %v5421 = vpop.f32.mrb[0].mxu0
        %v5422 = vadd.f32 %v5379, %v5421
        %v5423 = vpop.f32.mrb[0].mxu0
        %v5424 = vadd.f32 %v5381, %v5423
        %v5425 = vpop.f32.mrb[0].mxu0
        %v5426 = vadd.f32 %v5383, %v5425
        %v5427 = vpop.f32.mrb[0].mxu0
        %v5428 = vadd.f32 %v5385, %v5427
        %5429 = vdwg.mxu0
        %5430 = vmatprep.subr.bf16.mxu0 %v4835
        %5431 = vmatpush1.bf16.msra.mxu0 %v4834
        %5432 = vmatprep.subr.bf16.mxu0 %v4843
        %5433 = vmatpush1.bf16.msra.mxu0 %v4842
        %5434 = vmatprep.subr.bf16.mxu0 %v4851
        %5435 = vmatpush1.bf16.msra.mxu0 %v4850
        %5436 = vmatprep.subr.bf16.mxu0 %v4859
        %5437 = vmatpush1.bf16.msra.mxu0 %v4858
        %5438 = vmatprep.subr.bf16.mxu0 %v4867
        %5439 = vmatpush1.bf16.msra.mxu0 %v4866
        %5440 = vmatprep.subr.bf16.mxu0 %v4875
        %5441 = vmatpush1.bf16.msra.mxu0 %v4874
        %5442 = vmatprep.subr.bf16.mxu0 %v4883
        %5443 = vmatpush1.bf16.msra.mxu0 %v4882
        %5444 = vmatprep.subr.bf16.mxu0 %v4891
        %5445 = vmatpush1.bf16.msra.mxu0 %v4890
        %5446 = vmatprep.subr.bf16.mxu0 %v4899
        %5447 = vmatpush1.bf16.msra.mxu0 %v4898
        %5448 = vmatprep.subr.bf16.mxu0 %v4907
        %5449 = vmatpush1.bf16.msra.mxu0 %v4906
        %5450 = vmatprep.subr.bf16.mxu0 %v4915
        %5451 = vmatpush1.bf16.msra.mxu0 %v4914
        %5452 = vmatprep.subr.bf16.mxu0 %v4923
        %5453 = vmatpush1.bf16.msra.mxu0 %v4922
        %5454 = vmatprep.subr.bf16.mxu0 %v4931
        %5455 = vmatpush1.bf16.msra.mxu0 %v4930
        %5456 = vmatprep.subr.bf16.mxu0 %v4939
        %5457 = vmatpush1.bf16.msra.mxu0 %v4938
        %5458 = vmatprep.subr.bf16.mxu0 %v4947
        %5459 = vmatpush1.bf16.msra.mxu0 %v4946
        %5460 = vmatprep.subr.bf16.mxu0 %v4955
        %5461 = vmatpush1.bf16.msra.mxu0 %v4954
        %5462 = vmatprep.mubr.bf16.mxu0 %v3763
        %5463 = vmatmul.mubr.bf16.gmra.mrb[0].mxu0 %v3762
        %v5464 = vpop.f32.mrb[0].mxu0
        %v5465 = vadd.f32 %v4035, %v5464
        %v5466 = vpop.f32.mrb[0].mxu0
        %v5467 = vadd.f32 %v4039, %v5466
        %v5468 = vpop.f32.mrb[0].mxu0
        %v5469 = vadd.f32 %v4035, %v5468
        %v5470 = vpop.f32.mrb[0].mxu0
        %v5471 = vadd.f32 %v4039, %v5470
        %5472 = vdwg.mxu0
        %5473 = vmatprep.subr.bf16.mxu0 %v4963
        %5474 = vmatpush1.bf16.msra.mxu0 %v4962
        %5475 = vmatprep.subr.bf16.mxu0 %v4971
        %5476 = vmatpush1.bf16.msra.mxu0 %v4970
        %5477 = vmatprep.subr.bf16.mxu0 %v4979
        %5478 = vmatpush1.bf16.msra.mxu0 %v4978
        %5479 = vmatprep.subr.bf16.mxu0 %v4987
        %5480 = vmatpush1.bf16.msra.mxu0 %v4986
        %5481 = vmatprep.subr.bf16.mxu0 %v4995
        %5482 = vmatpush1.bf16.msra.mxu0 %v4994
        %5483 = vmatprep.subr.bf16.mxu0 %v5003
        %5484 = vmatpush1.bf16.msra.mxu0 %v5002
        %5485 = vmatprep.subr.bf16.mxu0 %v5011
        %5486 = vmatpush1.bf16.msra.mxu0 %v5010
        %5487 = vmatprep.subr.bf16.mxu0 %v5019
        %5488 = vmatpush1.bf16.msra.mxu0 %v5018
        %5489 = vmatprep.subr.bf16.mxu0 %v5027
        %5490 = vmatpush1.bf16.msra.mxu0 %v5026
        %5491 = vmatprep.subr.bf16.mxu0 %v5035
        %5492 = vmatpush1.bf16.msra.mxu0 %v5034
        %5493 = vmatprep.subr.bf16.mxu0 %v5043
        %5494 = vmatpush1.bf16.msra.mxu0 %v5042
        %5495 = vmatprep.subr.bf16.mxu0 %v5051
        %5496 = vmatpush1.bf16.msra.mxu0 %v5050
        %5497 = vmatprep.subr.bf16.mxu0 %v5059
        %5498 = vmatpush1.bf16.msra.mxu0 %v5058
        %5499 = vmatprep.subr.bf16.mxu0 %v5067
        %5500 = vmatpush1.bf16.msra.mxu0 %v5066
        %5501 = vmatprep.subr.bf16.mxu0 %v5075
        %5502 = vmatpush1.bf16.msra.mxu0 %v5074
        %5503 = vmatprep.subr.bf16.mxu0 %v5083
        %5504 = vmatpush1.bf16.msra.mxu0 %v5082
        %5505 = vmatprep.mubr.bf16.mxu0 %v3765
        %5506 = vmatmul.mubr.bf16.gmra.mrb[0].mxu0 %v3764
        %v5507 = vpop.f32.mrb[0].mxu0
        %v5508 = vadd.f32 %v5465, %v5507
        %v5509 = vpop.f32.mrb[0].mxu0
        %v5510 = vadd.f32 %v5467, %v5509
        %v5511 = vpop.f32.mrb[0].mxu0
        %v5512 = vadd.f32 %v5469, %v5511
        %v5513 = vpop.f32.mrb[0].mxu0
        %v5514 = vadd.f32 %v5471, %v5513
        %5515 = vdwg.mxu0
        %5516 = vmatprep.subr.bf16.mxu0 %v4837
        %5517 = vmatpush1.bf16.msra.mxu0 %v4836
        %5518 = vmatprep.subr.bf16.mxu0 %v4845
        %5519 = vmatpush1.bf16.msra.mxu0 %v4844
        %5520 = vmatprep.subr.bf16.mxu0 %v4853
        %5521 = vmatpush1.bf16.msra.mxu0 %v4852
        %5522 = vmatprep.subr.bf16.mxu0 %v4861
        %5523 = vmatpush1.bf16.msra.mxu0 %v4860
        %5524 = vmatprep.subr.bf16.mxu0 %v4869
        %5525 = vmatpush1.bf16.msra.mxu0 %v4868
        %5526 = vmatprep.subr.bf16.mxu0 %v4877
        %5527 = vmatpush1.bf16.msra.mxu0 %v4876
        %5528 = vmatprep.subr.bf16.mxu0 %v4885
        %5529 = vmatpush1.bf16.msra.mxu0 %v4884
        %5530 = vmatprep.subr.bf16.mxu0 %v4893
        %5531 = vmatpush1.bf16.msra.mxu0 %v4892
        %5532 = vmatprep.subr.bf16.mxu0 %v4901
        %5533 = vmatpush1.bf16.msra.mxu0 %v4900
        %5534 = vmatprep.subr.bf16.mxu0 %v4909
        %5535 = vmatpush1.bf16.msra.mxu0 %v4908
        %5536 = vmatprep.subr.bf16.mxu0 %v4917
        %5537 = vmatpush1.bf16.msra.mxu0 %v4916
        %5538 = vmatprep.subr.bf16.mxu0 %v4925
        %5539 = vmatpush1.bf16.msra.mxu0 %v4924
        %5540 = vmatprep.subr.bf16.mxu0 %v4933
        %5541 = vmatpush1.bf16.msra.mxu0 %v4932
        %5542 = vmatprep.subr.bf16.mxu0 %v4941
        %5543 = vmatpush1.bf16.msra.mxu0 %v4940
        %5544 = vmatprep.subr.bf16.mxu0 %v4949
        %5545 = vmatpush1.bf16.msra.mxu0 %v4948
        %5546 = vmatprep.subr.bf16.mxu0 %v4957
        %5547 = vmatpush1.bf16.msra.mxu0 %v4956
        %5548 = vmatprep.mubr.bf16.mxu0 %v3763
        %5549 = vmatmul.mubr.bf16.gmra.mrb[0].mxu0 %v3762
        %v5550 = vpop.f32.mrb[0].mxu0
        %v5551 = vadd.f32 %v4043, %v5550
        %v5552 = vpop.f32.mrb[0].mxu0
        %v5553 = vadd.f32 %v4047, %v5552
        %v5554 = vpop.f32.mrb[0].mxu0
        %v5555 = vadd.f32 %v4043, %v5554
        %v5556 = vpop.f32.mrb[0].mxu0
        %v5557 = vadd.f32 %v4047, %v5556
        %5558 = vdwg.mxu0
        %5559 = vmatprep.subr.bf16.mxu0 %v4965
        %5560 = vmatpush1.bf16.msra.mxu0 %v4964
        %5561 = vmatprep.subr.bf16.mxu0 %v4973
        %5562 = vmatpush1.bf16.msra.mxu0 %v4972
        %5563 = vmatprep.subr.bf16.mxu0 %v4981
        %5564 = vmatpush1.bf16.msra.mxu0 %v4980
        %5565 = vmatprep.subr.bf16.mxu0 %v4989
        %5566 = vmatpush1.bf16.msra.mxu0 %v4988
        %5567 = vmatprep.subr.bf16.mxu0 %v4997
        %5568 = vmatpush1.bf16.msra.mxu0 %v4996
        %5569 = vmatprep.subr.bf16.mxu0 %v5005
        %5570 = vmatpush1.bf16.msra.mxu0 %v5004
        %5571 = vmatprep.subr.bf16.mxu0 %v5013
        %5572 = vmatpush1.bf16.msra.mxu0 %v5012
        %5573 = vmatprep.subr.bf16.mxu0 %v5021
        %5574 = vmatpush1.bf16.msra.mxu0 %v5020
        %5575 = vmatprep.subr.bf16.mxu0 %v5029
        %5576 = vmatpush1.bf16.msra.mxu0 %v5028
        %5577 = vmatprep.subr.bf16.mxu0 %v5037
        %5578 = vmatpush1.bf16.msra.mxu0 %v5036
        %5579 = vmatprep.subr.bf16.mxu0 %v5045
        %5580 = vmatpush1.bf16.msra.mxu0 %v5044
        %5581 = vmatprep.subr.bf16.mxu0 %v5053
        %5582 = vmatpush1.bf16.msra.mxu0 %v5052
        %5583 = vmatprep.subr.bf16.mxu0 %v5061
        %5584 = vmatpush1.bf16.msra.mxu0 %v5060
        %5585 = vmatprep.subr.bf16.mxu0 %v5069
        %5586 = vmatpush1.bf16.msra.mxu0 %v5068
        %5587 = vmatprep.subr.bf16.mxu0 %v5077
        %5588 = vmatpush1.bf16.msra.mxu0 %v5076
        %5589 = vmatprep.subr.bf16.mxu0 %v5085
        %5590 = vmatpush1.bf16.msra.mxu0 %v5084
        %5591 = vmatprep.mubr.bf16.mxu0 %v3765
        %5592 = vmatmul.mubr.bf16.gmra.mrb[0].mxu0 %v3764
        %v5593 = vpop.f32.mrb[0].mxu0
        %v5594 = vadd.f32 %v5551, %v5593
        %v5595 = vpop.f32.mrb[0].mxu0
        %v5596 = vadd.f32 %v5553, %v5595
        %v5597 = vpop.f32.mrb[0].mxu0
        %v5598 = vadd.f32 %v5555, %v5597
        %v5599 = vpop.f32.mrb[0].mxu0
        %v5600 = vadd.f32 %v5557, %v5599
        %5601 = vdwg.mxu0
        %5602 = vmatprep.subr.bf16.mxu0 %v4839
        %5603 = vmatpush1.bf16.msra.mxu0 %v4838
        %5604 = vmatprep.subr.bf16.mxu0 %v4847
        %5605 = vmatpush1.bf16.msra.mxu0 %v4846
        %5606 = vmatprep.subr.bf16.mxu0 %v4855
        %5607 = vmatpush1.bf16.msra.mxu0 %v4854
        %5608 = vmatprep.subr.bf16.mxu0 %v4863
        %5609 = vmatpush1.bf16.msra.mxu0 %v4862
        %5610 = vmatprep.subr.bf16.mxu0 %v4871
        %5611 = vmatpush1.bf16.msra.mxu0 %v4870
        %5612 = vmatprep.subr.bf16.mxu0 %v4879
        %5613 = vmatpush1.bf16.msra.mxu0 %v4878
        %5614 = vmatprep.subr.bf16.mxu0 %v4887
        %5615 = vmatpush1.bf16.msra.mxu0 %v4886
        %5616 = vmatprep.subr.bf16.mxu0 %v4895
        %5617 = vmatpush1.bf16.msra.mxu0 %v4894
        %5618 = vmatprep.subr.bf16.mxu0 %v4903
        %5619 = vmatpush1.bf16.msra.mxu0 %v4902
        %5620 = vmatprep.subr.bf16.mxu0 %v4911
        %5621 = vmatpush1.bf16.msra.mxu0 %v4910
        %5622 = vmatprep.subr.bf16.mxu0 %v4919
        %5623 = vmatpush1.bf16.msra.mxu0 %v4918
        %5624 = vmatprep.subr.bf16.mxu0 %v4927
        %5625 = vmatpush1.bf16.msra.mxu0 %v4926
        %5626 = vmatprep.subr.bf16.mxu0 %v4935
        %5627 = vmatpush1.bf16.msra.mxu0 %v4934
        %5628 = vmatprep.subr.bf16.mxu0 %v4943
        %5629 = vmatpush1.bf16.msra.mxu0 %v4942
        %5630 = vmatprep.subr.bf16.mxu0 %v4951
        %5631 = vmatpush1.bf16.msra.mxu0 %v4950
        %5632 = vmatprep.subr.bf16.mxu0 %v4959
        %5633 = vmatpush1.bf16.msra.mxu0 %v4958
        %5634 = vmatprep.mubr.bf16.mxu0 %v3763
        %5635 = vmatmul.mubr.bf16.gmra.mrb[0].mxu0 %v3762
        %v5636 = vpop.f32.mrb[0].mxu0
        %v5637 = vadd.f32 %v4051, %v5636
        %v5638 = vpop.f32.mrb[0].mxu0
        %v5639 = vadd.f32 %v4055, %v5638
        %v5640 = vpop.f32.mrb[0].mxu0
        %v5641 = vadd.f32 %v4051, %v5640
        %v5642 = vpop.f32.mrb[0].mxu0
        %v5643 = vadd.f32 %v4055, %v5642
        %5644 = vdwg.mxu0
        %5645 = vmatprep.subr.bf16.mxu0 %v4967
        %5646 = vmatpush1.bf16.msra.mxu0 %v4966
        %5647 = vmatprep.subr.bf16.mxu0 %v4975
        %5648 = vmatpush1.bf16.msra.mxu0 %v4974
        %5649 = vmatprep.subr.bf16.mxu0 %v4983
        %5650 = vmatpush1.bf16.msra.mxu0 %v4982
        %5651 = vmatprep.subr.bf16.mxu0 %v4991
        %5652 = vmatpush1.bf16.msra.mxu0 %v4990
        %5653 = vmatprep.subr.bf16.mxu0 %v4999
        %5654 = vmatpush1.bf16.msra.mxu0 %v4998
        %5655 = vmatprep.subr.bf16.mxu0 %v5007
        %5656 = vmatpush1.bf16.msra.mxu0 %v5006
        %5657 = vmatprep.subr.bf16.mxu0 %v5015
        %5658 = vmatpush1.bf16.msra.mxu0 %v5014
        %5659 = vmatprep.subr.bf16.mxu0 %v5023
        %5660 = vmatpush1.bf16.msra.mxu0 %v5022
        %5661 = vmatprep.subr.bf16.mxu0 %v5031
        %5662 = vmatpush1.bf16.msra.mxu0 %v5030
        %5663 = vmatprep.subr.bf16.mxu0 %v5039
        %5664 = vmatpush1.bf16.msra.mxu0 %v5038
        %5665 = vmatprep.subr.bf16.mxu0 %v5047
        %5666 = vmatpush1.bf16.msra.mxu0 %v5046
        %5667 = vmatprep.subr.bf16.mxu0 %v5055
        %5668 = vmatpush1.bf16.msra.mxu0 %v5054
        %5669 = vmatprep.subr.bf16.mxu0 %v5063
        %5670 = vmatpush1.bf16.msra.mxu0 %v5062
        %5671 = vmatprep.subr.bf16.mxu0 %v5071
        %5672 = vmatpush1.bf16.msra.mxu0 %v5070
        %5673 = vmatprep.subr.bf16.mxu0 %v5079
        %5674 = vmatpush1.bf16.msra.mxu0 %v5078
        %5675 = vmatprep.subr.bf16.mxu0 %v5087
        %5676 = vmatpush1.bf16.msra.mxu0 %v5086
        %5677 = vmatprep.mubr.bf16.mxu0 %v3765
        %5678 = vmatmul.mubr.bf16.gmra.mrb[0].mxu0 %v3764
        %v5679 = vpop.f32.mrb[0].mxu0
        %v5680 = vadd.f32 %v5637, %v5679
        %v5681 = vpop.f32.mrb[0].mxu0
        %v5682 = vadd.f32 %v5639, %v5681
        %v5683 = vpop.f32.mrb[0].mxu0
        %v5684 = vadd.f32 %v5641, %v5683
        %v5685 = vpop.f32.mrb[0].mxu0
        %v5686 = vadd.f32 %v5643, %v5685
        %5687 = vdwg.mxu0
        %v5688 = vmax.f32 %v5422, 0.0
        %v5689 = vmax.f32 %v5424, 0.0
        %v5690 = vmax.f32 %v5508, 0.0
        %v5691 = vmax.f32 %v5510, 0.0
        %v5692 = vmax.f32 %v5594, 0.0
        %v5693 = vmax.f32 %v5596, 0.0
        %v5694 = vmax.f32 %v5680, 0.0
        %v5695 = vmax.f32 %v5682, 0.0
        %v5696 = vmax.f32 %v5426, 0.0
        %v5697 = vmax.f32 %v5428, 0.0
        %v5698 = vmax.f32 %v5512, 0.0
        %v5699 = vmax.f32 %v5514, 0.0
        %v5700 = vmax.f32 %v5598, 0.0
        %v5701 = vmax.f32 %v5600, 0.0
        %v5702 = vmax.f32 %v5684, 0.0
        %v5703 = vmax.f32 %v5686, 0.0
        %v5704 = vpack.c.bf16 %v5696, %v5688
        %v5705 = vpack.c.bf16 %v5697, %v5689
        %v5706 = vpack.c.bf16 %v5698, %v5690
        %v5707 = vpack.c.bf16 %v5699, %v5691
        %v5708 = vpack.c.bf16 %v5700, %v5692
        %v5709 = vpack.c.bf16 %v5701, %v5693
        %v5710 = vpack.c.bf16 %v5702, %v5694
        %v5711 = vpack.c.bf16 %v5703, %v5695
        %v5712 = vld [vmem:[#allocation14] sm:$0xf]
        %v5713 = vld [vmem:[#allocation14 + $0x4] sm:$0xf]
        %v5714 = vld [vmem:[#allocation14 + $0x8] sm:$0xf]
        %v5715 = vld [vmem:[#allocation14 + $0xc] sm:$0xf]
        %v5716 = vld [vmem:[#allocation14 + $0x10] sm:$0xf]
        %v5717 = vld [vmem:[#allocation14 + $0x14] sm:$0xf]
        %v5718 = vld [vmem:[#allocation14 + $0x18] sm:$0xf]
        %v5719 = vld [vmem:[#allocation14 + $0x1c] sm:$0xf]
        %v5720 = vld [vmem:[#allocation14 + $0x20] sm:$0xf]
        %v5721 = vld [vmem:[#allocation14 + $0x24] sm:$0xf]
        %v5722 = vld [vmem:[#allocation14 + $0x28] sm:$0xf]
        %v5723 = vld [vmem:[#allocation14 + $0x2c] sm:$0xf]
        %v5724 = vld [vmem:[#allocation14 + $0x30] sm:$0xf]
        %v5725 = vld [vmem:[#allocation14 + $0x34] sm:$0xf]
        %v5726 = vld [vmem:[#allocation14 + $0x38] sm:$0xf]
        %v5727 = vld [vmem:[#allocation14 + $0x3c] sm:$0xf]
        %v5728 = vld [vmem:[#allocation14 + $0x40] sm:$0xf]
        %v5729 = vld [vmem:[#allocation14 + $0x44] sm:$0xf]
        %v5730 = vld [vmem:[#allocation14 + $0x48] sm:$0xf]
        %v5731 = vld [vmem:[#allocation14 + $0x4c] sm:$0xf]
        %v5732 = vld [vmem:[#allocation14 + $0x50] sm:$0xf]
        %v5733 = vld [vmem:[#allocation14 + $0x54] sm:$0xf]
        %v5734 = vld [vmem:[#allocation14 + $0x58] sm:$0xf]
        %v5735 = vld [vmem:[#allocation14 + $0x5c] sm:$0xf]
        %v5736 = vld [vmem:[#allocation14 + $0x60] sm:$0xf]
        %v5737 = vld [vmem:[#allocation14 + $0x64] sm:$0xf]
        %v5738 = vld [vmem:[#allocation14 + $0x68] sm:$0xf]
        %v5739 = vld [vmem:[#allocation14 + $0x6c] sm:$0xf]
        %v5740 = vld [vmem:[#allocation14 + $0x70] sm:$0xf]
        %v5741 = vld [vmem:[#allocation14 + $0x74] sm:$0xf]
        %v5742 = vld [vmem:[#allocation14 + $0x78] sm:$0xf]
        %v5743 = vld [vmem:[#allocation14 + $0x7c] sm:$0xf]
        %v5744 = vld [vmem:[#allocation14 + $0x80] sm:$0xf]
        %v5745 = vld [vmem:[#allocation14 + $0x84] sm:$0xf]
        %v5746 = vld [vmem:[#allocation14 + $0x88] sm:$0xf]
        %v5747 = vld [vmem:[#allocation14 + $0x8c] sm:$0xf]
        %v5748 = vld [vmem:[#allocation14 + $0x90] sm:$0xf]
        %v5749 = vld [vmem:[#allocation14 + $0x94] sm:$0xf]
        %v5750 = vld [vmem:[#allocation14 + $0x98] sm:$0xf]
        %v5751 = vld [vmem:[#allocation14 + $0x9c] sm:$0xf]
        %v5752 = vld [vmem:[#allocation14 + $0xa0] sm:$0xf]
        %v5753 = vld [vmem:[#allocation14 + $0xa4] sm:$0xf]
        %v5754 = vld [vmem:[#allocation14 + $0xa8] sm:$0xf]
        %v5755 = vld [vmem:[#allocation14 + $0xac] sm:$0xf]
        %v5756 = vld [vmem:[#allocation14 + $0xb0] sm:$0xf]
        %v5757 = vld [vmem:[#allocation14 + $0xb4] sm:$0xf]
        %v5758 = vld [vmem:[#allocation14 + $0xb8] sm:$0xf]
        %v5759 = vld [vmem:[#allocation14 + $0xbc] sm:$0xf]
        %v5760 = vld [vmem:[#allocation14 + $0xc0] sm:$0xf]
        %v5761 = vld [vmem:[#allocation14 + $0xc4] sm:$0xf]
        %v5762 = vld [vmem:[#allocation14 + $0xc8] sm:$0xf]
        %v5763 = vld [vmem:[#allocation14 + $0xcc] sm:$0xf]
        %v5764 = vld [vmem:[#allocation14 + $0xd0] sm:$0xf]
        %v5765 = vld [vmem:[#allocation14 + $0xd4] sm:$0xf]
        %v5766 = vld [vmem:[#allocation14 + $0xd8] sm:$0xf]
        %v5767 = vld [vmem:[#allocation14 + $0xdc] sm:$0xf]
        %v5768 = vld [vmem:[#allocation14 + $0xe0] sm:$0xf]
        %v5769 = vld [vmem:[#allocation14 + $0xe4] sm:$0xf]
        %v5770 = vld [vmem:[#allocation14 + $0xe8] sm:$0xf]
        %v5771 = vld [vmem:[#allocation14 + $0xec] sm:$0xf]
        %v5772 = vld [vmem:[#allocation14 + $0xf0] sm:$0xf]
        %v5773 = vld [vmem:[#allocation14 + $0xf4] sm:$0xf]
        %v5774 = vld [vmem:[#allocation14 + $0xf8] sm:$0xf]
        %v5775 = vld [vmem:[#allocation14 + $0xfc] sm:$0xf]
        %v5776 = vld [vmem:[#allocation14 + $0x100] sm:$0xf]
        %v5777 = vld [vmem:[#allocation14 + $0x104] sm:$0xf]
        %v5778 = vld [vmem:[#allocation14 + $0x108] sm:$0xf]
        %v5779 = vld [vmem:[#allocation14 + $0x10c] sm:$0xf]
        %v5780 = vld [vmem:[#allocation14 + $0x110] sm:$0xf]
        %v5781 = vld [vmem:[#allocation14 + $0x114] sm:$0xf]
        %v5782 = vld [vmem:[#allocation14 + $0x118] sm:$0xf]
        %v5783 = vld [vmem:[#allocation14 + $0x11c] sm:$0xf]
        %v5784 = vld [vmem:[#allocation14 + $0x120] sm:$0xf]
        %v5785 = vld [vmem:[#allocation14 + $0x124] sm:$0xf]
        %v5786 = vld [vmem:[#allocation14 + $0x128] sm:$0xf]
        %v5787 = vld [vmem:[#allocation14 + $0x12c] sm:$0xf]
        %v5788 = vld [vmem:[#allocation14 + $0x130] sm:$0xf]
        %v5789 = vld [vmem:[#allocation14 + $0x134] sm:$0xf]
        %v5790 = vld [vmem:[#allocation14 + $0x138] sm:$0xf]
        %v5791 = vld [vmem:[#allocation14 + $0x13c] sm:$0xf]
        %v5792 = vld [vmem:[#allocation14 + $0x140] sm:$0xf]
        %v5793 = vld [vmem:[#allocation14 + $0x144] sm:$0xf]
        %v5794 = vld [vmem:[#allocation14 + $0x148] sm:$0xf]
        %v5795 = vld [vmem:[#allocation14 + $0x14c] sm:$0xf]
        %v5796 = vld [vmem:[#allocation14 + $0x150] sm:$0xf]
        %v5797 = vld [vmem:[#allocation14 + $0x154] sm:$0xf]
        %v5798 = vld [vmem:[#allocation14 + $0x158] sm:$0xf]
        %v5799 = vld [vmem:[#allocation14 + $0x15c] sm:$0xf]
        %v5800 = vld [vmem:[#allocation14 + $0x160] sm:$0xf]
        %v5801 = vld [vmem:[#allocation14 + $0x164] sm:$0xf]
        %v5802 = vld [vmem:[#allocation14 + $0x168] sm:$0xf]
        %v5803 = vld [vmem:[#allocation14 + $0x16c] sm:$0xf]
        %v5804 = vld [vmem:[#allocation14 + $0x170] sm:$0xf]
        %v5805 = vld [vmem:[#allocation14 + $0x174] sm:$0xf]
        %v5806 = vld [vmem:[#allocation14 + $0x178] sm:$0xf]
        %v5807 = vld [vmem:[#allocation14 + $0x17c] sm:$0xf]
        %v5808 = vld [vmem:[#allocation14 + $0x180] sm:$0xf]
        %v5809 = vld [vmem:[#allocation14 + $0x184] sm:$0xf]
        %v5810 = vld [vmem:[#allocation14 + $0x188] sm:$0xf]
        %v5811 = vld [vmem:[#allocation14 + $0x18c] sm:$0xf]
        %v5812 = vld [vmem:[#allocation14 + $0x190] sm:$0xf]
        %v5813 = vld [vmem:[#allocation14 + $0x194] sm:$0xf]
        %v5814 = vld [vmem:[#allocation14 + $0x198] sm:$0xf]
        %v5815 = vld [vmem:[#allocation14 + $0x19c] sm:$0xf]
        %v5816 = vld [vmem:[#allocation14 + $0x1a0] sm:$0xf]
        %v5817 = vld [vmem:[#allocation14 + $0x1a4] sm:$0xf]
        %v5818 = vld [vmem:[#allocation14 + $0x1a8] sm:$0xf]
        %v5819 = vld [vmem:[#allocation14 + $0x1ac] sm:$0xf]
        %v5820 = vld [vmem:[#allocation14 + $0x1b0] sm:$0xf]
        %v5821 = vld [vmem:[#allocation14 + $0x1b4] sm:$0xf]
        %v5822 = vld [vmem:[#allocation14 + $0x1b8] sm:$0xf]
        %v5823 = vld [vmem:[#allocation14 + $0x1bc] sm:$0xf]
        %v5824 = vld [vmem:[#allocation14 + $0x1c0] sm:$0xf]
        %v5825 = vld [vmem:[#allocation14 + $0x1c4] sm:$0xf]
        %v5826 = vld [vmem:[#allocation14 + $0x1c8] sm:$0xf]
        %v5827 = vld [vmem:[#allocation14 + $0x1cc] sm:$0xf]
        %v5828 = vld [vmem:[#allocation14 + $0x1d0] sm:$0xf]
        %v5829 = vld [vmem:[#allocation14 + $0x1d4] sm:$0xf]
        %v5830 = vld [vmem:[#allocation14 + $0x1d8] sm:$0xf]
        %v5831 = vld [vmem:[#allocation14 + $0x1dc] sm:$0xf]
        %v5832 = vld [vmem:[#allocation14 + $0x1e0] sm:$0xf]
        %v5833 = vld [vmem:[#allocation14 + $0x1e4] sm:$0xf]
        %v5834 = vld [vmem:[#allocation14 + $0x1e8] sm:$0xf]
        %v5835 = vld [vmem:[#allocation14 + $0x1ec] sm:$0xf]
        %v5836 = vld [vmem:[#allocation14 + $0x1f0] sm:$0xf]
        %v5837 = vld [vmem:[#allocation14 + $0x1f4] sm:$0xf]
        %v5838 = vld [vmem:[#allocation14 + $0x1f8] sm:$0xf]
        %v5839 = vld [vmem:[#allocation14 + $0x1fc] sm:$0xf]
        %v5840 = vld [vmem:[%s12] sm:$0x1]
        %v5842 = vlaneseq
        %v5843 = vshrl.u32 %v5842, 7
        %v5844 = vsub.s32 0, %v5843
        %v5845 = vrot.slane %v5840, %v5844
        %v5975 = vunpack.c.l.b16 %v5712
        %v5976 = vunpack.c.l.b16 %v5713
        %v5977 = vunpack.c.l.b16 %v5714
        %v5978 = vunpack.c.l.b16 %v5715
        %v5979 = vunpack.c.l.b16 %v5716
        %v5980 = vunpack.c.l.b16 %v5717
        %v5981 = vunpack.c.l.b16 %v5718
        %v5982 = vunpack.c.l.b16 %v5719
        %v5983 = vunpack.c.l.b16 %v5720
        %v5984 = vunpack.c.l.b16 %v5721
        %v5985 = vunpack.c.l.b16 %v5722
        %v5986 = vunpack.c.l.b16 %v5723
        %v5987 = vunpack.c.l.b16 %v5724
        %v5988 = vunpack.c.l.b16 %v5725
        %v5989 = vunpack.c.l.b16 %v5726
        %v5990 = vunpack.c.l.b16 %v5727
        %v5991 = vunpack.c.l.b16 %v5728
        %v5992 = vunpack.c.l.b16 %v5729
        %v5993 = vunpack.c.l.b16 %v5730
        %v5994 = vunpack.c.l.b16 %v5731
        %v5995 = vunpack.c.l.b16 %v5732
        %v5996 = vunpack.c.l.b16 %v5733
        %v5997 = vunpack.c.l.b16 %v5734
        %v5998 = vunpack.c.l.b16 %v5735
        %v5999 = vunpack.c.l.b16 %v5736
        %v6000 = vunpack.c.l.b16 %v5737
        %v6001 = vunpack.c.l.b16 %v5738
        %v6002 = vunpack.c.l.b16 %v5739
        %v6003 = vunpack.c.l.b16 %v5740
        %v6004 = vunpack.c.l.b16 %v5741
        %v6005 = vunpack.c.l.b16 %v5742
        %v6006 = vunpack.c.l.b16 %v5743
        %v6007 = vunpack.c.l.b16 %v5744
        %v6008 = vunpack.c.l.b16 %v5745
        %v6009 = vunpack.c.l.b16 %v5746
        %v6010 = vunpack.c.l.b16 %v5747
        %v6011 = vunpack.c.l.b16 %v5748
        %v6012 = vunpack.c.l.b16 %v5749
        %v6013 = vunpack.c.l.b16 %v5750
        %v6014 = vunpack.c.l.b16 %v5751
        %v6015 = vunpack.c.l.b16 %v5752
        %v6016 = vunpack.c.l.b16 %v5753
        %v6017 = vunpack.c.l.b16 %v5754
        %v6018 = vunpack.c.l.b16 %v5755
        %v6019 = vunpack.c.l.b16 %v5756
        %v6020 = vunpack.c.l.b16 %v5757
        %v6021 = vunpack.c.l.b16 %v5758
        %v6022 = vunpack.c.l.b16 %v5759
        %v6023 = vunpack.c.l.b16 %v5760
        %v6024 = vunpack.c.l.b16 %v5761
        %v6025 = vunpack.c.l.b16 %v5762
        %v6026 = vunpack.c.l.b16 %v5763
        %v6027 = vunpack.c.l.b16 %v5764
        %v6028 = vunpack.c.l.b16 %v5765
        %v6029 = vunpack.c.l.b16 %v5766
        %v6030 = vunpack.c.l.b16 %v5767
        %v6031 = vunpack.c.l.b16 %v5768
        %v6032 = vunpack.c.l.b16 %v5769
        %v6033 = vunpack.c.l.b16 %v5770
        %v6034 = vunpack.c.l.b16 %v5771
        %v6035 = vunpack.c.l.b16 %v5772
        %v6036 = vunpack.c.l.b16 %v5773
        %v6037 = vunpack.c.l.b16 %v5774
        %v6038 = vunpack.c.l.b16 %v5775
        %v6039 = vunpack.c.l.b16 %v5776
        %v6040 = vunpack.c.l.b16 %v5777
        %v6041 = vunpack.c.l.b16 %v5778
        %v6042 = vunpack.c.l.b16 %v5779
        %v6043 = vunpack.c.l.b16 %v5780
        %v6044 = vunpack.c.l.b16 %v5781
        %v6045 = vunpack.c.l.b16 %v5782
        %v6046 = vunpack.c.l.b16 %v5783
        %v6047 = vunpack.c.l.b16 %v5784
        %v6048 = vunpack.c.l.b16 %v5785
        %v6049 = vunpack.c.l.b16 %v5786
        %v6050 = vunpack.c.l.b16 %v5787
        %v6051 = vunpack.c.l.b16 %v5788
        %v6052 = vunpack.c.l.b16 %v5789
        %v6053 = vunpack.c.l.b16 %v5790
        %v6054 = vunpack.c.l.b16 %v5791
        %v6055 = vunpack.c.l.b16 %v5792
        %v6056 = vunpack.c.l.b16 %v5793
        %v6057 = vunpack.c.l.b16 %v5794
        %v6058 = vunpack.c.l.b16 %v5795
        %v6059 = vunpack.c.l.b16 %v5796
        %v6060 = vunpack.c.l.b16 %v5797
        %v6061 = vunpack.c.l.b16 %v5798
        %v6062 = vunpack.c.l.b16 %v5799
        %v6063 = vunpack.c.l.b16 %v5800
        %v6064 = vunpack.c.l.b16 %v5801
        %v6065 = vunpack.c.l.b16 %v5802
        %v6066 = vunpack.c.l.b16 %v5803
        %v6067 = vunpack.c.l.b16 %v5804
        %v6068 = vunpack.c.l.b16 %v5805
        %v6069 = vunpack.c.l.b16 %v5806
        %v6070 = vunpack.c.l.b16 %v5807
        %v6071 = vunpack.c.l.b16 %v5808
        %v6072 = vunpack.c.l.b16 %v5809
        %v6073 = vunpack.c.l.b16 %v5810
        %v6074 = vunpack.c.l.b16 %v5811
        %v6075 = vunpack.c.l.b16 %v5812
        %v6076 = vunpack.c.l.b16 %v5813
        %v6077 = vunpack.c.l.b16 %v5814
        %v6078 = vunpack.c.l.b16 %v5815
        %v6079 = vunpack.c.l.b16 %v5816
        %v6080 = vunpack.c.l.b16 %v5817
        %v6081 = vunpack.c.l.b16 %v5818
        %v6082 = vunpack.c.l.b16 %v5819
        %v6083 = vunpack.c.l.b16 %v5820
        %v6084 = vunpack.c.l.b16 %v5821
        %v6085 = vunpack.c.l.b16 %v5822
        %v6086 = vunpack.c.l.b16 %v5823
        %v6087 = vunpack.c.l.b16 %v5824
        %v6088 = vunpack.c.l.b16 %v5825
        %v6089 = vunpack.c.l.b16 %v5826
        %v6090 = vunpack.c.l.b16 %v5827
        %v6091 = vunpack.c.l.b16 %v5828
        %v6092 = vunpack.c.l.b16 %v5829
        %v6093 = vunpack.c.l.b16 %v5830
        %v6094 = vunpack.c.l.b16 %v5831
        %v6095 = vunpack.c.l.b16 %v5832
        %v6096 = vunpack.c.l.b16 %v5833
        %v6097 = vunpack.c.l.b16 %v5834
        %v6098 = vunpack.c.l.b16 %v5835
        %v6099 = vunpack.c.l.b16 %v5836
        %v6100 = vunpack.c.l.b16 %v5837
        %v6101 = vunpack.c.l.b16 %v5838
        %v6102 = vunpack.c.l.b16 %v5839
        %v6103 = vpack.c.b16 %v5976, %v5975
        %v6104 = vpack.c.b16 %v5978, %v5977
        %v6105 = vpack.c.b16 %v5980, %v5979
        %v6106 = vpack.c.b16 %v5982, %v5981
        %v6107 = vpack.c.b16 %v5984, %v5983
        %v6108 = vpack.c.b16 %v5986, %v5985
        %v6109 = vpack.c.b16 %v5988, %v5987
        %v6110 = vpack.c.b16 %v5990, %v5989
        %v6111 = vpack.c.b16 %v5992, %v5991
        %v6112 = vpack.c.b16 %v5994, %v5993
        %v6113 = vpack.c.b16 %v5996, %v5995
        %v6114 = vpack.c.b16 %v5998, %v5997
        %v6115 = vpack.c.b16 %v6000, %v5999
        %v6116 = vpack.c.b16 %v6002, %v6001
        %v6117 = vpack.c.b16 %v6004, %v6003
        %v6118 = vpack.c.b16 %v6006, %v6005
        %v6119 = vpack.c.b16 %v6008, %v6007
        %v6120 = vpack.c.b16 %v6010, %v6009
        %v6121 = vpack.c.b16 %v6012, %v6011
        %v6122 = vpack.c.b16 %v6014, %v6013
        %v6123 = vpack.c.b16 %v6016, %v6015
        %v6124 = vpack.c.b16 %v6018, %v6017
        %v6125 = vpack.c.b16 %v6020, %v6019
        %v6126 = vpack.c.b16 %v6022, %v6021
        %v6127 = vpack.c.b16 %v6024, %v6023
        %v6128 = vpack.c.b16 %v6026, %v6025
        %v6129 = vpack.c.b16 %v6028, %v6027
        %v6130 = vpack.c.b16 %v6030, %v6029
        %v6131 = vpack.c.b16 %v6032, %v6031
        %v6132 = vpack.c.b16 %v6034, %v6033
        %v6133 = vpack.c.b16 %v6036, %v6035
        %v6134 = vpack.c.b16 %v6038, %v6037
        %v6135 = vpack.c.b16 %v6040, %v6039
        %v6136 = vpack.c.b16 %v6042, %v6041
        %v6137 = vpack.c.b16 %v6044, %v6043
        %v6138 = vpack.c.b16 %v6046, %v6045
        %v6139 = vpack.c.b16 %v6048, %v6047
        %v6140 = vpack.c.b16 %v6050, %v6049
        %v6141 = vpack.c.b16 %v6052, %v6051
        %v6142 = vpack.c.b16 %v6054, %v6053
        %v6143 = vpack.c.b16 %v6056, %v6055
        %v6144 = vpack.c.b16 %v6058, %v6057
        %v6145 = vpack.c.b16 %v6060, %v6059
        %v6146 = vpack.c.b16 %v6062, %v6061
        %v6147 = vpack.c.b16 %v6064, %v6063
        %v6148 = vpack.c.b16 %v6066, %v6065
        %v6149 = vpack.c.b16 %v6068, %v6067
        %v6150 = vpack.c.b16 %v6070, %v6069
        %v6151 = vpack.c.b16 %v6072, %v6071
        %v6152 = vpack.c.b16 %v6074, %v6073
        %v6153 = vpack.c.b16 %v6076, %v6075
        %v6154 = vpack.c.b16 %v6078, %v6077
        %v6155 = vpack.c.b16 %v6080, %v6079
        %v6156 = vpack.c.b16 %v6082, %v6081
        %v6157 = vpack.c.b16 %v6084, %v6083
        %v6158 = vpack.c.b16 %v6086, %v6085
        %v6159 = vpack.c.b16 %v6088, %v6087
        %v6160 = vpack.c.b16 %v6090, %v6089
        %v6161 = vpack.c.b16 %v6092, %v6091
        %v6162 = vpack.c.b16 %v6094, %v6093
        %v6163 = vpack.c.b16 %v6096, %v6095
        %v6164 = vpack.c.b16 %v6098, %v6097
        %v6165 = vpack.c.b16 %v6100, %v6099
        %v6166 = vpack.c.b16 %v6102, %v6101
        %6231 = vmatprep.subr.bf16.mxu0 0
        %6232 = vmatpush1.bf16.msra.mxu0 %v6103
        %6233 = vmatprep.subr.bf16.mxu0 0
        %6234 = vmatpush1.bf16.msra.mxu0 %v6104
        %6235 = vmatprep.subr.bf16.mxu0 0
        %6236 = vmatpush1.bf16.msra.mxu0 %v6105
        %6237 = vmatprep.subr.bf16.mxu0 0
        %6238 = vmatpush1.bf16.msra.mxu0 %v6106
        %6239 = vmatprep.subr.bf16.mxu0 0
        %6240 = vmatpush1.bf16.msra.mxu0 %v6107
        %6241 = vmatprep.subr.bf16.mxu0 0
        %6242 = vmatpush1.bf16.msra.mxu0 %v6108
        %6243 = vmatprep.subr.bf16.mxu0 0
        %6244 = vmatpush1.bf16.msra.mxu0 %v6109
        %6245 = vmatprep.subr.bf16.mxu0 0
        %6246 = vmatpush1.bf16.msra.mxu0 %v6110
        %6247 = vmatprep.subr.bf16.mxu0 0
        %6248 = vmatpush1.bf16.msra.mxu0 %v6111
        %6249 = vmatprep.subr.bf16.mxu0 0
        %6250 = vmatpush1.bf16.msra.mxu0 %v6112
        %6251 = vmatprep.subr.bf16.mxu0 0
        %6252 = vmatpush1.bf16.msra.mxu0 %v6113
        %6253 = vmatprep.subr.bf16.mxu0 0
        %6254 = vmatpush1.bf16.msra.mxu0 %v6114
        %6255 = vmatprep.subr.bf16.mxu0 0
        %6256 = vmatpush1.bf16.msra.mxu0 %v6115
        %6257 = vmatprep.subr.bf16.mxu0 0
        %6258 = vmatpush1.bf16.msra.mxu0 %v6116
        %6259 = vmatprep.subr.bf16.mxu0 0
        %6260 = vmatpush1.bf16.msra.mxu0 %v6117
        %6261 = vmatprep.subr.bf16.mxu0 0
        %6262 = vmatpush1.bf16.msra.mxu0 %v6118
        %6263 = vmatprep.mubr.bf16.mxu0 %v5705
        %6264 = vmatmul.mubr.bf16.gmra.mrb[0].mxu0 %v5704
        %v6265 = vpop.f32.mrb[0].mxu0
        %v6266 = vadd.f32 %v5845, %v6265
        %v6267 = vpop.f32.mrb[0].mxu0
        %v6268 = vpop.f32.mrb[0].mxu0
        %v6269 = vadd.f32 %v5845, %v6268
        %v6270 = vpop.f32.mrb[0].mxu0
        %6271 = vdwg.mxu0
        %6272 = vmatprep.subr.bf16.mxu0 0
        %6273 = vmatpush1.bf16.msra.mxu0 %v6119
        %6274 = vmatprep.subr.bf16.mxu0 0
        %6275 = vmatpush1.bf16.msra.mxu0 %v6120
        %6276 = vmatprep.subr.bf16.mxu0 0
        %6277 = vmatpush1.bf16.msra.mxu0 %v6121
        %6278 = vmatprep.subr.bf16.mxu0 0
        %6279 = vmatpush1.bf16.msra.mxu0 %v6122
        %6280 = vmatprep.subr.bf16.mxu0 0
        %6281 = vmatpush1.bf16.msra.mxu0 %v6123
        %6282 = vmatprep.subr.bf16.mxu0 0
        %6283 = vmatpush1.bf16.msra.mxu0 %v6124
        %6284 = vmatprep.subr.bf16.mxu0 0
        %6285 = vmatpush1.bf16.msra.mxu0 %v6125
        %6286 = vmatprep.subr.bf16.mxu0 0
        %6287 = vmatpush1.bf16.msra.mxu0 %v6126
        %6288 = vmatprep.subr.bf16.mxu0 0
        %6289 = vmatpush1.bf16.msra.mxu0 %v6127
        %6290 = vmatprep.subr.bf16.mxu0 0
        %6291 = vmatpush1.bf16.msra.mxu0 %v6128
        %6292 = vmatprep.subr.bf16.mxu0 0
        %6293 = vmatpush1.bf16.msra.mxu0 %v6129
        %6294 = vmatprep.subr.bf16.mxu0 0
        %6295 = vmatpush1.bf16.msra.mxu0 %v6130
        %6296 = vmatprep.subr.bf16.mxu0 0
        %6297 = vmatpush1.bf16.msra.mxu0 %v6131
        %6298 = vmatprep.subr.bf16.mxu0 0
        %6299 = vmatpush1.bf16.msra.mxu0 %v6132
        %6300 = vmatprep.subr.bf16.mxu0 0
        %6301 = vmatpush1.bf16.msra.mxu0 %v6133
        %6302 = vmatprep.subr.bf16.mxu0 0
        %6303 = vmatpush1.bf16.msra.mxu0 %v6134
        %6304 = vmatprep.mubr.bf16.mxu0 %v5707
        %6305 = vmatmul.mubr.bf16.gmra.mrb[0].mxu0 %v5706
        %v6306 = vpop.f32.mrb[0].mxu0
        %v6307 = vadd.f32 %v6266, %v6306
        %v6308 = vpop.f32.mrb[0].mxu0
        %v6309 = vpop.f32.mrb[0].mxu0
        %v6310 = vadd.f32 %v6269, %v6309
        %v6311 = vpop.f32.mrb[0].mxu0
        %6312 = vdwg.mxu0
        %6313 = vmatprep.subr.bf16.mxu0 0
        %6314 = vmatpush1.bf16.msra.mxu0 %v6135
        %6315 = vmatprep.subr.bf16.mxu0 0
        %6316 = vmatpush1.bf16.msra.mxu0 %v6136
        %6317 = vmatprep.subr.bf16.mxu0 0
        %6318 = vmatpush1.bf16.msra.mxu0 %v6137
        %6319 = vmatprep.subr.bf16.mxu0 0
        %6320 = vmatpush1.bf16.msra.mxu0 %v6138
        %6321 = vmatprep.subr.bf16.mxu0 0
        %6322 = vmatpush1.bf16.msra.mxu0 %v6139
        %6323 = vmatprep.subr.bf16.mxu0 0
        %6324 = vmatpush1.bf16.msra.mxu0 %v6140
        %6325 = vmatprep.subr.bf16.mxu0 0
        %6326 = vmatpush1.bf16.msra.mxu0 %v6141
        %6327 = vmatprep.subr.bf16.mxu0 0
        %6328 = vmatpush1.bf16.msra.mxu0 %v6142
        %6329 = vmatprep.subr.bf16.mxu0 0
        %6330 = vmatpush1.bf16.msra.mxu0 %v6143
        %6331 = vmatprep.subr.bf16.mxu0 0
        %6332 = vmatpush1.bf16.msra.mxu0 %v6144
        %6333 = vmatprep.subr.bf16.mxu0 0
        %6334 = vmatpush1.bf16.msra.mxu0 %v6145
        %6335 = vmatprep.subr.bf16.mxu0 0
        %6336 = vmatpush1.bf16.msra.mxu0 %v6146
        %6337 = vmatprep.subr.bf16.mxu0 0
        %6338 = vmatpush1.bf16.msra.mxu0 %v6147
        %6339 = vmatprep.subr.bf16.mxu0 0
        %6340 = vmatpush1.bf16.msra.mxu0 %v6148
        %6341 = vmatprep.subr.bf16.mxu0 0
        %6342 = vmatpush1.bf16.msra.mxu0 %v6149
        %6343 = vmatprep.subr.bf16.mxu0 0
        %6344 = vmatpush1.bf16.msra.mxu0 %v6150
        %6345 = vmatprep.mubr.bf16.mxu0 %v5709
        %6346 = vmatmul.mubr.bf16.gmra.mrb[0].mxu0 %v5708
        %v6347 = vpop.f32.mrb[0].mxu0
        %v6348 = vadd.f32 %v6307, %v6347
        %v6349 = vpop.f32.mrb[0].mxu0
        %v6350 = vpop.f32.mrb[0].mxu0
        %v6351 = vadd.f32 %v6310, %v6350
        %v6352 = vpop.f32.mrb[0].mxu0
        %6353 = vdwg.mxu0
        %6354 = vmatprep.subr.bf16.mxu0 0
        %6355 = vmatpush1.bf16.msra.mxu0 %v6151
        %6356 = vmatprep.subr.bf16.mxu0 0
        %6357 = vmatpush1.bf16.msra.mxu0 %v6152
        %6358 = vmatprep.subr.bf16.mxu0 0
        %6359 = vmatpush1.bf16.msra.mxu0 %v6153
        %6360 = vmatprep.subr.bf16.mxu0 0
        %6361 = vmatpush1.bf16.msra.mxu0 %v6154
        %6362 = vmatprep.subr.bf16.mxu0 0
        %6363 = vmatpush1.bf16.msra.mxu0 %v6155
        %6364 = vmatprep.subr.bf16.mxu0 0
        %6365 = vmatpush1.bf16.msra.mxu0 %v6156
        %6366 = vmatprep.subr.bf16.mxu0 0
        %6367 = vmatpush1.bf16.msra.mxu0 %v6157
        %6368 = vmatprep.subr.bf16.mxu0 0
        %6369 = vmatpush1.bf16.msra.mxu0 %v6158
        %6370 = vmatprep.subr.bf16.mxu0 0
        %6371 = vmatpush1.bf16.msra.mxu0 %v6159
        %6372 = vmatprep.subr.bf16.mxu0 0
        %6373 = vmatpush1.bf16.msra.mxu0 %v6160
        %6374 = vmatprep.subr.bf16.mxu0 0
        %6375 = vmatpush1.bf16.msra.mxu0 %v6161
        %6376 = vmatprep.subr.bf16.mxu0 0
        %6377 = vmatpush1.bf16.msra.mxu0 %v6162
        %6378 = vmatprep.subr.bf16.mxu0 0
        %6379 = vmatpush1.bf16.msra.mxu0 %v6163
        %6380 = vmatprep.subr.bf16.mxu0 0
        %6381 = vmatpush1.bf16.msra.mxu0 %v6164
        %6382 = vmatprep.subr.bf16.mxu0 0
        %6383 = vmatpush1.bf16.msra.mxu0 %v6165
        %6384 = vmatprep.subr.bf16.mxu0 0
        %6385 = vmatpush1.bf16.msra.mxu0 %v6166
        %6386 = vmatprep.mubr.bf16.mxu0 %v5711
        %6387 = vmatmul.mubr.bf16.gmra.mrb[0].mxu0 %v5710
        %v6388 = vpop.f32.mrb[0].mxu0
        %v6389 = vadd.f32 %v6348, %v6388
        %v6390 = vpop.f32.mrb[0].mxu0
        %v6391 = vpop.f32.mrb[0].mxu0
        %v6392 = vadd.f32 %v6351, %v6391
        %v6393 = vpop.f32.mrb[0].mxu0
        %6394 = vdwg.mxu0
        %v6395 = vsub.f32 0.0, %v6389
        %v6396 = vsub.f32 0.0, %v6392
        %v6397 = vmul.f32 %v6395, 1.442695
        %v6398 = vpow.pop %v6397
        %v6399 = vmul.f32 %v6396, 1.442695
        %v6400 = vpow.pop %v6399
        %v6401 = vadd.f32 %v6398, 1.0
        %v6402 = vadd.f32 %v6400, 1.0
        %v6403 = vrcp.pop %v6401
        %v6404 = vrcp.pop %v6402
        %6405 = vst [vmem:[%s558] sm:$0xff] %v6403
        %6406 = vst [vmem:[%s558 + $0x8] sm:$0xff] %v6404
        %s6407 = sand.u32 %s320, 1
        %s6408 = scalar_lea.sflag [#allocation4], %s6407
        %s6409 = sand.u32 %s320, 1
        %s6410 = smul.addr %s6409, 16
        %s6411 = scalar_lea.vmem [#allocation16], %s6410
        // Predicated region
        $region105: #{tpu_custom_call.1} parent=71 // pred_check
          %p6412 = pneg %p330
        $region106: #{tpu_custom_call.1} parent=71 // pred_check_branch
          %6414 = sbr.rel (%p6412) target = $region108
        $region107: #{tpu_custom_call.1} parent=71 // pred_region
          %s6415 = smul.u32 2, %s34
          %s6417 = ssub.s32 256, 256
          %6418 = vsyncadd %s6408, %s6417
          %s6419 = smul.addr %s6415, 128
          %s6420 = scalar_lea.hbm %s13, %s6419
          %s6421 = sshll.u32 %s6411, 4
          %s6422 = int_to_ptr.vmem [resolvable:$true] %s6421
          %6427 = dma.vmem_to_hbm [thread:$0]  %s6422, 256, %s6420, %s6408, 128, 128, 8
        $region108: #{tpu_custom_call.1} parent=71 // pred_fallthru
          _
      $region72: #{tpu_custom_call.1} parent=5 // pred_fallthru
        _
      %p6428 = scmp.le.s32.totalorder 2, %s29
      // Predicated region
      $region109: #{tpu_custom_call.1} parent=5 // pred_check
        %p6429 = pneg %p6428
      $region110: #{tpu_custom_call.1} parent=5 // pred_check_branch
        %6431 = sbr.rel (%p6429) target = $region112
      $region111: #{tpu_custom_call.1} parent=5 // pred_region
        %s6432 = ssub.s32 %s29, 2
        // Predicated region
        $region113: #{tpu_custom_call.1} parent=111 // pred_check
          %p6433 = pneg %p336
        $region114: #{tpu_custom_call.1} parent=111 // pred_check_branch
          %6435 = sbr.rel (%p6433) target = $region116
        $region115: #{tpu_custom_call.1} parent=111 // pred_region
          %s6436 = sand.u32 %s321, 1
          %s6437 = scalar_lea.sflag [#allocation4], %s6436
          %s6438 = sand.u32 %s321, 1
          %s6439 = smul.addr %s6438, 16
          %s6440 = scalar_lea.vmem [#allocation16], %s6439
          %6441 = dma.done %s6437, 256
        $region116: #{tpu_custom_call.1} parent=111 // pred_fallthru
          _
      $region112: #{tpu_custom_call.1} parent=5 // pred_fallthru
        _
    $region6: #{tpu_custom_call.1} parent=1 // loop_footer
      %s33 = sadd.s32 1, %s29
    $region7: #{tpu_custom_call.1} parent=1 // loop_footer_branch
      %28 = sbr.rel target = $region3
    $region8: #{tpu_custom_call.1} parent=1 // loop_exit
      _
    %6442 = vsyncpa [#allocation3], 1
    %s6443 = scalar_lea.sflag [#allocation3], 1
    %6444 = vsyncpa %s6443, 1
    %6445 = vsyncpa [#allocation6], 1
    %6446 = vsyncpa [#allocation9], 1
    %6447 = vsyncpa [#allocation12], 1
    %6448 = vsyncpa [#allocation15], 1
    %6449 = vsyncpa [#allocation4], 1
    %s6450 = scalar_lea.sflag [#allocation4], 1
    %6451 = vsyncpa %s6450, 1

// kernel: tpu_custom_call.1
$region0: #{tpu_custom_call.1}
  #allocation0 [shape = 'u32[]', space=smem, size = 0x4, offset = 0x4, fixed_abs, tag = 'smem constant byte address 0x4 - core index']
  #allocation1 [shape = 'u32[144,128]{1,0:T(1,128)}', space=vmem, size = 0x12000, scoped, tag = 'internal scratch']
  %s0 = inlined_call_operand.hbm [shape: bf16[32,128], index: 0, kind: input, shape index: {}]
  %s1 = inlined_call_operand.hbm [shape: bf16[128,1024], index: 1, kind: input, shape index: {}]
  %s2 = inlined_call_operand.hbm [shape: f32[1,1024], index: 2, kind: input, shape index: {}]
  %s3 = inlined_call_operand.hbm [shape: bf16[1024,512], index: 3, kind: input, shape index: {}]
  %s4 = inlined_call_operand.vmem [shape: f32[1,512], index: 4, kind: input, shape index: {}]
  %s5 = inlined_call_operand.hbm [shape: bf16[512,128], index: 5, kind: input, shape index: {}]
  %s6 = inlined_call_operand.vmem [shape: f32[1,128], index: 6, kind: input, shape index: {}]
  %s7 = inlined_call_operand.hbm [shape: bf16[128,512], index: 7, kind: input, shape index: {}]
  %s8 = inlined_call_operand.vmem [shape: f32[1,512], index: 8, kind: input, shape index: {}]
  %s9 = inlined_call_operand.hbm [shape: bf16[512,1024], index: 9, kind: input, shape index: {}]
  %s10 = inlined_call_operand.vmem [shape: f32[1,1024], index: 10, kind: input, shape index: {}]
  %s11 = inlined_call_operand.hbm [shape: bf16[1024,128], index: 11, kind: input, shape index: {}]
  %s12 = inlined_call_operand.vmem [shape: f32[1,128], index: 12, kind: input, shape index: {}]
  %s13 = inlined_call_operand.hbm [shape: f32[32,128], index: 13, kind: output, shape index: {}]
  %s14 = sld [smem:[#allocation0]]
  $region117: #{tpu_custom_call.1} parent=0
    _
  %s16 = ssub.s32 1, %s14
  %s17 = scalar_select 0, %s16, %s14
  $region1: #{tpu_custom_call.1} parent=0
    #allocation2 [shape = 'u8[8192]{0}', space=vmem, size = 0x2000, scoped, tag = 'input window, operand 0']
    #allocation3 [shape = 's32[2]{0}', space=sflag, size = 0x8, scoped, tag = 'scoped memory for tpu_custom_call.1']
    #allocation4 [shape = 's32[2]{0}', space=sflag, size = 0x8, scoped, tag = 'scoped memory for tpu_custom_call.1']
    #allocation5 [shape = 'u8[262144]{0}', space=vmem, size = 0x40000, scoped, tag = 'input window, operand 1, single buffered']
    #allocation6 [shape = 's32[1]{0}', space=sflag, size = 0x4, scoped, tag = 'scoped memory for tpu_custom_call.1']
    #allocation7 [shape = 'u8[4096]{0}', space=vmem, size = 0x1000, scoped, tag = 'input window, operand 2, single buffered']
    #allocation8 [shape = 'u8[1048576]{0}', space=vmem, size = 0x100000, scoped, tag = 'input window, operand 3, single buffered']
    #allocation9 [shape = 's32[1]{0}', space=sflag, size = 0x4, scoped, tag = 'scoped memory for tpu_custom_call.1']
    #allocation10 [shape = 'u8[131072]{0}', space=vmem, size = 0x20000, scoped, tag = 'input window, operand 5, single buffered']
    #allocation11 [shape = 'u8[131072]{0}', space=vmem, size = 0x20000, scoped, tag = 'input window, operand 7, single buffered']
    #allocation12 [shape = 's32[1]{0}', space=sflag, size = 0x4, scoped, tag = 'scoped memory for tpu_custom_call.1']
    #allocation13 [shape = 'u8[1048576]{0}', space=vmem, size = 0x100000, scoped, tag = 'input window, operand 9, single buffered']
    #allocation14 [shape = 'u8[262144]{0}', space=vmem, size = 0x40000, scoped, tag = 'input window, operand 11, single buffered']
    #allocation15 [shape = 's32[1]{0}', space=sflag, size = 0x4, scoped, tag = 'scoped memory for tpu_custom_call.1']
    #allocation16 [shape = 'u8[16384]{0}', space=vmem, size = 0x4000, scoped, tag = 'output window, operand 0']
    %18 = vsyncpa [#allocation3], 0
    %s19 = scalar_lea.sflag [#allocation3], 1
    %20 = vsyncpa %s19, 0
    %21 = vsyncpa [#allocation6], 0
    %22 = vsyncpa [#allocation9], 0
    %23 = vsyncpa [#allocation12], 0
    %24 = vsyncpa [#allocation15], 0
    %25 = vsyncpa [#allocation4], 0
    %s26 = scalar_lea.sflag [#allocation4], 1
    %27 = vsyncpa %s26, 0
    loop: start=0, step=1, limit=4
    $region2: #{tpu_custom_call.1} parent=1 // loop_pre_header
      _
    $region3: #{tpu_custom_call.1} parent=1 // loop_header
      %s29 = sphi 0, %s33
      %p30 = scmp.ge.s32.totalorder %s29, 4
      %s39 = sphi 0, %s41
      %s42 = sphi 0, %s39
      %s43 = sphi 0, %s42
      %s59 = sphi 0, %s43
      %s63 = sphi 0, %s63
      %s65 = sphi 0, %s63
      %s66 = sphi 0, %s65
      %s80 = sphi 0, %s66
      %s84 = sphi 0, %s84
      %s86 = sphi 0, %s84
      %s87 = sphi 0, %s86
      %s101 = sphi 0, %s87
      %s105 = sphi 0, %s105
      %s107 = sphi 0, %s105
      %s108 = sphi 0, %s107
      %s122 = sphi 0, %s108
      %s126 = sphi 0, %s126
      %s128 = sphi 0, %s126
      %s129 = sphi 0, %s128
      %s143 = sphi 0, %s129
      %s147 = sphi 0, %s147
      %s149 = sphi 0, %s147
      %s150 = sphi 0, %s149
      %s164 = sphi 0, %s150
      %s168 = sphi 0, %s168
      %s170 = sphi 0, %s168
      %s171 = sphi 0, %s170
      %s185 = sphi 0, %s171
      %s189 = sphi 0, %s189
      %s191 = sphi 0, %s189
      %s192 = sphi 0, %s191
      %s206 = sphi 0, %s192
      %s210 = sphi 0, %s210
      %s212 = sphi 0, %s210
      %s213 = sphi 0, %s212
      %s227 = sphi 0, %s213
      %s231 = sphi 0, %s231
      %s233 = sphi 0, %s231
      %s234 = sphi 0, %s233
      %s248 = sphi 0, %s234
      %s252 = sphi 0, %s252
      %s254 = sphi 0, %s252
      %s255 = sphi 0, %s254
      %s269 = sphi 0, %s255
      %s273 = sphi 0, %s273
      %s275 = sphi 0, %s273
      %s276 = sphi 0, %s275
      %s290 = sphi 0, %s276
      %s294 = sphi 0, %s294
      %s296 = sphi 0, %s294
      %s297 = sphi 0, %s296
      %s311 = sphi 0, %s297
      %s317 = sphi 0, %s319
      %s320 = sphi 0, %s317
      %s321 = sphi 0, %s320
      %s337 = sphi 0, %s321
    $region4: #{tpu_custom_call.1} parent=1 // loop_header_branch
      %32 = sbr.rel (%p30) target = $region8
    $region5: #{tpu_custom_call.1} parent=1 // loop_body
      %s34 = ssub.s32 %s29, 1
      %s35 = ssub.s32 %s29, 2
      %s36 = sadd.s32 %s29, 1
      %s37 = ssub.s32 %s29, %s36
      %p38 = scmp.eq.s32.totalorder %s37, 0
      %s40 = sadd.s32 %s39, 1
      %s41 = scalar_select %p38, %s39, %s40
      %p44 = pneg %p38
      %p45 = scmp.eq.s32.totalorder %s29, 1
      %p46 = por %p44, %p45
      %p47 = scmp.ne.s32.totalorder %s39, %s42
      %p48 = scmp.eq.s32.totalorder %s29, 0
      %p49 = por %p47, %p48
      %p50 = scmp.ne.s32.totalorder %s39, %s42
      %p51 = scmp.eq.s32.totalorder %s34, 1
      %p52 = por %p50, %p51
      %p53 = scmp.ne.s32.totalorder %s42, %s43
      %p54 = scmp.eq.s32.totalorder %s34, 0
      %p55 = por %p53, %p54
      %p56 = scmp.ne.s32.totalorder %s42, %s43
      %p57 = scmp.eq.s32.totalorder %s35, 1
      %p58 = por %p56, %p57
      %p60 = scmp.ne.s32.totalorder %s43, %s59
      %p61 = scmp.eq.s32.totalorder %s35, 0
      %p62 = por %p60, %p61
      %s64 = sadd.s32 %s63, 1
      %p67 = scmp.eq.s32.totalorder %s29, 1
      %p68 = scmp.ne.s32.totalorder %s63, %s65
      %p69 = scmp.eq.s32.totalorder %s29, 0
      %p70 = por %p68, %p69
      %p71 = scmp.ne.s32.totalorder %s63, %s65
      %p72 = scmp.eq.s32.totalorder %s34, 1
      %p73 = por %p71, %p72
      %p74 = scmp.ne.s32.totalorder %s65, %s66
      %p75 = scmp.eq.s32.totalorder %s34, 0
      %p76 = por %p74, %p75
      %p77 = scmp.ne.s32.totalorder %s65, %s66
      %p78 = scmp.eq.s32.totalorder %s35, 1
      %p79 = por %p77, %p78
      %p81 = scmp.ne.s32.totalorder %s66, %s80
      %p82 = scmp.eq.s32.totalorder %s35, 0
      %p83 = por %p81, %p82
      %s85 = sadd.s32 %s84, 1
      %p88 = scmp.eq.s32.totalorder %s29, 1
      %p89 = scmp.ne.s32.totalorder %s84, %s86
      %p90 = scmp.eq.s32.totalorder %s29, 0
      %p91 = por %p89, %p90
      %p92 = scmp.ne.s32.totalorder %s84, %s86
      %p93 = scmp.eq.s32.totalorder %s34, 1
      %p94 = por %p92, %p93
      %p95 = scmp.ne.s32.totalorder %s86, %s87
      %p96 = scmp.eq.s32.totalorder %s34, 0
      %p97 = por %p95, %p96
      %p98 = scmp.ne.s32.totalorder %s86, %s87
      %p99 = scmp.eq.s32.totalorder %s35, 1
      %p100 = por %p98, %p99
      %p102 = scmp.ne.s32.totalorder %s87, %s101
      %p103 = scmp.eq.s32.totalorder %s35, 0
      %p104 = por %p102, %p103
      %s106 = sadd.s32 %s105, 1
      %p109 = scmp.eq.s32.totalorder %s29, 1
      %p110 = scmp.ne.s32.totalorder %s105, %s107
      %p111 = scmp.eq.s32.totalorder %s29, 0
      %p112 = por %p110, %p111
      %p113 = scmp.ne.s32.totalorder %s105, %s107
      %p114 = scmp.eq.s32.totalorder %s34, 1
      %p115 = por %p113, %p114
      %p116 = scmp.ne.s32.totalorder %s107, %s108
      %p117 = scmp.eq.s32.totalorder %s34, 0
      %p118 = por %p116, %p117
      %p119 = scmp.ne.s32.totalorder %s107, %s108
      %p120 = scmp.eq.s32.totalorder %s35, 1
      %p121 = por %p119, %p120
      %p123 = scmp.ne.s32.totalorder %s108, %s122
      %p124 = scmp.eq.s32.totalorder %s35, 0
      %p125 = por %p123, %p124
      %s127 = sadd.s32 %s126, 1
      %p130 = scmp.eq.s32.totalorder %s29, 1
      %p131 = scmp.ne.s32.totalorder %s126, %s128
      %p132 = scmp.eq.s32.totalorder %s29, 0
      %p133 = por %p131, %p132
      %p134 = scmp.ne.s32.totalorder %s126, %s128
      %p135 = scmp.eq.s32.totalorder %s34, 1
      %p136 = por %p134, %p135
      %p137 = scmp.ne.s32.totalorder %s128, %s129
      %p138 = scmp.eq.s32.totalorder %s34, 0
      %p139 = por %p137, %p138
      %p140 = scmp.ne.s32.totalorder %s128, %s129
      %p141 = scmp.eq.s32.totalorder %s35, 1
      %p142 = por %p140, %p141
      %p144 = scmp.ne.s32.totalorder %s129, %s143
      %p145 = scmp.eq.s32.totalorder %s35, 0
      %p146 = por %p144, %p145
      %s148 = sadd.s32 %s147, 1
      %p151 = scmp.eq.s32.totalorder %s29, 1
      %p152 = scmp.ne.s32.totalorder %s147, %s149
      %p153 = scmp.eq.s32.totalorder %s29, 0
      %p154 = por %p152, %p153
      %p155 = scmp.ne.s32.totalorder %s147, %s149
      %p156 = scmp.eq.s32.totalorder %s34, 1
      %p157 = por %p155, %p156
      %p158 = scmp.ne.s32.totalorder %s149, %s150
      %p159 = scmp.eq.s32.totalorder %s34, 0
      %p160 = por %p158, %p159
      %p161 = scmp.ne.s32.totalorder %s149, %s150
      %p162 = scmp.eq.s32.totalorder %s35, 1
      %p163 = por %p161, %p162
      %p165 = scmp.ne.s32.totalorder %s150, %s164
      %p166 = scmp.eq.s32.totalorder %s35, 0
      %p167 = por %p165, %p166
      %s169 = sadd.s32 %s168, 1
      %p172 = scmp.eq.s32.totalorder %s29, 1
      %p173 = scmp.ne.s32.totalorder %s168, %s170
      %p174 = scmp.eq.s32.totalorder %s29, 0
      %p175 = por %p173, %p174
      %p176 = scmp.ne.s32.totalorder %s168, %s170
      %p177 = scmp.eq.s32.totalorder %s34, 1
      %p178 = por %p176, %p177
      %p179 = scmp.ne.s32.totalorder %s170, %s171
      %p180 = scmp.eq.s32.totalorder %s34, 0
      %p181 = por %p179, %p180
      %p182 = scmp.ne.s32.totalorder %s170, %s171
      %p183 = scmp.eq.s32.totalorder %s35, 1
      %p184 = por %p182, %p183
      %p186 = scmp.ne.s32.totalorder %s171, %s185
      %p187 = scmp.eq.s32.totalorder %s35, 0
      %p188 = por %p186, %p187
      %s190 = sadd.s32 %s189, 1
      %p193 = scmp.eq.s32.totalorder %s29, 1
      %p194 = scmp.ne.s32.totalorder %s189, %s191
      %p195 = scmp.eq.s32.totalorder %s29, 0
      %p196 = por %p194, %p195
      %p197 = scmp.ne.s32.totalorder %s189, %s191
      %p198 = scmp.eq.s32.totalorder %s34, 1
      %p199 = por %p197, %p198
      %p200 = scmp.ne.s32.totalorder %s191, %s192
      %p201 = scmp.eq.s32.totalorder %s34, 0
      %p202 = por %p200, %p201
      %p203 = scmp.ne.s32.totalorder %s191, %s192
      %p204 = scmp.eq.s32.totalorder %s35, 1
      %p205 = por %p203, %p204
      %p207 = scmp.ne.s32.totalorder %s192, %s206
      %p208 = scmp.eq.s32.totalorder %s35, 0
      %p209 = por %p207, %p208
      %s211 = sadd.s32 %s210, 1
      %p214 = scmp.eq.s32.totalorder %s29, 1
      %p215 = scmp.ne.s32.totalorder %s210, %s212
      %p216 = scmp.eq.s32.totalorder %s29, 0
      %p217 = por %p215, %p216
      %p218 = scmp.ne.s32.totalorder %s210, %s212
      %p219 = scmp.eq.s32.totalorder %s34, 1
      %p220 = por %p218, %p219
      %p221 = scmp.ne.s32.totalorder %s212, %s213
      %p222 = scmp.eq.s32.totalorder %s34, 0
      %p223 = por %p221, %p222
      %p224 = scmp.ne.s32.totalorder %s212, %s213
      %p225 = scmp.eq.s32.totalorder %s35, 1
      %p226 = por %p224, %p225
      %p228 = scmp.ne.s32.totalorder %s213, %s227
      %p229 = scmp.eq.s32.totalorder %s35, 0
      %p230 = por %p228, %p229
      %s232 = sadd.s32 %s231, 1
      %p235 = scmp.eq.s32.totalorder %s29, 1
      %p236 = scmp.ne.s32.totalorder %s231, %s233
      %p237 = scmp.eq.s32.totalorder %s29, 0
      %p238 = por %p236, %p237
      %p239 = scmp.ne.s32.totalorder %s231, %s233
      %p240 = scmp.eq.s32.totalorder %s34, 1
      %p241 = por %p239, %p240
      %p242 = scmp.ne.s32.totalorder %s233, %s234
      %p243 = scmp.eq.s32.totalorder %s34, 0
      %p244 = por %p242, %p243
      %p245 = scmp.ne.s32.totalorder %s233, %s234
      %p246 = scmp.eq.s32.totalorder %s35, 1
      %p247 = por %p245, %p246
      %p249 = scmp.ne.s32.totalorder %s234, %s248
      %p250 = scmp.eq.s32.totalorder %s35, 0
      %p251 = por %p249, %p250
      %s253 = sadd.s32 %s252, 1
      %p256 = scmp.eq.s32.totalorder %s29, 1
      %p257 = scmp.ne.s32.totalorder %s252, %s254
      %p258 = scmp.eq.s32.totalorder %s29, 0
      %p259 = por %p257, %p258
      %p260 = scmp.ne.s32.totalorder %s252, %s254
      %p261 = scmp.eq.s32.totalorder %s34, 1
      %p262 = por %p260, %p261
      %p263 = scmp.ne.s32.totalorder %s254, %s255
      %p264 = scmp.eq.s32.totalorder %s34, 0
      %p265 = por %p263, %p264
      %p266 = scmp.ne.s32.totalorder %s254, %s255
      %p267 = scmp.eq.s32.totalorder %s35, 1
      %p268 = por %p266, %p267
      %p270 = scmp.ne.s32.totalorder %s255, %s269
      %p271 = scmp.eq.s32.totalorder %s35, 0
      %p272 = por %p270, %p271
      %s274 = sadd.s32 %s273, 1
      %p277 = scmp.eq.s32.totalorder %s29, 1
      %p278 = scmp.ne.s32.totalorder %s273, %s275
      %p279 = scmp.eq.s32.totalorder %s29, 0
      %p280 = por %p278, %p279
      %p281 = scmp.ne.s32.totalorder %s273, %s275
      %p282 = scmp.eq.s32.totalorder %s34, 1
      %p283 = por %p281, %p282
      %p284 = scmp.ne.s32.totalorder %s275, %s276
      %p285 = scmp.eq.s32.totalorder %s34, 0
      %p286 = por %p284, %p285
      %p287 = scmp.ne.s32.totalorder %s275, %s276
      %p288 = scmp.eq.s32.totalorder %s35, 1
      %p289 = por %p287, %p288
      %p291 = scmp.ne.s32.totalorder %s276, %s290
      %p292 = scmp.eq.s32.totalorder %s35, 0
      %p293 = por %p291, %p292
      %s295 = sadd.s32 %s294, 1
      %p298 = scmp.eq.s32.totalorder %s29, 1
      %p299 = scmp.ne.s32.totalorder %s294, %s296
      %p300 = scmp.eq.s32.totalorder %s29, 0
      %p301 = por %p299, %p300
      %p302 = scmp.ne.s32.totalorder %s294, %s296
      %p303 = scmp.eq.s32.totalorder %s34, 1
      %p304 = por %p302, %p303
      %p305 = scmp.ne.s32.totalorder %s296, %s297
      %p306 = scmp.eq.s32.totalorder %s34, 0
      %p307 = por %p305, %p306
      %p308 = scmp.ne.s32.totalorder %s296, %s297
      %p309 = scmp.eq.s32.totalorder %s35, 1
      %p310 = por %p308, %p309
      %p312 = scmp.ne.s32.totalorder %s297, %s311
      %p313 = scmp.eq.s32.totalorder %s35, 0
      %p314 = por %p312, %p313
      %s315 = ssub.s32 %s29, %s36
      %p316 = scmp.eq.s32.totalorder %s315, 0
      %s318 = sadd.s32 %s317, 1
      %s319 = scalar_select %p316, %s317, %s318
      %p322 = pneg %p316
      %p323 = scmp.eq.s32.totalorder %s29, 1
      %p324 = por %p322, %p323
      %p325 = scmp.ne.s32.totalorder %s317, %s320
      %p326 = scmp.eq.s32.totalorder %s29, 0
      %p327 = por %p325, %p326
      %p328 = scmp.ne.s32.totalorder %s317, %s320
      %p329 = scmp.eq.s32.totalorder %s34, 1
      %p330 = por %p328, %p329
      %p331 = scmp.ne.s32.totalorder %s320, %s321
      %p332 = scmp.eq.s32.totalorder %s34, 0
      %p333 = por %p331, %p332
      %p334 = scmp.ne.s32.totalorder %s320, %s321
      %p335 = scmp.eq.s32.totalorder %s35, 1
      %p336 = por %p334, %p335
      %p338 = scmp.ne.s32.totalorder %s321, %s337
      %p339 = scmp.eq.s32.totalorder %s35, 0
      %p340 = por %p338, %p339
      %p341 = scmp.le.s32.totalorder 1, %s29
      %p342 = scmp.lt.s32.totalorder %s29, 3
      %p343 = pnand %p341, %p342
      %p344 = pneg %p343
      // Predicated region
      $region9: #{tpu_custom_call.1} parent=5 // pred_check
        _
      $region10: #{tpu_custom_call.1} parent=5 // pred_check_branch
        %346 = sbr.rel (%p343) target = $region12
      $region11: #{tpu_custom_call.1} parent=5 // pred_region
        %s347 = ssub.s32 %s29, 1
        // Predicated region
        $region13: #{tpu_custom_call.1} parent=11 // pred_check
          %p348 = pneg %p76
        $region14: #{tpu_custom_call.1} parent=11 // pred_check_branch
          %350 = sbr.rel (%p348) target = $region16
        $region15: #{tpu_custom_call.1} parent=11 // pred_region
          %s352 = ssub.s32 8192, 8192
          %353 = vsyncadd [#allocation6], %s352
          %s354 = sshll.u32 [#allocation5], 4
          %s355 = int_to_ptr.vmem [resolvable:$true] %s354
          %360 = dma.hbm_to_vmem [thread:$0]  %s1, 8192, %s355, [#allocation6], 512, 512, 32
        $region16: #{tpu_custom_call.1} parent=11 // pred_fallthru
          _
        // Predicated region
        $region17: #{tpu_custom_call.1} parent=11 // pred_check
          %p361 = pneg %p97
        $region18: #{tpu_custom_call.1} parent=11 // pred_check_branch
          %363 = sbr.rel (%p361) target = $region20
        $region19: #{tpu_custom_call.1} parent=11 // pred_region
          %s365 = ssub.s32 128, 128
          %366 = vsyncadd [#allocation6], %s365
          %s368 = sshll.u32 [#allocation7], 4
          %s369 = int_to_ptr.vmem [resolvable:$true] %s368
          %371 = dma.hbm_to_vmem [thread:$0]  %s2, 128, %s369, [#allocation6]
        $region20: #{tpu_custom_call.1} parent=11 // pred_fallthru
          _
        // Predicated region
        $region21: #{tpu_custom_call.1} parent=11 // pred_check
          %p372 = pneg %p118
        $region22: #{tpu_custom_call.1} parent=11 // pred_check_branch
          %374 = sbr.rel (%p372) target = $region24
        $region23: #{tpu_custom_call.1} parent=11 // pred_region
          %s376 = ssub.s32 32768, 32768
          %377 = vsyncadd [#allocation9], %s376
          %s378 = sshll.u32 [#allocation8], 4
          %s379 = int_to_ptr.vmem [resolvable:$true] %s378
          %384 = dma.hbm_to_vmem [thread:$0]  %s3, 32768, %s379, [#allocation9], 256, 256, 16
        $region24: #{tpu_custom_call.1} parent=11 // pred_fallthru
          _
        // Predicated region
        $region25: #{tpu_custom_call.1} parent=11 // pred_check
          %p385 = pneg %p139
        $region26: #{tpu_custom_call.1} parent=11 // pred_check_branch
          %387 = sbr.rel (%p385) target = $region28
        $region27: #{tpu_custom_call.1} parent=11 // pred_region
          _
        $region28: #{tpu_custom_call.1} parent=11 // pred_fallthru
          _
        // Predicated region
        $region29: #{tpu_custom_call.1} parent=11 // pred_check
          %p388 = pneg %p160
        $region30: #{tpu_custom_call.1} parent=11 // pred_check_branch
          %390 = sbr.rel (%p388) target = $region32
        $region31: #{tpu_custom_call.1} parent=11 // pred_region
          %s392 = ssub.s32 4096, 4096
          %393 = vsyncadd [#allocation9], %s392
          %s394 = sshll.u32 [#allocation10], 4
          %s395 = int_to_ptr.vmem [resolvable:$true] %s394
          %400 = dma.hbm_to_vmem [thread:$0]  %s5, 4096, %s395, [#allocation9], 64, 64, 4
        $region32: #{tpu_custom_call.1} parent=11 // pred_fallthru
          _
        // Predicated region
        $region33: #{tpu_custom_call.1} parent=11 // pred_check
          %p401 = pneg %p181
        $region34: #{tpu_custom_call.1} parent=11 // pred_check_branch
          %403 = sbr.rel (%p401) target = $region36
        $region35: #{tpu_custom_call.1} parent=11 // pred_region
          _
        $region36: #{tpu_custom_call.1} parent=11 // pred_fallthru
          _
        // Predicated region
        $region37: #{tpu_custom_call.1} parent=11 // pred_check
          %p404 = pneg %p202
        $region38: #{tpu_custom_call.1} parent=11 // pred_check_branch
          %406 = sbr.rel (%p404) target = $region40
        $region39: #{tpu_custom_call.1} parent=11 // pred_region
          %s408 = ssub.s32 4096, 4096
          %409 = vsyncadd [#allocation12], %s408
          %s410 = sshll.u32 [#allocation11], 4
          %s411 = int_to_ptr.vmem [resolvable:$true] %s410
          %416 = dma.hbm_to_vmem [thread:$0]  %s7, 4096, %s411, [#allocation12], 256, 256, 16
        $region40: #{tpu_custom_call.1} parent=11 // pred_fallthru
          _
        // Predicated region
        $region41: #{tpu_custom_call.1} parent=11 // pred_check
          %p417 = pneg %p223
        $region42: #{tpu_custom_call.1} parent=11 // pred_check_branch
          %419 = sbr.rel (%p417) target = $region44
        $region43: #{tpu_custom_call.1} parent=11 // pred_region
          _
        $region44: #{tpu_custom_call.1} parent=11 // pred_fallthru
          _
        // Predicated region
        $region45: #{tpu_custom_call.1} parent=11 // pred_check
          %p420 = pneg %p244
        $region46: #{tpu_custom_call.1} parent=11 // pred_check_branch
          %422 = sbr.rel (%p420) target = $region48
        $region47: #{tpu_custom_call.1} parent=11 // pred_region
          %s424 = ssub.s32 32768, 32768
          %425 = vsyncadd [#allocation12], %s424
          %s426 = sshll.u32 [#allocation13], 4
          %s427 = int_to_ptr.vmem [resolvable:$true] %s426
          %432 = dma.hbm_to_vmem [thread:$0]  %s9, 32768, %s427, [#allocation12], 512, 512, 32
        $region48: #{tpu_custom_call.1} parent=11 // pred_fallthru
          _
        // Predicated region
        $region49: #{tpu_custom_call.1} parent=11 // pred_check
          %p433 = pneg %p265
        $region50: #{tpu_custom_call.1} parent=11 // pred_check_branch
          %435 = sbr.rel (%p433) target = $region52
        $region51: #{tpu_custom_call.1} parent=11 // pred_region
          _
        $region52: #{tpu_custom_call.1} parent=11 // pred_fallthru
          _
        // Predicated region
        $region53: #{tpu_custom_call.1} parent=11 // pred_check
          %p436 = pneg %p286
        $region54: #{tpu_custom_call.1} parent=11 // pred_check_branch
          %438 = sbr.rel (%p436) target = $region56
        $region55: #{tpu_custom_call.1} parent=11 // pred_region
          %s440 = ssub.s32 8192, 8192
          %441 = vsyncadd [#allocation15], %s440
          %s442 = sshll.u32 [#allocation14], 4
          %s443 = int_to_ptr.vmem [resolvable:$true] %s442
          %448 = dma.hbm_to_vmem [thread:$0]  %s11, 8192, %s443, [#allocation15], 64, 64, 4
        $region56: #{tpu_custom_call.1} parent=11 // pred_fallthru
          _
        // Predicated region
        $region57: #{tpu_custom_call.1} parent=11 // pred_check
          %p449 = pneg %p307
        $region58: #{tpu_custom_call.1} parent=11 // pred_check_branch
          %451 = sbr.rel (%p449) target = $region60
        $region59: #{tpu_custom_call.1} parent=11 // pred_region
          _
        $region60: #{tpu_custom_call.1} parent=11 // pred_fallthru
          _
      $region12: #{tpu_custom_call.1} parent=5 // pred_fallthru
        _
      %p452 = scmp.lt.s32.totalorder %s29, 2
      // Predicated region
      $region61: #{tpu_custom_call.1} parent=5 // pred_check
        %p453 = pneg %p452
      $region62: #{tpu_custom_call.1} parent=5 // pred_check_branch
        %455 = sbr.rel (%p453) target = $region64
      $region63: #{tpu_custom_call.1} parent=5 // pred_region
        // Predicated region
        $region65: #{tpu_custom_call.1} parent=63 // pred_check
          %p456 = pneg %p49
        $region66: #{tpu_custom_call.1} parent=63 // pred_check_branch
          %458 = sbr.rel (%p456) target = $region68
        $region67: #{tpu_custom_call.1} parent=63 // pred_region
          %s459 = sand.u32 %s39, 1
          %s460 = scalar_lea.sflag [#allocation3], %s459
          %s461 = sand.u32 %s39, 1
          %s462 = smul.addr %s461, 8
          %s463 = scalar_lea.vmem [#allocation2], %s462
          %s464 = smul.u32 2, %s29
          %s466 = ssub.s32 128, 128
          %467 = vsyncadd %s460, %s466
          %s468 = smul.addr %s464, 64
          %s469 = scalar_lea.hbm %s0, %s468
          %s470 = sshll.u32 %s463, 4
          %s471 = int_to_ptr.vmem [resolvable:$true] %s470
          %476 = dma.hbm_to_vmem [thread:$0]  %s469, 128, %s471, %s460, 64, 64, 4
        $region68: #{tpu_custom_call.1} parent=63 // pred_fallthru
          _
      $region64: #{tpu_custom_call.1} parent=5 // pred_fallthru
        _
      %p477 = scmp.le.s32.totalorder 1, %s29
      %p478 = scmp.lt.s32.totalorder %s29, 3
      %p479 = pnand %p477, %p478
      %p480 = pneg %p479
      // Predicated region
      $region69: #{tpu_custom_call.1} parent=5 // pred_check
        _
      $region70: #{tpu_custom_call.1} parent=5 // pred_check_branch
        %482 = sbr.rel (%p479) target = $region72
      $region71: #{tpu_custom_call.1} parent=5 // pred_region
        %s483 = ssub.s32 %s29, 1
        %s484 = sand.u32 %s42, 1
        %s485 = scalar_lea.sflag [#allocation3], %s484
        %s486 = sand.u32 %s42, 1
        %s487 = smul.addr %s486, 8
        %s488 = scalar_lea.vmem [#allocation2], %s487
        // Predicated region
        $region73: #{tpu_custom_call.1} parent=71 // pred_check
          %p489 = pneg %p55
        $region74: #{tpu_custom_call.1} parent=71 // pred_check_branch
          %491 = sbr.rel (%p489) target = $region76
        $region75: #{tpu_custom_call.1} parent=71 // pred_region
          %492 = dma.done %s485, 128
        $region76: #{tpu_custom_call.1} parent=71 // pred_fallthru
          _
        // Predicated region
        $region77: #{tpu_custom_call.1} parent=71 // pred_check
          %p493 = pneg %p76
        $region78: #{tpu_custom_call.1} parent=71 // pred_check_branch
          %495 = sbr.rel (%p493) target = $region80
        $region79: #{tpu_custom_call.1} parent=71 // pred_region
          %496 = dma.done [#allocation6], 8192
        $region80: #{tpu_custom_call.1} parent=71 // pred_fallthru
          _
        // Predicated region
        $region81: #{tpu_custom_call.1} parent=71 // pred_check
          %p497 = pneg %p97
        $region82: #{tpu_custom_call.1} parent=71 // pred_check_branch
          %499 = sbr.rel (%p497) target = $region84
        $region83: #{tpu_custom_call.1} parent=71 // pred_region
          %500 = dma.done [#allocation6], 128
        $region84: #{tpu_custom_call.1} parent=71 // pred_fallthru
          _
        // Predicated region
        $region85: #{tpu_custom_call.1} parent=71 // pred_check
          %p501 = pneg %p118
        $region86: #{tpu_custom_call.1} parent=71 // pred_check_branch
          %503 = sbr.rel (%p501) target = $region88
        $region87: #{tpu_custom_call.1} parent=71 // pred_region
          %504 = dma.done [#allocation9], 32768
        $region88: #{tpu_custom_call.1} parent=71 // pred_fallthru
          _
        // Predicated region
        $region89: #{tpu_custom_call.1} parent=71 // pred_check
          %p505 = pneg %p160
        $region90: #{tpu_custom_call.1} parent=71 // pred_check_branch
          %507 = sbr.rel (%p505) target = $region92
        $region91: #{tpu_custom_call.1} parent=71 // pred_region
          %508 = dma.done [#allocation9], 4096
        $region92: #{tpu_custom_call.1} parent=71 // pred_fallthru
          _
        // Predicated region
        $region93: #{tpu_custom_call.1} parent=71 // pred_check
          %p509 = pneg %p202
        $region94: #{tpu_custom_call.1} parent=71 // pred_check_branch
          %511 = sbr.rel (%p509) target = $region96
        $region95: #{tpu_custom_call.1} parent=71 // pred_region
          %512 = dma.done [#allocation12], 4096
        $region96: #{tpu_custom_call.1} parent=71 // pred_fallthru
          _
        // Predicated region
        $region97: #{tpu_custom_call.1} parent=71 // pred_check
          %p513 = pneg %p244
        $region98: #{tpu_custom_call.1} parent=71 // pred_check_branch
          %515 = sbr.rel (%p513) target = $region100
        $region99: #{tpu_custom_call.1} parent=71 // pred_region
          %516 = dma.done [#allocation12], 32768
        $region100: #{tpu_custom_call.1} parent=71 // pred_fallthru
          _
        // Predicated region
        $region101: #{tpu_custom_call.1} parent=71 // pred_check
          %p517 = pneg %p286
        $region102: #{tpu_custom_call.1} parent=71 // pred_check_branch
          %519 = sbr.rel (%p517) target = $region104
        $region103: #{tpu_custom_call.1} parent=71 // pred_region
          %520 = dma.done [#allocation15], 8192
        $region104: #{tpu_custom_call.1} parent=71 // pred_fallthru
          _
        %s521 = sand.u32 %s42, 1
        %s522 = scalar_lea.sflag [#allocation3], %s521
        %s523 = sand.u32 %s42, 1
        %s524 = smul.addr %s523, 8
        %s525 = scalar_lea.vmem [#allocation2], %s524
        %p526 = pneg %p55
        %p527 = pneg %p52
        %p528 = pneg %p76
        %p529 = pneg %p73
        %p530 = pneg %p97
        %p531 = pneg %p94
        %p532 = pneg %p118
        %p533 = pneg %p115
        %p534 = pneg %p139
        %p535 = pneg %p136
        %p536 = pneg %p160
        %p537 = pneg %p157
        %p538 = pneg %p181
        %p539 = pneg %p178
        %p540 = pneg %p202
        %p541 = pneg %p199
        %p542 = pneg %p223
        %p543 = pneg %p220
        %p544 = pneg %p244
        %p545 = pneg %p241
        %p546 = pneg %p265
        %p547 = pneg %p262
        %p548 = pneg %p286
        %p549 = pneg %p283
        %p550 = pneg %p307
        %p551 = pneg %p304
        %p552 = pneg %p333
        %p553 = pneg %p330
        %s554 = sand.u32 %s320, 1
        %s555 = scalar_lea.sflag [#allocation4], %s554
        %s556 = sand.u32 %s320, 1
        %s557 = smul.addr %s556, 16
        %s558 = scalar_lea.vmem [#allocation16], %s557
        %s559 = smul.u32 2, %s34
        %s560 = smul.u32 2, %s34
        %v562 = vld [vmem:[%s488] sm:$0xf]
        %v563 = vld [vmem:[%s488 + $0x4] sm:$0xf]
        %v564 = vld [vmem:[#allocation5] sm:$0xff]
        %v565 = vld [vmem:[#allocation5 + $0x8] sm:$0xff]
        %v566 = vld [vmem:[#allocation5 + $0x10] sm:$0xff]
        %v567 = vld [vmem:[#allocation5 + $0x18] sm:$0xff]
        %v568 = vld [vmem:[#allocation5 + $0x20] sm:$0xff]
        %v569 = vld [vmem:[#allocation5 + $0x28] sm:$0xff]
        %v570 = vld [vmem:[#allocation5 + $0x30] sm:$0xff]
        %v571 = vld [vmem:[#allocation5 + $0x38] sm:$0xff]
        %v572 = vld [vmem:[#allocation5 + $0x40] sm:$0xff]
        %v573 = vld [vmem:[#allocation5 + $0x48] sm:$0xff]
        %v574 = vld [vmem:[#allocation5 + $0x50] sm:$0xff]
        %v575 = vld [vmem:[#allocation5 + $0x58] sm:$0xff]
        %v576 = vld [vmem:[#allocation5 + $0x60] sm:$0xff]
        %v577 = vld [vmem:[#allocation5 + $0x68] sm:$0xff]
        %v578 = vld [vmem:[#allocation5 + $0x70] sm:$0xff]
        %v579 = vld [vmem:[#allocation5 + $0x78] sm:$0xff]
        %v580 = vld [vmem:[#allocation5 + $0x80] sm:$0xff]
        %v581 = vld [vmem:[#allocation5 + $0x88] sm:$0xff]
        %v582 = vld [vmem:[#allocation5 + $0x90] sm:$0xff]
        %v583 = vld [vmem:[#allocation5 + $0x98] sm:$0xff]
        %v584 = vld [vmem:[#allocation5 + $0xa0] sm:$0xff]
        %v585 = vld [vmem:[#allocation5 + $0xa8] sm:$0xff]
        %v586 = vld [vmem:[#allocation5 + $0xb0] sm:$0xff]
        %v587 = vld [vmem:[#allocation5 + $0xb8] sm:$0xff]
        %v588 = vld [vmem:[#allocation5 + $0xc0] sm:$0xff]
        %v589 = vld [vmem:[#allocation5 + $0xc8] sm:$0xff]
        %v590 = vld [vmem:[#allocation5 + $0xd0] sm:$0xff]
        %v591 = vld [vmem:[#allocation5 + $0xd8] sm:$0xff]
        %v592 = vld [vmem:[#allocation5 + $0xe0] sm:$0xff]
        %v593 = vld [vmem:[#allocation5 + $0xe8] sm:$0xff]
        %v594 = vld [vmem:[#allocation5 + $0xf0] sm:$0xff]
        %v595 = vld [vmem:[#allocation5 + $0xf8] sm:$0xff]
        %v596 = vld [vmem:[#allocation5 + $0x100] sm:$0xff]
        %v597 = vld [vmem:[#allocation5 + $0x108] sm:$0xff]
        %v598 = vld [vmem:[#allocation5 + $0x110] sm:$0xff]
        %v599 = vld [vmem:[#allocation5 + $0x118] sm:$0xff]
        %v600 = vld [vmem:[#allocation5 + $0x120] sm:$0xff]
        %v601 = vld [vmem:[#allocation5 + $0x128] sm:$0xff]
        %v602 = vld [vmem:[#allocation5 + $0x130] sm:$0xff]
        %v603 = vld [vmem:[#allocation5 + $0x138] sm:$0xff]
        %v604 = vld [vmem:[#allocation5 + $0x140] sm:$0xff]
        %v605 = vld [vmem:[#allocation5 + $0x148] sm:$0xff]
        %v606 = vld [vmem:[#allocation5 + $0x150] sm:$0xff]
        %v607 = vld [vmem:[#allocation5 + $0x158] sm:$0xff]
        %v608 = vld [vmem:[#allocation5 + $0x160] sm:$0xff]
        %v609 = vld [vmem:[#allocation5 + $0x168] sm:$0xff]
        %v610 = vld [vmem:[#allocation5 + $0x170] sm:$0xff]
        %v611 = vld [vmem:[#allocation5 + $0x178] sm:$0xff]
        %v612 = vld [vmem:[#allocation5 + $0x180] sm:$0xff]
        %v613 = vld [vmem:[#allocation5 + $0x188] sm:$0xff]
        %v614 = vld [vmem:[#allocation5 + $0x190] sm:$0xff]
        %v615 = vld [vmem:[#allocation5 + $0x198] sm:$0xff]
        %v616 = vld [vmem:[#allocation5 + $0x1a0] sm:$0xff]
        %v617 = vld [vmem:[#allocation5 + $0x1a8] sm:$0xff]
        %v618 = vld [vmem:[#allocation5 + $0x1b0] sm:$0xff]
        %v619 = vld [vmem:[#allocation5 + $0x1b8] sm:$0xff]
        %v620 = vld [vmem:[#allocation5 + $0x1c0] sm:$0xff]
        %v621 = vld [vmem:[#allocation5 + $0x1c8] sm:$0xff]
        %v622 = vld [vmem:[#allocation5 + $0x1d0] sm:$0xff]
        %v623 = vld [vmem:[#allocation5 + $0x1d8] sm:$0xff]
        %v624 = vld [vmem:[#allocation5 + $0x1e0] sm:$0xff]
        %v625 = vld [vmem:[#allocation5 + $0x1e8] sm:$0xff]
        %v626 = vld [vmem:[#allocation5 + $0x1f0] sm:$0xff]
        %v627 = vld [vmem:[#allocation5 + $0x1f8] sm:$0xff]
        %v628 = vld [vmem:[#allocation7] sm:$0xff]
        %v630 = vlaneseq
        %v631 = vshrl.u32 %v630, 7
        %v632 = vsub.s32 0, %v631
        %v633 = vrot.slane %v628, %v632
        %v634 = vlaneseq
        %v635 = vshrl.u32 %v634, 7
        %v636 = vsub.s32 1, %v635
        %v637 = vrot.slane %v628, %v636
        %v638 = vlaneseq
        %v639 = vshrl.u32 %v638, 7
        %v640 = vsub.s32 2, %v639
        %v641 = vrot.slane %v628, %v640
        %v642 = vlaneseq
        %v643 = vshrl.u32 %v642, 7
        %v644 = vsub.s32 3, %v643
        %v645 = vrot.slane %v628, %v644
        %v646 = vlaneseq
        %v647 = vshrl.u32 %v646, 7
        %v648 = vsub.s32 4, %v647
        %v649 = vrot.slane %v628, %v648
        %v650 = vlaneseq
        %v651 = vshrl.u32 %v650, 7
        %v652 = vsub.s32 5, %v651
        %v653 = vrot.slane %v628, %v652
        %v654 = vlaneseq
        %v655 = vshrl.u32 %v654, 7
        %v656 = vsub.s32 6, %v655
        %v657 = vrot.slane %v628, %v656
        %v658 = vlaneseq
        %v659 = vshrl.u32 %v658, 7
        %v660 = vsub.s32 7, %v659
        %v661 = vrot.slane %v628, %v660
        %v672 = vunpack.c.l.b16 %v562
        %v673 = vunpack.c.l.b16 %v563
        %v674 = vpack.c.b16 %v673, %v672
        %v740 = vunpack.c.l.b16 %v564
        %v741 = vunpack.c.h.b16 %v564
        %v742 = vunpack.c.l.b16 %v565
        %v743 = vunpack.c.h.b16 %v565
        %v744 = vunpack.c.l.b16 %v566
        %v745 = vunpack.c.h.b16 %v566
        %v746 = vunpack.c.l.b16 %v567
        %v747 = vunpack.c.h.b16 %v567
        %v748 = vunpack.c.l.b16 %v568
        %v749 = vunpack.c.h.b16 %v568
        %v750 = vunpack.c.l.b16 %v569
        %v751 = vunpack.c.h.b16 %v569
        %v752 = vunpack.c.l.b16 %v570
        %v753 = vunpack.c.h.b16 %v570
        %v754 = vunpack.c.l.b16 %v571
        %v755 = vunpack.c.h.b16 %v571
        %v756 = vunpack.c.l.b16 %v572
        %v757 = vunpack.c.h.b16 %v572
        %v758 = vunpack.c.l.b16 %v573
        %v759 = vunpack.c.h.b16 %v573
        %v760 = vunpack.c.l.b16 %v574
        %v761 = vunpack.c.h.b16 %v574
        %v762 = vunpack.c.l.b16 %v575
        %v763 = vunpack.c.h.b16 %v575
        %v764 = vunpack.c.l.b16 %v576
        %v765 = vunpack.c.h.b16 %v576
        %v766 = vunpack.c.l.b16 %v577
        %v767 = vunpack.c.h.b16 %v577
        %v768 = vunpack.c.l.b16 %v578
        %v769 = vunpack.c.h.b16 %v578
        %v770 = vunpack.c.l.b16 %v579
        %v771 = vunpack.c.h.b16 %v579
        %v772 = vunpack.c.l.b16 %v580
        %v773 = vunpack.c.h.b16 %v580
        %v774 = vunpack.c.l.b16 %v581
        %v775 = vunpack.c.h.b16 %v581
        %v776 = vunpack.c.l.b16 %v582
        %v777 = vunpack.c.h.b16 %v582
        %v778 = vunpack.c.l.b16 %v583
        %v779 = vunpack.c.h.b16 %v583
        %v780 = vunpack.c.l.b16 %v584
        %v781 = vunpack.c.h.b16 %v584
        %v782 = vunpack.c.l.b16 %v585
        %v783 = vunpack.c.h.b16 %v585
        %v784 = vunpack.c.l.b16 %v586
        %v785 = vunpack.c.h.b16 %v586
        %v786 = vunpack.c.l.b16 %v587
        %v787 = vunpack.c.h.b16 %v587
        %v788 = vunpack.c.l.b16 %v588
        %v789 = vunpack.c.h.b16 %v588
        %v790 = vunpack.c.l.b16 %v589
        %v791 = vunpack.c.h.b16 %v589
        %v792 = vunpack.c.l.b16 %v590
        %v793 = vunpack.c.h.b16 %v590
        %v794 = vunpack.c.l.b16 %v591
        %v795 = vunpack.c.h.b16 %v591
        %v796 = vunpack.c.l.b16 %v592
        %v797 = vunpack.c.h.b16 %v592
        %v798 = vunpack.c.l.b16 %v593
        %v799 = vunpack.c.h.b16 %v593
        %v800 = vunpack.c.l.b16 %v594
        %v801 = vunpack.c.h.b16 %v594
        %v802 = vunpack.c.l.b16 %v595
        %v803 = vunpack.c.h.b16 %v595
        %v804 = vunpack.c.l.b16 %v596
        %v805 = vunpack.c.h.b16 %v596
        %v806 = vunpack.c.l.b16 %v597
        %v807 = vunpack.c.h.b16 %v597
        %v808 = vunpack.c.l.b16 %v598
        %v809 = vunpack.c.h.b16 %v598
        %v810 = vunpack.c.l.b16 %v599
        %v811 = vunpack.c.h.b16 %v599
        %v812 = vunpack.c.l.b16 %v600
        %v813 = vunpack.c.h.b16 %v600
        %v814 = vunpack.c.l.b16 %v601
        %v815 = vunpack.c.h.b16 %v601
        %v816 = vunpack.c.l.b16 %v602
        %v817 = vunpack.c.h.b16 %v602
        %v818 = vunpack.c.l.b16 %v603
        %v819 = vunpack.c.h.b16 %v603
        %v820 = vunpack.c.l.b16 %v604
        %v821 = vunpack.c.h.b16 %v604
        %v822 = vunpack.c.l.b16 %v605
        %v823 = vunpack.c.h.b16 %v605
        %v824 = vunpack.c.l.b16 %v606
        %v825 = vunpack.c.h.b16 %v606
        %v826 = vunpack.c.l.b16 %v607
        %v827 = vunpack.c.h.b16 %v607
        %v828 = vunpack.c.l.b16 %v608
        %v829 = vunpack.c.h.b16 %v608
        %v830 = vunpack.c.l.b16 %v609
        %v831 = vunpack.c.h.b16 %v609
        %v832 = vunpack.c.l.b16 %v610
        %v833 = vunpack.c.h.b16 %v610
        %v834 = vunpack.c.l.b16 %v611
        %v835 = vunpack.c.h.b16 %v611
        %v836 = vunpack.c.l.b16 %v612
        %v837 = vunpack.c.h.b16 %v612
        %v838 = vunpack.c.l.b16 %v613
        %v839 = vunpack.c.h.b16 %v613
        %v840 = vunpack.c.l.b16 %v614
        %v841 = vunpack.c.h.b16 %v614
        %v842 = vunpack.c.l.b16 %v615
        %v843 = vunpack.c.h.b16 %v615
        %v844 = vunpack.c.l.b16 %v616
        %v845 = vunpack.c.h.b16 %v616
        %v846 = vunpack.c.l.b16 %v617
        %v847 = vunpack.c.h.b16 %v617
        %v848 = vunpack.c.l.b16 %v618
        %v849 = vunpack.c.h.b16 %v618
        %v850 = vunpack.c.l.b16 %v619
        %v851 = vunpack.c.h.b16 %v619
        %v852 = vunpack.c.l.b16 %v620
        %v853 = vunpack.c.h.b16 %v620
        %v854 = vunpack.c.l.b16 %v621
        %v855 = vunpack.c.h.b16 %v621
        %v856 = vunpack.c.l.b16 %v622
        %v857 = vunpack.c.h.b16 %v622
        %v858 = vunpack.c.l.b16 %v623
        %v859 = vunpack.c.h.b16 %v623
        %v860 = vunpack.c.l.b16 %v624
        %v861 = vunpack.c.h.b16 %v624
        %v862 = vunpack.c.l.b16 %v625
        %v863 = vunpack.c.h.b16 %v625
        %v864 = vunpack.c.l.b16 %v626
        %v865 = vunpack.c.h.b16 %v626
        %v866 = vunpack.c.l.b16 %v627
        %v867 = vunpack.c.h.b16 %v627
        %v868 = vpack.c.b16 %v748, %v740
        %v869 = vpack.c.b16 %v749, %v741
        %v870 = vpack.c.b16 %v750, %v742
        %v871 = vpack.c.b16 %v751, %v743
        %v872 = vpack.c.b16 %v752, %v744
        %v873 = vpack.c.b16 %v753, %v745
        %v874 = vpack.c.b16 %v754, %v746
        %v875 = vpack.c.b16 %v755, %v747
        %v876 = vpack.c.b16 %v764, %v756
        %v877 = vpack.c.b16 %v765, %v757
        %v878 = vpack.c.b16 %v766, %v758
        %v879 = vpack.c.b16 %v767, %v759
        %v880 = vpack.c.b16 %v768, %v760
        %v881 = vpack.c.b16 %v769, %v761
        %v882 = vpack.c.b16 %v770, %v762
        %v883 = vpack.c.b16 %v771, %v763
        %v884 = vpack.c.b16 %v780, %v772
        %v885 = vpack.c.b16 %v781, %v773
        %v886 = vpack.c.b16 %v782, %v774
        %v887 = vpack.c.b16 %v783, %v775
        %v888 = vpack.c.b16 %v784, %v776
        %v889 = vpack.c.b16 %v785, %v777
        %v890 = vpack.c.b16 %v786, %v778
        %v891 = vpack.c.b16 %v787, %v779
        %v892 = vpack.c.b16 %v796, %v788
        %v893 = vpack.c.b16 %v797, %v789
        %v894 = vpack.c.b16 %v798, %v790
        %v895 = vpack.c.b16 %v799, %v791
        %v896 = vpack.c.b16 %v800, %v792
        %v897 = vpack.c.b16 %v801, %v793
        %v898 = vpack.c.b16 %v802, %v794
        %v899 = vpack.c.b16 %v803, %v795
        %v900 = vpack.c.b16 %v812, %v804
        %v901 = vpack.c.b16 %v813, %v805
        %v902 = vpack.c.b16 %v814, %v806
        %v903 = vpack.c.b16 %v815, %v807
        %v904 = vpack.c.b16 %v816, %v808
        %v905 = vpack.c.b16 %v817, %v809
        %v906 = vpack.c.b16 %v818, %v810
        %v907 = vpack.c.b16 %v819, %v811
        %v908 = vpack.c.b16 %v828, %v820
        %v909 = vpack.c.b16 %v829, %v821
        %v910 = vpack.c.b16 %v830, %v822
        %v911 = vpack.c.b16 %v831, %v823
        %v912 = vpack.c.b16 %v832, %v824
        %v913 = vpack.c.b16 %v833, %v825
        %v914 = vpack.c.b16 %v834, %v826
        %v915 = vpack.c.b16 %v835, %v827
        %v916 = vpack.c.b16 %v844, %v836
        %v917 = vpack.c.b16 %v845, %v837
        %v918 = vpack.c.b16 %v846, %v838
        %v919 = vpack.c.b16 %v847, %v839
        %v920 = vpack.c.b16 %v848, %v840
        %v921 = vpack.c.b16 %v849, %v841
        %v922 = vpack.c.b16 %v850, %v842
        %v923 = vpack.c.b16 %v851, %v843
        %v924 = vpack.c.b16 %v860, %v852
        %v925 = vpack.c.b16 %v861, %v853
        %v926 = vpack.c.b16 %v862, %v854
        %v927 = vpack.c.b16 %v863, %v855
        %v928 = vpack.c.b16 %v864, %v856
        %v929 = vpack.c.b16 %v865, %v857
        %v930 = vpack.c.b16 %v866, %v858
        %v931 = vpack.c.b16 %v867, %v859
        %996 = vmatprep.subr.bf16.mxu0 %v869
        %997 = vmatpush1.bf16.msra.mxu0 %v868
        %998 = vmatprep.subr.bf16.mxu0 %v877
        %999 = vmatpush1.bf16.msra.mxu0 %v876
        %1000 = vmatprep.subr.bf16.mxu0 %v885
        %1001 = vmatpush1.bf16.msra.mxu0 %v884
        %1002 = vmatprep.subr.bf16.mxu0 %v893
        %1003 = vmatpush1.bf16.msra.mxu0 %v892
        %1004 = vmatprep.subr.bf16.mxu0 %v901
        %1005 = vmatpush1.bf16.msra.mxu0 %v900
        %1006 = vmatprep.subr.bf16.mxu0 %v909
        %1007 = vmatpush1.bf16.msra.mxu0 %v908
        %1008 = vmatprep.subr.bf16.mxu0 %v917
        %1009 = vmatpush1.bf16.msra.mxu0 %v916
        %1010 = vmatprep.subr.bf16.mxu0 %v925
        %1011 = vmatpush1.bf16.msra.mxu0 %v924
        %1012 = vmatprep.subr.bf16.mxu0 0
        %1013 = vmatpush1.bf16.msra.mxu0 0
        %1014 = vmatprep.subr.bf16.mxu0 0
        %1015 = vmatpush1.bf16.msra.mxu0 0
        %1016 = vmatprep.subr.bf16.mxu0 0
        %1017 = vmatpush1.bf16.msra.mxu0 0
        %1018 = vmatprep.subr.bf16.mxu0 0
        %1019 = vmatpush1.bf16.msra.mxu0 0
        %1020 = vmatprep.subr.bf16.mxu0 0
        %1021 = vmatpush1.bf16.msra.mxu0 0
        %1022 = vmatprep.subr.bf16.mxu0 0
        %1023 = vmatpush1.bf16.msra.mxu0 0
        %1024 = vmatprep.subr.bf16.mxu0 0
        %1025 = vmatpush1.bf16.msra.mxu0 0
        %1026 = vmatprep.subr.bf16.mxu0 0
        %1027 = vmatpush1.bf16.msra.mxu0 0
        %1028 = vmatprep.mubr.bf16.mxu0 0
        %1029 = vmatmul.mubr.bf16.gmra.mrb[0].mxu0 %v674
        %v1030 = vpop.f32.mrb[0].mxu0
        %v1031 = vadd.f32 %v633, %v1030
        %v1032 = vpop.f32.mrb[0].mxu0
        %v1033 = vadd.f32 %v637, %v1032
        %v1034 = vpop.f32.mrb[0].mxu0
        %v1035 = vadd.f32 %v633, %v1034
        %v1036 = vpop.f32.mrb[0].mxu0
        %v1037 = vadd.f32 %v637, %v1036
        %1038 = vdwg.mxu0
        %1039 = vmatprep.subr.bf16.mxu0 %v871
        %1040 = vmatpush1.bf16.msra.mxu0 %v870
        %1041 = vmatprep.subr.bf16.mxu0 %v879
        %1042 = vmatpush1.bf16.msra.mxu0 %v878
        %1043 = vmatprep.subr.bf16.mxu0 %v887
        %1044 = vmatpush1.bf16.msra.mxu0 %v886
        %1045 = vmatprep.subr.bf16.mxu0 %v895
        %1046 = vmatpush1.bf16.msra.mxu0 %v894
        %1047 = vmatprep.subr.bf16.mxu0 %v903
        %1048 = vmatpush1.bf16.msra.mxu0 %v902
        %1049 = vmatprep.subr.bf16.mxu0 %v911
        %1050 = vmatpush1.bf16.msra.mxu0 %v910
        %1051 = vmatprep.subr.bf16.mxu0 %v919
        %1052 = vmatpush1.bf16.msra.mxu0 %v918
        %1053 = vmatprep.subr.bf16.mxu0 %v927
        %1054 = vmatpush1.bf16.msra.mxu0 %v926
        %1055 = vmatprep.subr.bf16.mxu0 0
        %1056 = vmatpush1.bf16.msra.mxu0 0
        %1057 = vmatprep.subr.bf16.mxu0 0
        %1058 = vmatpush1.bf16.msra.mxu0 0
        %1059 = vmatprep.subr.bf16.mxu0 0
        %1060 = vmatpush1.bf16.msra.mxu0 0
        %1061 = vmatprep.subr.bf16.mxu0 0
        %1062 = vmatpush1.bf16.msra.mxu0 0
        %1063 = vmatprep.subr.bf16.mxu0 0
        %1064 = vmatpush1.bf16.msra.mxu0 0
        %1065 = vmatprep.subr.bf16.mxu0 0
        %1066 = vmatpush1.bf16.msra.mxu0 0
        %1067 = vmatprep.subr.bf16.mxu0 0
        %1068 = vmatpush1.bf16.msra.mxu0 0
        %1069 = vmatprep.subr.bf16.mxu0 0
        %1070 = vmatpush1.bf16.msra.mxu0 0
        %1071 = vmatprep.mubr.bf16.mxu0 0
        %1072 = vmatmul.mubr.bf16.gmra.mrb[0].mxu0 %v674
        %v1073 = vpop.f32.mrb[0].mxu0
        %v1074 = vadd.f32 %v641, %v1073
        %v1075 = vpop.f32.mrb[0].mxu0
        %v1076 = vadd.f32 %v645, %v1075
        %v1077 = vpop.f32.mrb[0].mxu0
        %v1078 = vadd.f32 %v641, %v1077
        %v1079 = vpop.f32.mrb[0].mxu0
        %v1080 = vadd.f32 %v645, %v1079
        %1081 = vdwg.mxu0
        %1082 = vmatprep.subr.bf16.mxu0 %v873
        %1083 = vmatpush1.bf16.msra.mxu0 %v872
        %1084 = vmatprep.subr.bf16.mxu0 %v881
        %1085 = vmatpush1.bf16.msra.mxu0 %v880
        %1086 = vmatprep.subr.bf16.mxu0 %v889
        %1087 = vmatpush1.bf16.msra.mxu0 %v888
        %1088 = vmatprep.subr.bf16.mxu0 %v897
        %1089 = vmatpush1.bf16.msra.mxu0 %v896
        %1090 = vmatprep.subr.bf16.mxu0 %v905
        %1091 = vmatpush1.bf16.msra.mxu0 %v904
        %1092 = vmatprep.subr.bf16.mxu0 %v913
        %1093 = vmatpush1.bf16.msra.mxu0 %v912
        %1094 = vmatprep.subr.bf16.mxu0 %v921
        %1095 = vmatpush1.bf16.msra.mxu0 %v920
        %1096 = vmatprep.subr.bf16.mxu0 %v929
        %1097 = vmatpush1.bf16.msra.mxu0 %v928
        %1098 = vmatprep.subr.bf16.mxu0 0
        %1099 = vmatpush1.bf16.msra.mxu0 0
        %1100 = vmatprep.subr.bf16.mxu0 0
        %1101 = vmatpush1.bf16.msra.mxu0 0
        %1102 = vmatprep.subr.bf16.mxu0 0
        %1103 = vmatpush1.bf16.msra.mxu0 0
        %1104 = vmatprep.subr.bf16.mxu0 0
        %1105 = vmatpush1.bf16.msra.mxu0 0
        %1106 = vmatprep.subr.bf16.mxu0 0
        %1107 = vmatpush1.bf16.msra.mxu0 0
        %1108 = vmatprep.subr.bf16.mxu0 0
        %1109 = vmatpush1.bf16.msra.mxu0 0
        %1110 = vmatprep.subr.bf16.mxu0 0
        %1111 = vmatpush1.bf16.msra.mxu0 0
        %1112 = vmatprep.subr.bf16.mxu0 0
        %1113 = vmatpush1.bf16.msra.mxu0 0
        %1114 = vmatprep.mubr.bf16.mxu0 0
        %1115 = vmatmul.mubr.bf16.gmra.mrb[0].mxu0 %v674
        %v1116 = vpop.f32.mrb[0].mxu0
        %v1117 = vadd.f32 %v649, %v1116
        %v1118 = vpop.f32.mrb[0].mxu0
        %v1119 = vadd.f32 %v653, %v1118
        %v1120 = vpop.f32.mrb[0].mxu0
        %v1121 = vadd.f32 %v649, %v1120
        %v1122 = vpop.f32.mrb[0].mxu0
        %v1123 = vadd.f32 %v653, %v1122
        %1124 = vdwg.mxu0
        %1125 = vmatprep.subr.bf16.mxu0 %v875
        %1126 = vmatpush1.bf16.msra.mxu0 %v874
        %1127 = vmatprep.subr.bf16.mxu0 %v883
        %1128 = vmatpush1.bf16.msra.mxu0 %v882
        %1129 = vmatprep.subr.bf16.mxu0 %v891
        %1130 = vmatpush1.bf16.msra.mxu0 %v890
        %1131 = vmatprep.subr.bf16.mxu0 %v899
        %1132 = vmatpush1.bf16.msra.mxu0 %v898
        %1133 = vmatprep.subr.bf16.mxu0 %v907
        %1134 = vmatpush1.bf16.msra.mxu0 %v906
        %1135 = vmatprep.subr.bf16.mxu0 %v915
        %1136 = vmatpush1.bf16.msra.mxu0 %v914
        %1137 = vmatprep.subr.bf16.mxu0 %v923
        %1138 = vmatpush1.bf16.msra.mxu0 %v922
        %1139 = vmatprep.subr.bf16.mxu0 %v931
        %1140 = vmatpush1.bf16.msra.mxu0 %v930
        %1141 = vmatprep.subr.bf16.mxu0 0
        %1142 = vmatpush1.bf16.msra.mxu0 0
        %1143 = vmatprep.subr.bf16.mxu0 0
        %1144 = vmatpush1.bf16.msra.mxu0 0
        %1145 = vmatprep.subr.bf16.mxu0 0
        %1146 = vmatpush1.bf16.msra.mxu0 0
        %1147 = vmatprep.subr.bf16.mxu0 0
        %1148 = vmatpush1.bf16.msra.mxu0 0
        %1149 = vmatprep.subr.bf16.mxu0 0
        %1150 = vmatpush1.bf16.msra.mxu0 0
        %1151 = vmatprep.subr.bf16.mxu0 0
        %1152 = vmatpush1.bf16.msra.mxu0 0
        %1153 = vmatprep.subr.bf16.mxu0 0
        %1154 = vmatpush1.bf16.msra.mxu0 0
        %1155 = vmatprep.subr.bf16.mxu0 0
        %1156 = vmatpush1.bf16.msra.mxu0 0
        %1157 = vmatprep.mubr.bf16.mxu0 0
        %1158 = vmatmul.mubr.bf16.gmra.mrb[0].mxu0 %v674
        %v1159 = vpop.f32.mrb[0].mxu0
        %v1160 = vadd.f32 %v657, %v1159
        %v1161 = vpop.f32.mrb[0].mxu0
        %v1162 = vadd.f32 %v661, %v1161
        %v1163 = vpop.f32.mrb[0].mxu0
        %v1164 = vadd.f32 %v657, %v1163
        %v1165 = vpop.f32.mrb[0].mxu0
        %v1166 = vadd.f32 %v661, %v1165
        %1167 = vdwg.mxu0
        %v1168 = vmax.f32 %v1031, 0.0
        %v1169 = vmax.f32 %v1033, 0.0
        %v1170 = vmax.f32 %v1074, 0.0
        %v1171 = vmax.f32 %v1076, 0.0
        %v1172 = vmax.f32 %v1117, 0.0
        %v1173 = vmax.f32 %v1119, 0.0
        %v1174 = vmax.f32 %v1160, 0.0
        %v1175 = vmax.f32 %v1162, 0.0
        %v1176 = vmax.f32 %v1035, 0.0
        %v1177 = vmax.f32 %v1037, 0.0
        %v1178 = vmax.f32 %v1078, 0.0
        %v1179 = vmax.f32 %v1080, 0.0
        %v1180 = vmax.f32 %v1121, 0.0
        %v1181 = vmax.f32 %v1123, 0.0
        %v1182 = vmax.f32 %v1164, 0.0
        %v1183 = vmax.f32 %v1166, 0.0
        %v1184 = vpack.c.bf16 %v1176, %v1168
        %v1185 = vpack.c.bf16 %v1177, %v1169
        %v1186 = vpack.c.bf16 %v1178, %v1170
        %v1187 = vpack.c.bf16 %v1179, %v1171
        %v1188 = vpack.c.bf16 %v1180, %v1172
        %v1189 = vpack.c.bf16 %v1181, %v1173
        %v1190 = vpack.c.bf16 %v1182, %v1174
        %v1191 = vpack.c.bf16 %v1183, %v1175
        %v1192 = vld [vmem:[#allocation8] sm:$0xff]
        %v1193 = vld [vmem:[#allocation8 + $0x8] sm:$0xff]
        %v1194 = vld [vmem:[#allocation8 + $0x10] sm:$0xff]
        %v1195 = vld [vmem:[#allocation8 + $0x18] sm:$0xff]
        %v1196 = vld [vmem:[#allocation8 + $0x20] sm:$0xff]
        %v1197 = vld [vmem:[#allocation8 + $0x28] sm:$0xff]
        %v1198 = vld [vmem:[#allocation8 + $0x30] sm:$0xff]
        %v1199 = vld [vmem:[#allocation8 + $0x38] sm:$0xff]
        %v1200 = vld [vmem:[#allocation8 + $0x40] sm:$0xff]
        %v1201 = vld [vmem:[#allocation8 + $0x48] sm:$0xff]
        %v1202 = vld [vmem:[#allocation8 + $0x50] sm:$0xff]
        %v1203 = vld [vmem:[#allocation8 + $0x58] sm:$0xff]
        %v1204 = vld [vmem:[#allocation8 + $0x60] sm:$0xff]
        %v1205 = vld [vmem:[#allocation8 + $0x68] sm:$0xff]
        %v1206 = vld [vmem:[#allocation8 + $0x70] sm:$0xff]
        %v1207 = vld [vmem:[#allocation8 + $0x78] sm:$0xff]
        %v1208 = vld [vmem:[#allocation8 + $0x80] sm:$0xff]
        %v1209 = vld [vmem:[#allocation8 + $0x88] sm:$0xff]
        %v1210 = vld [vmem:[#allocation8 + $0x90] sm:$0xff]
        %v1211 = vld [vmem:[#allocation8 + $0x98] sm:$0xff]
        %v1212 = vld [vmem:[#allocation8 + $0xa0] sm:$0xff]
        %v1213 = vld [vmem:[#allocation8 + $0xa8] sm:$0xff]
        %v1214 = vld [vmem:[#allocation8 + $0xb0] sm:$0xff]
        %v1215 = vld [vmem:[#allocation8 + $0xb8] sm:$0xff]
        %v1216 = vld [vmem:[#allocation8 + $0xc0] sm:$0xff]
        %v1217 = vld [vmem:[#allocation8 + $0xc8] sm:$0xff]
        %v1218 = vld [vmem:[#allocation8 + $0xd0] sm:$0xff]
        %v1219 = vld [vmem:[#allocation8 + $0xd8] sm:$0xff]
        %v1220 = vld [vmem:[#allocation8 + $0xe0] sm:$0xff]
        %v1221 = vld [vmem:[#allocation8 + $0xe8] sm:$0xff]
        %v1222 = vld [vmem:[#allocation8 + $0xf0] sm:$0xff]
        %v1223 = vld [vmem:[#allocation8 + $0xf8] sm:$0xff]
        %v1224 = vld [vmem:[#allocation8 + $0x100] sm:$0xff]
        %v1225 = vld [vmem:[#allocation8 + $0x108] sm:$0xff]
        %v1226 = vld [vmem:[#allocation8 + $0x110] sm:$0xff]
        %v1227 = vld [vmem:[#allocation8 + $0x118] sm:$0xff]
        %v1228 = vld [vmem:[#allocation8 + $0x120] sm:$0xff]
        %v1229 = vld [vmem:[#allocation8 + $0x128] sm:$0xff]
        %v1230 = vld [vmem:[#allocation8 + $0x130] sm:$0xff]
        %v1231 = vld [vmem:[#allocation8 + $0x138] sm:$0xff]
        %v1232 = vld [vmem:[#allocation8 + $0x140] sm:$0xff]
        %v1233 = vld [vmem:[#allocation8 + $0x148] sm:$0xff]
        %v1234 = vld [vmem:[#allocation8 + $0x150] sm:$0xff]
        %v1235 = vld [vmem:[#allocation8 + $0x158] sm:$0xff]
        %v1236 = vld [vmem:[#allocation8 + $0x160] sm:$0xff]
        %v1237 = vld [vmem:[#allocation8 + $0x168] sm:$0xff]
        %v1238 = vld [vmem:[#allocation8 + $0x170] sm:$0xff]
        %v1239 = vld [vmem:[#allocation8 + $0x178] sm:$0xff]
        %v1240 = vld [vmem:[#allocation8 + $0x180] sm:$0xff]
        %v1241 = vld [vmem:[#allocation8 + $0x188] sm:$0xff]
        %v1242 = vld [vmem:[#allocation8 + $0x190] sm:$0xff]
        %v1243 = vld [vmem:[#allocation8 + $0x198] sm:$0xff]
        %v1244 = vld [vmem:[#allocation8 + $0x1a0] sm:$0xff]
        %v1245 = vld [vmem:[#allocation8 + $0x1a8] sm:$0xff]
        %v1246 = vld [vmem:[#allocation8 + $0x1b0] sm:$0xff]
        %v1247 = vld [vmem:[#allocation8 + $0x1b8] sm:$0xff]
        %v1248 = vld [vmem:[#allocation8 + $0x1c0] sm:$0xff]
        %v1249 = vld [vmem:[#allocation8 + $0x1c8] sm:$0xff]
        %v1250 = vld [vmem:[#allocation8 + $0x1d0] sm:$0xff]
        %v1251 = vld [vmem:[#allocation8 + $0x1d8] sm:$0xff]
        %v1252 = vld [vmem:[#allocation8 + $0x1e0] sm:$0xff]
        %v1253 = vld [vmem:[#allocation8 + $0x1e8] sm:$0xff]
        %v1254 = vld [vmem:[#allocation8 + $0x1f0] sm:$0xff]
        %v1255 = vld [vmem:[#allocation8 + $0x1f8] sm:$0xff]
        %v1256 = vld [vmem:[#allocation8 + $0x200] sm:$0xff]
        %v1257 = vld [vmem:[#allocation8 + $0x208] sm:$0xff]
        %v1258 = vld [vmem:[#allocation8 + $0x210] sm:$0xff]
        %v1259 = vld [vmem:[#allocation8 + $0x218] sm:$0xff]
        %v1260 = vld [vmem:[#allocation8 + $0x220] sm:$0xff]
        %v1261 = vld [vmem:[#allocation8 + $0x228] sm:$0xff]
        %v1262 = vld [vmem:[#allocation8 + $0x230] sm:$0xff]
        %v1263 = vld [vmem:[#allocation8 + $0x238] sm:$0xff]
        %v1264 = vld [vmem:[#allocation8 + $0x240] sm:$0xff]
        %v1265 = vld [vmem:[#allocation8 + $0x248] sm:$0xff]
        %v1266 = vld [vmem:[#allocation8 + $0x250] sm:$0xff]
        %v1267 = vld [vmem:[#allocation8 + $0x258] sm:$0xff]
        %v1268 = vld [vmem:[#allocation8 + $0x260] sm:$0xff]
        %v1269 = vld [vmem:[#allocation8 + $0x268] sm:$0xff]
        %v1270 = vld [vmem:[#allocation8 + $0x270] sm:$0xff]
        %v1271 = vld [vmem:[#allocation8 + $0x278] sm:$0xff]
        %v1272 = vld [vmem:[#allocation8 + $0x280] sm:$0xff]
        %v1273 = vld [vmem:[#allocation8 + $0x288] sm:$0xff]
        %v1274 = vld [vmem:[#allocation8 + $0x290] sm:$0xff]
        %v1275 = vld [vmem:[#allocation8 + $0x298] sm:$0xff]
        %v1276 = vld [vmem:[#allocation8 + $0x2a0] sm:$0xff]
        %v1277 = vld [vmem:[#allocation8 + $0x2a8] sm:$0xff]
        %v1278 = vld [vmem:[#allocation8 + $0x2b0] sm:$0xff]
        %v1279 = vld [vmem:[#allocation8 + $0x2b8] sm:$0xff]
        %v1280 = vld [vmem:[#allocation8 + $0x2c0] sm:$0xff]
        %v1281 = vld [vmem:[#allocation8 + $0x2c8] sm:$0xff]
        %v1282 = vld [vmem:[#allocation8 + $0x2d0] sm:$0xff]
        %v1283 = vld [vmem:[#allocation8 + $0x2d8] sm:$0xff]
        %v1284 = vld [vmem:[#allocation8 + $0x2e0] sm:$0xff]
        %v1285 = vld [vmem:[#allocation8 + $0x2e8] sm:$0xff]
        %v1286 = vld [vmem:[#allocation8 + $0x2f0] sm:$0xff]
        %v1287 = vld [vmem:[#allocation8 + $0x2f8] sm:$0xff]
        %v1288 = vld [vmem:[#allocation8 + $0x300] sm:$0xff]
        %v1289 = vld [vmem:[#allocation8 + $0x308] sm:$0xff]
        %v1290 = vld [vmem:[#allocation8 + $0x310] sm:$0xff]
        %v1291 = vld [vmem:[#allocation8 + $0x318] sm:$0xff]
        %v1292 = vld [vmem:[#allocation8 + $0x320] sm:$0xff]
        %v1293 = vld [vmem:[#allocation8 + $0x328] sm:$0xff]
        %v1294 = vld [vmem:[#allocation8 + $0x330] sm:$0xff]
        %v1295 = vld [vmem:[#allocation8 + $0x338] sm:$0xff]
        %v1296 = vld [vmem:[#allocation8 + $0x340] sm:$0xff]
        %v1297 = vld [vmem:[#allocation8 + $0x348] sm:$0xff]
        %v1298 = vld [vmem:[#allocation8 + $0x350] sm:$0xff]
        %v1299 = vld [vmem:[#allocation8 + $0x358] sm:$0xff]
        %v1300 = vld [vmem:[#allocation8 + $0x360] sm:$0xff]
        %v1301 = vld [vmem:[#allocation8 + $0x368] sm:$0xff]
        %v1302 = vld [vmem:[#allocation8 + $0x370] sm:$0xff]
        %v1303 = vld [vmem:[#allocation8 + $0x378] sm:$0xff]
        %v1304 = vld [vmem:[#allocation8 + $0x380] sm:$0xff]
        %v1305 = vld [vmem:[#allocation8 + $0x388] sm:$0xff]
        %v1306 = vld [vmem:[#allocation8 + $0x390] sm:$0xff]
        %v1307 = vld [vmem:[#allocation8 + $0x398] sm:$0xff]
        %v1308 = vld [vmem:[#allocation8 + $0x3a0] sm:$0xff]
        %v1309 = vld [vmem:[#allocation8 + $0x3a8] sm:$0xff]
        %v1310 = vld [vmem:[#allocation8 + $0x3b0] sm:$0xff]
        %v1311 = vld [vmem:[#allocation8 + $0x3b8] sm:$0xff]
        %v1312 = vld [vmem:[#allocation8 + $0x3c0] sm:$0xff]
        %v1313 = vld [vmem:[#allocation8 + $0x3c8] sm:$0xff]
        %v1314 = vld [vmem:[#allocation8 + $0x3d0] sm:$0xff]
        %v1315 = vld [vmem:[#allocation8 + $0x3d8] sm:$0xff]
        %v1316 = vld [vmem:[#allocation8 + $0x3e0] sm:$0xff]
        %v1317 = vld [vmem:[#allocation8 + $0x3e8] sm:$0xff]
        %v1318 = vld [vmem:[#allocation8 + $0x3f0] sm:$0xff]
        %v1319 = vld [vmem:[#allocation8 + $0x3f8] sm:$0xff]
        %v1320 = vld [vmem:[#allocation8 + $0x400] sm:$0xff]
        %v1321 = vld [vmem:[#allocation8 + $0x408] sm:$0xff]
        %v1322 = vld [vmem:[#allocation8 + $0x410] sm:$0xff]
        %v1323 = vld [vmem:[#allocation8 + $0x418] sm:$0xff]
        %v1324 = vld [vmem:[#allocation8 + $0x420] sm:$0xff]
        %v1325 = vld [vmem:[#allocation8 + $0x428] sm:$0xff]
        %v1326 = vld [vmem:[#allocation8 + $0x430] sm:$0xff]
        %v1327 = vld [vmem:[#allocation8 + $0x438] sm:$0xff]
        %v1328 = vld [vmem:[#allocation8 + $0x440] sm:$0xff]
        %v1329 = vld [vmem:[#allocation8 + $0x448] sm:$0xff]
        %v1330 = vld [vmem:[#allocation8 + $0x450] sm:$0xff]
        %v1331 = vld [vmem:[#allocation8 + $0x458] sm:$0xff]
        %v1332 = vld [vmem:[#allocation8 + $0x460] sm:$0xff]
        %v1333 = vld [vmem:[#allocation8 + $0x468] sm:$0xff]
        %v1334 = vld [vmem:[#allocation8 + $0x470] sm:$0xff]
        %v1335 = vld [vmem:[#allocation8 + $0x478] sm:$0xff]
        %v1336 = vld [vmem:[#allocation8 + $0x480] sm:$0xff]
        %v1337 = vld [vmem:[#allocation8 + $0x488] sm:$0xff]
        %v1338 = vld [vmem:[#allocation8 + $0x490] sm:$0xff]
        %v1339 = vld [vmem:[#allocation8 + $0x498] sm:$0xff]
        %v1340 = vld [vmem:[#allocation8 + $0x4a0] sm:$0xff]
        %v1341 = vld [vmem:[#allocation8 + $0x4a8] sm:$0xff]
        %v1342 = vld [vmem:[#allocation8 + $0x4b0] sm:$0xff]
        %v1343 = vld [vmem:[#allocation8 + $0x4b8] sm:$0xff]
        %v1344 = vld [vmem:[#allocation8 + $0x4c0] sm:$0xff]
        %v1345 = vld [vmem:[#allocation8 + $0x4c8] sm:$0xff]
        %v1346 = vld [vmem:[#allocation8 + $0x4d0] sm:$0xff]
        %v1347 = vld [vmem:[#allocation8 + $0x4d8] sm:$0xff]
        %v1348 = vld [vmem:[#allocation8 + $0x4e0] sm:$0xff]
        %v1349 = vld [vmem:[#allocation8 + $0x4e8] sm:$0xff]
        %v1350 = vld [vmem:[#allocation8 + $0x4f0] sm:$0xff]
        %v1351 = vld [vmem:[#allocation8 + $0x4f8] sm:$0xff]
        %v1352 = vld [vmem:[#allocation8 + $0x500] sm:$0xff]
        %v1353 = vld [vmem:[#allocation8 + $0x508] sm:$0xff]
        %v1354 = vld [vmem:[#allocation8 + $0x510] sm:$0xff]
        %v1355 = vld [vmem:[#allocation8 + $0x518] sm:$0xff]
        %v1356 = vld [vmem:[#allocation8 + $0x520] sm:$0xff]
        %v1357 = vld [vmem:[#allocation8 + $0x528] sm:$0xff]
        %v1358 = vld [vmem:[#allocation8 + $0x530] sm:$0xff]
        %v1359 = vld [vmem:[#allocation8 + $0x538] sm:$0xff]
        %v1360 = vld [vmem:[#allocation8 + $0x540] sm:$0xff]
        %v1361 = vld [vmem:[#allocation8 + $0x548] sm:$0xff]
        %v1362 = vld [vmem:[#allocation8 + $0x550] sm:$0xff]
        %v1363 = vld [vmem:[#allocation8 + $0x558] sm:$0xff]
        %v1364 = vld [vmem:[#allocation8 + $0x560] sm:$0xff]
        %v1365 = vld [vmem:[#allocation8 + $0x568] sm:$0xff]
        %v1366 = vld [vmem:[#allocation8 + $0x570] sm:$0xff]
        %v1367 = vld [vmem:[#allocation8 + $0x578] sm:$0xff]
        %v1368 = vld [vmem:[#allocation8 + $0x580] sm:$0xff]
        %v1369 = vld [vmem:[#allocation8 + $0x588] sm:$0xff]
        %v1370 = vld [vmem:[#allocation8 + $0x590] sm:$0xff]
        %v1371 = vld [vmem:[#allocation8 + $0x598] sm:$0xff]
        %v1372 = vld [vmem:[#allocation8 + $0x5a0] sm:$0xff]
        %v1373 = vld [vmem:[#allocation8 + $0x5a8] sm:$0xff]
        %v1374 = vld [vmem:[#allocation8 + $0x5b0] sm:$0xff]
        %v1375 = vld [vmem:[#allocation8 + $0x5b8] sm:$0xff]
        %v1376 = vld [vmem:[#allocation8 + $0x5c0] sm:$0xff]
        %v1377 = vld [vmem:[#allocation8 + $0x5c8] sm:$0xff]
        %v1378 = vld [vmem:[#allocation8 + $0x5d0] sm:$0xff]
        %v1379 = vld [vmem:[#allocation8 + $0x5d8] sm:$0xff]
        %v1380 = vld [vmem:[#allocation8 + $0x5e0] sm:$0xff]
        %v1381 = vld [vmem:[#allocation8 + $0x5e8] sm:$0xff]
        %v1382 = vld [vmem:[#allocation8 + $0x5f0] sm:$0xff]
        %v1383 = vld [vmem:[#allocation8 + $0x5f8] sm:$0xff]
        %v1384 = vld [vmem:[#allocation8 + $0x600] sm:$0xff]
        %v1385 = vld [vmem:[#allocation8 + $0x608] sm:$0xff]
        %v1386 = vld [vmem:[#allocation8 + $0x610] sm:$0xff]
        %v1387 = vld [vmem:[#allocation8 + $0x618] sm:$0xff]
        %v1388 = vld [vmem:[#allocation8 + $0x620] sm:$0xff]
        %v1389 = vld [vmem:[#allocation8 + $0x628] sm:$0xff]
        %v1390 = vld [vmem:[#allocation8 + $0x630] sm:$0xff]
        %v1391 = vld [vmem:[#allocation8 + $0x638] sm:$0xff]
        %v1392 = vld [vmem:[#allocation8 + $0x640] sm:$0xff]
        %v1393 = vld [vmem:[#allocation8 + $0x648] sm:$0xff]
        %v1394 = vld [vmem:[#allocation8 + $0x650] sm:$0xff]
        %v1395 = vld [vmem:[#allocation8 + $0x658] sm:$0xff]
        %v1396 = vld [vmem:[#allocation8 + $0x660] sm:$0xff]
        %v1397 = vld [vmem:[#allocation8 + $0x668] sm:$0xff]
        %v1398 = vld [vmem:[#allocation8 + $0x670] sm:$0xff]
        %v1399 = vld [vmem:[#allocation8 + $0x678] sm:$0xff]
        %v1400 = vld [vmem:[#allocation8 + $0x680] sm:$0xff]
        %v1401 = vld [vmem:[#allocation8 + $0x688] sm:$0xff]
        %v1402 = vld [vmem:[#allocation8 + $0x690] sm:$0xff]
        %v1403 = vld [vmem:[#allocation8 + $0x698] sm:$0xff]
        %v1404 = vld [vmem:[#allocation8 + $0x6a0] sm:$0xff]
        %v1405 = vld [vmem:[#allocation8 + $0x6a8] sm:$0xff]
        %v1406 = vld [vmem:[#allocation8 + $0x6b0] sm:$0xff]
        %v1407 = vld [vmem:[#allocation8 + $0x6b8] sm:$0xff]
        %v1408 = vld [vmem:[#allocation8 + $0x6c0] sm:$0xff]
        %v1409 = vld [vmem:[#allocation8 + $0x6c8] sm:$0xff]
        %v1410 = vld [vmem:[#allocation8 + $0x6d0] sm:$0xff]
        %v1411 = vld [vmem:[#allocation8 + $0x6d8] sm:$0xff]
        %v1412 = vld [vmem:[#allocation8 + $0x6e0] sm:$0xff]
        %v1413 = vld [vmem:[#allocation8 + $0x6e8] sm:$0xff]
        %v1414 = vld [vmem:[#allocation8 + $0x6f0] sm:$0xff]
        %v1415 = vld [vmem:[#allocation8 + $0x6f8] sm:$0xff]
        %v1416 = vld [vmem:[#allocation8 + $0x700] sm:$0xff]
        %v1417 = vld [vmem:[#allocation8 + $0x708] sm:$0xff]
        %v1418 = vld [vmem:[#allocation8 + $0x710] sm:$0xff]
        %v1419 = vld [vmem:[#allocation8 + $0x718] sm:$0xff]
        %v1420 = vld [vmem:[#allocation8 + $0x720] sm:$0xff]
        %v1421 = vld [vmem:[#allocation8 + $0x728] sm:$0xff]
        %v1422 = vld [vmem:[#allocation8 + $0x730] sm:$0xff]
        %v1423 = vld [vmem:[#allocation8 + $0x738] sm:$0xff]
        %v1424 = vld [vmem:[#allocation8 + $0x740] sm:$0xff]
        %v1425 = vld [vmem:[#allocation8 + $0x748] sm:$0xff]
        %v1426 = vld [vmem:[#allocation8 + $0x750] sm:$0xff]
        %v1427 = vld [vmem:[#allocation8 + $0x758] sm:$0xff]
        %v1428 = vld [vmem:[#allocation8 + $0x760] sm:$0xff]
        %v1429 = vld [vmem:[#allocation8 + $0x768] sm:$0xff]
        %v1430 = vld [vmem:[#allocation8 + $0x770] sm:$0xff]
        %v1431 = vld [vmem:[#allocation8 + $0x778] sm:$0xff]
        %v1432 = vld [vmem:[#allocation8 + $0x780] sm:$0xff]
        %v1433 = vld [vmem:[#allocation8 + $0x788] sm:$0xff]
        %v1434 = vld [vmem:[#allocation8 + $0x790] sm:$0xff]
        %v1435 = vld [vmem:[#allocation8 + $0x798] sm:$0xff]
        %v1436 = vld [vmem:[#allocation8 + $0x7a0] sm:$0xff]
        %v1437 = vld [vmem:[#allocation8 + $0x7a8] sm:$0xff]
        %v1438 = vld [vmem:[#allocation8 + $0x7b0] sm:$0xff]
        %v1439 = vld [vmem:[#allocation8 + $0x7b8] sm:$0xff]
        %v1440 = vld [vmem:[#allocation8 + $0x7c0] sm:$0xff]
        %v1441 = vld [vmem:[#allocation8 + $0x7c8] sm:$0xff]
        %v1442 = vld [vmem:[#allocation8 + $0x7d0] sm:$0xff]
        %v1443 = vld [vmem:[#allocation8 + $0x7d8] sm:$0xff]
        %v1444 = vld [vmem:[#allocation8 + $0x7e0] sm:$0xff]
        %v1445 = vld [vmem:[#allocation8 + $0x7e8] sm:$0xff]
        %v1446 = vld [vmem:[#allocation8 + $0x7f0] sm:$0xff]
        %v1447 = vld [vmem:[#allocation8 + $0x7f8] sm:$0xff]
        %v1448 = vld [vmem:[%s4] sm:$0xf]
        %v1450 = vlaneseq
        %v1451 = vshrl.u32 %v1450, 7
        %v1452 = vsub.s32 0, %v1451
        %v1453 = vrot.slane %v1448, %v1452
        %v1454 = vlaneseq
        %v1455 = vshrl.u32 %v1454, 7
        %v1456 = vsub.s32 1, %v1455
        %v1457 = vrot.slane %v1448, %v1456
        %v1458 = vlaneseq
        %v1459 = vshrl.u32 %v1458, 7
        %v1460 = vsub.s32 2, %v1459
        %v1461 = vrot.slane %v1448, %v1460
        %v1462 = vlaneseq
        %v1463 = vshrl.u32 %v1462, 7
        %v1464 = vsub.s32 3, %v1463
        %v1465 = vrot.slane %v1448, %v1464
        %v1726 = vunpack.c.l.b16 %v1192
        %v1727 = vunpack.c.h.b16 %v1192
        %v1728 = vunpack.c.l.b16 %v1193
        %v1729 = vunpack.c.h.b16 %v1193
        %v1730 = vunpack.c.l.b16 %v1194
        %v1731 = vunpack.c.h.b16 %v1194
        %v1732 = vunpack.c.l.b16 %v1195
        %v1733 = vunpack.c.h.b16 %v1195
        %v1734 = vunpack.c.l.b16 %v1196
        %v1735 = vunpack.c.h.b16 %v1196
        %v1736 = vunpack.c.l.b16 %v1197
        %v1737 = vunpack.c.h.b16 %v1197
        %v1738 = vunpack.c.l.b16 %v1198
        %v1739 = vunpack.c.h.b16 %v1198
        %v1740 = vunpack.c.l.b16 %v1199
        %v1741 = vunpack.c.h.b16 %v1199
        %v1742 = vunpack.c.l.b16 %v1200
        %v1743 = vunpack.c.h.b16 %v1200
        %v1744 = vunpack.c.l.b16 %v1201
        %v1745 = vunpack.c.h.b16 %v1201
        %v1746 = vunpack.c.l.b16 %v1202
        %v1747 = vunpack.c.h.b16 %v1202
        %v1748 = vunpack.c.l.b16 %v1203
        %v1749 = vunpack.c.h.b16 %v1203
        %v1750 = vunpack.c.l.b16 %v1204
        %v1751 = vunpack.c.h.b16 %v1204
        %v1752 = vunpack.c.l.b16 %v1205
        %v1753 = vunpack.c.h.b16 %v1205
        %v1754 = vunpack.c.l.b16 %v1206
        %v1755 = vunpack.c.h.b16 %v1206
        %v1756 = vunpack.c.l.b16 %v1207
        %v1757 = vunpack.c.h.b16 %v1207
        %v1758 = vunpack.c.l.b16 %v1208
        %v1759 = vunpack.c.h.b16 %v1208
        %v1760 = vunpack.c.l.b16 %v1209
        %v1761 = vunpack.c.h.b16 %v1209
        %v1762 = vunpack.c.l.b16 %v1210
        %v1763 = vunpack.c.h.b16 %v1210
        %v1764 = vunpack.c.l.b16 %v1211
        %v1765 = vunpack.c.h.b16 %v1211
        %v1766 = vunpack.c.l.b16 %v1212
        %v1767 = vunpack.c.h.b16 %v1212
        %v1768 = vunpack.c.l.b16 %v1213
        %v1769 = vunpack.c.h.b16 %v1213
        %v1770 = vunpack.c.l.b16 %v1214
        %v1771 = vunpack.c.h.b16 %v1214
        %v1772 = vunpack.c.l.b16 %v1215
        %v1773 = vunpack.c.h.b16 %v1215
        %v1774 = vunpack.c.l.b16 %v1216
        %v1775 = vunpack.c.h.b16 %v1216
        %v1776 = vunpack.c.l.b16 %v1217
        %v1777 = vunpack.c.h.b16 %v1217
        %v1778 = vunpack.c.l.b16 %v1218
        %v1779 = vunpack.c.h.b16 %v1218
        %v1780 = vunpack.c.l.b16 %v1219
        %v1781 = vunpack.c.h.b16 %v1219
        %v1782 = vunpack.c.l.b16 %v1220
        %v1783 = vunpack.c.h.b16 %v1220
        %v1784 = vunpack.c.l.b16 %v1221
        %v1785 = vunpack.c.h.b16 %v1221
        %v1786 = vunpack.c.l.b16 %v1222
        %v1787 = vunpack.c.h.b16 %v1222
        %v1788 = vunpack.c.l.b16 %v1223
        %v1789 = vunpack.c.h.b16 %v1223
        %v1790 = vunpack.c.l.b16 %v1224
        %v1791 = vunpack.c.h.b16 %v1224
        %v1792 = vunpack.c.l.b16 %v1225
        %v1793 = vunpack.c.h.b16 %v1225
        %v1794 = vunpack.c.l.b16 %v1226
        %v1795 = vunpack.c.h.b16 %v1226
        %v1796 = vunpack.c.l.b16 %v1227
        %v1797 = vunpack.c.h.b16 %v1227
        %v1798 = vunpack.c.l.b16 %v1228
        %v1799 = vunpack.c.h.b16 %v1228
        %v1800 = vunpack.c.l.b16 %v1229
        %v1801 = vunpack.c.h.b16 %v1229
        %v1802 = vunpack.c.l.b16 %v1230
        %v1803 = vunpack.c.h.b16 %v1230
        %v1804 = vunpack.c.l.b16 %v1231
        %v1805 = vunpack.c.h.b16 %v1231
        %v1806 = vunpack.c.l.b16 %v1232
        %v1807 = vunpack.c.h.b16 %v1232
        %v1808 = vunpack.c.l.b16 %v1233
        %v1809 = vunpack.c.h.b16 %v1233
        %v1810 = vunpack.c.l.b16 %v1234
        %v1811 = vunpack.c.h.b16 %v1234
        %v1812 = vunpack.c.l.b16 %v1235
        %v1813 = vunpack.c.h.b16 %v1235
        %v1814 = vunpack.c.l.b16 %v1236
        %v1815 = vunpack.c.h.b16 %v1236
        %v1816 = vunpack.c.l.b16 %v1237
        %v1817 = vunpack.c.h.b16 %v1237
        %v1818 = vunpack.c.l.b16 %v1238
        %v1819 = vunpack.c.h.b16 %v1238
        %v1820 = vunpack.c.l.b16 %v1239
        %v1821 = vunpack.c.h.b16 %v1239
        %v1822 = vunpack.c.l.b16 %v1240
        %v1823 = vunpack.c.h.b16 %v1240
        %v1824 = vunpack.c.l.b16 %v1241
        %v1825 = vunpack.c.h.b16 %v1241
        %v1826 = vunpack.c.l.b16 %v1242
        %v1827 = vunpack.c.h.b16 %v1242
        %v1828 = vunpack.c.l.b16 %v1243
        %v1829 = vunpack.c.h.b16 %v1243
        %v1830 = vunpack.c.l.b16 %v1244
        %v1831 = vunpack.c.h.b16 %v1244
        %v1832 = vunpack.c.l.b16 %v1245
        %v1833 = vunpack.c.h.b16 %v1245
        %v1834 = vunpack.c.l.b16 %v1246
        %v1835 = vunpack.c.h.b16 %v1246
        %v1836 = vunpack.c.l.b16 %v1247
        %v1837 = vunpack.c.h.b16 %v1247
        %v1838 = vunpack.c.l.b16 %v1248
        %v1839 = vunpack.c.h.b16 %v1248
        %v1840 = vunpack.c.l.b16 %v1249
        %v1841 = vunpack.c.h.b16 %v1249
        %v1842 = vunpack.c.l.b16 %v1250
        %v1843 = vunpack.c.h.b16 %v1250
        %v1844 = vunpack.c.l.b16 %v1251
        %v1845 = vunpack.c.h.b16 %v1251
        %v1846 = vunpack.c.l.b16 %v1252
        %v1847 = vunpack.c.h.b16 %v1252
        %v1848 = vunpack.c.l.b16 %v1253
        %v1849 = vunpack.c.h.b16 %v1253
        %v1850 = vunpack.c.l.b16 %v1254
        %v1851 = vunpack.c.h.b16 %v1254
        %v1852 = vunpack.c.l.b16 %v1255
        %v1853 = vunpack.c.h.b16 %v1255
        %v1854 = vunpack.c.l.b16 %v1256
        %v1855 = vunpack.c.h.b16 %v1256
        %v1856 = vunpack.c.l.b16 %v1257
        %v1857 = vunpack.c.h.b16 %v1257
        %v1858 = vunpack.c.l.b16 %v1258
        %v1859 = vunpack.c.h.b16 %v1258
        %v1860 = vunpack.c.l.b16 %v1259
        %v1861 = vunpack.c.h.b16 %v1259
        %v1862 = vunpack.c.l.b16 %v1260
        %v1863 = vunpack.c.h.b16 %v1260
        %v1864 = vunpack.c.l.b16 %v1261
        %v1865 = vunpack.c.h.b16 %v1261
        %v1866 = vunpack.c.l.b16 %v1262
        %v1867 = vunpack.c.h.b16 %v1262
        %v1868 = vunpack.c.l.b16 %v1263
        %v1869 = vunpack.c.h.b16 %v1263
        %v1870 = vunpack.c.l.b16 %v1264
        %v1871 = vunpack.c.h.b16 %v1264
        %v1872 = vunpack.c.l.b16 %v1265
        %v1873 = vunpack.c.h.b16 %v1265
        %v1874 = vunpack.c.l.b16 %v1266
        %v1875 = vunpack.c.h.b16 %v1266
        %v1876 = vunpack.c.l.b16 %v1267
        %v1877 = vunpack.c.h.b16 %v1267
        %v1878 = vunpack.c.l.b16 %v1268
        %v1879 = vunpack.c.h.b16 %v1268
        %v1880 = vunpack.c.l.b16 %v1269
        %v1881 = vunpack.c.h.b16 %v1269
        %v1882 = vunpack.c.l.b16 %v1270
        %v1883 = vunpack.c.h.b16 %v1270
        %v1884 = vunpack.c.l.b16 %v1271
        %v1885 = vunpack.c.h.b16 %v1271
        %v1886 = vunpack.c.l.b16 %v1272
        %v1887 = vunpack.c.h.b16 %v1272
        %v1888 = vunpack.c.l.b16 %v1273
        %v1889 = vunpack.c.h.b16 %v1273
        %v1890 = vunpack.c.l.b16 %v1274
        %v1891 = vunpack.c.h.b16 %v1274
        %v1892 = vunpack.c.l.b16 %v1275
        %v1893 = vunpack.c.h.b16 %v1275
        %v1894 = vunpack.c.l.b16 %v1276
        %v1895 = vunpack.c.h.b16 %v1276
        %v1896 = vunpack.c.l.b16 %v1277
        %v1897 = vunpack.c.h.b16 %v1277
        %v1898 = vunpack.c.l.b16 %v1278
        %v1899 = vunpack.c.h.b16 %v1278
        %v1900 = vunpack.c.l.b16 %v1279
        %v1901 = vunpack.c.h.b16 %v1279
        %v1902 = vunpack.c.l.b16 %v1280
        %v1903 = vunpack.c.h.b16 %v1280
        %v1904 = vunpack.c.l.b16 %v1281
        %v1905 = vunpack.c.h.b16 %v1281
        %v1906 = vunpack.c.l.b16 %v1282
        %v1907 = vunpack.c.h.b16 %v1282
        %v1908 = vunpack.c.l.b16 %v1283
        %v1909 = vunpack.c.h.b16 %v1283
        %v1910 = vunpack.c.l.b16 %v1284
        %v1911 = vunpack.c.h.b16 %v1284
        %v1912 = vunpack.c.l.b16 %v1285
        %v1913 = vunpack.c.h.b16 %v1285
        %v1914 = vunpack.c.l.b16 %v1286
        %v1915 = vunpack.c.h.b16 %v1286
        %v1916 = vunpack.c.l.b16 %v1287
        %v1917 = vunpack.c.h.b16 %v1287
        %v1918 = vunpack.c.l.b16 %v1288
        %v1919 = vunpack.c.h.b16 %v1288
        %v1920 = vunpack.c.l.b16 %v1289
        %v1921 = vunpack.c.h.b16 %v1289
        %v1922 = vunpack.c.l.b16 %v1290
        %v1923 = vunpack.c.h.b16 %v1290
        %v1924 = vunpack.c.l.b16 %v1291
        %v1925 = vunpack.c.h.b16 %v1291
        %v1926 = vunpack.c.l.b16 %v1292
        %v1927 = vunpack.c.h.b16 %v1292
        %v1928 = vunpack.c.l.b16 %v1293
        %v1929 = vunpack.c.h.b16 %v1293
        %v1930 = vunpack.c.l.b16 %v1294
        %v1931 = vunpack.c.h.b16 %v1294
        %v1932 = vunpack.c.l.b16 %v1295
        %v1933 = vunpack.c.h.b16 %v1295
        %v1934 = vunpack.c.l.b16 %v1296
        %v1935 = vunpack.c.h.b16 %v1296
        %v1936 = vunpack.c.l.b16 %v1297
        %v1937 = vunpack.c.h.b16 %v1297
        %v1938 = vunpack.c.l.b16 %v1298
        %v1939 = vunpack.c.h.b16 %v1298
        %v1940 = vunpack.c.l.b16 %v1299
        %v1941 = vunpack.c.h.b16 %v1299
        %v1942 = vunpack.c.l.b16 %v1300
        %v1943 = vunpack.c.h.b16 %v1300
        %v1944 = vunpack.c.l.b16 %v1301
        %v1945 = vunpack.c.h.b16 %v1301
        %v1946 = vunpack.c.l.b16 %v1302
        %v1947 = vunpack.c.h.b16 %v1302
        %v1948 = vunpack.c.l.b16 %v1303
        %v1949 = vunpack.c.h.b16 %v1303
        %v1950 = vunpack.c.l.b16 %v1304
        %v1951 = vunpack.c.h.b16 %v1304
        %v1952 = vunpack.c.l.b16 %v1305
        %v1953 = vunpack.c.h.b16 %v1305
        %v1954 = vunpack.c.l.b16 %v1306
        %v1955 = vunpack.c.h.b16 %v1306
        %v1956 = vunpack.c.l.b16 %v1307
        %v1957 = vunpack.c.h.b16 %v1307
        %v1958 = vunpack.c.l.b16 %v1308
        %v1959 = vunpack.c.h.b16 %v1308
        %v1960 = vunpack.c.l.b16 %v1309
        %v1961 = vunpack.c.h.b16 %v1309
        %v1962 = vunpack.c.l.b16 %v1310
        %v1963 = vunpack.c.h.b16 %v1310
        %v1964 = vunpack.c.l.b16 %v1311
        %v1965 = vunpack.c.h.b16 %v1311
        %v1966 = vunpack.c.l.b16 %v1312
        %v1967 = vunpack.c.h.b16 %v1312
        %v1968 = vunpack.c.l.b16 %v1313
        %v1969 = vunpack.c.h.b16 %v1313
        %v1970 = vunpack.c.l.b16 %v1314
        %v1971 = vunpack.c.h.b16 %v1314
        %v1972 = vunpack.c.l.b16 %v1315
        %v1973 = vunpack.c.h.b16 %v1315
        %v1974 = vunpack.c.l.b16 %v1316
        %v1975 = vunpack.c.h.b16 %v1316
        %v1976 = vunpack.c.l.b16 %v1317
        %v1977 = vunpack.c.h.b16 %v1317
        %v1978 = vunpack.c.l.b16 %v1318
        %v1979 = vunpack.c.h.b16 %v1318
        %v1980 = vunpack.c.l.b16 %v1319
        %v1981 = vunpack.c.h.b16 %v1319
        %v1982 = vunpack.c.l.b16 %v1320
        %v1983 = vunpack.c.h.b16 %v1320
        %v1984 = vunpack.c.l.b16 %v1321
        %v1985 = vunpack.c.h.b16 %v1321
        %v1986 = vunpack.c.l.b16 %v1322
        %v1987 = vunpack.c.h.b16 %v1322
        %v1988 = vunpack.c.l.b16 %v1323
        %v1989 = vunpack.c.h.b16 %v1323
        %v1990 = vunpack.c.l.b16 %v1324
        %v1991 = vunpack.c.h.b16 %v1324
        %v1992 = vunpack.c.l.b16 %v1325
        %v1993 = vunpack.c.h.b16 %v1325
        %v1994 = vunpack.c.l.b16 %v1326
        %v1995 = vunpack.c.h.b16 %v1326
        %v1996 = vunpack.c.l.b16 %v1327
        %v1997 = vunpack.c.h.b16 %v1327
        %v1998 = vunpack.c.l.b16 %v1328
        %v1999 = vunpack.c.h.b16 %v1328
        %v2000 = vunpack.c.l.b16 %v1329
        %v2001 = vunpack.c.h.b16 %v1329
        %v2002 = vunpack.c.l.b16 %v1330
        %v2003 = vunpack.c.h.b16 %v1330
        %v2004 = vunpack.c.l.b16 %v1331
        %v2005 = vunpack.c.h.b16 %v1331
        %v2006 = vunpack.c.l.b16 %v1332
        %v2007 = vunpack.c.h.b16 %v1332
        %v2008 = vunpack.c.l.b16 %v1333
        %v2009 = vunpack.c.h.b16 %v1333
        %v2010 = vunpack.c.l.b16 %v1334
        %v2011 = vunpack.c.h.b16 %v1334
        %v2012 = vunpack.c.l.b16 %v1335
        %v2013 = vunpack.c.h.b16 %v1335
        %v2014 = vunpack.c.l.b16 %v1336
        %v2015 = vunpack.c.h.b16 %v1336
        %v2016 = vunpack.c.l.b16 %v1337
        %v2017 = vunpack.c.h.b16 %v1337
        %v2018 = vunpack.c.l.b16 %v1338
        %v2019 = vunpack.c.h.b16 %v1338
        %v2020 = vunpack.c.l.b16 %v1339
        %v2021 = vunpack.c.h.b16 %v1339
        %v2022 = vunpack.c.l.b16 %v1340
        %v2023 = vunpack.c.h.b16 %v1340
        %v2024 = vunpack.c.l.b16 %v1341
        %v2025 = vunpack.c.h.b16 %v1341
        %v2026 = vunpack.c.l.b16 %v1342
        %v2027 = vunpack.c.h.b16 %v1342
        %v2028 = vunpack.c.l.b16 %v1343
        %v2029 = vunpack.c.h.b16 %v1343
        %v2030 = vunpack.c.l.b16 %v1344
        %v2031 = vunpack.c.h.b16 %v1344
        %v2032 = vunpack.c.l.b16 %v1345
        %v2033 = vunpack.c.h.b16 %v1345
        %v2034 = vunpack.c.l.b16 %v1346
        %v2035 = vunpack.c.h.b16 %v1346
        %v2036 = vunpack.c.l.b16 %v1347
        %v2037 = vunpack.c.h.b16 %v1347
        %v2038 = vunpack.c.l.b16 %v1348
        %v2039 = vunpack.c.h.b16 %v1348
        %v2040 = vunpack.c.l.b16 %v1349
        %v2041 = vunpack.c.h.b16 %v1349
        %v2042 = vunpack.c.l.b16 %v1350
        %v2043 = vunpack.c.h.b16 %v1350
        %v2044 = vunpack.c.l.b16 %v1351
        %v2045 = vunpack.c.h.b16 %v1351
        %v2046 = vunpack.c.l.b16 %v1352
        %v2047 = vunpack.c.h.b16 %v1352
        %v2048 = vunpack.c.l.b16 %v1353
        %v2049 = vunpack.c.h.b16 %v1353
        %v2050 = vunpack.c.l.b16 %v1354
        %v2051 = vunpack.c.h.b16 %v1354
        %v2052 = vunpack.c.l.b16 %v1355
        %v2053 = vunpack.c.h.b16 %v1355
        %v2054 = vunpack.c.l.b16 %v1356
        %v2055 = vunpack.c.h.b16 %v1356
        %v2056 = vunpack.c.l.b16 %v1357
        %v2057 = vunpack.c.h.b16 %v1357
        %v2058 = vunpack.c.l.b16 %v1358
        %v2059 = vunpack.c.h.b16 %v1358
        %v2060 = vunpack.c.l.b16 %v1359
        %v2061 = vunpack.c.h.b16 %v1359
        %v2062 = vunpack.c.l.b16 %v1360
        %v2063 = vunpack.c.h.b16 %v1360
        %v2064 = vunpack.c.l.b16 %v1361
        %v2065 = vunpack.c.h.b16 %v1361
        %v2066 = vunpack.c.l.b16 %v1362
        %v2067 = vunpack.c.h.b16 %v1362
        %v2068 = vunpack.c.l.b16 %v1363
        %v2069 = vunpack.c.h.b16 %v1363
        %v2070 = vunpack.c.l.b16 %v1364
        %v2071 = vunpack.c.h.b16 %v1364
        %v2072 = vunpack.c.l.b16 %v1365
        %v2073 = vunpack.c.h.b16 %v1365
        %v2074 = vunpack.c.l.b16 %v1366
        %v2075 = vunpack.c.h.b16 %v1366
        %v2076 = vunpack.c.l.b16 %v1367
        %v2077 = vunpack.c.h.b16 %v1367
        %v2078 = vunpack.c.l.b16 %v1368
        %v2079 = vunpack.c.h.b16 %v1368
        %v2080 = vunpack.c.l.b16 %v1369
        %v2081 = vunpack.c.h.b16 %v1369
        %v2082 = vunpack.c.l.b16 %v1370
        %v2083 = vunpack.c.h.b16 %v1370
        %v2084 = vunpack.c.l.b16 %v1371
        %v2085 = vunpack.c.h.b16 %v1371
        %v2086 = vunpack.c.l.b16 %v1372
        %v2087 = vunpack.c.h.b16 %v1372
        %v2088 = vunpack.c.l.b16 %v1373
        %v2089 = vunpack.c.h.b16 %v1373
        %v2090 = vunpack.c.l.b16 %v1374
        %v2091 = vunpack.c.h.b16 %v1374
        %v2092 = vunpack.c.l.b16 %v1375
        %v2093 = vunpack.c.h.b16 %v1375
        %v2094 = vunpack.c.l.b16 %v1376
        %v2095 = vunpack.c.h.b16 %v1376
        %v2096 = vunpack.c.l.b16 %v1377
        %v2097 = vunpack.c.h.b16 %v1377
        %v2098 = vunpack.c.l.b16 %v1378
        %v2099 = vunpack.c.h.b16 %v1378
        %v2100 = vunpack.c.l.b16 %v1379
        %v2101 = vunpack.c.h.b16 %v1379
        %v2102 = vunpack.c.l.b16 %v1380
        %v2103 = vunpack.c.h.b16 %v1380
        %v2104 = vunpack.c.l.b16 %v1381
        %v2105 = vunpack.c.h.b16 %v1381
        %v2106 = vunpack.c.l.b16 %v1382
        %v2107 = vunpack.c.h.b16 %v1382
        %v2108 = vunpack.c.l.b16 %v1383
        %v2109 = vunpack.c.h.b16 %v1383
        %v2110 = vunpack.c.l.b16 %v1384
        %v2111 = vunpack.c.h.b16 %v1384
        %v2112 = vunpack.c.l.b16 %v1385
        %v2113 = vunpack.c.h.b16 %v1385
        %v2114 = vunpack.c.l.b16 %v1386
        %v2115 = vunpack.c.h.b16 %v1386
        %v2116 = vunpack.c.l.b16 %v1387
        %v2117 = vunpack.c.h.b16 %v1387
        %v2118 = vunpack.c.l.b16 %v1388
        %v2119 = vunpack.c.h.b16 %v1388
        %v2120 = vunpack.c.l.b16 %v1389
        %v2121 = vunpack.c.h.b16 %v1389
        %v2122 = vunpack.c.l.b16 %v1390
        %v2123 = vunpack.c.h.b16 %v1390
        %v2124 = vunpack.c.l.b16 %v1391
        %v2125 = vunpack.c.h.b16 %v1391
        %v2126 = vunpack.c.l.b16 %v1392
        %v2127 = vunpack.c.h.b16 %v1392
        %v2128 = vunpack.c.l.b16 %v1393
        %v2129 = vunpack.c.h.b16 %v1393
        %v2130 = vunpack.c.l.b16 %v1394
        %v2131 = vunpack.c.h.b16 %v1394
        %v2132 = vunpack.c.l.b16 %v1395
        %v2133 = vunpack.c.h.b16 %v1395
        %v2134 = vunpack.c.l.b16 %v1396
        %v2135 = vunpack.c.h.b16 %v1396
        %v2136 = vunpack.c.l.b16 %v1397
        %v2137 = vunpack.c.h.b16 %v1397
        %v2138 = vunpack.c.l.b16 %v1398
        %v2139 = vunpack.c.h.b16 %v1398
        %v2140 = vunpack.c.l.b16 %v1399
        %v2141 = vunpack.c.h.b16 %v1399
        %v2142 = vunpack.c.l.b16 %v1400
        %v2143 = vunpack.c.h.b16 %v1400
        %v2144 = vunpack.c.l.b16 %v1401
        %v2145 = vunpack.c.h.b16 %v1401
        %v2146 = vunpack.c.l.b16 %v1402
        %v2147 = vunpack.c.h.b16 %v1402
        %v2148 = vunpack.c.l.b16 %v1403
        %v2149 = vunpack.c.h.b16 %v1403
        %v2150 = vunpack.c.l.b16 %v1404
        %v2151 = vunpack.c.h.b16 %v1404
        %v2152 = vunpack.c.l.b16 %v1405
        %v2153 = vunpack.c.h.b16 %v1405
        %v2154 = vunpack.c.l.b16 %v1406
        %v2155 = vunpack.c.h.b16 %v1406
        %v2156 = vunpack.c.l.b16 %v1407
        %v2157 = vunpack.c.h.b16 %v1407
        %v2158 = vunpack.c.l.b16 %v1408
        %v2159 = vunpack.c.h.b16 %v1408
        %v2160 = vunpack.c.l.b16 %v1409
        %v2161 = vunpack.c.h.b16 %v1409
        %v2162 = vunpack.c.l.b16 %v1410
        %v2163 = vunpack.c.h.b16 %v1410
        %v2164 = vunpack.c.l.b16 %v1411
        %v2165 = vunpack.c.h.b16 %v1411
        %v2166 = vunpack.c.l.b16 %v1412
        %v2167 = vunpack.c.h.b16 %v1412
        %v2168 = vunpack.c.l.b16 %v1413
        %v2169 = vunpack.c.h.b16 %v1413
        %v2170 = vunpack.c.l.b16 %v1414
        %v2171 = vunpack.c.h.b16 %v1414
        %v2172 = vunpack.c.l.b16 %v1415
        %v2173 = vunpack.c.h.b16 %v1415
        %v2174 = vunpack.c.l.b16 %v1416
        %v2175 = vunpack.c.h.b16 %v1416
        %v2176 = vunpack.c.l.b16 %v1417
        %v2177 = vunpack.c.h.b16 %v1417
        %v2178 = vunpack.c.l.b16 %v1418
        %v2179 = vunpack.c.h.b16 %v1418
        %v2180 = vunpack.c.l.b16 %v1419
        %v2181 = vunpack.c.h.b16 %v1419
        %v2182 = vunpack.c.l.b16 %v1420
        %v2183 = vunpack.c.h.b16 %v1420
        %v2184 = vunpack.c.l.b16 %v1421
        %v2185 = vunpack.c.h.b16 %v1421
        %v2186 = vunpack.c.l.b16 %v1422
        %v2187 = vunpack.c.h.b16 %v1422
        %v2188 = vunpack.c.l.b16 %v1423
        %v2189 = vunpack.c.h.b16 %v1423
        %v2190 = vunpack.c.l.b16 %v1424
        %v2191 = vunpack.c.h.b16 %v1424
        %v2192 = vunpack.c.l.b16 %v1425
        %v2193 = vunpack.c.h.b16 %v1425
        %v2194 = vunpack.c.l.b16 %v1426
        %v2195 = vunpack.c.h.b16 %v1426
        %v2196 = vunpack.c.l.b16 %v1427
        %v2197 = vunpack.c.h.b16 %v1427
        %v2198 = vunpack.c.l.b16 %v1428
        %v2199 = vunpack.c.h.b16 %v1428
        %v2200 = vunpack.c.l.b16 %v1429
        %v2201 = vunpack.c.h.b16 %v1429
        %v2202 = vunpack.c.l.b16 %v1430
        %v2203 = vunpack.c.h.b16 %v1430
        %v2204 = vunpack.c.l.b16 %v1431
        %v2205 = vunpack.c.h.b16 %v1431
        %v2206 = vunpack.c.l.b16 %v1432
        %v2207 = vunpack.c.h.b16 %v1432
        %v2208 = vunpack.c.l.b16 %v1433
        %v2209 = vunpack.c.h.b16 %v1433
        %v2210 = vunpack.c.l.b16 %v1434
        %v2211 = vunpack.c.h.b16 %v1434
        %v2212 = vunpack.c.l.b16 %v1435
        %v2213 = vunpack.c.h.b16 %v1435
        %v2214 = vunpack.c.l.b16 %v1436
        %v2215 = vunpack.c.h.b16 %v1436
        %v2216 = vunpack.c.l.b16 %v1437
        %v2217 = vunpack.c.h.b16 %v1437
        %v2218 = vunpack.c.l.b16 %v1438
        %v2219 = vunpack.c.h.b16 %v1438
        %v2220 = vunpack.c.l.b16 %v1439
        %v2221 = vunpack.c.h.b16 %v1439
        %v2222 = vunpack.c.l.b16 %v1440
        %v2223 = vunpack.c.h.b16 %v1440
        %v2224 = vunpack.c.l.b16 %v1441
        %v2225 = vunpack.c.h.b16 %v1441
        %v2226 = vunpack.c.l.b16 %v1442
        %v2227 = vunpack.c.h.b16 %v1442
        %v2228 = vunpack.c.l.b16 %v1443
        %v2229 = vunpack.c.h.b16 %v1443
        %v2230 = vunpack.c.l.b16 %v1444
        %v2231 = vunpack.c.h.b16 %v1444
        %v2232 = vunpack.c.l.b16 %v1445
        %v2233 = vunpack.c.h.b16 %v1445
        %v2234 = vunpack.c.l.b16 %v1446
        %v2235 = vunpack.c.h.b16 %v1446
        %v2236 = vunpack.c.l.b16 %v1447
        %v2237 = vunpack.c.h.b16 %v1447
        %v2238 = vpack.c.b16 %v1730, %v1726
        %v2239 = vpack.c.b16 %v1731, %v1727
        %v2240 = vpack.c.b16 %v1732, %v1728
        %v2241 = vpack.c.b16 %v1733, %v1729
        %v2242 = vpack.c.b16 %v1738, %v1734
        %v2243 = vpack.c.b16 %v1739, %v1735
        %v2244 = vpack.c.b16 %v1740, %v1736
        %v2245 = vpack.c.b16 %v1741, %v1737
        %v2246 = vpack.c.b16 %v1746, %v1742
        %v2247 = vpack.c.b16 %v1747, %v1743
        %v2248 = vpack.c.b16 %v1748, %v1744
        %v2249 = vpack.c.b16 %v1749, %v1745
        %v2250 = vpack.c.b16 %v1754, %v1750
        %v2251 = vpack.c.b16 %v1755, %v1751
        %v2252 = vpack.c.b16 %v1756, %v1752
        %v2253 = vpack.c.b16 %v1757, %v1753
        %v2254 = vpack.c.b16 %v1762, %v1758
        %v2255 = vpack.c.b16 %v1763, %v1759
        %v2256 = vpack.c.b16 %v1764, %v1760
        %v2257 = vpack.c.b16 %v1765, %v1761
        %v2258 = vpack.c.b16 %v1770, %v1766
        %v2259 = vpack.c.b16 %v1771, %v1767
        %v2260 = vpack.c.b16 %v1772, %v1768
        %v2261 = vpack.c.b16 %v1773, %v1769
        %v2262 = vpack.c.b16 %v1778, %v1774
        %v2263 = vpack.c.b16 %v1779, %v1775
        %v2264 = vpack.c.b16 %v1780, %v1776
        %v2265 = vpack.c.b16 %v1781, %v1777
        %v2266 = vpack.c.b16 %v1786, %v1782
        %v2267 = vpack.c.b16 %v1787, %v1783
        %v2268 = vpack.c.b16 %v1788, %v1784
        %v2269 = vpack.c.b16 %v1789, %v1785
        %v2270 = vpack.c.b16 %v1794, %v1790
        %v2271 = vpack.c.b16 %v1795, %v1791
        %v2272 = vpack.c.b16 %v1796, %v1792
        %v2273 = vpack.c.b16 %v1797, %v1793
        %v2274 = vpack.c.b16 %v1802, %v1798
        %v2275 = vpack.c.b16 %v1803, %v1799
        %v2276 = vpack.c.b16 %v1804, %v1800
        %v2277 = vpack.c.b16 %v1805, %v1801
        %v2278 = vpack.c.b16 %v1810, %v1806
        %v2279 = vpack.c.b16 %v1811, %v1807
        %v2280 = vpack.c.b16 %v1812, %v1808
        %v2281 = vpack.c.b16 %v1813, %v1809
        %v2282 = vpack.c.b16 %v1818, %v1814
        %v2283 = vpack.c.b16 %v1819, %v1815
        %v2284 = vpack.c.b16 %v1820, %v1816
        %v2285 = vpack.c.b16 %v1821, %v1817
        %v2286 = vpack.c.b16 %v1826, %v1822
        %v2287 = vpack.c.b16 %v1827, %v1823
        %v2288 = vpack.c.b16 %v1828, %v1824
        %v2289 = vpack.c.b16 %v1829, %v1825
        %v2290 = vpack.c.b16 %v1834, %v1830
        %v2291 = vpack.c.b16 %v1835, %v1831
        %v2292 = vpack.c.b16 %v1836, %v1832
        %v2293 = vpack.c.b16 %v1837, %v1833
        %v2294 = vpack.c.b16 %v1842, %v1838
        %v2295 = vpack.c.b16 %v1843, %v1839
        %v2296 = vpack.c.b16 %v1844, %v1840
        %v2297 = vpack.c.b16 %v1845, %v1841
        %v2298 = vpack.c.b16 %v1850, %v1846
        %v2299 = vpack.c.b16 %v1851, %v1847
        %v2300 = vpack.c.b16 %v1852, %v1848
        %v2301 = vpack.c.b16 %v1853, %v1849
        %v2302 = vpack.c.b16 %v1858, %v1854
        %v2303 = vpack.c.b16 %v1859, %v1855
        %v2304 = vpack.c.b16 %v1860, %v1856
        %v2305 = vpack.c.b16 %v1861, %v1857
        %v2306 = vpack.c.b16 %v1866, %v1862
        %v2307 = vpack.c.b16 %v1867, %v1863
        %v2308 = vpack.c.b16 %v1868, %v1864
        %v2309 = vpack.c.b16 %v1869, %v1865
        %v2310 = vpack.c.b16 %v1874, %v1870
        %v2311 = vpack.c.b16 %v1875, %v1871
        %v2312 = vpack.c.b16 %v1876, %v1872
        %v2313 = vpack.c.b16 %v1877, %v1873
        %v2314 = vpack.c.b16 %v1882, %v1878
        %v2315 = vpack.c.b16 %v1883, %v1879
        %v2316 = vpack.c.b16 %v1884, %v1880
        %v2317 = vpack.c.b16 %v1885, %v1881
        %v2318 = vpack.c.b16 %v1890, %v1886
        %v2319 = vpack.c.b16 %v1891, %v1887
        %v2320 = vpack.c.b16 %v1892, %v1888
        %v2321 = vpack.c.b16 %v1893, %v1889
        %v2322 = vpack.c.b16 %v1898, %v1894
        %v2323 = vpack.c.b16 %v1899, %v1895
        %v2324 = vpack.c.b16 %v1900, %v1896
        %v2325 = vpack.c.b16 %v1901, %v1897
        %v2326 = vpack.c.b16 %v1906, %v1902
        %v2327 = vpack.c.b16 %v1907, %v1903
        %v2328 = vpack.c.b16 %v1908, %v1904
        %v2329 = vpack.c.b16 %v1909, %v1905
        %v2330 = vpack.c.b16 %v1914, %v1910
        %v2331 = vpack.c.b16 %v1915, %v1911
        %v2332 = vpack.c.b16 %v1916, %v1912
        %v2333 = vpack.c.b16 %v1917, %v1913
        %v2334 = vpack.c.b16 %v1922, %v1918
        %v2335 = vpack.c.b16 %v1923, %v1919
        %v2336 = vpack.c.b16 %v1924, %v1920
        %v2337 = vpack.c.b16 %v1925, %v1921
        %v2338 = vpack.c.b16 %v1930, %v1926
        %v2339 = vpack.c.b16 %v1931, %v1927
        %v2340 = vpack.c.b16 %v1932, %v1928
        %v2341 = vpack.c.b16 %v1933, %v1929
        %v2342 = vpack.c.b16 %v1938, %v1934
        %v2343 = vpack.c.b16 %v1939, %v1935
        %v2344 = vpack.c.b16 %v1940, %v1936
        %v2345 = vpack.c.b16 %v1941, %v1937
        %v2346 = vpack.c.b16 %v1946, %v1942
        %v2347 = vpack.c.b16 %v1947, %v1943
        %v2348 = vpack.c.b16 %v1948, %v1944
        %v2349 = vpack.c.b16 %v1949, %v1945
        %v2350 = vpack.c.b16 %v1954, %v1950
        %v2351 = vpack.c.b16 %v1955, %v1951
        %v2352 = vpack.c.b16 %v1956, %v1952
        %v2353 = vpack.c.b16 %v1957, %v1953
        %v2354 = vpack.c.b16 %v1962, %v1958
        %v2355 = vpack.c.b16 %v1963, %v1959
        %v2356 = vpack.c.b16 %v1964, %v1960
        %v2357 = vpack.c.b16 %v1965, %v1961
        %v2358 = vpack.c.b16 %v1970, %v1966
        %v2359 = vpack.c.b16 %v1971, %v1967
        %v2360 = vpack.c.b16 %v1972, %v1968
        %v2361 = vpack.c.b16 %v1973, %v1969
        %v2362 = vpack.c.b16 %v1978, %v1974
        %v2363 = vpack.c.b16 %v1979, %v1975
        %v2364 = vpack.c.b16 %v1980, %v1976
        %v2365 = vpack.c.b16 %v1981, %v1977
        %v2366 = vpack.c.b16 %v1986, %v1982
        %v2367 = vpack.c.b16 %v1987, %v1983
        %v2368 = vpack.c.b16 %v1988, %v1984
        %v2369 = vpack.c.b16 %v1989, %v1985
        %v2370 = vpack.c.b16 %v1994, %v1990
        %v2371 = vpack.c.b16 %v1995, %v1991
        %v2372 = vpack.c.b16 %v1996, %v1992
        %v2373 = vpack.c.b16 %v1997, %v1993
        %v2374 = vpack.c.b16 %v2002, %v1998
        %v2375 = vpack.c.b16 %v2003, %v1999
        %v2376 = vpack.c.b16 %v2004, %v2000
        %v2377 = vpack.c.b16 %v2005, %v2001
        %v2378 = vpack.c.b16 %v2010, %v2006
        %v2379 = vpack.c.b16 %v2011, %v2007
        %v2380 = vpack.c.b16 %v2012, %v2008
        %v2381 = vpack.c.b16 %v2013, %v2009
        %v2382 = vpack.c.b16 %v2018, %v2014
        %v2383 = vpack.c.b16 %v2019, %v2015
        %v2384 = vpack.c.b16 %v2020, %v2016
        %v2385 = vpack.c.b16 %v2021, %v2017
        %v2386 = vpack.c.b16 %v2026, %v2022
        %v2387 = vpack.c.b16 %v2027, %v2023
        %v2388 = vpack.c.b16 %v2028, %v2024
        %v2389 = vpack.c.b16 %v2029, %v2025
        %v2390 = vpack.c.b16 %v2034, %v2030
        %v2391 = vpack.c.b16 %v2035, %v2031
        %v2392 = vpack.c.b16 %v2036, %v2032
        %v2393 = vpack.c.b16 %v2037, %v2033
        %v2394 = vpack.c.b16 %v2042, %v2038
        %v2395 = vpack.c.b16 %v2043, %v2039
        %v2396 = vpack.c.b16 %v2044, %v2040
        %v2397 = vpack.c.b16 %v2045, %v2041
        %v2398 = vpack.c.b16 %v2050, %v2046
        %v2399 = vpack.c.b16 %v2051, %v2047
        %v2400 = vpack.c.b16 %v2052, %v2048
        %v2401 = vpack.c.b16 %v2053, %v2049
        %v2402 = vpack.c.b16 %v2058, %v2054
        %v2403 = vpack.c.b16 %v2059, %v2055
        %v2404 = vpack.c.b16 %v2060, %v2056
        %v2405 = vpack.c.b16 %v2061, %v2057
        %v2406 = vpack.c.b16 %v2066, %v2062
        %v2407 = vpack.c.b16 %v2067, %v2063
        %v2408 = vpack.c.b16 %v2068, %v2064
        %v2409 = vpack.c.b16 %v2069, %v2065
        %v2410 = vpack.c.b16 %v2074, %v2070
        %v2411 = vpack.c.b16 %v2075, %v2071
        %v2412 = vpack.c.b16 %v2076, %v2072
        %v2413 = vpack.c.b16 %v2077, %v2073
        %v2414 = vpack.c.b16 %v2082, %v2078
        %v2415 = vpack.c.b16 %v2083, %v2079
        %v2416 = vpack.c.b16 %v2084, %v2080
        %v2417 = vpack.c.b16 %v2085, %v2081
        %v2418 = vpack.c.b16 %v2090, %v2086
        %v2419 = vpack.c.b16 %v2091, %v2087
        %v2420 = vpack.c.b16 %v2092, %v2088
        %v2421 = vpack.c.b16 %v2093, %v2089
        %v2422 = vpack.c.b16 %v2098, %v2094
        %v2423 = vpack.c.b16 %v2099, %v2095
        %v2424 = vpack.c.b16 %v2100, %v2096
        %v2425 = vpack.c.b16 %v2101, %v2097
        %v2426 = vpack.c.b16 %v2106, %v2102
        %v2427 = vpack.c.b16 %v2107, %v2103
        %v2428 = vpack.c.b16 %v2108, %v2104
        %v2429 = vpack.c.b16 %v2109, %v2105
        %v2430 = vpack.c.b16 %v2114, %v2110
        %v2431 = vpack.c.b16 %v2115, %v2111
        %v2432 = vpack.c.b16 %v2116, %v2112
        %v2433 = vpack.c.b16 %v2117, %v2113
        %v2434 = vpack.c.b16 %v2122, %v2118
        %v2435 = vpack.c.b16 %v2123, %v2119
        %v2436 = vpack.c.b16 %v2124, %v2120
        %v2437 = vpack.c.b16 %v2125, %v2121
        %v2438 = vpack.c.b16 %v2130, %v2126
        %v2439 = vpack.c.b16 %v2131, %v2127
        %v2440 = vpack.c.b16 %v2132, %v2128
        %v2441 = vpack.c.b16 %v2133, %v2129
        %v2442 = vpack.c.b16 %v2138, %v2134
        %v2443 = vpack.c.b16 %v2139, %v2135
        %v2444 = vpack.c.b16 %v2140, %v2136
        %v2445 = vpack.c.b16 %v2141, %v2137
        %v2446 = vpack.c.b16 %v2146, %v2142
        %v2447 = vpack.c.b16 %v2147, %v2143
        %v2448 = vpack.c.b16 %v2148, %v2144
        %v2449 = vpack.c.b16 %v2149, %v2145
        %v2450 = vpack.c.b16 %v2154, %v2150
        %v2451 = vpack.c.b16 %v2155, %v2151
        %v2452 = vpack.c.b16 %v2156, %v2152
        %v2453 = vpack.c.b16 %v2157, %v2153
        %v2454 = vpack.c.b16 %v2162, %v2158
        %v2455 = vpack.c.b16 %v2163, %v2159
        %v2456 = vpack.c.b16 %v2164, %v2160
        %v2457 = vpack.c.b16 %v2165, %v2161
        %v2458 = vpack.c.b16 %v2170, %v2166
        %v2459 = vpack.c.b16 %v2171, %v2167
        %v2460 = vpack.c.b16 %v2172, %v2168
        %v2461 = vpack.c.b16 %v2173, %v2169
        %v2462 = vpack.c.b16 %v2178, %v2174
        %v2463 = vpack.c.b16 %v2179, %v2175
        %v2464 = vpack.c.b16 %v2180, %v2176
        %v2465 = vpack.c.b16 %v2181, %v2177
        %v2466 = vpack.c.b16 %v2186, %v2182
        %v2467 = vpack.c.b16 %v2187, %v2183
        %v2468 = vpack.c.b16 %v2188, %v2184
        %v2469 = vpack.c.b16 %v2189, %v2185
        %v2470 = vpack.c.b16 %v2194, %v2190
        %v2471 = vpack.c.b16 %v2195, %v2191
        %v2472 = vpack.c.b16 %v2196, %v2192
        %v2473 = vpack.c.b16 %v2197, %v2193
        %v2474 = vpack.c.b16 %v2202, %v2198
        %v2475 = vpack.c.b16 %v2203, %v2199
        %v2476 = vpack.c.b16 %v2204, %v2200
        %v2477 = vpack.c.b16 %v2205, %v2201
        %v2478 = vpack.c.b16 %v2210, %v2206
        %v2479 = vpack.c.b16 %v2211, %v2207
        %v2480 = vpack.c.b16 %v2212, %v2208
        %v2481 = vpack.c.b16 %v2213, %v2209
        %v2482 = vpack.c.b16 %v2218, %v2214
        %v2483 = vpack.c.b16 %v2219, %v2215
        %v2484 = vpack.c.b16 %v2220, %v2216
        %v2485 = vpack.c.b16 %v2221, %v2217
        %v2486 = vpack.c.b16 %v2226, %v2222
        %v2487 = vpack.c.b16 %v2227, %v2223
        %v2488 = vpack.c.b16 %v2228, %v2224
        %v2489 = vpack.c.b16 %v2229, %v2225
        %v2490 = vpack.c.b16 %v2234, %v2230
        %v2491 = vpack.c.b16 %v2235, %v2231
        %v2492 = vpack.c.b16 %v2236, %v2232
        %v2493 = vpack.c.b16 %v2237, %v2233
        %2750 = vmatprep.subr.bf16.mxu0 %v2239
        %2751 = vmatpush1.bf16.msra.mxu0 %v2238
        %2752 = vmatprep.subr.bf16.mxu0 %v2243
        %2753 = vmatpush1.bf16.msra.mxu0 %v2242
        %2754 = vmatprep.subr.bf16.mxu0 %v2247
        %2755 = vmatpush1.bf16.msra.mxu0 %v2246
        %2756 = vmatprep.subr.bf16.mxu0 %v2251
        %2757 = vmatpush1.bf16.msra.mxu0 %v2250
        %2758 = vmatprep.subr.bf16.mxu0 %v2255
        %2759 = vmatpush1.bf16.msra.mxu0 %v2254
        %2760 = vmatprep.subr.bf16.mxu0 %v2259
        %2761 = vmatpush1.bf16.msra.mxu0 %v2258
        %2762 = vmatprep.subr.bf16.mxu0 %v2263
        %2763 = vmatpush1.bf16.msra.mxu0 %v2262
        %2764 = vmatprep.subr.bf16.mxu0 %v2267
        %2765 = vmatpush1.bf16.msra.mxu0 %v2266
        %2766 = vmatprep.subr.bf16.mxu0 %v2271
        %2767 = vmatpush1.bf16.msra.mxu0 %v2270
        %2768 = vmatprep.subr.bf16.mxu0 %v2275
        %2769 = vmatpush1.bf16.msra.mxu0 %v2274
        %2770 = vmatprep.subr.bf16.mxu0 %v2279
        %2771 = vmatpush1.bf16.msra.mxu0 %v2278
        %2772 = vmatprep.subr.bf16.mxu0 %v2283
        %2773 = vmatpush1.bf16.msra.mxu0 %v2282
        %2774 = vmatprep.subr.bf16.mxu0 %v2287
        %2775 = vmatpush1.bf16.msra.mxu0 %v2286
        %2776 = vmatprep.subr.bf16.mxu0 %v2291
        %2777 = vmatpush1.bf16.msra.mxu0 %v2290
        %2778 = vmatprep.subr.bf16.mxu0 %v2295
        %2779 = vmatpush1.bf16.msra.mxu0 %v2294
        %2780 = vmatprep.subr.bf16.mxu0 %v2299
        %2781 = vmatpush1.bf16.msra.mxu0 %v2298
        %2782 = vmatprep.mubr.bf16.mxu0 %v1185
        %2783 = vmatmul.mubr.bf16.gmra.mrb[0].mxu0 %v1184
        %v2784 = vpop.f32.mrb[0].mxu0
        %v2785 = vadd.f32 %v1453, %v2784
        %v2786 = vpop.f32.mrb[0].mxu0
        %v2787 = vadd.f32 %v1457, %v2786
        %v2788 = vpop.f32.mrb[0].mxu0
        %v2789 = vadd.f32 %v1453, %v2788
        %v2790 = vpop.f32.mrb[0].mxu0
        %v2791 = vadd.f32 %v1457, %v2790
        %2792 = vdwg.mxu0
        %2793 = vmatprep.subr.bf16.mxu0 %v2303
        %2794 = vmatpush1.bf16.msra.mxu0 %v2302
        %2795 = vmatprep.subr.bf16.mxu0 %v2307
        %2796 = vmatpush1.bf16.msra.mxu0 %v2306
        %2797 = vmatprep.subr.bf16.mxu0 %v2311
        %2798 = vmatpush1.bf16.msra.mxu0 %v2310
        %2799 = vmatprep.subr.bf16.mxu0 %v2315
        %2800 = vmatpush1.bf16.msra.mxu0 %v2314
        %2801 = vmatprep.subr.bf16.mxu0 %v2319
        %2802 = vmatpush1.bf16.msra.mxu0 %v2318
        %2803 = vmatprep.subr.bf16.mxu0 %v2323
        %2804 = vmatpush1.bf16.msra.mxu0 %v2322
        %2805 = vmatprep.subr.bf16.mxu0 %v2327
        %2806 = vmatpush1.bf16.msra.mxu0 %v2326
        %2807 = vmatprep.subr.bf16.mxu0 %v2331
        %2808 = vmatpush1.bf16.msra.mxu0 %v2330
        %2809 = vmatprep.subr.bf16.mxu0 %v2335
        %2810 = vmatpush1.bf16.msra.mxu0 %v2334
        %2811 = vmatprep.subr.bf16.mxu0 %v2339
        %2812 = vmatpush1.bf16.msra.mxu0 %v2338
        %2813 = vmatprep.subr.bf16.mxu0 %v2343
        %2814 = vmatpush1.bf16.msra.mxu0 %v2342
        %2815 = vmatprep.subr.bf16.mxu0 %v2347
        %2816 = vmatpush1.bf16.msra.mxu0 %v2346
        %2817 = vmatprep.subr.bf16.mxu0 %v2351
        %2818 = vmatpush1.bf16.msra.mxu0 %v2350
        %2819 = vmatprep.subr.bf16.mxu0 %v2355
        %2820 = vmatpush1.bf16.msra.mxu0 %v2354
        %2821 = vmatprep.subr.bf16.mxu0 %v2359
        %2822 = vmatpush1.bf16.msra.mxu0 %v2358
        %2823 = vmatprep.subr.bf16.mxu0 %v2363
        %2824 = vmatpush1.bf16.msra.mxu0 %v2362
        %2825 = vmatprep.mubr.bf16.mxu0 %v1187
        %2826 = vmatmul.mubr.bf16.gmra.mrb[0].mxu0 %v1186
        %v2827 = vpop.f32.mrb[0].mxu0
        %v2828 = vadd.f32 %v2785, %v2827
        %v2829 = vpop.f32.mrb[0].mxu0
        %v2830 = vadd.f32 %v2787, %v2829
        %v2831 = vpop.f32.mrb[0].mxu0
        %v2832 = vadd.f32 %v2789, %v2831
        %v2833 = vpop.f32.mrb[0].mxu0
        %v2834 = vadd.f32 %v2791, %v2833
        %2835 = vdwg.mxu0
        %2836 = vmatprep.subr.bf16.mxu0 %v2367
        %2837 = vmatpush1.bf16.msra.mxu0 %v2366
        %2838 = vmatprep.subr.bf16.mxu0 %v2371
        %2839 = vmatpush1.bf16.msra.mxu0 %v2370
        %2840 = vmatprep.subr.bf16.mxu0 %v2375
        %2841 = vmatpush1.bf16.msra.mxu0 %v2374
        %2842 = vmatprep.subr.bf16.mxu0 %v2379
        %2843 = vmatpush1.bf16.msra.mxu0 %v2378
        %2844 = vmatprep.subr.bf16.mxu0 %v2383
        %2845 = vmatpush1.bf16.msra.mxu0 %v2382
        %2846 = vmatprep.subr.bf16.mxu0 %v2387
        %2847 = vmatpush1.bf16.msra.mxu0 %v2386
        %2848 = vmatprep.subr.bf16.mxu0 %v2391
        %2849 = vmatpush1.bf16.msra.mxu0 %v2390
        %2850 = vmatprep.subr.bf16.mxu0 %v2395
        %2851 = vmatpush1.bf16.msra.mxu0 %v2394
        %2852 = vmatprep.subr.bf16.mxu0 %v2399
        %2853 = vmatpush1.bf16.msra.mxu0 %v2398
        %2854 = vmatprep.subr.bf16.mxu0 %v2403
        %2855 = vmatpush1.bf16.msra.mxu0 %v2402
        %2856 = vmatprep.subr.bf16.mxu0 %v2407
        %2857 = vmatpush1.bf16.msra.mxu0 %v2406
        %2858 = vmatprep.subr.bf16.mxu0 %v2411
        %2859 = vmatpush1.bf16.msra.mxu0 %v2410
        %2860 = vmatprep.subr.bf16.mxu0 %v2415
        %2861 = vmatpush1.bf16.msra.mxu0 %v2414
        %2862 = vmatprep.subr.bf16.mxu0 %v2419
        %2863 = vmatpush1.bf16.msra.mxu0 %v2418
        %2864 = vmatprep.subr.bf16.mxu0 %v2423
        %2865 = vmatpush1.bf16.msra.mxu0 %v2422
        %2866 = vmatprep.subr.bf16.mxu0 %v2427
        %2867 = vmatpush1.bf16.msra.mxu0 %v2426
        %2868 = vmatprep.mubr.bf16.mxu0 %v1189
        %2869 = vmatmul.mubr.bf16.gmra.mrb[0].mxu0 %v1188
        %v2870 = vpop.f32.mrb[0].mxu0
        %v2871 = vadd.f32 %v2828, %v2870
        %v2872 = vpop.f32.mrb[0].mxu0
        %v2873 = vadd.f32 %v2830, %v2872
        %v2874 = vpop.f32.mrb[0].mxu0
        %v2875 = vadd.f32 %v2832, %v2874
        %v2876 = vpop.f32.mrb[0].mxu0
        %v2877 = vadd.f32 %v2834, %v2876
        %2878 = vdwg.mxu0
        %2879 = vmatprep.subr.bf16.mxu0 %v2431
        %2880 = vmatpush1.bf16.msra.mxu0 %v2430
        %2881 = vmatprep.subr.bf16.mxu0 %v2435
        %2882 = vmatpush1.bf16.msra.mxu0 %v2434
        %2883 = vmatprep.subr.bf16.mxu0 %v2439
        %2884 = vmatpush1.bf16.msra.mxu0 %v2438
        %2885 = vmatprep.subr.bf16.mxu0 %v2443
        %2886 = vmatpush1.bf16.msra.mxu0 %v2442
        %2887 = vmatprep.subr.bf16.mxu0 %v2447
        %2888 = vmatpush1.bf16.msra.mxu0 %v2446
        %2889 = vmatprep.subr.bf16.mxu0 %v2451
        %2890 = vmatpush1.bf16.msra.mxu0 %v2450
        %2891 = vmatprep.subr.bf16.mxu0 %v2455
        %2892 = vmatpush1.bf16.msra.mxu0 %v2454
        %2893 = vmatprep.subr.bf16.mxu0 %v2459
        %2894 = vmatpush1.bf16.msra.mxu0 %v2458
        %2895 = vmatprep.subr.bf16.mxu0 %v2463
        %2896 = vmatpush1.bf16.msra.mxu0 %v2462
        %2897 = vmatprep.subr.bf16.mxu0 %v2467
        %2898 = vmatpush1.bf16.msra.mxu0 %v2466
        %2899 = vmatprep.subr.bf16.mxu0 %v2471
        %2900 = vmatpush1.bf16.msra.mxu0 %v2470
        %2901 = vmatprep.subr.bf16.mxu0 %v2475
        %2902 = vmatpush1.bf16.msra.mxu0 %v2474
        %2903 = vmatprep.subr.bf16.mxu0 %v2479
        %2904 = vmatpush1.bf16.msra.mxu0 %v2478
        %2905 = vmatprep.subr.bf16.mxu0 %v2483
        %2906 = vmatpush1.bf16.msra.mxu0 %v2482
        %2907 = vmatprep.subr.bf16.mxu0 %v2487
        %2908 = vmatpush1.bf16.msra.mxu0 %v2486
        %2909 = vmatprep.subr.bf16.mxu0 %v2491
        %2910 = vmatpush1.bf16.msra.mxu0 %v2490
        %2911 = vmatprep.mubr.bf16.mxu0 %v1191
        %2912 = vmatmul.mubr.bf16.gmra.mrb[0].mxu0 %v1190
        %v2913 = vpop.f32.mrb[0].mxu0
        %v2914 = vadd.f32 %v2871, %v2913
        %v2915 = vpop.f32.mrb[0].mxu0
        %v2916 = vadd.f32 %v2873, %v2915
        %v2917 = vpop.f32.mrb[0].mxu0
        %v2918 = vadd.f32 %v2875, %v2917
        %v2919 = vpop.f32.mrb[0].mxu0
        %v2920 = vadd.f32 %v2877, %v2919
        %2921 = vdwg.mxu0
        %2922 = vmatprep.subr.bf16.mxu0 %v2241
        %2923 = vmatpush1.bf16.msra.mxu0 %v2240
        %2924 = vmatprep.subr.bf16.mxu0 %v2245
        %2925 = vmatpush1.bf16.msra.mxu0 %v2244
        %2926 = vmatprep.subr.bf16.mxu0 %v2249
        %2927 = vmatpush1.bf16.msra.mxu0 %v2248
        %2928 = vmatprep.subr.bf16.mxu0 %v2253
        %2929 = vmatpush1.bf16.msra.mxu0 %v2252
        %2930 = vmatprep.subr.bf16.mxu0 %v2257
        %2931 = vmatpush1.bf16.msra.mxu0 %v2256
        %2932 = vmatprep.subr.bf16.mxu0 %v2261
        %2933 = vmatpush1.bf16.msra.mxu0 %v2260
        %2934 = vmatprep.subr.bf16.mxu0 %v2265
        %2935 = vmatpush1.bf16.msra.mxu0 %v2264
        %2936 = vmatprep.subr.bf16.mxu0 %v2269
        %2937 = vmatpush1.bf16.msra.mxu0 %v2268
        %2938 = vmatprep.subr.bf16.mxu0 %v2273
        %2939 = vmatpush1.bf16.msra.mxu0 %v2272
        %2940 = vmatprep.subr.bf16.mxu0 %v2277
        %2941 = vmatpush1.bf16.msra.mxu0 %v2276
        %2942 = vmatprep.subr.bf16.mxu0 %v2281
        %2943 = vmatpush1.bf16.msra.mxu0 %v2280
        %2944 = vmatprep.subr.bf16.mxu0 %v2285
        %2945 = vmatpush1.bf16.msra.mxu0 %v2284
        %2946 = vmatprep.subr.bf16.mxu0 %v2289
        %2947 = vmatpush1.bf16.msra.mxu0 %v2288
        %2948 = vmatprep.subr.bf16.mxu0 %v2293
        %2949 = vmatpush1.bf16.msra.mxu0 %v2292
        %2950 = vmatprep.subr.bf16.mxu0 %v2297
        %2951 = vmatpush1.bf16.msra.mxu0 %v2296
        %2952 = vmatprep.subr.bf16.mxu0 %v2301
        %2953 = vmatpush1.bf16.msra.mxu0 %v2300
        %2954 = vmatprep.mubr.bf16.mxu0 %v1185
        %2955 = vmatmul.mubr.bf16.gmra.mrb[0].mxu0 %v1184
        %v2956 = vpop.f32.mrb[0].mxu0
        %v2957 = vadd.f32 %v1461, %v2956
        %v2958 = vpop.f32.mrb[0].mxu0
        %v2959 = vadd.f32 %v1465, %v2958
        %v2960 = vpop.f32.mrb[0].mxu0
        %v2961 = vadd.f32 %v1461, %v2960
        %v2962 = vpop.f32.mrb[0].mxu0
        %v2963 = vadd.f32 %v1465, %v2962
        %2964 = vdwg.mxu0
        %2965 = vmatprep.subr.bf16.mxu0 %v2305
        %2966 = vmatpush1.bf16.msra.mxu0 %v2304
        %2967 = vmatprep.subr.bf16.mxu0 %v2309
        %2968 = vmatpush1.bf16.msra.mxu0 %v2308
        %2969 = vmatprep.subr.bf16.mxu0 %v2313
        %2970 = vmatpush1.bf16.msra.mxu0 %v2312
        %2971 = vmatprep.subr.bf16.mxu0 %v2317
        %2972 = vmatpush1.bf16.msra.mxu0 %v2316
        %2973 = vmatprep.subr.bf16.mxu0 %v2321
        %2974 = vmatpush1.bf16.msra.mxu0 %v2320
        %2975 = vmatprep.subr.bf16.mxu0 %v2325
        %2976 = vmatpush1.bf16.msra.mxu0 %v2324
        %2977 = vmatprep.subr.bf16.mxu0 %v2329
        %2978 = vmatpush1.bf16.msra.mxu0 %v2328
        %2979 = vmatprep.subr.bf16.mxu0 %v2333
        %2980 = vmatpush1.bf16.msra.mxu0 %v2332
        %2981 = vmatprep.subr.bf16.mxu0 %v2337
        %2982 = vmatpush1.bf16.msra.mxu0 %v2336
        %2983 = vmatprep.subr.bf16.mxu0 %v2341
        %2984 = vmatpush1.bf16.msra.mxu0 %v2340
        %2985 = vmatprep.subr.bf16.mxu0 %v2345
        %2986 = vmatpush1.bf16.msra.mxu0 %v2344
        %2987 = vmatprep.subr.bf16.mxu0 %v2349
        %2988 = vmatpush1.bf16.msra.mxu0 %v2348
        %2989 = vmatprep.subr.bf16.mxu0 %v2353
        %2990 = vmatpush1.bf16.msra.mxu0 %v2352
        %2991 = vmatprep.subr.bf16.mxu0 %v2357
        %2992 = vmatpush1.bf16.msra.mxu0 %v2356
        %2993 = vmatprep.subr.bf16.mxu0 %v2361
        %2994 = vmatpush1.bf16.msra.mxu0 %v2360
        %2995 = vmatprep.subr.bf16.mxu0 %v2365
        %2996 = vmatpush1.bf16.msra.mxu0 %v2364
        %2997 = vmatprep.mubr.bf16.mxu0 %v1187
        %2998 = vmatmul.mubr.bf16.gmra.mrb[0].mxu0 %v1186
        %v2999 = vpop.f32.mrb[0].mxu0
        %v3000 = vadd.f32 %v2957, %v2999
        %v3001 = vpop.f32.mrb[0].mxu0
        %v3002 = vadd.f32 %v2959, %v3001
        %v3003 = vpop.f32.mrb[0].mxu0
        %v3004 = vadd.f32 %v2961, %v3003
        %v3005 = vpop.f32.mrb[0].mxu0
        %v3006 = vadd.f32 %v2963, %v3005
        %3007 = vdwg.mxu0
        %3008 = vmatprep.subr.bf16.mxu0 %v2369
        %3009 = vmatpush1.bf16.msra.mxu0 %v2368
        %3010 = vmatprep.subr.bf16.mxu0 %v2373
        %3011 = vmatpush1.bf16.msra.mxu0 %v2372
        %3012 = vmatprep.subr.bf16.mxu0 %v2377
        %3013 = vmatpush1.bf16.msra.mxu0 %v2376
        %3014 = vmatprep.subr.bf16.mxu0 %v2381
        %3015 = vmatpush1.bf16.msra.mxu0 %v2380
        %3016 = vmatprep.subr.bf16.mxu0 %v2385
        %3017 = vmatpush1.bf16.msra.mxu0 %v2384
        %3018 = vmatprep.subr.bf16.mxu0 %v2389
        %3019 = vmatpush1.bf16.msra.mxu0 %v2388
        %3020 = vmatprep.subr.bf16.mxu0 %v2393
        %3021 = vmatpush1.bf16.msra.mxu0 %v2392
        %3022 = vmatprep.subr.bf16.mxu0 %v2397
        %3023 = vmatpush1.bf16.msra.mxu0 %v2396
        %3024 = vmatprep.subr.bf16.mxu0 %v2401
        %3025 = vmatpush1.bf16.msra.mxu0 %v2400
        %3026 = vmatprep.subr.bf16.mxu0 %v2405
        %3027 = vmatpush1.bf16.msra.mxu0 %v2404
        %3028 = vmatprep.subr.bf16.mxu0 %v2409
        %3029 = vmatpush1.bf16.msra.mxu0 %v2408
        %3030 = vmatprep.subr.bf16.mxu0 %v2413
        %3031 = vmatpush1.bf16.msra.mxu0 %v2412
        %3032 = vmatprep.subr.bf16.mxu0 %v2417
        %3033 = vmatpush1.bf16.msra.mxu0 %v2416
        %3034 = vmatprep.subr.bf16.mxu0 %v2421
        %3035 = vmatpush1.bf16.msra.mxu0 %v2420
        %3036 = vmatprep.subr.bf16.mxu0 %v2425
        %3037 = vmatpush1.bf16.msra.mxu0 %v2424
        %3038 = vmatprep.subr.bf16.mxu0 %v2429
        %3039 = vmatpush1.bf16.msra.mxu0 %v2428
        %3040 = vmatprep.mubr.bf16.mxu0 %v1189
        %3041 = vmatmul.mubr.bf16.gmra.mrb[0].mxu0 %v1188
        %v3042 = vpop.f32.mrb[0].mxu0
        %v3043 = vadd.f32 %v3000, %v3042
        %v3044 = vpop.f32.mrb[0].mxu0
        %v3045 = vadd.f32 %v3002, %v3044
        %v3046 = vpop.f32.mrb[0].mxu0
        %v3047 = vadd.f32 %v3004, %v3046
        %v3048 = vpop.f32.mrb[0].mxu0
        %v3049 = vadd.f32 %v3006, %v3048
        %3050 = vdwg.mxu0
        %3051 = vmatprep.subr.bf16.mxu0 %v2433
        %3052 = vmatpush1.bf16.msra.mxu0 %v2432
        %3053 = vmatprep.subr.bf16.mxu0 %v2437
        %3054 = vmatpush1.bf16.msra.mxu0 %v2436
        %3055 = vmatprep.subr.bf16.mxu0 %v2441
        %3056 = vmatpush1.bf16.msra.mxu0 %v2440
        %3057 = vmatprep.subr.bf16.mxu0 %v2445
        %3058 = vmatpush1.bf16.msra.mxu0 %v2444
        %3059 = vmatprep.subr.bf16.mxu0 %v2449
        %3060 = vmatpush1.bf16.msra.mxu0 %v2448
        %3061 = vmatprep.subr.bf16.mxu0 %v2453
        %3062 = vmatpush1.bf16.msra.mxu0 %v2452
        %3063 = vmatprep.subr.bf16.mxu0 %v2457
        %3064 = vmatpush1.bf16.msra.mxu0 %v2456
        %3065 = vmatprep.subr.bf16.mxu0 %v2461
        %3066 = vmatpush1.bf16.msra.mxu0 %v2460
        %3067 = vmatprep.subr.bf16.mxu0 %v2465
        %3068 = vmatpush1.bf16.msra.mxu0 %v2464
        %3069 = vmatprep.subr.bf16.mxu0 %v2469
        %3070 = vmatpush1.bf16.msra.mxu0 %v2468
        %3071 = vmatprep.subr.bf16.mxu0 %v2473
        %3072 = vmatpush1.bf16.msra.mxu0 %v2472
        %3073 = vmatprep.subr.bf16.mxu0 %v2477
        %3074 = vmatpush1.bf16.msra.mxu0 %v2476
        %3075 = vmatprep.subr.bf16.mxu0 %v2481
        %3076 = vmatpush1.bf16.msra.mxu0 %v2480
        %3077 = vmatprep.subr.bf16.mxu0 %v2485
        %3078 = vmatpush1.bf16.msra.mxu0 %v2484
        %3079 = vmatprep.subr.bf16.mxu0 %v2489
        %3080 = vmatpush1.bf16.msra.mxu0 %v2488
        %3081 = vmatprep.subr.bf16.mxu0 %v2493
        %3082 = vmatpush1.bf16.msra.mxu0 %v2492
        %3083 = vmatprep.mubr.bf16.mxu0 %v1191
        %3084 = vmatmul.mubr.bf16.gmra.mrb[0].mxu0 %v1190
        %v3085 = vpop.f32.mrb[0].mxu0
        %v3086 = vadd.f32 %v3043, %v3085
        %v3087 = vpop.f32.mrb[0].mxu0
        %v3088 = vadd.f32 %v3045, %v3087
        %v3089 = vpop.f32.mrb[0].mxu0
        %v3090 = vadd.f32 %v3047, %v3089
        %v3091 = vpop.f32.mrb[0].mxu0
        %v3092 = vadd.f32 %v3049, %v3091
        %3093 = vdwg.mxu0
        %v3094 = vmax.f32 %v2914, 0.0
        %v3095 = vmax.f32 %v2916, 0.0
        %v3096 = vmax.f32 %v3086, 0.0
        %v3097 = vmax.f32 %v3088, 0.0
        %v3098 = vmax.f32 %v2918, 0.0
        %v3099 = vmax.f32 %v2920, 0.0
        %v3100 = vmax.f32 %v3090, 0.0
        %v3101 = vmax.f32 %v3092, 0.0
        %v3102 = vpack.c.bf16 %v3098, %v3094
        %v3103 = vpack.c.bf16 %v3099, %v3095
        %v3104 = vpack.c.bf16 %v3100, %v3096
        %v3105 = vpack.c.bf16 %v3101, %v3097
        %v3106 = vld [vmem:[#allocation10] sm:$0xf]
        %v3107 = vld [vmem:[#allocation10 + $0x4] sm:$0xf]
        %v3108 = vld [vmem:[#allocation10 + $0x8] sm:$0xf]
        %v3109 = vld [vmem:[#allocation10 + $0xc] sm:$0xf]
        %v3110 = vld [vmem:[#allocation10 + $0x10] sm:$0xf]
        %v3111 = vld [vmem:[#allocation10 + $0x14] sm:$0xf]
        %v3112 = vld [vmem:[#allocation10 + $0x18] sm:$0xf]
        %v3113 = vld [vmem:[#allocation10 + $0x1c] sm:$0xf]
        %v3114 = vld [vmem:[#allocation10 + $0x20] sm:$0xf]
        %v3115 = vld [vmem:[#allocation10 + $0x24] sm:$0xf]
        %v3116 = vld [vmem:[#allocation10 + $0x28] sm:$0xf]
        %v3117 = vld [vmem:[#allocation10 + $0x2c] sm:$0xf]
        %v3118 = vld [vmem:[#allocation10 + $0x30] sm:$0xf]
        %v3119 = vld [vmem:[#allocation10 + $0x34] sm:$0xf]
        %v3120 = vld [vmem:[#allocation10 + $0x38] sm:$0xf]
        %v3121 = vld [vmem:[#allocation10 + $0x3c] sm:$0xf]
        %v3122 = vld [vmem:[#allocation10 + $0x40] sm:$0xf]
        %v3123 = vld [vmem:[#allocation10 + $0x44] sm:$0xf]
        %v3124 = vld [vmem:[#allocation10 + $0x48] sm:$0xf]
        %v3125 = vld [vmem:[#allocation10 + $0x4c] sm:$0xf]
        %v3126 = vld [vmem:[#allocation10 + $0x50] sm:$0xf]
        %v3127 = vld [vmem:[#allocation10 + $0x54] sm:$0xf]
        %v3128 = vld [vmem:[#allocation10 + $0x58] sm:$0xf]
        %v3129 = vld [vmem:[#allocation10 + $0x5c] sm:$0xf]
        %v3130 = vld [vmem:[#allocation10 + $0x60] sm:$0xf]
        %v3131 = vld [vmem:[#allocation10 + $0x64] sm:$0xf]
        %v3132 = vld [vmem:[#allocation10 + $0x68] sm:$0xf]
        %v3133 = vld [vmem:[#allocation10 + $0x6c] sm:$0xf]
        %v3134 = vld [vmem:[#allocation10 + $0x70] sm:$0xf]
        %v3135 = vld [vmem:[#allocation10 + $0x74] sm:$0xf]
        %v3136 = vld [vmem:[#allocation10 + $0x78] sm:$0xf]
        %v3137 = vld [vmem:[#allocation10 + $0x7c] sm:$0xf]
        %v3138 = vld [vmem:[#allocation10 + $0x80] sm:$0xf]
        %v3139 = vld [vmem:[#allocation10 + $0x84] sm:$0xf]
        %v3140 = vld [vmem:[#allocation10 + $0x88] sm:$0xf]
        %v3141 = vld [vmem:[#allocation10 + $0x8c] sm:$0xf]
        %v3142 = vld [vmem:[#allocation10 + $0x90] sm:$0xf]
        %v3143 = vld [vmem:[#allocation10 + $0x94] sm:$0xf]
        %v3144 = vld [vmem:[#allocation10 + $0x98] sm:$0xf]
        %v3145 = vld [vmem:[#allocation10 + $0x9c] sm:$0xf]
        %v3146 = vld [vmem:[#allocation10 + $0xa0] sm:$0xf]
        %v3147 = vld [vmem:[#allocation10 + $0xa4] sm:$0xf]
        %v3148 = vld [vmem:[#allocation10 + $0xa8] sm:$0xf]
        %v3149 = vld [vmem:[#allocation10 + $0xac] sm:$0xf]
        %v3150 = vld [vmem:[#allocation10 + $0xb0] sm:$0xf]
        %v3151 = vld [vmem:[#allocation10 + $0xb4] sm:$0xf]
        %v3152 = vld [vmem:[#allocation10 + $0xb8] sm:$0xf]
        %v3153 = vld [vmem:[#allocation10 + $0xbc] sm:$0xf]
        %v3154 = vld [vmem:[#allocation10 + $0xc0] sm:$0xf]
        %v3155 = vld [vmem:[#allocation10 + $0xc4] sm:$0xf]
        %v3156 = vld [vmem:[#allocation10 + $0xc8] sm:$0xf]
        %v3157 = vld [vmem:[#allocation10 + $0xcc] sm:$0xf]
        %v3158 = vld [vmem:[#allocation10 + $0xd0] sm:$0xf]
        %v3159 = vld [vmem:[#allocation10 + $0xd4] sm:$0xf]
        %v3160 = vld [vmem:[#allocation10 + $0xd8] sm:$0xf]
        %v3161 = vld [vmem:[#allocation10 + $0xdc] sm:$0xf]
        %v3162 = vld [vmem:[#allocation10 + $0xe0] sm:$0xf]
        %v3163 = vld [vmem:[#allocation10 + $0xe4] sm:$0xf]
        %v3164 = vld [vmem:[#allocation10 + $0xe8] sm:$0xf]
        %v3165 = vld [vmem:[#allocation10 + $0xec] sm:$0xf]
        %v3166 = vld [vmem:[#allocation10 + $0xf0] sm:$0xf]
        %v3167 = vld [vmem:[#allocation10 + $0xf4] sm:$0xf]
        %v3168 = vld [vmem:[#allocation10 + $0xf8] sm:$0xf]
        %v3169 = vld [vmem:[#allocation10 + $0xfc] sm:$0xf]
        %v3170 = vld [vmem:[%s6] sm:$0x1]
        %v3172 = vlaneseq
        %v3173 = vshrl.u32 %v3172, 7
        %v3174 = vsub.s32 0, %v3173
        %v3175 = vrot.slane %v3170, %v3174
        %v3241 = vunpack.c.l.b16 %v3106
        %v3242 = vunpack.c.l.b16 %v3107
        %v3243 = vunpack.c.l.b16 %v3108
        %v3244 = vunpack.c.l.b16 %v3109
        %v3245 = vunpack.c.l.b16 %v3110
        %v3246 = vunpack.c.l.b16 %v3111
        %v3247 = vunpack.c.l.b16 %v3112
        %v3248 = vunpack.c.l.b16 %v3113
        %v3249 = vunpack.c.l.b16 %v3114
        %v3250 = vunpack.c.l.b16 %v3115
        %v3251 = vunpack.c.l.b16 %v3116
        %v3252 = vunpack.c.l.b16 %v3117
        %v3253 = vunpack.c.l.b16 %v3118
        %v3254 = vunpack.c.l.b16 %v3119
        %v3255 = vunpack.c.l.b16 %v3120
        %v3256 = vunpack.c.l.b16 %v3121
        %v3257 = vunpack.c.l.b16 %v3122
        %v3258 = vunpack.c.l.b16 %v3123
        %v3259 = vunpack.c.l.b16 %v3124
        %v3260 = vunpack.c.l.b16 %v3125
        %v3261 = vunpack.c.l.b16 %v3126
        %v3262 = vunpack.c.l.b16 %v3127
        %v3263 = vunpack.c.l.b16 %v3128
        %v3264 = vunpack.c.l.b16 %v3129
        %v3265 = vunpack.c.l.b16 %v3130
        %v3266 = vunpack.c.l.b16 %v3131
        %v3267 = vunpack.c.l.b16 %v3132
        %v3268 = vunpack.c.l.b16 %v3133
        %v3269 = vunpack.c.l.b16 %v3134
        %v3270 = vunpack.c.l.b16 %v3135
        %v3271 = vunpack.c.l.b16 %v3136
        %v3272 = vunpack.c.l.b16 %v3137
        %v3273 = vunpack.c.l.b16 %v3138
        %v3274 = vunpack.c.l.b16 %v3139
        %v3275 = vunpack.c.l.b16 %v3140
        %v3276 = vunpack.c.l.b16 %v3141
        %v3277 = vunpack.c.l.b16 %v3142
        %v3278 = vunpack.c.l.b16 %v3143
        %v3279 = vunpack.c.l.b16 %v3144
        %v3280 = vunpack.c.l.b16 %v3145
        %v3281 = vunpack.c.l.b16 %v3146
        %v3282 = vunpack.c.l.b16 %v3147
        %v3283 = vunpack.c.l.b16 %v3148
        %v3284 = vunpack.c.l.b16 %v3149
        %v3285 = vunpack.c.l.b16 %v3150
        %v3286 = vunpack.c.l.b16 %v3151
        %v3287 = vunpack.c.l.b16 %v3152
        %v3288 = vunpack.c.l.b16 %v3153
        %v3289 = vunpack.c.l.b16 %v3154
        %v3290 = vunpack.c.l.b16 %v3155
        %v3291 = vunpack.c.l.b16 %v3156
        %v3292 = vunpack.c.l.b16 %v3157
        %v3293 = vunpack.c.l.b16 %v3158
        %v3294 = vunpack.c.l.b16 %v3159
        %v3295 = vunpack.c.l.b16 %v3160
        %v3296 = vunpack.c.l.b16 %v3161
        %v3297 = vunpack.c.l.b16 %v3162
        %v3298 = vunpack.c.l.b16 %v3163
        %v3299 = vunpack.c.l.b16 %v3164
        %v3300 = vunpack.c.l.b16 %v3165
        %v3301 = vunpack.c.l.b16 %v3166
        %v3302 = vunpack.c.l.b16 %v3167
        %v3303 = vunpack.c.l.b16 %v3168
        %v3304 = vunpack.c.l.b16 %v3169
        %v3305 = vpack.c.b16 %v3242, %v3241
        %v3306 = vpack.c.b16 %v3244, %v3243
        %v3307 = vpack.c.b16 %v3246, %v3245
        %v3308 = vpack.c.b16 %v3248, %v3247
        %v3309 = vpack.c.b16 %v3250, %v3249
        %v3310 = vpack.c.b16 %v3252, %v3251
        %v3311 = vpack.c.b16 %v3254, %v3253
        %v3312 = vpack.c.b16 %v3256, %v3255
        %v3313 = vpack.c.b16 %v3258, %v3257
        %v3314 = vpack.c.b16 %v3260, %v3259
        %v3315 = vpack.c.b16 %v3262, %v3261
        %v3316 = vpack.c.b16 %v3264, %v3263
        %v3317 = vpack.c.b16 %v3266, %v3265
        %v3318 = vpack.c.b16 %v3268, %v3267
        %v3319 = vpack.c.b16 %v3270, %v3269
        %v3320 = vpack.c.b16 %v3272, %v3271
        %v3321 = vpack.c.b16 %v3274, %v3273
        %v3322 = vpack.c.b16 %v3276, %v3275
        %v3323 = vpack.c.b16 %v3278, %v3277
        %v3324 = vpack.c.b16 %v3280, %v3279
        %v3325 = vpack.c.b16 %v3282, %v3281
        %v3326 = vpack.c.b16 %v3284, %v3283
        %v3327 = vpack.c.b16 %v3286, %v3285
        %v3328 = vpack.c.b16 %v3288, %v3287
        %v3329 = vpack.c.b16 %v3290, %v3289
        %v3330 = vpack.c.b16 %v3292, %v3291
        %v3331 = vpack.c.b16 %v3294, %v3293
        %v3332 = vpack.c.b16 %v3296, %v3295
        %v3333 = vpack.c.b16 %v3298, %v3297
        %v3334 = vpack.c.b16 %v3300, %v3299
        %v3335 = vpack.c.b16 %v3302, %v3301
        %v3336 = vpack.c.b16 %v3304, %v3303
        %3369 = vmatprep.subr.bf16.mxu0 0
        %3370 = vmatpush1.bf16.msra.mxu0 %v3305
        %3371 = vmatprep.subr.bf16.mxu0 0
        %3372 = vmatpush1.bf16.msra.mxu0 %v3306
        %3373 = vmatprep.subr.bf16.mxu0 0
        %3374 = vmatpush1.bf16.msra.mxu0 %v3307
        %3375 = vmatprep.subr.bf16.mxu0 0
        %3376 = vmatpush1.bf16.msra.mxu0 %v3308
        %3377 = vmatprep.subr.bf16.mxu0 0
        %3378 = vmatpush1.bf16.msra.mxu0 %v3309
        %3379 = vmatprep.subr.bf16.mxu0 0
        %3380 = vmatpush1.bf16.msra.mxu0 %v3310
        %3381 = vmatprep.subr.bf16.mxu0 0
        %3382 = vmatpush1.bf16.msra.mxu0 %v3311
        %3383 = vmatprep.subr.bf16.mxu0 0
        %3384 = vmatpush1.bf16.msra.mxu0 %v3312
        %3385 = vmatprep.subr.bf16.mxu0 0
        %3386 = vmatpush1.bf16.msra.mxu0 %v3313
        %3387 = vmatprep.subr.bf16.mxu0 0
        %3388 = vmatpush1.bf16.msra.mxu0 %v3314
        %3389 = vmatprep.subr.bf16.mxu0 0
        %3390 = vmatpush1.bf16.msra.mxu0 %v3315
        %3391 = vmatprep.subr.bf16.mxu0 0
        %3392 = vmatpush1.bf16.msra.mxu0 %v3316
        %3393 = vmatprep.subr.bf16.mxu0 0
        %3394 = vmatpush1.bf16.msra.mxu0 %v3317
        %3395 = vmatprep.subr.bf16.mxu0 0
        %3396 = vmatpush1.bf16.msra.mxu0 %v3318
        %3397 = vmatprep.subr.bf16.mxu0 0
        %3398 = vmatpush1.bf16.msra.mxu0 %v3319
        %3399 = vmatprep.subr.bf16.mxu0 0
        %3400 = vmatpush1.bf16.msra.mxu0 %v3320
        %3401 = vmatprep.mubr.bf16.mxu0 %v3103
        %3402 = vmatmul.mubr.bf16.gmra.mrb[0].mxu0 %v3102
        %v3403 = vpop.f32.mrb[0].mxu0
        %v3404 = vadd.f32 %v3175, %v3403
        %v3405 = vpop.f32.mrb[0].mxu0
        %v3406 = vpop.f32.mrb[0].mxu0
        %v3407 = vadd.f32 %v3175, %v3406
        %v3408 = vpop.f32.mrb[0].mxu0
        %3409 = vdwg.mxu0
        %3410 = vmatprep.subr.bf16.mxu0 0
        %3411 = vmatpush1.bf16.msra.mxu0 %v3321
        %3412 = vmatprep.subr.bf16.mxu0 0
        %3413 = vmatpush1.bf16.msra.mxu0 %v3322
        %3414 = vmatprep.subr.bf16.mxu0 0
        %3415 = vmatpush1.bf16.msra.mxu0 %v3323
        %3416 = vmatprep.subr.bf16.mxu0 0
        %3417 = vmatpush1.bf16.msra.mxu0 %v3324
        %3418 = vmatprep.subr.bf16.mxu0 0
        %3419 = vmatpush1.bf16.msra.mxu0 %v3325
        %3420 = vmatprep.subr.bf16.mxu0 0
        %3421 = vmatpush1.bf16.msra.mxu0 %v3326
        %3422 = vmatprep.subr.bf16.mxu0 0
        %3423 = vmatpush1.bf16.msra.mxu0 %v3327
        %3424 = vmatprep.subr.bf16.mxu0 0
        %3425 = vmatpush1.bf16.msra.mxu0 %v3328
        %3426 = vmatprep.subr.bf16.mxu0 0
        %3427 = vmatpush1.bf16.msra.mxu0 %v3329
        %3428 = vmatprep.subr.bf16.mxu0 0
        %3429 = vmatpush1.bf16.msra.mxu0 %v3330
        %3430 = vmatprep.subr.bf16.mxu0 0
        %3431 = vmatpush1.bf16.msra.mxu0 %v3331
        %3432 = vmatprep.subr.bf16.mxu0 0
        %3433 = vmatpush1.bf16.msra.mxu0 %v3332
        %3434 = vmatprep.subr.bf16.mxu0 0
        %3435 = vmatpush1.bf16.msra.mxu0 %v3333
        %3436 = vmatprep.subr.bf16.mxu0 0
        %3437 = vmatpush1.bf16.msra.mxu0 %v3334
        %3438 = vmatprep.subr.bf16.mxu0 0
        %3439 = vmatpush1.bf16.msra.mxu0 %v3335
        %3440 = vmatprep.subr.bf16.mxu0 0
        %3441 = vmatpush1.bf16.msra.mxu0 %v3336
        %3442 = vmatprep.mubr.bf16.mxu0 %v3105
        %3443 = vmatmul.mubr.bf16.gmra.mrb[0].mxu0 %v3104
        %v3444 = vpop.f32.mrb[0].mxu0
        %v3445 = vadd.f32 %v3404, %v3444
        %v3446 = vpop.f32.mrb[0].mxu0
        %v3447 = vpop.f32.mrb[0].mxu0
        %v3448 = vadd.f32 %v3407, %v3447
        %v3449 = vpop.f32.mrb[0].mxu0
        %3450 = vdwg.mxu0
        %v3451 = vmax.f32 %v3445, 0.0
        %v3452 = vmax.f32 %v3448, 0.0
        %v3453 = vpack.c.bf16 %v3452, %v3451
        %v3454 = vld [vmem:[#allocation11] sm:$0xff]
        %v3455 = vld [vmem:[#allocation11 + $0x8] sm:$0xff]
        %v3456 = vld [vmem:[#allocation11 + $0x10] sm:$0xff]
        %v3457 = vld [vmem:[#allocation11 + $0x18] sm:$0xff]
        %v3458 = vld [vmem:[#allocation11 + $0x20] sm:$0xff]
        %v3459 = vld [vmem:[#allocation11 + $0x28] sm:$0xff]
        %v3460 = vld [vmem:[#allocation11 + $0x30] sm:$0xff]
        %v3461 = vld [vmem:[#allocation11 + $0x38] sm:$0xff]
        %v3462 = vld [vmem:[#allocation11 + $0x40] sm:$0xff]
        %v3463 = vld [vmem:[#allocation11 + $0x48] sm:$0xff]
        %v3464 = vld [vmem:[#allocation11 + $0x50] sm:$0xff]
        %v3465 = vld [vmem:[#allocation11 + $0x58] sm:$0xff]
        %v3466 = vld [vmem:[#allocation11 + $0x60] sm:$0xff]
        %v3467 = vld [vmem:[#allocation11 + $0x68] sm:$0xff]
        %v3468 = vld [vmem:[#allocation11 + $0x70] sm:$0xff]
        %v3469 = vld [vmem:[#allocation11 + $0x78] sm:$0xff]
        %v3470 = vld [vmem:[#allocation11 + $0x80] sm:$0xff]
        %v3471 = vld [vmem:[#allocation11 + $0x88] sm:$0xff]
        %v3472 = vld [vmem:[#allocation11 + $0x90] sm:$0xff]
        %v3473 = vld [vmem:[#allocation11 + $0x98] sm:$0xff]
        %v3474 = vld [vmem:[#allocation11 + $0xa0] sm:$0xff]
        %v3475 = vld [vmem:[#allocation11 + $0xa8] sm:$0xff]
        %v3476 = vld [vmem:[#allocation11 + $0xb0] sm:$0xff]
        %v3477 = vld [vmem:[#allocation11 + $0xb8] sm:$0xff]
        %v3478 = vld [vmem:[#allocation11 + $0xc0] sm:$0xff]
        %v3479 = vld [vmem:[#allocation11 + $0xc8] sm:$0xff]
        %v3480 = vld [vmem:[#allocation11 + $0xd0] sm:$0xff]
        %v3481 = vld [vmem:[#allocation11 + $0xd8] sm:$0xff]
        %v3482 = vld [vmem:[#allocation11 + $0xe0] sm:$0xff]
        %v3483 = vld [vmem:[#allocation11 + $0xe8] sm:$0xff]
        %v3484 = vld [vmem:[#allocation11 + $0xf0] sm:$0xff]
        %v3485 = vld [vmem:[#allocation11 + $0xf8] sm:$0xff]
        %v3486 = vld [vmem:[%s8] sm:$0xf]
        %v3488 = vlaneseq
        %v3489 = vshrl.u32 %v3488, 7
        %v3490 = vsub.s32 0, %v3489
        %v3491 = vrot.slane %v3486, %v3490
        %v3492 = vlaneseq
        %v3493 = vshrl.u32 %v3492, 7
        %v3494 = vsub.s32 1, %v3493
        %v3495 = vrot.slane %v3486, %v3494
        %v3496 = vlaneseq
        %v3497 = vshrl.u32 %v3496, 7
        %v3498 = vsub.s32 2, %v3497
        %v3499 = vrot.slane %v3486, %v3498
        %v3500 = vlaneseq
        %v3501 = vshrl.u32 %v3500, 7
        %v3502 = vsub.s32 3, %v3501
        %v3503 = vrot.slane %v3486, %v3502
        %v3540 = vunpack.c.l.b16 %v3454
        %v3541 = vunpack.c.h.b16 %v3454
        %v3542 = vunpack.c.l.b16 %v3455
        %v3543 = vunpack.c.h.b16 %v3455
        %v3544 = vunpack.c.l.b16 %v3456
        %v3545 = vunpack.c.h.b16 %v3456
        %v3546 = vunpack.c.l.b16 %v3457
        %v3547 = vunpack.c.h.b16 %v3457
        %v3548 = vunpack.c.l.b16 %v3458
        %v3549 = vunpack.c.h.b16 %v3458
        %v3550 = vunpack.c.l.b16 %v3459
        %v3551 = vunpack.c.h.b16 %v3459
        %v3552 = vunpack.c.l.b16 %v3460
        %v3553 = vunpack.c.h.b16 %v3460
        %v3554 = vunpack.c.l.b16 %v3461
        %v3555 = vunpack.c.h.b16 %v3461
        %v3556 = vunpack.c.l.b16 %v3462
        %v3557 = vunpack.c.h.b16 %v3462
        %v3558 = vunpack.c.l.b16 %v3463
        %v3559 = vunpack.c.h.b16 %v3463
        %v3560 = vunpack.c.l.b16 %v3464
        %v3561 = vunpack.c.h.b16 %v3464
        %v3562 = vunpack.c.l.b16 %v3465
        %v3563 = vunpack.c.h.b16 %v3465
        %v3564 = vunpack.c.l.b16 %v3466
        %v3565 = vunpack.c.h.b16 %v3466
        %v3566 = vunpack.c.l.b16 %v3467
        %v3567 = vunpack.c.h.b16 %v3467
        %v3568 = vunpack.c.l.b16 %v3468
        %v3569 = vunpack.c.h.b16 %v3468
        %v3570 = vunpack.c.l.b16 %v3469
        %v3571 = vunpack.c.h.b16 %v3469
        %v3572 = vunpack.c.l.b16 %v3470
        %v3573 = vunpack.c.h.b16 %v3470
        %v3574 = vunpack.c.l.b16 %v3471
        %v3575 = vunpack.c.h.b16 %v3471
        %v3576 = vunpack.c.l.b16 %v3472
        %v3577 = vunpack.c.h.b16 %v3472
        %v3578 = vunpack.c.l.b16 %v3473
        %v3579 = vunpack.c.h.b16 %v3473
        %v3580 = vunpack.c.l.b16 %v3474
        %v3581 = vunpack.c.h.b16 %v3474
        %v3582 = vunpack.c.l.b16 %v3475
        %v3583 = vunpack.c.h.b16 %v3475
        %v3584 = vunpack.c.l.b16 %v3476
        %v3585 = vunpack.c.h.b16 %v3476
        %v3586 = vunpack.c.l.b16 %v3477
        %v3587 = vunpack.c.h.b16 %v3477
        %v3588 = vunpack.c.l.b16 %v3478
        %v3589 = vunpack.c.h.b16 %v3478
        %v3590 = vunpack.c.l.b16 %v3479
        %v3591 = vunpack.c.h.b16 %v3479
        %v3592 = vunpack.c.l.b16 %v3480
        %v3593 = vunpack.c.h.b16 %v3480
        %v3594 = vunpack.c.l.b16 %v3481
        %v3595 = vunpack.c.h.b16 %v3481
        %v3596 = vunpack.c.l.b16 %v3482
        %v3597 = vunpack.c.h.b16 %v3482
        %v3598 = vunpack.c.l.b16 %v3483
        %v3599 = vunpack.c.h.b16 %v3483
        %v3600 = vunpack.c.l.b16 %v3484
        %v3601 = vunpack.c.h.b16 %v3484
        %v3602 = vunpack.c.l.b16 %v3485
        %v3603 = vunpack.c.h.b16 %v3485
        %v3604 = vpack.c.b16 %v3544, %v3540
        %v3605 = vpack.c.b16 %v3545, %v3541
        %v3606 = vpack.c.b16 %v3546, %v3542
        %v3607 = vpack.c.b16 %v3547, %v3543
        %v3608 = vpack.c.b16 %v3552, %v3548
        %v3609 = vpack.c.b16 %v3553, %v3549
        %v3610 = vpack.c.b16 %v3554, %v3550
        %v3611 = vpack.c.b16 %v3555, %v3551
        %v3612 = vpack.c.b16 %v3560, %v3556
        %v3613 = vpack.c.b16 %v3561, %v3557
        %v3614 = vpack.c.b16 %v3562, %v3558
        %v3615 = vpack.c.b16 %v3563, %v3559
        %v3616 = vpack.c.b16 %v3568, %v3564
        %v3617 = vpack.c.b16 %v3569, %v3565
        %v3618 = vpack.c.b16 %v3570, %v3566
        %v3619 = vpack.c.b16 %v3571, %v3567
        %v3620 = vpack.c.b16 %v3576, %v3572
        %v3621 = vpack.c.b16 %v3577, %v3573
        %v3622 = vpack.c.b16 %v3578, %v3574
        %v3623 = vpack.c.b16 %v3579, %v3575
        %v3624 = vpack.c.b16 %v3584, %v3580
        %v3625 = vpack.c.b16 %v3585, %v3581
        %v3626 = vpack.c.b16 %v3586, %v3582
        %v3627 = vpack.c.b16 %v3587, %v3583
        %v3628 = vpack.c.b16 %v3592, %v3588
        %v3629 = vpack.c.b16 %v3593, %v3589
        %v3630 = vpack.c.b16 %v3594, %v3590
        %v3631 = vpack.c.b16 %v3595, %v3591
        %v3632 = vpack.c.b16 %v3600, %v3596
        %v3633 = vpack.c.b16 %v3601, %v3597
        %v3634 = vpack.c.b16 %v3602, %v3598
        %v3635 = vpack.c.b16 %v3603, %v3599
        %3668 = vmatprep.subr.bf16.mxu0 %v3605
        %3669 = vmatpush1.bf16.msra.mxu0 %v3604
        %3670 = vmatprep.subr.bf16.mxu0 %v3609
        %3671 = vmatpush1.bf16.msra.mxu0 %v3608
        %3672 = vmatprep.subr.bf16.mxu0 %v3613
        %3673 = vmatpush1.bf16.msra.mxu0 %v3612
        %3674 = vmatprep.subr.bf16.mxu0 %v3617
        %3675 = vmatpush1.bf16.msra.mxu0 %v3616
        %3676 = vmatprep.subr.bf16.mxu0 %v3621
        %3677 = vmatpush1.bf16.msra.mxu0 %v3620
        %3678 = vmatprep.subr.bf16.mxu0 %v3625
        %3679 = vmatpush1.bf16.msra.mxu0 %v3624
        %3680 = vmatprep.subr.bf16.mxu0 %v3629
        %3681 = vmatpush1.bf16.msra.mxu0 %v3628
        %3682 = vmatprep.subr.bf16.mxu0 %v3633
        %3683 = vmatpush1.bf16.msra.mxu0 %v3632
        %3684 = vmatprep.subr.bf16.mxu0 0
        %3685 = vmatpush1.bf16.msra.mxu0 0
        %3686 = vmatprep.subr.bf16.mxu0 0
        %3687 = vmatpush1.bf16.msra.mxu0 0
        %3688 = vmatprep.subr.bf16.mxu0 0
        %3689 = vmatpush1.bf16.msra.mxu0 0
        %3690 = vmatprep.subr.bf16.mxu0 0
        %3691 = vmatpush1.bf16.msra.mxu0 0
        %3692 = vmatprep.subr.bf16.mxu0 0
        %3693 = vmatpush1.bf16.msra.mxu0 0
        %3694 = vmatprep.subr.bf16.mxu0 0
        %3695 = vmatpush1.bf16.msra.mxu0 0
        %3696 = vmatprep.subr.bf16.mxu0 0
        %3697 = vmatpush1.bf16.msra.mxu0 0
        %3698 = vmatprep.subr.bf16.mxu0 0
        %3699 = vmatpush1.bf16.msra.mxu0 0
        %3700 = vmatprep.mubr.bf16.mxu0 0
        %3701 = vmatmul.mubr.bf16.gmra.mrb[0].mxu0 %v3453
        %v3702 = vpop.f32.mrb[0].mxu0
        %v3703 = vadd.f32 %v3491, %v3702
        %v3704 = vpop.f32.mrb[0].mxu0
        %v3705 = vadd.f32 %v3495, %v3704
        %v3706 = vpop.f32.mrb[0].mxu0
        %v3707 = vadd.f32 %v3491, %v3706
        %v3708 = vpop.f32.mrb[0].mxu0
        %v3709 = vadd.f32 %v3495, %v3708
        %3710 = vdwg.mxu0
        %3711 = vmatprep.subr.bf16.mxu0 %v3607
        %3712 = vmatpush1.bf16.msra.mxu0 %v3606
        %3713 = vmatprep.subr.bf16.mxu0 %v3611
        %3714 = vmatpush1.bf16.msra.mxu0 %v3610
        %3715 = vmatprep.subr.bf16.mxu0 %v3615
        %3716 = vmatpush1.bf16.msra.mxu0 %v3614
        %3717 = vmatprep.subr.bf16.mxu0 %v3619
        %3718 = vmatpush1.bf16.msra.mxu0 %v3618
        %3719 = vmatprep.subr.bf16.mxu0 %v3623
        %3720 = vmatpush1.bf16.msra.mxu0 %v3622
        %3721 = vmatprep.subr.bf16.mxu0 %v3627
        %3722 = vmatpush1.bf16.msra.mxu0 %v3626
        %3723 = vmatprep.subr.bf16.mxu0 %v3631
        %3724 = vmatpush1.bf16.msra.mxu0 %v3630
        %3725 = vmatprep.subr.bf16.mxu0 %v3635
        %3726 = vmatpush1.bf16.msra.mxu0 %v3634
        %3727 = vmatprep.subr.bf16.mxu0 0
        %3728 = vmatpush1.bf16.msra.mxu0 0
        %3729 = vmatprep.subr.bf16.mxu0 0
        %3730 = vmatpush1.bf16.msra.mxu0 0
        %3731 = vmatprep.subr.bf16.mxu0 0
        %3732 = vmatpush1.bf16.msra.mxu0 0
        %3733 = vmatprep.subr.bf16.mxu0 0
        %3734 = vmatpush1.bf16.msra.mxu0 0
        %3735 = vmatprep.subr.bf16.mxu0 0
        %3736 = vmatpush1.bf16.msra.mxu0 0
        %3737 = vmatprep.subr.bf16.mxu0 0
        %3738 = vmatpush1.bf16.msra.mxu0 0
        %3739 = vmatprep.subr.bf16.mxu0 0
        %3740 = vmatpush1.bf16.msra.mxu0 0
        %3741 = vmatprep.subr.bf16.mxu0 0
        %3742 = vmatpush1.bf16.msra.mxu0 0
        %3743 = vmatprep.mubr.bf16.mxu0 0
        %3744 = vmatmul.mubr.bf16.gmra.mrb[0].mxu0 %v3453
        %v3745 = vpop.f32.mrb[0].mxu0
        %v3746 = vadd.f32 %v3499, %v3745
        %v3747 = vpop.f32.mrb[0].mxu0
        %v3748 = vadd.f32 %v3503, %v3747
        %v3749 = vpop.f32.mrb[0].mxu0
        %v3750 = vadd.f32 %v3499, %v3749
        %v3751 = vpop.f32.mrb[0].mxu0
        %v3752 = vadd.f32 %v3503, %v3751
        %3753 = vdwg.mxu0
        %v3754 = vmax.f32 %v3703, 0.0
        %v3755 = vmax.f32 %v3705, 0.0
        %v3756 = vmax.f32 %v3746, 0.0
        %v3757 = vmax.f32 %v3748, 0.0
        %v3758 = vmax.f32 %v3707, 0.0
        %v3759 = vmax.f32 %v3709, 0.0
        %v3760 = vmax.f32 %v3750, 0.0
        %v3761 = vmax.f32 %v3752, 0.0
        %v3762 = vpack.c.bf16 %v3758, %v3754
        %v3763 = vpack.c.bf16 %v3759, %v3755
        %v3764 = vpack.c.bf16 %v3760, %v3756
        %v3765 = vpack.c.bf16 %v3761, %v3757
        %v3766 = vld [vmem:[#allocation13] sm:$0xff]
        %v3767 = vld [vmem:[#allocation13 + $0x8] sm:$0xff]
        %v3768 = vld [vmem:[#allocation13 + $0x10] sm:$0xff]
        %v3769 = vld [vmem:[#allocation13 + $0x18] sm:$0xff]
        %v3770 = vld [vmem:[#allocation13 + $0x20] sm:$0xff]
        %v3771 = vld [vmem:[#allocation13 + $0x28] sm:$0xff]
        %v3772 = vld [vmem:[#allocation13 + $0x30] sm:$0xff]
        %v3773 = vld [vmem:[#allocation13 + $0x38] sm:$0xff]
        %v3774 = vld [vmem:[#allocation13 + $0x40] sm:$0xff]
        %v3775 = vld [vmem:[#allocation13 + $0x48] sm:$0xff]
        %v3776 = vld [vmem:[#allocation13 + $0x50] sm:$0xff]
        %v3777 = vld [vmem:[#allocation13 + $0x58] sm:$0xff]
        %v3778 = vld [vmem:[#allocation13 + $0x60] sm:$0xff]
        %v3779 = vld [vmem:[#allocation13 + $0x68] sm:$0xff]
        %v3780 = vld [vmem:[#allocation13 + $0x70] sm:$0xff]
        %v3781 = vld [vmem:[#allocation13 + $0x78] sm:$0xff]
        %v3782 = vld [vmem:[#allocation13 + $0x80] sm:$0xff]
        %v3783 = vld [vmem:[#allocation13 + $0x88] sm:$0xff]
        %v3784 = vld [vmem:[#allocation13 + $0x90] sm:$0xff]
        %v3785 = vld [vmem:[#allocation13 + $0x98] sm:$0xff]
        %v3786 = vld [vmem:[#allocation13 + $0xa0] sm:$0xff]
        %v3787 = vld [vmem:[#allocation13 + $0xa8] sm:$0xff]
        %v3788 = vld [vmem:[#allocation13 + $0xb0] sm:$0xff]
        %v3789 = vld [vmem:[#allocation13 + $0xb8] sm:$0xff]
        %v3790 = vld [vmem:[#allocation13 + $0xc0] sm:$0xff]
        %v3791 = vld [vmem:[#allocation13 + $0xc8] sm:$0xff]
        %v3792 = vld [vmem:[#allocation13 + $0xd0] sm:$0xff]
        %v3793 = vld [vmem:[#allocation13 + $0xd8] sm:$0xff]
        %v3794 = vld [vmem:[#allocation13 + $0xe0] sm:$0xff]
        %v3795 = vld [vmem:[#allocation13 + $0xe8] sm:$0xff]
        %v3796 = vld [vmem:[#allocation13 + $0xf0] sm:$0xff]
        %v3797 = vld [vmem:[#allocation13 + $0xf8] sm:$0xff]
        %v3798 = vld [vmem:[#allocation13 + $0x100] sm:$0xff]
        %v3799 = vld [vmem:[#allocation13 + $0x108] sm:$0xff]
        %v3800 = vld [vmem:[#allocation13 + $0x110] sm:$0xff]
        %v3801 = vld [vmem:[#allocation13 + $0x118] sm:$0xff]
        %v3802 = vld [vmem:[#allocation13 + $0x120] sm:$0xff]
        %v3803 = vld [vmem:[#allocation13 + $0x128] sm:$0xff]
        %v3804 = vld [vmem:[#allocation13 + $0x130] sm:$0xff]
        %v3805 = vld [vmem:[#allocation13 + $0x138] sm:$0xff]
        %v3806 = vld [vmem:[#allocation13 + $0x140] sm:$0xff]
        %v3807 = vld [vmem:[#allocation13 + $0x148] sm:$0xff]
        %v3808 = vld [vmem:[#allocation13 + $0x150] sm:$0xff]
        %v3809 = vld [vmem:[#allocation13 + $0x158] sm:$0xff]
        %v3810 = vld [vmem:[#allocation13 + $0x160] sm:$0xff]
        %v3811 = vld [vmem:[#allocation13 + $0x168] sm:$0xff]
        %v3812 = vld [vmem:[#allocation13 + $0x170] sm:$0xff]
        %v3813 = vld [vmem:[#allocation13 + $0x178] sm:$0xff]
        %v3814 = vld [vmem:[#allocation13 + $0x180] sm:$0xff]
        %v3815 = vld [vmem:[#allocation13 + $0x188] sm:$0xff]
        %v3816 = vld [vmem:[#allocation13 + $0x190] sm:$0xff]
        %v3817 = vld [vmem:[#allocation13 + $0x198] sm:$0xff]
        %v3818 = vld [vmem:[#allocation13 + $0x1a0] sm:$0xff]
        %v3819 = vld [vmem:[#allocation13 + $0x1a8] sm:$0xff]
        %v3820 = vld [vmem:[#allocation13 + $0x1b0] sm:$0xff]
        %v3821 = vld [vmem:[#allocation13 + $0x1b8] sm:$0xff]
        %v3822 = vld [vmem:[#allocation13 + $0x1c0] sm:$0xff]
        %v3823 = vld [vmem:[#allocation13 + $0x1c8] sm:$0xff]
        %v3824 = vld [vmem:[#allocation13 + $0x1d0] sm:$0xff]
        %v3825 = vld [vmem:[#allocation13 + $0x1d8] sm:$0xff]
        %v3826 = vld [vmem:[#allocation13 + $0x1e0] sm:$0xff]
        %v3827 = vld [vmem:[#allocation13 + $0x1e8] sm:$0xff]
        %v3828 = vld [vmem:[#allocation13 + $0x1f0] sm:$0xff]
        %v3829 = vld [vmem:[#allocation13 + $0x1f8] sm:$0xff]
        %v3830 = vld [vmem:[#allocation13 + $0x200] sm:$0xff]
        %v3831 = vld [vmem:[#allocation13 + $0x208] sm:$0xff]
        %v3832 = vld [vmem:[#allocation13 + $0x210] sm:$0xff]
        %v3833 = vld [vmem:[#allocation13 + $0x218] sm:$0xff]
        %v3834 = vld [vmem:[#allocation13 + $0x220] sm:$0xff]
        %v3835 = vld [vmem:[#allocation13 + $0x228] sm:$0xff]
        %v3836 = vld [vmem:[#allocation13 + $0x230] sm:$0xff]
        %v3837 = vld [vmem:[#allocation13 + $0x238] sm:$0xff]
        %v3838 = vld [vmem:[#allocation13 + $0x240] sm:$0xff]
        %v3839 = vld [vmem:[#allocation13 + $0x248] sm:$0xff]
        %v3840 = vld [vmem:[#allocation13 + $0x250] sm:$0xff]
        %v3841 = vld [vmem:[#allocation13 + $0x258] sm:$0xff]
        %v3842 = vld [vmem:[#allocation13 + $0x260] sm:$0xff]
        %v3843 = vld [vmem:[#allocation13 + $0x268] sm:$0xff]
        %v3844 = vld [vmem:[#allocation13 + $0x270] sm:$0xff]
        %v3845 = vld [vmem:[#allocation13 + $0x278] sm:$0xff]
        %v3846 = vld [vmem:[#allocation13 + $0x280] sm:$0xff]
        %v3847 = vld [vmem:[#allocation13 + $0x288] sm:$0xff]
        %v3848 = vld [vmem:[#allocation13 + $0x290] sm:$0xff]
        %v3849 = vld [vmem:[#allocation13 + $0x298] sm:$0xff]
        %v3850 = vld [vmem:[#allocation13 + $0x2a0] sm:$0xff]
        %v3851 = vld [vmem:[#allocation13 + $0x2a8] sm:$0xff]
        %v3852 = vld [vmem:[#allocation13 + $0x2b0] sm:$0xff]
        %v3853 = vld [vmem:[#allocation13 + $0x2b8] sm:$0xff]
        %v3854 = vld [vmem:[#allocation13 + $0x2c0] sm:$0xff]
        %v3855 = vld [vmem:[#allocation13 + $0x2c8] sm:$0xff]
        %v3856 = vld [vmem:[#allocation13 + $0x2d0] sm:$0xff]
        %v3857 = vld [vmem:[#allocation13 + $0x2d8] sm:$0xff]
        %v3858 = vld [vmem:[#allocation13 + $0x2e0] sm:$0xff]
        %v3859 = vld [vmem:[#allocation13 + $0x2e8] sm:$0xff]
        %v3860 = vld [vmem:[#allocation13 + $0x2f0] sm:$0xff]
        %v3861 = vld [vmem:[#allocation13 + $0x2f8] sm:$0xff]
        %v3862 = vld [vmem:[#allocation13 + $0x300] sm:$0xff]
        %v3863 = vld [vmem:[#allocation13 + $0x308] sm:$0xff]
        %v3864 = vld [vmem:[#allocation13 + $0x310] sm:$0xff]
        %v3865 = vld [vmem:[#allocation13 + $0x318] sm:$0xff]
        %v3866 = vld [vmem:[#allocation13 + $0x320] sm:$0xff]
        %v3867 = vld [vmem:[#allocation13 + $0x328] sm:$0xff]
        %v3868 = vld [vmem:[#allocation13 + $0x330] sm:$0xff]
        %v3869 = vld [vmem:[#allocation13 + $0x338] sm:$0xff]
        %v3870 = vld [vmem:[#allocation13 + $0x340] sm:$0xff]
        %v3871 = vld [vmem:[#allocation13 + $0x348] sm:$0xff]
        %v3872 = vld [vmem:[#allocation13 + $0x350] sm:$0xff]
        %v3873 = vld [vmem:[#allocation13 + $0x358] sm:$0xff]
        %v3874 = vld [vmem:[#allocation13 + $0x360] sm:$0xff]
        %v3875 = vld [vmem:[#allocation13 + $0x368] sm:$0xff]
        %v3876 = vld [vmem:[#allocation13 + $0x370] sm:$0xff]
        %v3877 = vld [vmem:[#allocation13 + $0x378] sm:$0xff]
        %v3878 = vld [vmem:[#allocation13 + $0x380] sm:$0xff]
        %v3879 = vld [vmem:[#allocation13 + $0x388] sm:$0xff]
        %v3880 = vld [vmem:[#allocation13 + $0x390] sm:$0xff]
        %v3881 = vld [vmem:[#allocation13 + $0x398] sm:$0xff]
        %v3882 = vld [vmem:[#allocation13 + $0x3a0] sm:$0xff]
        %v3883 = vld [vmem:[#allocation13 + $0x3a8] sm:$0xff]
        %v3884 = vld [vmem:[#allocation13 + $0x3b0] sm:$0xff]
        %v3885 = vld [vmem:[#allocation13 + $0x3b8] sm:$0xff]
        %v3886 = vld [vmem:[#allocation13 + $0x3c0] sm:$0xff]
        %v3887 = vld [vmem:[#allocation13 + $0x3c8] sm:$0xff]
        %v3888 = vld [vmem:[#allocation13 + $0x3d0] sm:$0xff]
        %v3889 = vld [vmem:[#allocation13 + $0x3d8] sm:$0xff]
        %v3890 = vld [vmem:[#allocation13 + $0x3e0] sm:$0xff]
        %v3891 = vld [vmem:[#allocation13 + $0x3e8] sm:$0xff]
        %v3892 = vld [vmem:[#allocation13 + $0x3f0] sm:$0xff]
        %v3893 = vld [vmem:[#allocation13 + $0x3f8] sm:$0xff]
        %v3894 = vld [vmem:[#allocation13 + $0x400] sm:$0xff]
        %v3895 = vld [vmem:[#allocation13 + $0x408] sm:$0xff]
        %v3896 = vld [vmem:[#allocation13 + $0x410] sm:$0xff]
        %v3897 = vld [vmem:[#allocation13 + $0x418] sm:$0xff]
        %v3898 = vld [vmem:[#allocation13 + $0x420] sm:$0xff]
        %v3899 = vld [vmem:[#allocation13 + $0x428] sm:$0xff]
        %v3900 = vld [vmem:[#allocation13 + $0x430] sm:$0xff]
        %v3901 = vld [vmem:[#allocation13 + $0x438] sm:$0xff]
        %v3902 = vld [vmem:[#allocation13 + $0x440] sm:$0xff]
        %v3903 = vld [vmem:[#allocation13 + $0x448] sm:$0xff]
        %v3904 = vld [vmem:[#allocation13 + $0x450] sm:$0xff]
        %v3905 = vld [vmem:[#allocation13 + $0x458] sm:$0xff]
        %v3906 = vld [vmem:[#allocation13 + $0x460] sm:$0xff]
        %v3907 = vld [vmem:[#allocation13 + $0x468] sm:$0xff]
        %v3908 = vld [vmem:[#allocation13 + $0x470] sm:$0xff]
        %v3909 = vld [vmem:[#allocation13 + $0x478] sm:$0xff]
        %v3910 = vld [vmem:[#allocation13 + $0x480] sm:$0xff]
        %v3911 = vld [vmem:[#allocation13 + $0x488] sm:$0xff]
        %v3912 = vld [vmem:[#allocation13 + $0x490] sm:$0xff]
        %v3913 = vld [vmem:[#allocation13 + $0x498] sm:$0xff]
        %v3914 = vld [vmem:[#allocation13 + $0x4a0] sm:$0xff]
        %v3915 = vld [vmem:[#allocation13 + $0x4a8] sm:$0xff]
        %v3916 = vld [vmem:[#allocation13 + $0x4b0] sm:$0xff]
        %v3917 = vld [vmem:[#allocation13 + $0x4b8] sm:$0xff]
        %v3918 = vld [vmem:[#allocation13 + $0x4c0] sm:$0xff]
        %v3919 = vld [vmem:[#allocation13 + $0x4c8] sm:$0xff]
        %v3920 = vld [vmem:[#allocation13 + $0x4d0] sm:$0xff]
        %v3921 = vld [vmem:[#allocation13 + $0x4d8] sm:$0xff]
        %v3922 = vld [vmem:[#allocation13 + $0x4e0] sm:$0xff]
        %v3923 = vld [vmem:[#allocation13 + $0x4e8] sm:$0xff]
        %v3924 = vld [vmem:[#allocation13 + $0x4f0] sm:$0xff]
        %v3925 = vld [vmem:[#allocation13 + $0x4f8] sm:$0xff]
        %v3926 = vld [vmem:[#allocation13 + $0x500] sm:$0xff]
        %v3927 = vld [vmem:[#allocation13 + $0x508] sm:$0xff]
        %v3928 = vld [vmem:[#allocation13 + $0x510] sm:$0xff]
        %v3929 = vld [vmem:[#allocation13 + $0x518] sm:$0xff]
        %v3930 = vld [vmem:[#allocation13 + $0x520] sm:$0xff]
        %v3931 = vld [vmem:[#allocation13 + $0x528] sm:$0xff]
        %v3932 = vld [vmem:[#allocation13 + $0x530] sm:$0xff]
        %v3933 = vld [vmem:[#allocation13 + $0x538] sm:$0xff]
        %v3934 = vld [vmem:[#allocation13 + $0x540] sm:$0xff]
        %v3935 = vld [vmem:[#allocation13 + $0x548] sm:$0xff]
        %v3936 = vld [vmem:[#allocation13 + $0x550] sm:$0xff]
        %v3937 = vld [vmem:[#allocation13 + $0x558] sm:$0xff]
        %v3938 = vld [vmem:[#allocation13 + $0x560] sm:$0xff]
        %v3939 = vld [vmem:[#allocation13 + $0x568] sm:$0xff]
        %v3940 = vld [vmem:[#allocation13 + $0x570] sm:$0xff]
        %v3941 = vld [vmem:[#allocation13 + $0x578] sm:$0xff]
        %v3942 = vld [vmem:[#allocation13 + $0x580] sm:$0xff]
        %v3943 = vld [vmem:[#allocation13 + $0x588] sm:$0xff]
        %v3944 = vld [vmem:[#allocation13 + $0x590] sm:$0xff]
        %v3945 = vld [vmem:[#allocation13 + $0x598] sm:$0xff]
        %v3946 = vld [vmem:[#allocation13 + $0x5a0] sm:$0xff]
        %v3947 = vld [vmem:[#allocation13 + $0x5a8] sm:$0xff]
        %v3948 = vld [vmem:[#allocation13 + $0x5b0] sm:$0xff]
        %v3949 = vld [vmem:[#allocation13 + $0x5b8] sm:$0xff]
        %v3950 = vld [vmem:[#allocation13 + $0x5c0] sm:$0xff]
        %v3951 = vld [vmem:[#allocation13 + $0x5c8] sm:$0xff]
        %v3952 = vld [vmem:[#allocation13 + $0x5d0] sm:$0xff]
        %v3953 = vld [vmem:[#allocation13 + $0x5d8] sm:$0xff]
        %v3954 = vld [vmem:[#allocation13 + $0x5e0] sm:$0xff]
        %v3955 = vld [vmem:[#allocation13 + $0x5e8] sm:$0xff]
        %v3956 = vld [vmem:[#allocation13 + $0x5f0] sm:$0xff]
        %v3957 = vld [vmem:[#allocation13 + $0x5f8] sm:$0xff]
        %v3958 = vld [vmem:[#allocation13 + $0x600] sm:$0xff]
        %v3959 = vld [vmem:[#allocation13 + $0x608] sm:$0xff]
        %v3960 = vld [vmem:[#allocation13 + $0x610] sm:$0xff]
        %v3961 = vld [vmem:[#allocation13 + $0x618] sm:$0xff]
        %v3962 = vld [vmem:[#allocation13 + $0x620] sm:$0xff]
        %v3963 = vld [vmem:[#allocation13 + $0x628] sm:$0xff]
        %v3964 = vld [vmem:[#allocation13 + $0x630] sm:$0xff]
        %v3965 = vld [vmem:[#allocation13 + $0x638] sm:$0xff]
        %v3966 = vld [vmem:[#allocation13 + $0x640] sm:$0xff]
        %v3967 = vld [vmem:[#allocation13 + $0x648] sm:$0xff]
        %v3968 = vld [vmem:[#allocation13 + $0x650] sm:$0xff]
        %v3969 = vld [vmem:[#allocation13 + $0x658] sm:$0xff]
        %v3970 = vld [vmem:[#allocation13 + $0x660] sm:$0xff]
        %v3971 = vld [vmem:[#allocation13 + $0x668] sm:$0xff]
        %v3972 = vld [vmem:[#allocation13 + $0x670] sm:$0xff]
        %v3973 = vld [vmem:[#allocation13 + $0x678] sm:$0xff]
        %v3974 = vld [vmem:[#allocation13 + $0x680] sm:$0xff]
        %v3975 = vld [vmem:[#allocation13 + $0x688] sm:$0xff]
        %v3976 = vld [vmem:[#allocation13 + $0x690] sm:$0xff]
        %v3977 = vld [vmem:[#allocation13 + $0x698] sm:$0xff]
        %v3978 = vld [vmem:[#allocation13 + $0x6a0] sm:$0xff]
        %v3979 = vld [vmem:[#allocation13 + $0x6a8] sm:$0xff]
        %v3980 = vld [vmem:[#allocation13 + $0x6b0] sm:$0xff]
        %v3981 = vld [vmem:[#allocation13 + $0x6b8] sm:$0xff]
        %v3982 = vld [vmem:[#allocation13 + $0x6c0] sm:$0xff]
        %v3983 = vld [vmem:[#allocation13 + $0x6c8] sm:$0xff]
        %v3984 = vld [vmem:[#allocation13 + $0x6d0] sm:$0xff]
        %v3985 = vld [vmem:[#allocation13 + $0x6d8] sm:$0xff]
        %v3986 = vld [vmem:[#allocation13 + $0x6e0] sm:$0xff]
        %v3987 = vld [vmem:[#allocation13 + $0x6e8] sm:$0xff]
        %v3988 = vld [vmem:[#allocation13 + $0x6f0] sm:$0xff]
        %v3989 = vld [vmem:[#allocation13 + $0x6f8] sm:$0xff]
        %v3990 = vld [vmem:[#allocation13 + $0x700] sm:$0xff]
        %v3991 = vld [vmem:[#allocation13 + $0x708] sm:$0xff]
        %v3992 = vld [vmem:[#allocation13 + $0x710] sm:$0xff]
        %v3993 = vld [vmem:[#allocation13 + $0x718] sm:$0xff]
        %v3994 = vld [vmem:[#allocation13 + $0x720] sm:$0xff]
        %v3995 = vld [vmem:[#allocation13 + $0x728] sm:$0xff]
        %v3996 = vld [vmem:[#allocation13 + $0x730] sm:$0xff]
        %v3997 = vld [vmem:[#allocation13 + $0x738] sm:$0xff]
        %v3998 = vld [vmem:[#allocation13 + $0x740] sm:$0xff]
        %v3999 = vld [vmem:[#allocation13 + $0x748] sm:$0xff]
        %v4000 = vld [vmem:[#allocation13 + $0x750] sm:$0xff]
        %v4001 = vld [vmem:[#allocation13 + $0x758] sm:$0xff]
        %v4002 = vld [vmem:[#allocation13 + $0x760] sm:$0xff]
        %v4003 = vld [vmem:[#allocation13 + $0x768] sm:$0xff]
        %v4004 = vld [vmem:[#allocation13 + $0x770] sm:$0xff]
        %v4005 = vld [vmem:[#allocation13 + $0x778] sm:$0xff]
        %v4006 = vld [vmem:[#allocation13 + $0x780] sm:$0xff]
        %v4007 = vld [vmem:[#allocation13 + $0x788] sm:$0xff]
        %v4008 = vld [vmem:[#allocation13 + $0x790] sm:$0xff]
        %v4009 = vld [vmem:[#allocation13 + $0x798] sm:$0xff]
        %v4010 = vld [vmem:[#allocation13 + $0x7a0] sm:$0xff]
        %v4011 = vld [vmem:[#allocation13 + $0x7a8] sm:$0xff]
        %v4012 = vld [vmem:[#allocation13 + $0x7b0] sm:$0xff]
        %v4013 = vld [vmem:[#allocation13 + $0x7b8] sm:$0xff]
        %v4014 = vld [vmem:[#allocation13 + $0x7c0] sm:$0xff]
        %v4015 = vld [vmem:[#allocation13 + $0x7c8] sm:$0xff]
        %v4016 = vld [vmem:[#allocation13 + $0x7d0] sm:$0xff]
        %v4017 = vld [vmem:[#allocation13 + $0x7d8] sm:$0xff]
        %v4018 = vld [vmem:[#allocation13 + $0x7e0] sm:$0xff]
        %v4019 = vld [vmem:[#allocation13 + $0x7e8] sm:$0xff]
        %v4020 = vld [vmem:[#allocation13 + $0x7f0] sm:$0xff]
        %v4021 = vld [vmem:[#allocation13 + $0x7f8] sm:$0xff]
        %v4022 = vld [vmem:[%s10] sm:$0xff]
        %v4024 = vlaneseq
        %v4025 = vshrl.u32 %v4024, 7
        %v4026 = vsub.s32 0, %v4025
        %v4027 = vrot.slane %v4022, %v4026
        %v4028 = vlaneseq
        %v4029 = vshrl.u32 %v4028, 7
        %v4030 = vsub.s32 1, %v4029
        %v4031 = vrot.slane %v4022, %v4030
        %v4032 = vlaneseq
        %v4033 = vshrl.u32 %v4032, 7
        %v4034 = vsub.s32 2, %v4033
        %v4035 = vrot.slane %v4022, %v4034
        %v4036 = vlaneseq
        %v4037 = vshrl.u32 %v4036, 7
        %v4038 = vsub.s32 3, %v4037
        %v4039 = vrot.slane %v4022, %v4038
        %v4040 = vlaneseq
        %v4041 = vshrl.u32 %v4040, 7
        %v4042 = vsub.s32 4, %v4041
        %v4043 = vrot.slane %v4022, %v4042
        %v4044 = vlaneseq
        %v4045 = vshrl.u32 %v4044, 7
        %v4046 = vsub.s32 5, %v4045
        %v4047 = vrot.slane %v4022, %v4046
        %v4048 = vlaneseq
        %v4049 = vshrl.u32 %v4048, 7
        %v4050 = vsub.s32 6, %v4049
        %v4051 = vrot.slane %v4022, %v4050
        %v4052 = vlaneseq
        %v4053 = vshrl.u32 %v4052, 7
        %v4054 = vsub.s32 7, %v4053
        %v4055 = vrot.slane %v4022, %v4054
        %v4320 = vunpack.c.l.b16 %v3766
        %v4321 = vunpack.c.h.b16 %v3766
        %v4322 = vunpack.c.l.b16 %v3767
        %v4323 = vunpack.c.h.b16 %v3767
        %v4324 = vunpack.c.l.b16 %v3768
        %v4325 = vunpack.c.h.b16 %v3768
        %v4326 = vunpack.c.l.b16 %v3769
        %v4327 = vunpack.c.h.b16 %v3769
        %v4328 = vunpack.c.l.b16 %v3770
        %v4329 = vunpack.c.h.b16 %v3770
        %v4330 = vunpack.c.l.b16 %v3771
        %v4331 = vunpack.c.h.b16 %v3771
        %v4332 = vunpack.c.l.b16 %v3772
        %v4333 = vunpack.c.h.b16 %v3772
        %v4334 = vunpack.c.l.b16 %v3773
        %v4335 = vunpack.c.h.b16 %v3773
        %v4336 = vunpack.c.l.b16 %v3774
        %v4337 = vunpack.c.h.b16 %v3774
        %v4338 = vunpack.c.l.b16 %v3775
        %v4339 = vunpack.c.h.b16 %v3775
        %v4340 = vunpack.c.l.b16 %v3776
        %v4341 = vunpack.c.h.b16 %v3776
        %v4342 = vunpack.c.l.b16 %v3777
        %v4343 = vunpack.c.h.b16 %v3777
        %v4344 = vunpack.c.l.b16 %v3778
        %v4345 = vunpack.c.h.b16 %v3778
        %v4346 = vunpack.c.l.b16 %v3779
        %v4347 = vunpack.c.h.b16 %v3779
        %v4348 = vunpack.c.l.b16 %v3780
        %v4349 = vunpack.c.h.b16 %v3780
        %v4350 = vunpack.c.l.b16 %v3781
        %v4351 = vunpack.c.h.b16 %v3781
        %v4352 = vunpack.c.l.b16 %v3782
        %v4353 = vunpack.c.h.b16 %v3782
        %v4354 = vunpack.c.l.b16 %v3783
        %v4355 = vunpack.c.h.b16 %v3783
        %v4356 = vunpack.c.l.b16 %v3784
        %v4357 = vunpack.c.h.b16 %v3784
        %v4358 = vunpack.c.l.b16 %v3785
        %v4359 = vunpack.c.h.b16 %v3785
        %v4360 = vunpack.c.l.b16 %v3786
        %v4361 = vunpack.c.h.b16 %v3786
        %v4362 = vunpack.c.l.b16 %v3787
        %v4363 = vunpack.c.h.b16 %v3787
        %v4364 = vunpack.c.l.b16 %v3788
        %v4365 = vunpack.c.h.b16 %v3788
        %v4366 = vunpack.c.l.b16 %v3789
        %v4367 = vunpack.c.h.b16 %v3789
        %v4368 = vunpack.c.l.b16 %v3790
        %v4369 = vunpack.c.h.b16 %v3790
        %v4370 = vunpack.c.l.b16 %v3791
        %v4371 = vunpack.c.h.b16 %v3791
        %v4372 = vunpack.c.l.b16 %v3792
        %v4373 = vunpack.c.h.b16 %v3792
        %v4374 = vunpack.c.l.b16 %v3793
        %v4375 = vunpack.c.h.b16 %v3793
        %v4376 = vunpack.c.l.b16 %v3794
        %v4377 = vunpack.c.h.b16 %v3794
        %v4378 = vunpack.c.l.b16 %v3795
        %v4379 = vunpack.c.h.b16 %v3795
        %v4380 = vunpack.c.l.b16 %v3796
        %v4381 = vunpack.c.h.b16 %v3796
        %v4382 = vunpack.c.l.b16 %v3797
        %v4383 = vunpack.c.h.b16 %v3797
        %v4384 = vunpack.c.l.b16 %v3798
        %v4385 = vunpack.c.h.b16 %v3798
        %v4386 = vunpack.c.l.b16 %v3799
        %v4387 = vunpack.c.h.b16 %v3799
        %v4388 = vunpack.c.l.b16 %v3800
        %v4389 = vunpack.c.h.b16 %v3800
        %v4390 = vunpack.c.l.b16 %v3801
        %v4391 = vunpack.c.h.b16 %v3801
        %v4392 = vunpack.c.l.b16 %v3802
        %v4393 = vunpack.c.h.b16 %v3802
        %v4394 = vunpack.c.l.b16 %v3803
        %v4395 = vunpack.c.h.b16 %v3803
        %v4396 = vunpack.c.l.b16 %v3804
        %v4397 = vunpack.c.h.b16 %v3804
        %v4398 = vunpack.c.l.b16 %v3805
        %v4399 = vunpack.c.h.b16 %v3805
        %v4400 = vunpack.c.l.b16 %v3806
        %v4401 = vunpack.c.h.b16 %v3806
        %v4402 = vunpack.c.l.b16 %v3807
        %v4403 = vunpack.c.h.b16 %v3807
        %v4404 = vunpack.c.l.b16 %v3808
        %v4405 = vunpack.c.h.b16 %v3808
        %v4406 = vunpack.c.l.b16 %v3809
        %v4407 = vunpack.c.h.b16 %v3809
        %v4408 = vunpack.c.l.b16 %v3810
        %v4409 = vunpack.c.h.b16 %v3810
        %v4410 = vunpack.c.l.b16 %v3811
        %v4411 = vunpack.c.h.b16 %v3811
        %v4412 = vunpack.c.l.b16 %v3812
        %v4413 = vunpack.c.h.b16 %v3812
        %v4414 = vunpack.c.l.b16 %v3813
        %v4415 = vunpack.c.h.b16 %v3813
        %v4416 = vunpack.c.l.b16 %v3814
        %v4417 = vunpack.c.h.b16 %v3814
        %v4418 = vunpack.c.l.b16 %v3815
        %v4419 = vunpack.c.h.b16 %v3815
        %v4420 = vunpack.c.l.b16 %v3816
        %v4421 = vunpack.c.h.b16 %v3816
        %v4422 = vunpack.c.l.b16 %v3817
        %v4423 = vunpack.c.h.b16 %v3817
        %v4424 = vunpack.c.l.b16 %v3818
        %v4425 = vunpack.c.h.b16 %v3818
        %v4426 = vunpack.c.l.b16 %v3819
        %v4427 = vunpack.c.h.b16 %v3819
        %v4428 = vunpack.c.l.b16 %v3820
        %v4429 = vunpack.c.h.b16 %v3820
        %v4430 = vunpack.c.l.b16 %v3821
        %v4431 = vunpack.c.h.b16 %v3821
        %v4432 = vunpack.c.l.b16 %v3822
        %v4433 = vunpack.c.h.b16 %v3822
        %v4434 = vunpack.c.l.b16 %v3823
        %v4435 = vunpack.c.h.b16 %v3823
        %v4436 = vunpack.c.l.b16 %v3824
        %v4437 = vunpack.c.h.b16 %v3824
        %v4438 = vunpack.c.l.b16 %v3825
        %v4439 = vunpack.c.h.b16 %v3825
        %v4440 = vunpack.c.l.b16 %v3826
        %v4441 = vunpack.c.h.b16 %v3826
        %v4442 = vunpack.c.l.b16 %v3827
        %v4443 = vunpack.c.h.b16 %v3827
        %v4444 = vunpack.c.l.b16 %v3828
        %v4445 = vunpack.c.h.b16 %v3828
        %v4446 = vunpack.c.l.b16 %v3829
        %v4447 = vunpack.c.h.b16 %v3829
        %v4448 = vunpack.c.l.b16 %v3830
        %v4449 = vunpack.c.h.b16 %v3830
        %v4450 = vunpack.c.l.b16 %v3831
        %v4451 = vunpack.c.h.b16 %v3831
        %v4452 = vunpack.c.l.b16 %v3832
        %v4453 = vunpack.c.h.b16 %v3832
        %v4454 = vunpack.c.l.b16 %v3833
        %v4455 = vunpack.c.h.b16 %v3833
        %v4456 = vunpack.c.l.b16 %v3834
        %v4457 = vunpack.c.h.b16 %v3834
        %v4458 = vunpack.c.l.b16 %v3835
        %v4459 = vunpack.c.h.b16 %v3835
        %v4460 = vunpack.c.l.b16 %v3836
        %v4461 = vunpack.c.h.b16 %v3836
        %v4462 = vunpack.c.l.b16 %v3837
        %v4463 = vunpack.c.h.b16 %v3837
        %v4464 = vunpack.c.l.b16 %v3838
        %v4465 = vunpack.c.h.b16 %v3838
        %v4466 = vunpack.c.l.b16 %v3839
        %v4467 = vunpack.c.h.b16 %v3839
        %v4468 = vunpack.c.l.b16 %v3840
        %v4469 = vunpack.c.h.b16 %v3840
        %v4470 = vunpack.c.l.b16 %v3841
        %v4471 = vunpack.c.h.b16 %v3841
        %v4472 = vunpack.c.l.b16 %v3842
        %v4473 = vunpack.c.h.b16 %v3842
        %v4474 = vunpack.c.l.b16 %v3843
        %v4475 = vunpack.c.h.b16 %v3843
        %v4476 = vunpack.c.l.b16 %v3844
        %v4477 = vunpack.c.h.b16 %v3844
        %v4478 = vunpack.c.l.b16 %v3845
        %v4479 = vunpack.c.h.b16 %v3845
        %v4480 = vunpack.c.l.b16 %v3846
        %v4481 = vunpack.c.h.b16 %v3846
        %v4482 = vunpack.c.l.b16 %v3847
        %v4483 = vunpack.c.h.b16 %v3847
        %v4484 = vunpack.c.l.b16 %v3848
        %v4485 = vunpack.c.h.b16 %v3848
        %v4486 = vunpack.c.l.b16 %v3849
        %v4487 = vunpack.c.h.b16 %v3849
        %v4488 = vunpack.c.l.b16 %v3850
        %v4489 = vunpack.c.h.b16 %v3850
        %v4490 = vunpack.c.l.b16 %v3851
        %v4491 = vunpack.c.h.b16 %v3851
        %v4492 = vunpack.c.l.b16 %v3852
        %v4493 = vunpack.c.h.b16 %v3852
        %v4494 = vunpack.c.l.b16 %v3853
        %v4495 = vunpack.c.h.b16 %v3853
        %v4496 = vunpack.c.l.b16 %v3854
        %v4497 = vunpack.c.h.b16 %v3854
        %v4498 = vunpack.c.l.b16 %v3855
        %v4499 = vunpack.c.h.b16 %v3855
        %v4500 = vunpack.c.l.b16 %v3856
        %v4501 = vunpack.c.h.b16 %v3856
        %v4502 = vunpack.c.l.b16 %v3857
        %v4503 = vunpack.c.h.b16 %v3857
        %v4504 = vunpack.c.l.b16 %v3858
        %v4505 = vunpack.c.h.b16 %v3858
        %v4506 = vunpack.c.l.b16 %v3859
        %v4507 = vunpack.c.h.b16 %v3859
        %v4508 = vunpack.c.l.b16 %v3860
        %v4509 = vunpack.c.h.b16 %v3860
        %v4510 = vunpack.c.l.b16 %v3861
        %v4511 = vunpack.c.h.b16 %v3861
        %v4512 = vunpack.c.l.b16 %v3862
        %v4513 = vunpack.c.h.b16 %v3862
        %v4514 = vunpack.c.l.b16 %v3863
        %v4515 = vunpack.c.h.b16 %v3863
        %v4516 = vunpack.c.l.b16 %v3864
        %v4517 = vunpack.c.h.b16 %v3864
        %v4518 = vunpack.c.l.b16 %v3865
        %v4519 = vunpack.c.h.b16 %v3865
        %v4520 = vunpack.c.l.b16 %v3866
        %v4521 = vunpack.c.h.b16 %v3866
        %v4522 = vunpack.c.l.b16 %v3867
        %v4523 = vunpack.c.h.b16 %v3867
        %v4524 = vunpack.c.l.b16 %v3868
        %v4525 = vunpack.c.h.b16 %v3868
        %v4526 = vunpack.c.l.b16 %v3869
        %v4527 = vunpack.c.h.b16 %v3869
        %v4528 = vunpack.c.l.b16 %v3870
        %v4529 = vunpack.c.h.b16 %v3870
        %v4530 = vunpack.c.l.b16 %v3871
        %v4531 = vunpack.c.h.b16 %v3871
        %v4532 = vunpack.c.l.b16 %v3872
        %v4533 = vunpack.c.h.b16 %v3872
        %v4534 = vunpack.c.l.b16 %v3873
        %v4535 = vunpack.c.h.b16 %v3873
        %v4536 = vunpack.c.l.b16 %v3874
        %v4537 = vunpack.c.h.b16 %v3874
        %v4538 = vunpack.c.l.b16 %v3875
        %v4539 = vunpack.c.h.b16 %v3875
        %v4540 = vunpack.c.l.b16 %v3876
        %v4541 = vunpack.c.h.b16 %v3876
        %v4542 = vunpack.c.l.b16 %v3877
        %v4543 = vunpack.c.h.b16 %v3877
        %v4544 = vunpack.c.l.b16 %v3878
        %v4545 = vunpack.c.h.b16 %v3878
        %v4546 = vunpack.c.l.b16 %v3879
        %v4547 = vunpack.c.h.b16 %v3879
        %v4548 = vunpack.c.l.b16 %v3880
        %v4549 = vunpack.c.h.b16 %v3880
        %v4550 = vunpack.c.l.b16 %v3881
        %v4551 = vunpack.c.h.b16 %v3881
        %v4552 = vunpack.c.l.b16 %v3882
        %v4553 = vunpack.c.h.b16 %v3882
        %v4554 = vunpack.c.l.b16 %v3883
        %v4555 = vunpack.c.h.b16 %v3883
        %v4556 = vunpack.c.l.b16 %v3884
        %v4557 = vunpack.c.h.b16 %v3884
        %v4558 = vunpack.c.l.b16 %v3885
        %v4559 = vunpack.c.h.b16 %v3885
        %v4560 = vunpack.c.l.b16 %v3886
        %v4561 = vunpack.c.h.b16 %v3886
        %v4562 = vunpack.c.l.b16 %v3887
        %v4563 = vunpack.c.h.b16 %v3887
        %v4564 = vunpack.c.l.b16 %v3888
        %v4565 = vunpack.c.h.b16 %v3888
        %v4566 = vunpack.c.l.b16 %v3889
        %v4567 = vunpack.c.h.b16 %v3889
        %v4568 = vunpack.c.l.b16 %v3890
        %v4569 = vunpack.c.h.b16 %v3890
        %v4570 = vunpack.c.l.b16 %v3891
        %v4571 = vunpack.c.h.b16 %v3891
        %v4572 = vunpack.c.l.b16 %v3892
        %v4573 = vunpack.c.h.b16 %v3892
        %v4574 = vunpack.c.l.b16 %v3893
        %v4575 = vunpack.c.h.b16 %v3893
        %v4576 = vunpack.c.l.b16 %v3894
        %v4577 = vunpack.c.h.b16 %v3894
        %v4578 = vunpack.c.l.b16 %v3895
        %v4579 = vunpack.c.h.b16 %v3895
        %v4580 = vunpack.c.l.b16 %v3896
        %v4581 = vunpack.c.h.b16 %v3896
        %v4582 = vunpack.c.l.b16 %v3897
        %v4583 = vunpack.c.h.b16 %v3897
        %v4584 = vunpack.c.l.b16 %v3898
        %v4585 = vunpack.c.h.b16 %v3898
        %v4586 = vunpack.c.l.b16 %v3899
        %v4587 = vunpack.c.h.b16 %v3899
        %v4588 = vunpack.c.l.b16 %v3900
        %v4589 = vunpack.c.h.b16 %v3900
        %v4590 = vunpack.c.l.b16 %v3901
        %v4591 = vunpack.c.h.b16 %v3901
        %v4592 = vunpack.c.l.b16 %v3902
        %v4593 = vunpack.c.h.b16 %v3902
        %v4594 = vunpack.c.l.b16 %v3903
        %v4595 = vunpack.c.h.b16 %v3903
        %v4596 = vunpack.c.l.b16 %v3904
        %v4597 = vunpack.c.h.b16 %v3904
        %v4598 = vunpack.c.l.b16 %v3905
        %v4599 = vunpack.c.h.b16 %v3905
        %v4600 = vunpack.c.l.b16 %v3906
        %v4601 = vunpack.c.h.b16 %v3906
        %v4602 = vunpack.c.l.b16 %v3907
        %v4603 = vunpack.c.h.b16 %v3907
        %v4604 = vunpack.c.l.b16 %v3908
        %v4605 = vunpack.c.h.b16 %v3908
        %v4606 = vunpack.c.l.b16 %v3909
        %v4607 = vunpack.c.h.b16 %v3909
        %v4608 = vunpack.c.l.b16 %v3910
        %v4609 = vunpack.c.h.b16 %v3910
        %v4610 = vunpack.c.l.b16 %v3911
        %v4611 = vunpack.c.h.b16 %v3911
        %v4612 = vunpack.c.l.b16 %v3912
        %v4613 = vunpack.c.h.b16 %v3912
        %v4614 = vunpack.c.l.b16 %v3913
        %v4615 = vunpack.c.h.b16 %v3913
        %v4616 = vunpack.c.l.b16 %v3914
        %v4617 = vunpack.c.h.b16 %v3914
        %v4618 = vunpack.c.l.b16 %v3915
        %v4619 = vunpack.c.h.b16 %v3915
        %v4620 = vunpack.c.l.b16 %v3916
        %v4621 = vunpack.c.h.b16 %v3916
        %v4622 = vunpack.c.l.b16 %v3917
        %v4623 = vunpack.c.h.b16 %v3917
        %v4624 = vunpack.c.l.b16 %v3918
        %v4625 = vunpack.c.h.b16 %v3918
        %v4626 = vunpack.c.l.b16 %v3919
        %v4627 = vunpack.c.h.b16 %v3919
        %v4628 = vunpack.c.l.b16 %v3920
        %v4629 = vunpack.c.h.b16 %v3920
        %v4630 = vunpack.c.l.b16 %v3921
        %v4631 = vunpack.c.h.b16 %v3921
        %v4632 = vunpack.c.l.b16 %v3922
        %v4633 = vunpack.c.h.b16 %v3922
        %v4634 = vunpack.c.l.b16 %v3923
        %v4635 = vunpack.c.h.b16 %v3923
        %v4636 = vunpack.c.l.b16 %v3924
        %v4637 = vunpack.c.h.b16 %v3924
        %v4638 = vunpack.c.l.b16 %v3925
        %v4639 = vunpack.c.h.b16 %v3925
        %v4640 = vunpack.c.l.b16 %v3926
        %v4641 = vunpack.c.h.b16 %v3926
        %v4642 = vunpack.c.l.b16 %v3927
        %v4643 = vunpack.c.h.b16 %v3927
        %v4644 = vunpack.c.l.b16 %v3928
        %v4645 = vunpack.c.h.b16 %v3928
        %v4646 = vunpack.c.l.b16 %v3929
        %v4647 = vunpack.c.h.b16 %v3929
        %v4648 = vunpack.c.l.b16 %v3930
        %v4649 = vunpack.c.h.b16 %v3930
        %v4650 = vunpack.c.l.b16 %v3931
        %v4651 = vunpack.c.h.b16 %v3931
        %v4652 = vunpack.c.l.b16 %v3932
        %v4653 = vunpack.c.h.b16 %v3932
        %v4654 = vunpack.c.l.b16 %v3933
        %v4655 = vunpack.c.h.b16 %v3933
        %v4656 = vunpack.c.l.b16 %v3934
        %v4657 = vunpack.c.h.b16 %v3934
        %v4658 = vunpack.c.l.b16 %v3935
        %v4659 = vunpack.c.h.b16 %v3935
        %v4660 = vunpack.c.l.b16 %v3936
        %v4661 = vunpack.c.h.b16 %v3936
        %v4662 = vunpack.c.l.b16 %v3937
        %v4663 = vunpack.c.h.b16 %v3937
        %v4664 = vunpack.c.l.b16 %v3938
        %v4665 = vunpack.c.h.b16 %v3938
        %v4666 = vunpack.c.l.b16 %v3939
        %v4667 = vunpack.c.h.b16 %v3939
        %v4668 = vunpack.c.l.b16 %v3940
        %v4669 = vunpack.c.h.b16 %v3940
        %v4670 = vunpack.c.l.b16 %v3941
        %v4671 = vunpack.c.h.b16 %v3941
        %v4672 = vunpack.c.l.b16 %v3942
        %v4673 = vunpack.c.h.b16 %v3942
        %v4674 = vunpack.c.l.b16 %v3943
        %v4675 = vunpack.c.h.b16 %v3943
        %v4676 = vunpack.c.l.b16 %v3944
        %v4677 = vunpack.c.h.b16 %v3944
        %v4678 = vunpack.c.l.b16 %v3945
        %v4679 = vunpack.c.h.b16 %v3945
        %v4680 = vunpack.c.l.b16 %v3946
        %v4681 = vunpack.c.h.b16 %v3946
        %v4682 = vunpack.c.l.b16 %v3947
        %v4683 = vunpack.c.h.b16 %v3947
        %v4684 = vunpack.c.l.b16 %v3948
        %v4685 = vunpack.c.h.b16 %v3948
        %v4686 = vunpack.c.l.b16 %v3949
        %v4687 = vunpack.c.h.b16 %v3949
        %v4688 = vunpack.c.l.b16 %v3950
        %v4689 = vunpack.c.h.b16 %v3950
        %v4690 = vunpack.c.l.b16 %v3951
        %v4691 = vunpack.c.h.b16 %v3951
        %v4692 = vunpack.c.l.b16 %v3952
        %v4693 = vunpack.c.h.b16 %v3952
        %v4694 = vunpack.c.l.b16 %v3953
        %v4695 = vunpack.c.h.b16 %v3953
        %v4696 = vunpack.c.l.b16 %v3954
        %v4697 = vunpack.c.h.b16 %v3954
        %v4698 = vunpack.c.l.b16 %v3955
        %v4699 = vunpack.c.h.b16 %v3955
        %v4700 = vunpack.c.l.b16 %v3956
        %v4701 = vunpack.c.h.b16 %v3956
        %v4702 = vunpack.c.l.b16 %v3957
        %v4703 = vunpack.c.h.b16 %v3957
        %v4704 = vunpack.c.l.b16 %v3958
        %v4705 = vunpack.c.h.b16 %v3958
        %v4706 = vunpack.c.l.b16 %v3959
        %v4707 = vunpack.c.h.b16 %v3959
        %v4708 = vunpack.c.l.b16 %v3960
        %v4709 = vunpack.c.h.b16 %v3960
        %v4710 = vunpack.c.l.b16 %v3961
        %v4711 = vunpack.c.h.b16 %v3961
        %v4712 = vunpack.c.l.b16 %v3962
        %v4713 = vunpack.c.h.b16 %v3962
        %v4714 = vunpack.c.l.b16 %v3963
        %v4715 = vunpack.c.h.b16 %v3963
        %v4716 = vunpack.c.l.b16 %v3964
        %v4717 = vunpack.c.h.b16 %v3964
        %v4718 = vunpack.c.l.b16 %v3965
        %v4719 = vunpack.c.h.b16 %v3965
        %v4720 = vunpack.c.l.b16 %v3966
        %v4721 = vunpack.c.h.b16 %v3966
        %v4722 = vunpack.c.l.b16 %v3967
        %v4723 = vunpack.c.h.b16 %v3967
        %v4724 = vunpack.c.l.b16 %v3968
        %v4725 = vunpack.c.h.b16 %v3968
        %v4726 = vunpack.c.l.b16 %v3969
        %v4727 = vunpack.c.h.b16 %v3969
        %v4728 = vunpack.c.l.b16 %v3970
        %v4729 = vunpack.c.h.b16 %v3970
        %v4730 = vunpack.c.l.b16 %v3971
        %v4731 = vunpack.c.h.b16 %v3971
        %v4732 = vunpack.c.l.b16 %v3972
        %v4733 = vunpack.c.h.b16 %v3972
        %v4734 = vunpack.c.l.b16 %v3973
        %v4735 = vunpack.c.h.b16 %v3973
        %v4736 = vunpack.c.l.b16 %v3974
        %v4737 = vunpack.c.h.b16 %v3974
        %v4738 = vunpack.c.l.b16 %v3975
        %v4739 = vunpack.c.h.b16 %v3975
        %v4740 = vunpack.c.l.b16 %v3976
        %v4741 = vunpack.c.h.b16 %v3976
        %v4742 = vunpack.c.l.b16 %v3977
        %v4743 = vunpack.c.h.b16 %v3977
        %v4744 = vunpack.c.l.b16 %v3978
        %v4745 = vunpack.c.h.b16 %v3978
        %v4746 = vunpack.c.l.b16 %v3979
        %v4747 = vunpack.c.h.b16 %v3979
        %v4748 = vunpack.c.l.b16 %v3980
        %v4749 = vunpack.c.h.b16 %v3980
        %v4750 = vunpack.c.l.b16 %v3981
        %v4751 = vunpack.c.h.b16 %v3981
        %v4752 = vunpack.c.l.b16 %v3982
        %v4753 = vunpack.c.h.b16 %v3982
        %v4754 = vunpack.c.l.b16 %v3983
        %v4755 = vunpack.c.h.b16 %v3983
        %v4756 = vunpack.c.l.b16 %v3984
        %v4757 = vunpack.c.h.b16 %v3984
        %v4758 = vunpack.c.l.b16 %v3985
        %v4759 = vunpack.c.h.b16 %v3985
        %v4760 = vunpack.c.l.b16 %v3986
        %v4761 = vunpack.c.h.b16 %v3986
        %v4762 = vunpack.c.l.b16 %v3987
        %v4763 = vunpack.c.h.b16 %v3987
        %v4764 = vunpack.c.l.b16 %v3988
        %v4765 = vunpack.c.h.b16 %v3988
        %v4766 = vunpack.c.l.b16 %v3989
        %v4767 = vunpack.c.h.b16 %v3989
        %v4768 = vunpack.c.l.b16 %v3990
        %v4769 = vunpack.c.h.b16 %v3990
        %v4770 = vunpack.c.l.b16 %v3991
        %v4771 = vunpack.c.h.b16 %v3991
        %v4772 = vunpack.c.l.b16 %v3992
        %v4773 = vunpack.c.h.b16 %v3992
        %v4774 = vunpack.c.l.b16 %v3993
        %v4775 = vunpack.c.h.b16 %v3993
        %v4776 = vunpack.c.l.b16 %v3994
        %v4777 = vunpack.c.h.b16 %v3994
        %v4778 = vunpack.c.l.b16 %v3995
        %v4779 = vunpack.c.h.b16 %v3995
        %v4780 = vunpack.c.l.b16 %v3996
        %v4781 = vunpack.c.h.b16 %v3996
        %v4782 = vunpack.c.l.b16 %v3997
        %v4783 = vunpack.c.h.b16 %v3997
        %v4784 = vunpack.c.l.b16 %v3998
        %v4785 = vunpack.c.h.b16 %v3998
        %v4786 = vunpack.c.l.b16 %v3999
        %v4787 = vunpack.c.h.b16 %v3999
        %v4788 = vunpack.c.l.b16 %v4000
        %v4789 = vunpack.c.h.b16 %v4000
        %v4790 = vunpack.c.l.b16 %v4001
        %v4791 = vunpack.c.h.b16 %v4001
        %v4792 = vunpack.c.l.b16 %v4002
        %v4793 = vunpack.c.h.b16 %v4002
        %v4794 = vunpack.c.l.b16 %v4003
        %v4795 = vunpack.c.h.b16 %v4003
        %v4796 = vunpack.c.l.b16 %v4004
        %v4797 = vunpack.c.h.b16 %v4004
        %v4798 = vunpack.c.l.b16 %v4005
        %v4799 = vunpack.c.h.b16 %v4005
        %v4800 = vunpack.c.l.b16 %v4006
        %v4801 = vunpack.c.h.b16 %v4006
        %v4802 = vunpack.c.l.b16 %v4007
        %v4803 = vunpack.c.h.b16 %v4007
        %v4804 = vunpack.c.l.b16 %v4008
        %v4805 = vunpack.c.h.b16 %v4008
        %v4806 = vunpack.c.l.b16 %v4009
        %v4807 = vunpack.c.h.b16 %v4009
        %v4808 = vunpack.c.l.b16 %v4010
        %v4809 = vunpack.c.h.b16 %v4010
        %v4810 = vunpack.c.l.b16 %v4011
        %v4811 = vunpack.c.h.b16 %v4011
        %v4812 = vunpack.c.l.b16 %v4012
        %v4813 = vunpack.c.h.b16 %v4012
        %v4814 = vunpack.c.l.b16 %v4013
        %v4815 = vunpack.c.h.b16 %v4013
        %v4816 = vunpack.c.l.b16 %v4014
        %v4817 = vunpack.c.h.b16 %v4014
        %v4818 = vunpack.c.l.b16 %v4015
        %v4819 = vunpack.c.h.b16 %v4015
        %v4820 = vunpack.c.l.b16 %v4016
        %v4821 = vunpack.c.h.b16 %v4016
        %v4822 = vunpack.c.l.b16 %v4017
        %v4823 = vunpack.c.h.b16 %v4017
        %v4824 = vunpack.c.l.b16 %v4018
        %v4825 = vunpack.c.h.b16 %v4018
        %v4826 = vunpack.c.l.b16 %v4019
        %v4827 = vunpack.c.h.b16 %v4019
        %v4828 = vunpack.c.l.b16 %v4020
        %v4829 = vunpack.c.h.b16 %v4020
        %v4830 = vunpack.c.l.b16 %v4021
        %v4831 = vunpack.c.h.b16 %v4021
        %v4832 = vpack.c.b16 %v4328, %v4320
        %v4833 = vpack.c.b16 %v4329, %v4321
        %v4834 = vpack.c.b16 %v4330, %v4322
        %v4835 = vpack.c.b16 %v4331, %v4323
        %v4836 = vpack.c.b16 %v4332, %v4324
        %v4837 = vpack.c.b16 %v4333, %v4325
        %v4838 = vpack.c.b16 %v4334, %v4326
        %v4839 = vpack.c.b16 %v4335, %v4327
        %v4840 = vpack.c.b16 %v4344, %v4336
        %v4841 = vpack.c.b16 %v4345, %v4337
        %v4842 = vpack.c.b16 %v4346, %v4338
        %v4843 = vpack.c.b16 %v4347, %v4339
        %v4844 = vpack.c.b16 %v4348, %v4340
        %v4845 = vpack.c.b16 %v4349, %v4341
        %v4846 = vpack.c.b16 %v4350, %v4342
        %v4847 = vpack.c.b16 %v4351, %v4343
        %v4848 = vpack.c.b16 %v4360, %v4352
        %v4849 = vpack.c.b16 %v4361, %v4353
        %v4850 = vpack.c.b16 %v4362, %v4354
        %v4851 = vpack.c.b16 %v4363, %v4355
        %v4852 = vpack.c.b16 %v4364, %v4356
        %v4853 = vpack.c.b16 %v4365, %v4357
        %v4854 = vpack.c.b16 %v4366, %v4358
        %v4855 = vpack.c.b16 %v4367, %v4359
        %v4856 = vpack.c.b16 %v4376, %v4368
        %v4857 = vpack.c.b16 %v4377, %v4369
        %v4858 = vpack.c.b16 %v4378, %v4370
        %v4859 = vpack.c.b16 %v4379, %v4371
        %v4860 = vpack.c.b16 %v4380, %v4372
        %v4861 = vpack.c.b16 %v4381, %v4373
        %v4862 = vpack.c.b16 %v4382, %v4374
        %v4863 = vpack.c.b16 %v4383, %v4375
        %v4864 = vpack.c.b16 %v4392, %v4384
        %v4865 = vpack.c.b16 %v4393, %v4385
        %v4866 = vpack.c.b16 %v4394, %v4386
        %v4867 = vpack.c.b16 %v4395, %v4387
        %v4868 = vpack.c.b16 %v4396, %v4388
        %v4869 = vpack.c.b16 %v4397, %v4389
        %v4870 = vpack.c.b16 %v4398, %v4390
        %v4871 = vpack.c.b16 %v4399, %v4391
        %v4872 = vpack.c.b16 %v4408, %v4400
        %v4873 = vpack.c.b16 %v4409, %v4401
        %v4874 = vpack.c.b16 %v4410, %v4402
        %v4875 = vpack.c.b16 %v4411, %v4403
        %v4876 = vpack.c.b16 %v4412, %v4404
        %v4877 = vpack.c.b16 %v4413, %v4405
        %v4878 = vpack.c.b16 %v4414, %v4406
        %v4879 = vpack.c.b16 %v4415, %v4407
        %v4880 = vpack.c.b16 %v4424, %v4416
        %v4881 = vpack.c.b16 %v4425, %v4417
        %v4882 = vpack.c.b16 %v4426, %v4418
        %v4883 = vpack.c.b16 %v4427, %v4419
        %v4884 = vpack.c.b16 %v4428, %v4420
        %v4885 = vpack.c.b16 %v4429, %v4421
        %v4886 = vpack.c.b16 %v4430, %v4422
        %v4887 = vpack.c.b16 %v4431, %v4423
        %v4888 = vpack.c.b16 %v4440, %v4432
        %v4889 = vpack.c.b16 %v4441, %v4433
        %v4890 = vpack.c.b16 %v4442, %v4434
        %v4891 = vpack.c.b16 %v4443, %v4435
        %v4892 = vpack.c.b16 %v4444, %v4436
        %v4893 = vpack.c.b16 %v4445, %v4437
        %v4894 = vpack.c.b16 %v4446, %v4438
        %v4895 = vpack.c.b16 %v4447, %v4439
        %v4896 = vpack.c.b16 %v4456, %v4448
        %v4897 = vpack.c.b16 %v4457, %v4449
        %v4898 = vpack.c.b16 %v4458, %v4450
        %v4899 = vpack.c.b16 %v4459, %v4451
        %v4900 = vpack.c.b16 %v4460, %v4452
        %v4901 = vpack.c.b16 %v4461, %v4453
        %v4902 = vpack.c.b16 %v4462, %v4454
        %v4903 = vpack.c.b16 %v4463, %v4455
        %v4904 = vpack.c.b16 %v4472, %v4464
        %v4905 = vpack.c.b16 %v4473, %v4465
        %v4906 = vpack.c.b16 %v4474, %v4466
        %v4907 = vpack.c.b16 %v4475, %v4467
        %v4908 = vpack.c.b16 %v4476, %v4468
        %v4909 = vpack.c.b16 %v4477, %v4469
        %v4910 = vpack.c.b16 %v4478, %v4470
        %v4911 = vpack.c.b16 %v4479, %v4471
        %v4912 = vpack.c.b16 %v4488, %v4480
        %v4913 = vpack.c.b16 %v4489, %v4481
        %v4914 = vpack.c.b16 %v4490, %v4482
        %v4915 = vpack.c.b16 %v4491, %v4483
        %v4916 = vpack.c.b16 %v4492, %v4484
        %v4917 = vpack.c.b16 %v4493, %v4485
        %v4918 = vpack.c.b16 %v4494, %v4486
        %v4919 = vpack.c.b16 %v4495, %v4487
        %v4920 = vpack.c.b16 %v4504, %v4496
        %v4921 = vpack.c.b16 %v4505, %v4497
        %v4922 = vpack.c.b16 %v4506, %v4498
        %v4923 = vpack.c.b16 %v4507, %v4499
        %v4924 = vpack.c.b16 %v4508, %v4500
        %v4925 = vpack.c.b16 %v4509, %v4501
        %v4926 = vpack.c.b16 %v4510, %v4502
        %v4927 = vpack.c.b16 %v4511, %v4503
        %v4928 = vpack.c.b16 %v4520, %v4512
        %v4929 = vpack.c.b16 %v4521, %v4513
        %v4930 = vpack.c.b16 %v4522, %v4514
        %v4931 = vpack.c.b16 %v4523, %v4515
        %v4932 = vpack.c.b16 %v4524, %v4516
        %v4933 = vpack.c.b16 %v4525, %v4517
        %v4934 = vpack.c.b16 %v4526, %v4518
        %v4935 = vpack.c.b16 %v4527, %v4519
        %v4936 = vpack.c.b16 %v4536, %v4528
        %v4937 = vpack.c.b16 %v4537, %v4529
        %v4938 = vpack.c.b16 %v4538, %v4530
        %v4939 = vpack.c.b16 %v4539, %v4531
        %v4940 = vpack.c.b16 %v4540, %v4532
        %v4941 = vpack.c.b16 %v4541, %v4533
        %v4942 = vpack.c.b16 %v4542, %v4534
        %v4943 = vpack.c.b16 %v4543, %v4535
        %v4944 = vpack.c.b16 %v4552, %v4544
        %v4945 = vpack.c.b16 %v4553, %v4545
        %v4946 = vpack.c.b16 %v4554, %v4546
        %v4947 = vpack.c.b16 %v4555, %v4547
        %v4948 = vpack.c.b16 %v4556, %v4548
        %v4949 = vpack.c.b16 %v4557, %v4549
        %v4950 = vpack.c.b16 %v4558, %v4550
        %v4951 = vpack.c.b16 %v4559, %v4551
        %v4952 = vpack.c.b16 %v4568, %v4560
        %v4953 = vpack.c.b16 %v4569, %v4561
        %v4954 = vpack.c.b16 %v4570, %v4562
        %v4955 = vpack.c.b16 %v4571, %v4563
        %v4956 = vpack.c.b16 %v4572, %v4564
        %v4957 = vpack.c.b16 %v4573, %v4565
        %v4958 = vpack.c.b16 %v4574, %v4566
        %v4959 = vpack.c.b16 %v4575, %v4567
        %v4960 = vpack.c.b16 %v4584, %v4576
        %v4961 = vpack.c.b16 %v4585, %v4577
        %v4962 = vpack.c.b16 %v4586, %v4578
        %v4963 = vpack.c.b16 %v4587, %v4579
        %v4964 = vpack.c.b16 %v4588, %v4580
        %v4965 = vpack.c.b16 %v4589, %v4581
        %v4966 = vpack.c.b16 %v4590, %v4582
        %v4967 = vpack.c.b16 %v4591, %v4583
        %v4968 = vpack.c.b16 %v4600, %v4592
        %v4969 = vpack.c.b16 %v4601, %v4593
        %v4970 = vpack.c.b16 %v4602, %v4594
        %v4971 = vpack.c.b16 %v4603, %v4595
        %v4972 = vpack.c.b16 %v4604, %v4596
        %v4973 = vpack.c.b16 %v4605, %v4597
        %v4974 = vpack.c.b16 %v4606, %v4598
        %v4975 = vpack.c.b16 %v4607, %v4599
        %v4976 = vpack.c.b16 %v4616, %v4608
        %v4977 = vpack.c.b16 %v4617, %v4609
        %v4978 = vpack.c.b16 %v4618, %v4610
        %v4979 = vpack.c.b16 %v4619, %v4611
        %v4980 = vpack.c.b16 %v4620, %v4612
        %v4981 = vpack.c.b16 %v4621, %v4613
        %v4982 = vpack.c.b16 %v4622, %v4614
        %v4983 = vpack.c.b16 %v4623, %v4615
        %v4984 = vpack.c.b16 %v4632, %v4624
        %v4985 = vpack.c.b16 %v4633, %v4625
        %v4986 = vpack.c.b16 %v4634, %v4626
        %v4987 = vpack.c.b16 %v4635, %v4627
        %v4988 = vpack.c.b16 %v4636, %v4628
        %v4989 = vpack.c.b16 %v4637, %v4629
        %v4990 = vpack.c.b16 %v4638, %v4630
        %v4991 = vpack.c.b16 %v4639, %v4631
        %v4992 = vpack.c.b16 %v4648, %v4640
        %v4993 = vpack.c.b16 %v4649, %v4641
        %v4994 = vpack.c.b16 %v4650, %v4642
        %v4995 = vpack.c.b16 %v4651, %v4643
        %v4996 = vpack.c.b16 %v4652, %v4644
        %v4997 = vpack.c.b16 %v4653, %v4645
        %v4998 = vpack.c.b16 %v4654, %v4646
        %v4999 = vpack.c.b16 %v4655, %v4647
        %v5000 = vpack.c.b16 %v4664, %v4656
        %v5001 = vpack.c.b16 %v4665, %v4657
        %v5002 = vpack.c.b16 %v4666, %v4658
        %v5003 = vpack.c.b16 %v4667, %v4659
        %v5004 = vpack.c.b16 %v4668, %v4660
        %v5005 = vpack.c.b16 %v4669, %v4661
        %v5006 = vpack.c.b16 %v4670, %v4662
        %v5007 = vpack.c.b16 %v4671, %v4663
        %v5008 = vpack.c.b16 %v4680, %v4672
        %v5009 = vpack.c.b16 %v4681, %v4673
        %v5010 = vpack.c.b16 %v4682, %v4674
        %v5011 = vpack.c.b16 %v4683, %v4675
        %v5012 = vpack.c.b16 %v4684, %v4676
        %v5013 = vpack.c.b16 %v4685, %v4677
        %v5014 = vpack.c.b16 %v4686, %v4678
        %v5015 = vpack.c.b16 %v4687, %v4679
        %v5016 = vpack.c.b16 %v4696, %v4688
        %v5017 = vpack.c.b16 %v4697, %v4689
        %v5018 = vpack.c.b16 %v4698, %v4690
        %v5019 = vpack.c.b16 %v4699, %v4691
        %v5020 = vpack.c.b16 %v4700, %v4692
        %v5021 = vpack.c.b16 %v4701, %v4693
        %v5022 = vpack.c.b16 %v4702, %v4694
        %v5023 = vpack.c.b16 %v4703, %v4695
        %v5024 = vpack.c.b16 %v4712, %v4704
        %v5025 = vpack.c.b16 %v4713, %v4705
        %v5026 = vpack.c.b16 %v4714, %v4706
        %v5027 = vpack.c.b16 %v4715, %v4707
        %v5028 = vpack.c.b16 %v4716, %v4708
        %v5029 = vpack.c.b16 %v4717, %v4709
        %v5030 = vpack.c.b16 %v4718, %v4710
        %v5031 = vpack.c.b16 %v4719, %v4711
        %v5032 = vpack.c.b16 %v4728, %v4720
        %v5033 = vpack.c.b16 %v4729, %v4721
        %v5034 = vpack.c.b16 %v4730, %v4722
        %v5035 = vpack.c.b16 %v4731, %v4723
        %v5036 = vpack.c.b16 %v4732, %v4724
        %v5037 = vpack.c.b16 %v4733, %v4725
        %v5038 = vpack.c.b16 %v4734, %v4726
        %v5039 = vpack.c.b16 %v4735, %v4727
        %v5040 = vpack.c.b16 %v4744, %v4736
        %v5041 = vpack.c.b16 %v4745, %v4737
        %v5042 = vpack.c.b16 %v4746, %v4738
        %v5043 = vpack.c.b16 %v4747, %v4739
        %v5044 = vpack.c.b16 %v4748, %v4740
        %v5045 = vpack.c.b16 %v4749, %v4741
        %v5046 = vpack.c.b16 %v4750, %v4742
        %v5047 = vpack.c.b16 %v4751, %v4743
        %v5048 = vpack.c.b16 %v4760, %v4752
        %v5049 = vpack.c.b16 %v4761, %v4753
        %v5050 = vpack.c.b16 %v4762, %v4754
        %v5051 = vpack.c.b16 %v4763, %v4755
        %v5052 = vpack.c.b16 %v4764, %v4756
        %v5053 = vpack.c.b16 %v4765, %v4757
        %v5054 = vpack.c.b16 %v4766, %v4758
        %v5055 = vpack.c.b16 %v4767, %v4759
        %v5056 = vpack.c.b16 %v4776, %v4768
        %v5057 = vpack.c.b16 %v4777, %v4769
        %v5058 = vpack.c.b16 %v4778, %v4770
        %v5059 = vpack.c.b16 %v4779, %v4771
        %v5060 = vpack.c.b16 %v4780, %v4772
        %v5061 = vpack.c.b16 %v4781, %v4773
        %v5062 = vpack.c.b16 %v4782, %v4774
        %v5063 = vpack.c.b16 %v4783, %v4775
        %v5064 = vpack.c.b16 %v4792, %v4784
        %v5065 = vpack.c.b16 %v4793, %v4785
        %v5066 = vpack.c.b16 %v4794, %v4786
        %v5067 = vpack.c.b16 %v4795, %v4787
        %v5068 = vpack.c.b16 %v4796, %v4788
        %v5069 = vpack.c.b16 %v4797, %v4789
        %v5070 = vpack.c.b16 %v4798, %v4790
        %v5071 = vpack.c.b16 %v4799, %v4791
        %v5072 = vpack.c.b16 %v4808, %v4800
        %v5073 = vpack.c.b16 %v4809, %v4801
        %v5074 = vpack.c.b16 %v4810, %v4802
        %v5075 = vpack.c.b16 %v4811, %v4803
        %v5076 = vpack.c.b16 %v4812, %v4804
        %v5077 = vpack.c.b16 %v4813, %v4805
        %v5078 = vpack.c.b16 %v4814, %v4806
        %v5079 = vpack.c.b16 %v4815, %v4807
        %v5080 = vpack.c.b16 %v4824, %v4816
        %v5081 = vpack.c.b16 %v4825, %v4817
        %v5082 = vpack.c.b16 %v4826, %v4818
        %v5083 = vpack.c.b16 %v4827, %v4819
        %v5084 = vpack.c.b16 %v4828, %v4820
        %v5085 = vpack.c.b16 %v4829, %v4821
        %v5086 = vpack.c.b16 %v4830, %v4822
        %v5087 = vpack.c.b16 %v4831, %v4823
        %5344 = vmatprep.subr.bf16.mxu0 %v4833
        %5345 = vmatpush1.bf16.msra.mxu0 %v4832
        %5346 = vmatprep.subr.bf16.mxu0 %v4841
        %5347 = vmatpush1.bf16.msra.mxu0 %v4840
        %5348 = vmatprep.subr.bf16.mxu0 %v4849
        %5349 = vmatpush1.bf16.msra.mxu0 %v4848
        %5350 = vmatprep.subr.bf16.mxu0 %v4857
        %5351 = vmatpush1.bf16.msra.mxu0 %v4856
        %5352 = vmatprep.subr.bf16.mxu0 %v4865
        %5353 = vmatpush1.bf16.msra.mxu0 %v4864
        %5354 = vmatprep.subr.bf16.mxu0 %v4873
        %5355 = vmatpush1.bf16.msra.mxu0 %v4872
        %5356 = vmatprep.subr.bf16.mxu0 %v4881
        %5357 = vmatpush1.bf16.msra.mxu0 %v4880
        %5358 = vmatprep.subr.bf16.mxu0 %v4889
        %5359 = vmatpush1.bf16.msra.mxu0 %v4888
        %5360 = vmatprep.subr.bf16.mxu0 %v4897
        %5361 = vmatpush1.bf16.msra.mxu0 %v4896
        %5362 = vmatprep.subr.bf16.mxu0 %v4905
        %5363 = vmatpush1.bf16.msra.mxu0 %v4904
        %5364 = vmatprep.subr.bf16.mxu0 %v4913
        %5365 = vmatpush1.bf16.msra.mxu0 %v4912
        %5366 = vmatprep.subr.bf16.mxu0 %v4921
        %5367 = vmatpush1.bf16.msra.mxu0 %v4920
        %5368 = vmatprep.subr.bf16.mxu0 %v4929
        %5369 = vmatpush1.bf16.msra.mxu0 %v4928
        %5370 = vmatprep.subr.bf16.mxu0 %v4937
        %5371 = vmatpush1.bf16.msra.mxu0 %v4936
        %5372 = vmatprep.subr.bf16.mxu0 %v4945
        %5373 = vmatpush1.bf16.msra.mxu0 %v4944
        %5374 = vmatprep.subr.bf16.mxu0 %v4953
        %5375 = vmatpush1.bf16.msra.mxu0 %v4952
        %5376 = vmatprep.mubr.bf16.mxu0 %v3763
        %5377 = vmatmul.mubr.bf16.gmra.mrb[0].mxu0 %v3762
        %v5378 = vpop.f32.mrb[0].mxu0
        %v5379 = vadd.f32 %v4027, %v5378
        %v5380 = vpop.f32.mrb[0].mxu0
        %v5381 = vadd.f32 %v4031, %v5380
        %v5382 = vpop.f32.mrb[0].mxu0
        %v5383 = vadd.f32 %v4027, %v5382
        %v5384 = vpop.f32.mrb[0].mxu0
        %v5385 = vadd.f32 %v4031, %v5384
        %5386 = vdwg.mxu0
        %5387 = vmatprep.subr.bf16.mxu0 %v4961
        %5388 = vmatpush1.bf16.msra.mxu0 %v4960
        %5389 = vmatprep.subr.bf16.mxu0 %v4969
        %5390 = vmatpush1.bf16.msra.mxu0 %v4968
        %5391 = vmatprep.subr.bf16.mxu0 %v4977
        %5392 = vmatpush1.bf16.msra.mxu0 %v4976
        %5393 = vmatprep.subr.bf16.mxu0 %v4985
        %5394 = vmatpush1.bf16.msra.mxu0 %v4984
        %5395 = vmatprep.subr.bf16.mxu0 %v4993
        %5396 = vmatpush1.bf16.msra.mxu0 %v4992
        %5397 = vmatprep.subr.bf16.mxu0 %v5001
        %5398 = vmatpush1.bf16.msra.mxu0 %v5000
        %5399 = vmatprep.subr.bf16.mxu0 %v5009
        %5400 = vmatpush1.bf16.msra.mxu0 %v5008
        %5401 = vmatprep.subr.bf16.mxu0 %v5017
        %5402 = vmatpush1.bf16.msra.mxu0 %v5016
        %5403 = vmatprep.subr.bf16.mxu0 %v5025
        %5404 = vmatpush1.bf16.msra.mxu0 %v5024
        %5405 = vmatprep.subr.bf16.mxu0 %v5033
        %5406 = vmatpush1.bf16.msra.mxu0 %v5032
        %5407 = vmatprep.subr.bf16.mxu0 %v5041
        %5408 = vmatpush1.bf16.msra.mxu0 %v5040
        %5409 = vmatprep.subr.bf16.mxu0 %v5049
        %5410 = vmatpush1.bf16.msra.mxu0 %v5048
        %5411 = vmatprep.subr.bf16.mxu0 %v5057
        %5412 = vmatpush1.bf16.msra.mxu0 %v5056
        %5413 = vmatprep.subr.bf16.mxu0 %v5065
        %5414 = vmatpush1.bf16.msra.mxu0 %v5064
        %5415 = vmatprep.subr.bf16.mxu0 %v5073
        %5416 = vmatpush1.bf16.msra.mxu0 %v5072
        %5417 = vmatprep.subr.bf16.mxu0 %v5081
        %5418 = vmatpush1.bf16.msra.mxu0 %v5080
        %5419 = vmatprep.mubr.bf16.mxu0 %v3765
        %5420 = vmatmul.mubr.bf16.gmra.mrb[0].mxu0 %v3764
        %v5421 = vpop.f32.mrb[0].mxu0
        %v5422 = vadd.f32 %v5379, %v5421
        %v5423 = vpop.f32.mrb[0].mxu0
        %v5424 = vadd.f32 %v5381, %v5423
        %v5425 = vpop.f32.mrb[0].mxu0
        %v5426 = vadd.f32 %v5383, %v5425
        %v5427 = vpop.f32.mrb[0].mxu0
        %v5428 = vadd.f32 %v5385, %v5427
        %5429 = vdwg.mxu0
        %5430 = vmatprep.subr.bf16.mxu0 %v4835
        %5431 = vmatpush1.bf16.msra.mxu0 %v4834
        %5432 = vmatprep.subr.bf16.mxu0 %v4843
        %5433 = vmatpush1.bf16.msra.mxu0 %v4842
        %5434 = vmatprep.subr.bf16.mxu0 %v4851
        %5435 = vmatpush1.bf16.msra.mxu0 %v4850
        %5436 = vmatprep.subr.bf16.mxu0 %v4859
        %5437 = vmatpush1.bf16.msra.mxu0 %v4858
        %5438 = vmatprep.subr.bf16.mxu0 %v4867
        %5439 = vmatpush1.bf16.msra.mxu0 %v4866
        %5440 = vmatprep.subr.bf16.mxu0 %v4875
        %5441 = vmatpush1.bf16.msra.mxu0 %v4874
        %5442 = vmatprep.subr.bf16.mxu0 %v4883
        %5443 = vmatpush1.bf16.msra.mxu0 %v4882
        %5444 = vmatprep.subr.bf16.mxu0 %v4891
        %5445 = vmatpush1.bf16.msra.mxu0 %v4890
        %5446 = vmatprep.subr.bf16.mxu0 %v4899
        %5447 = vmatpush1.bf16.msra.mxu0 %v4898
        %5448 = vmatprep.subr.bf16.mxu0 %v4907
        %5449 = vmatpush1.bf16.msra.mxu0 %v4906
        %5450 = vmatprep.subr.bf16.mxu0 %v4915
        %5451 = vmatpush1.bf16.msra.mxu0 %v4914
        %5452 = vmatprep.subr.bf16.mxu0 %v4923
        %5453 = vmatpush1.bf16.msra.mxu0 %v4922
        %5454 = vmatprep.subr.bf16.mxu0 %v4931
        %5455 = vmatpush1.bf16.msra.mxu0 %v4930
        %5456 = vmatprep.subr.bf16.mxu0 %v4939
        %5457 = vmatpush1.bf16.msra.mxu0 %v4938
        %5458 = vmatprep.subr.bf16.mxu0 %v4947
        %5459 = vmatpush1.bf16.msra.mxu0 %v4946
        %5460 = vmatprep.subr.bf16.mxu0 %v4955
        %5461 = vmatpush1.bf16.msra.mxu0 %v4954
        %5462 = vmatprep.mubr.bf16.mxu0 %v3763
        %5463 = vmatmul.mubr.bf16.gmra.mrb[0].mxu0 %v3762
        %v5464 = vpop.f32.mrb[0].mxu0
        %v5465 = vadd.f32 %v4035, %v5464
        %v5466 = vpop.f32.mrb[0].mxu0
        %v5467 = vadd.f32 %v4039, %v5466
        %v5468 = vpop.f32.mrb[0].mxu0
        %v5469 = vadd.f32 %v4035, %v5468
        %v5470 = vpop.f32.mrb[0].mxu0
        %v5471 = vadd.f32 %v4039, %v5470
        %5472 = vdwg.mxu0
        %5473 = vmatprep.subr.bf16.mxu0 %v4963
        %5474 = vmatpush1.bf16.msra.mxu0 %v4962
        %5475 = vmatprep.subr.bf16.mxu0 %v4971
        %5476 = vmatpush1.bf16.msra.mxu0 %v4970
        %5477 = vmatprep.subr.bf16.mxu0 %v4979
        %5478 = vmatpush1.bf16.msra.mxu0 %v4978
        %5479 = vmatprep.subr.bf16.mxu0 %v4987
        %5480 = vmatpush1.bf16.msra.mxu0 %v4986
        %5481 = vmatprep.subr.bf16.mxu0 %v4995
        %5482 = vmatpush1.bf16.msra.mxu0 %v4994
        %5483 = vmatprep.subr.bf16.mxu0 %v5003
        %5484 = vmatpush1.bf16.msra.mxu0 %v5002
        %5485 = vmatprep.subr.bf16.mxu0 %v5011
        %5486 = vmatpush1.bf16.msra.mxu0 %v5010
        %5487 = vmatprep.subr.bf16.mxu0 %v5019
        %5488 = vmatpush1.bf16.msra.mxu0 %v5018
        %5489 = vmatprep.subr.bf16.mxu0 %v5027
        %5490 = vmatpush1.bf16.msra.mxu0 %v5026
        %5491 = vmatprep.subr.bf16.mxu0 %v5035
        %5492 = vmatpush1.bf16.msra.mxu0 %v5034
        %5493 = vmatprep.subr.bf16.mxu0 %v5043
        %5494 = vmatpush1.bf16.msra.mxu0 %v5042
        %5495 = vmatprep.subr.bf16.mxu0 %v5051
        %5496 = vmatpush1.bf16.msra.mxu0 %v5050
        %5497 = vmatprep.subr.bf16.mxu0 %v5059
        %5498 = vmatpush1.bf16.msra.mxu0 %v5058
        %5499 = vmatprep.subr.bf16.mxu0 %v5067
        %5500 = vmatpush1.bf16.msra.mxu0 %v5066
        %5501 = vmatprep.subr.bf16.mxu0 %v5075
        %5502 = vmatpush1.bf16.msra.mxu0 %v5074
        %5503 = vmatprep.subr.bf16.mxu0 %v5083
        %5504 = vmatpush1.bf16.msra.mxu0 %v5082
        %5505 = vmatprep.mubr.bf16.mxu0 %v3765
        %5506 = vmatmul.mubr.bf16.gmra.mrb[0].mxu0 %v3764
        %v5507 = vpop.f32.mrb[0].mxu0
        %v5508 = vadd.f32 %v5465, %v5507
        %v5509 = vpop.f32.mrb[0].mxu0
        %v5510 = vadd.f32 %v5467, %v5509
        %v5511 = vpop.f32.mrb[0].mxu0
        %v5512 = vadd.f32 %v5469, %v5511
        %v5513 = vpop.f32.mrb[0].mxu0
        %v5514 = vadd.f32 %v5471, %v5513
        %5515 = vdwg.mxu0
        %5516 = vmatprep.subr.bf16.mxu0 %v4837
        %5517 = vmatpush1.bf16.msra.mxu0 %v4836
        %5518 = vmatprep.subr.bf16.mxu0 %v4845
        %5519 = vmatpush1.bf16.msra.mxu0 %v4844
        %5520 = vmatprep.subr.bf16.mxu0 %v4853
        %5521 = vmatpush1.bf16.msra.mxu0 %v4852
        %5522 = vmatprep.subr.bf16.mxu0 %v4861
        %5523 = vmatpush1.bf16.msra.mxu0 %v4860
        %5524 = vmatprep.subr.bf16.mxu0 %v4869
        %5525 = vmatpush1.bf16.msra.mxu0 %v4868
        %5526 = vmatprep.subr.bf16.mxu0 %v4877
        %5527 = vmatpush1.bf16.msra.mxu0 %v4876
        %5528 = vmatprep.subr.bf16.mxu0 %v4885
        %5529 = vmatpush1.bf16.msra.mxu0 %v4884
        %5530 = vmatprep.subr.bf16.mxu0 %v4893
        %5531 = vmatpush1.bf16.msra.mxu0 %v4892
        %5532 = vmatprep.subr.bf16.mxu0 %v4901
        %5533 = vmatpush1.bf16.msra.mxu0 %v4900
        %5534 = vmatprep.subr.bf16.mxu0 %v4909
        %5535 = vmatpush1.bf16.msra.mxu0 %v4908
        %5536 = vmatprep.subr.bf16.mxu0 %v4917
        %5537 = vmatpush1.bf16.msra.mxu0 %v4916
        %5538 = vmatprep.subr.bf16.mxu0 %v4925
        %5539 = vmatpush1.bf16.msra.mxu0 %v4924
        %5540 = vmatprep.subr.bf16.mxu0 %v4933
        %5541 = vmatpush1.bf16.msra.mxu0 %v4932
        %5542 = vmatprep.subr.bf16.mxu0 %v4941
        %5543 = vmatpush1.bf16.msra.mxu0 %v4940
        %5544 = vmatprep.subr.bf16.mxu0 %v4949
        %5545 = vmatpush1.bf16.msra.mxu0 %v4948
        %5546 = vmatprep.subr.bf16.mxu0 %v4957
        %5547 = vmatpush1.bf16.msra.mxu0 %v4956
        %5548 = vmatprep.mubr.bf16.mxu0 %v3763
        %5549 = vmatmul.mubr.bf16.gmra.mrb[0].mxu0 %v3762
        %v5550 = vpop.f32.mrb[0].mxu0
        %v5551 = vadd.f32 %v4043, %v5550
        %v5552 = vpop.f32.mrb[0].mxu0
        %v5553 = vadd.f32 %v4047, %v5552
        %v5554 = vpop.f32.mrb[0].mxu0
        %v5555 = vadd.f32 %v4043, %v5554
        %v5556 = vpop.f32.mrb[0].mxu0
        %v5557 = vadd.f32 %v4047, %v5556
        %5558 = vdwg.mxu0
        %5559 = vmatprep.subr.bf16.mxu0 %v4965
        %5560 = vmatpush1.bf16.msra.mxu0 %v4964
        %5561 = vmatprep.subr.bf16.mxu0 %v4973
        %5562 = vmatpush1.bf16.msra.mxu0 %v4972
        %5563 = vmatprep.subr.bf16.mxu0 %v4981
        %5564 = vmatpush1.bf16.msra.mxu0 %v4980
        %5565 = vmatprep.subr.bf16.mxu0 %v4989
        %5566 = vmatpush1.bf16.msra.mxu0 %v4988
        %5567 = vmatprep.subr.bf16.mxu0 %v4997
        %5568 = vmatpush1.bf16.msra.mxu0 %v4996
        %5569 = vmatprep.subr.bf16.mxu0 %v5005
        %5570 = vmatpush1.bf16.msra.mxu0 %v5004
        %5571 = vmatprep.subr.bf16.mxu0 %v5013
        %5572 = vmatpush1.bf16.msra.mxu0 %v5012
        %5573 = vmatprep.subr.bf16.mxu0 %v5021
        %5574 = vmatpush1.bf16.msra.mxu0 %v5020
        %5575 = vmatprep.subr.bf16.mxu0 %v5029
        %5576 = vmatpush1.bf16.msra.mxu0 %v5028
        %5577 = vmatprep.subr.bf16.mxu0 %v5037
        %5578 = vmatpush1.bf16.msra.mxu0 %v5036
        %5579 = vmatprep.subr.bf16.mxu0 %v5045
        %5580 = vmatpush1.bf16.msra.mxu0 %v5044
        %5581 = vmatprep.subr.bf16.mxu0 %v5053
        %5582 = vmatpush1.bf16.msra.mxu0 %v5052
        %5583 = vmatprep.subr.bf16.mxu0 %v5061
        %5584 = vmatpush1.bf16.msra.mxu0 %v5060
        %5585 = vmatprep.subr.bf16.mxu0 %v5069
        %5586 = vmatpush1.bf16.msra.mxu0 %v5068
        %5587 = vmatprep.subr.bf16.mxu0 %v5077
        %5588 = vmatpush1.bf16.msra.mxu0 %v5076
        %5589 = vmatprep.subr.bf16.mxu0 %v5085
        %5590 = vmatpush1.bf16.msra.mxu0 %v5084
        %5591 = vmatprep.mubr.bf16.mxu0 %v3765
        %5592 = vmatmul.mubr.bf16.gmra.mrb[0].mxu0 %v3764
        %v5593 = vpop.f32.mrb[0].mxu0
        %v5594 = vadd.f32 %v5551, %v5593
        %v5595 = vpop.f32.mrb[0].mxu0
        %v5596 = vadd.f32 %v5553, %v5595
        %v5597 = vpop.f32.mrb[0].mxu0
        %v5598 = vadd.f32 %v5555, %v5597
        %v5599 = vpop.f32.mrb[0].mxu0
        %v5600 = vadd.f32 %v5557, %v5599
        %5601 = vdwg.mxu0
        %5602 = vmatprep.subr.bf16.mxu0 %v4839
        %5603 = vmatpush1.bf16.msra.mxu0 %v4838
        %5604 = vmatprep.subr.bf16.mxu0 %v4847
        %5605 = vmatpush1.bf16.msra.mxu0 %v4846
        %5606 = vmatprep.subr.bf16.mxu0 %v4855
        %5607 = vmatpush1.bf16.msra.mxu0 %v4854
        %5608 = vmatprep.subr.bf16.mxu0 %v4863
        %5609 = vmatpush1.bf16.msra.mxu0 %v4862
        %5610 = vmatprep.subr.bf16.mxu0 %v4871
        %5611 = vmatpush1.bf16.msra.mxu0 %v4870
        %5612 = vmatprep.subr.bf16.mxu0 %v4879
        %5613 = vmatpush1.bf16.msra.mxu0 %v4878
        %5614 = vmatprep.subr.bf16.mxu0 %v4887
        %5615 = vmatpush1.bf16.msra.mxu0 %v4886
        %5616 = vmatprep.subr.bf16.mxu0 %v4895
        %5617 = vmatpush1.bf16.msra.mxu0 %v4894
        %5618 = vmatprep.subr.bf16.mxu0 %v4903
        %5619 = vmatpush1.bf16.msra.mxu0 %v4902
        %5620 = vmatprep.subr.bf16.mxu0 %v4911
        %5621 = vmatpush1.bf16.msra.mxu0 %v4910
        %5622 = vmatprep.subr.bf16.mxu0 %v4919
        %5623 = vmatpush1.bf16.msra.mxu0 %v4918
        %5624 = vmatprep.subr.bf16.mxu0 %v4927
        %5625 = vmatpush1.bf16.msra.mxu0 %v4926
        %5626 = vmatprep.subr.bf16.mxu0 %v4935
        %5627 = vmatpush1.bf16.msra.mxu0 %v4934
        %5628 = vmatprep.subr.bf16.mxu0 %v4943
        %5629 = vmatpush1.bf16.msra.mxu0 %v4942
        %5630 = vmatprep.subr.bf16.mxu0 %v4951
        %5631 = vmatpush1.bf16.msra.mxu0 %v4950
        %5632 = vmatprep.subr.bf16.mxu0 %v4959
        %5633 = vmatpush1.bf16.msra.mxu0 %v4958
        %5634 = vmatprep.mubr.bf16.mxu0 %v3763
        %5635 = vmatmul.mubr.bf16.gmra.mrb[0].mxu0 %v3762
        %v5636 = vpop.f32.mrb[0].mxu0
        %v5637 = vadd.f32 %v4051, %v5636
        %v5638 = vpop.f32.mrb[0].mxu0
        %v5639 = vadd.f32 %v4055, %v5638
        %v5640 = vpop.f32.mrb[0].mxu0
        %v5641 = vadd.f32 %v4051, %v5640
        %v5642 = vpop.f32.mrb[0].mxu0
        %v5643 = vadd.f32 %v4055, %v5642
        %5644 = vdwg.mxu0
        %5645 = vmatprep.subr.bf16.mxu0 %v4967
        %5646 = vmatpush1.bf16.msra.mxu0 %v4966
        %5647 = vmatprep.subr.bf16.mxu0 %v4975
        %5648 = vmatpush1.bf16.msra.mxu0 %v4974
        %5649 = vmatprep.subr.bf16.mxu0 %v4983
        %5650 = vmatpush1.bf16.msra.mxu0 %v4982
        %5651 = vmatprep.subr.bf16.mxu0 %v4991
        %5652 = vmatpush1.bf16.msra.mxu0 %v4990
        %5653 = vmatprep.subr.bf16.mxu0 %v4999
        %5654 = vmatpush1.bf16.msra.mxu0 %v4998
        %5655 = vmatprep.subr.bf16.mxu0 %v5007
        %5656 = vmatpush1.bf16.msra.mxu0 %v5006
        %5657 = vmatprep.subr.bf16.mxu0 %v5015
        %5658 = vmatpush1.bf16.msra.mxu0 %v5014
        %5659 = vmatprep.subr.bf16.mxu0 %v5023
        %5660 = vmatpush1.bf16.msra.mxu0 %v5022
        %5661 = vmatprep.subr.bf16.mxu0 %v5031
        %5662 = vmatpush1.bf16.msra.mxu0 %v5030
        %5663 = vmatprep.subr.bf16.mxu0 %v5039
        %5664 = vmatpush1.bf16.msra.mxu0 %v5038
        %5665 = vmatprep.subr.bf16.mxu0 %v5047
        %5666 = vmatpush1.bf16.msra.mxu0 %v5046
        %5667 = vmatprep.subr.bf16.mxu0 %v5055
        %5668 = vmatpush1.bf16.msra.mxu0 %v5054
        %5669 = vmatprep.subr.bf16.mxu0 %v5063
        %5670 = vmatpush1.bf16.msra.mxu0 %v5062
        %5671 = vmatprep.subr.bf16.mxu0 %v5071
        %5672 = vmatpush1.bf16.msra.mxu0 %v5070
        %5673 = vmatprep.subr.bf16.mxu0 %v5079
        %5674 = vmatpush1.bf16.msra.mxu0 %v5078
        %5675 = vmatprep.subr.bf16.mxu0 %v5087
        %5676 = vmatpush1.bf16.msra.mxu0 %v5086
        %5677 = vmatprep.mubr.bf16.mxu0 %v3765
        %5678 = vmatmul.mubr.bf16.gmra.mrb[0].mxu0 %v3764
        %v5679 = vpop.f32.mrb[0].mxu0
        %v5680 = vadd.f32 %v5637, %v5679
        %v5681 = vpop.f32.mrb[0].mxu0
        %v5682 = vadd.f32 %v5639, %v5681
        %v5683 = vpop.f32.mrb[0].mxu0
        %v5684 = vadd.f32 %v5641, %v5683
        %v5685 = vpop.f32.mrb[0].mxu0
        %v5686 = vadd.f32 %v5643, %v5685
        %5687 = vdwg.mxu0
        %v5688 = vmax.f32 %v5422, 0.0
        %v5689 = vmax.f32 %v5424, 0.0
        %v5690 = vmax.f32 %v5508, 0.0
        %v5691 = vmax.f32 %v5510, 0.0
        %v5692 = vmax.f32 %v5594, 0.0
        %v5693 = vmax.f32 %v5596, 0.0
        %v5694 = vmax.f32 %v5680, 0.0
        %v5695 = vmax.f32 %v5682, 0.0
        %v5696 = vmax.f32 %v5426, 0.0
        %v5697 = vmax.f32 %v5428, 0.0
        %v5698 = vmax.f32 %v5512, 0.0
        %v5699 = vmax.f32 %v5514, 0.0
        %v5700 = vmax.f32 %v5598, 0.0
        %v5701 = vmax.f32 %v5600, 0.0
        %v5702 = vmax.f32 %v5684, 0.0
        %v5703 = vmax.f32 %v5686, 0.0
        %v5704 = vpack.c.bf16 %v5696, %v5688
        %v5705 = vpack.c.bf16 %v5697, %v5689
        %v5706 = vpack.c.bf16 %v5698, %v5690
        %v5707 = vpack.c.bf16 %v5699, %v5691
        %v5708 = vpack.c.bf16 %v5700, %v5692
        %v5709 = vpack.c.bf16 %v5701, %v5693
        %v5710 = vpack.c.bf16 %v5702, %v5694
        %v5711 = vpack.c.bf16 %v5703, %v5695
        %v5712 = vld [vmem:[#allocation14] sm:$0xf]
        %v5713 = vld [vmem:[#allocation14 + $0x4] sm:$0xf]
        %v5714 = vld [vmem:[#allocation14 + $0x8] sm:$0xf]
        %v5715 = vld [vmem:[#allocation14 + $0xc] sm:$0xf]
        %v5716 = vld [vmem:[#allocation14 + $0x10] sm:$0xf]
        %v5717 = vld [vmem:[#allocation14 + $0x14] sm:$0xf]
        %v5718 = vld [vmem:[#allocation14 + $0x18] sm:$0xf]
        %v5719 = vld [vmem:[#allocation14 + $0x1c] sm:$0xf]
        %v5720 = vld [vmem:[#allocation14 + $0x20] sm:$0xf]
        %v5721 = vld [vmem:[#allocation14 + $0x24] sm:$0xf]
        %v5722 = vld [vmem:[#allocation14 + $0x28] sm:$0xf]
        %v5723 = vld [vmem:[#allocation14 + $0x2c] sm:$0xf]
        %v5724 = vld [vmem:[#allocation14 + $0x30] sm:$0xf]
        %v5725 = vld [vmem:[#allocation14 + $0x34] sm:$0xf]
        %v5726 = vld [vmem:[#allocation14 + $0x38] sm:$0xf]
        %v5727 = vld [vmem:[#allocation14 + $0x3c] sm:$0xf]
        %v5728 = vld [vmem:[#allocation14 + $0x40] sm:$0xf]
        %v5729 = vld [vmem:[#allocation14 + $0x44] sm:$0xf]
        %v5730 = vld [vmem:[#allocation14 + $0x48] sm:$0xf]
        %v5731 = vld [vmem:[#allocation14 + $0x4c] sm:$0xf]
        %v5732 = vld [vmem:[#allocation14 + $0x50] sm:$0xf]
        %v5733 = vld [vmem:[#allocation14 + $0x54] sm:$0xf]
        %v5734 = vld [vmem:[#allocation14 + $0x58] sm:$0xf]
        %v5735 = vld [vmem:[#allocation14 + $0x5c] sm:$0xf]
        %v5736 = vld [vmem:[#allocation14 + $0x60] sm:$0xf]
        %v5737 = vld [vmem:[#allocation14 + $0x64] sm:$0xf]
        %v5738 = vld [vmem:[#allocation14 + $0x68] sm:$0xf]
        %v5739 = vld [vmem:[#allocation14 + $0x6c] sm:$0xf]
        %v5740 = vld [vmem:[#allocation14 + $0x70] sm:$0xf]
        %v5741 = vld [vmem:[#allocation14 + $0x74] sm:$0xf]
        %v5742 = vld [vmem:[#allocation14 + $0x78] sm:$0xf]
        %v5743 = vld [vmem:[#allocation14 + $0x7c] sm:$0xf]
        %v5744 = vld [vmem:[#allocation14 + $0x80] sm:$0xf]
        %v5745 = vld [vmem:[#allocation14 + $0x84] sm:$0xf]
        %v5746 = vld [vmem:[#allocation14 + $0x88] sm:$0xf]
        %v5747 = vld [vmem:[#allocation14 + $0x8c] sm:$0xf]
        %v5748 = vld [vmem:[#allocation14 + $0x90] sm:$0xf]
        %v5749 = vld [vmem:[#allocation14 + $0x94] sm:$0xf]
        %v5750 = vld [vmem:[#allocation14 + $0x98] sm:$0xf]
        %v5751 = vld [vmem:[#allocation14 + $0x9c] sm:$0xf]
        %v5752 = vld [vmem:[#allocation14 + $0xa0] sm:$0xf]
        %v5753 = vld [vmem:[#allocation14 + $0xa4] sm:$0xf]
        %v5754 = vld [vmem:[#allocation14 + $0xa8] sm:$0xf]
        %v5755 = vld [vmem:[#allocation14 + $0xac] sm:$0xf]
        %v5756 = vld [vmem:[#allocation14 + $0xb0] sm:$0xf]
        %v5757 = vld [vmem:[#allocation14 + $0xb4] sm:$0xf]
        %v5758 = vld [vmem:[#allocation14 + $0xb8] sm:$0xf]
        %v5759 = vld [vmem:[#allocation14 + $0xbc] sm:$0xf]
        %v5760 = vld [vmem:[#allocation14 + $0xc0] sm:$0xf]
        %v5761 = vld [vmem:[#allocation14 + $0xc4] sm:$0xf]
        %v5762 = vld [vmem:[#allocation14 + $0xc8] sm:$0xf]
        %v5763 = vld [vmem:[#allocation14 + $0xcc] sm:$0xf]
        %v5764 = vld [vmem:[#allocation14 + $0xd0] sm:$0xf]
        %v5765 = vld [vmem:[#allocation14 + $0xd4] sm:$0xf]
        %v5766 = vld [vmem:[#allocation14 + $0xd8] sm:$0xf]
        %v5767 = vld [vmem:[#allocation14 + $0xdc] sm:$0xf]
        %v5768 = vld [vmem:[#allocation14 + $0xe0] sm:$0xf]
        %v5769 = vld [vmem:[#allocation14 + $0xe4] sm:$0xf]
        %v5770 = vld [vmem:[#allocation14 + $0xe8] sm:$0xf]
        %v5771 = vld [vmem:[#allocation14 + $0xec] sm:$0xf]
        %v5772 = vld [vmem:[#allocation14 + $0xf0] sm:$0xf]
        %v5773 = vld [vmem:[#allocation14 + $0xf4] sm:$0xf]
        %v5774 = vld [vmem:[#allocation14 + $0xf8] sm:$0xf]
        %v5775 = vld [vmem:[#allocation14 + $0xfc] sm:$0xf]
        %v5776 = vld [vmem:[#allocation14 + $0x100] sm:$0xf]
        %v5777 = vld [vmem:[#allocation14 + $0x104] sm:$0xf]
        %v5778 = vld [vmem:[#allocation14 + $0x108] sm:$0xf]
        %v5779 = vld [vmem:[#allocation14 + $0x10c] sm:$0xf]
        %v5780 = vld [vmem:[#allocation14 + $0x110] sm:$0xf]
        %v5781 = vld [vmem:[#allocation14 + $0x114] sm:$0xf]
        %v5782 = vld [vmem:[#allocation14 + $0x118] sm:$0xf]
        %v5783 = vld [vmem:[#allocation14 + $0x11c] sm:$0xf]
        %v5784 = vld [vmem:[#allocation14 + $0x120] sm:$0xf]
        %v5785 = vld [vmem:[#allocation14 + $0x124] sm:$0xf]
        %v5786 = vld [vmem:[#allocation14 + $0x128] sm:$0xf]
        %v5787 = vld [vmem:[#allocation14 + $0x12c] sm:$0xf]
        %v5788 = vld [vmem:[#allocation14 + $0x130] sm:$0xf]
        %v5789 = vld [vmem:[#allocation14 + $0x134] sm:$0xf]
        %v5790 = vld [vmem:[#allocation14 + $0x138] sm:$0xf]
        %v5791 = vld [vmem:[#allocation14 + $0x13c] sm:$0xf]
        %v5792 = vld [vmem:[#allocation14 + $0x140] sm:$0xf]
        %v5793 = vld [vmem:[#allocation14 + $0x144] sm:$0xf]
        %v5794 = vld [vmem:[#allocation14 + $0x148] sm:$0xf]
        %v5795 = vld [vmem:[#allocation14 + $0x14c] sm:$0xf]
        %v5796 = vld [vmem:[#allocation14 + $0x150] sm:$0xf]
        %v5797 = vld [vmem:[#allocation14 + $0x154] sm:$0xf]
        %v5798 = vld [vmem:[#allocation14 + $0x158] sm:$0xf]
        %v5799 = vld [vmem:[#allocation14 + $0x15c] sm:$0xf]
        %v5800 = vld [vmem:[#allocation14 + $0x160] sm:$0xf]
        %v5801 = vld [vmem:[#allocation14 + $0x164] sm:$0xf]
        %v5802 = vld [vmem:[#allocation14 + $0x168] sm:$0xf]
        %v5803 = vld [vmem:[#allocation14 + $0x16c] sm:$0xf]
        %v5804 = vld [vmem:[#allocation14 + $0x170] sm:$0xf]
        %v5805 = vld [vmem:[#allocation14 + $0x174] sm:$0xf]
        %v5806 = vld [vmem:[#allocation14 + $0x178] sm:$0xf]
        %v5807 = vld [vmem:[#allocation14 + $0x17c] sm:$0xf]
        %v5808 = vld [vmem:[#allocation14 + $0x180] sm:$0xf]
        %v5809 = vld [vmem:[#allocation14 + $0x184] sm:$0xf]
        %v5810 = vld [vmem:[#allocation14 + $0x188] sm:$0xf]
        %v5811 = vld [vmem:[#allocation14 + $0x18c] sm:$0xf]
        %v5812 = vld [vmem:[#allocation14 + $0x190] sm:$0xf]
        %v5813 = vld [vmem:[#allocation14 + $0x194] sm:$0xf]
        %v5814 = vld [vmem:[#allocation14 + $0x198] sm:$0xf]
        %v5815 = vld [vmem:[#allocation14 + $0x19c] sm:$0xf]
        %v5816 = vld [vmem:[#allocation14 + $0x1a0] sm:$0xf]
        %v5817 = vld [vmem:[#allocation14 + $0x1a4] sm:$0xf]
        %v5818 = vld [vmem:[#allocation14 + $0x1a8] sm:$0xf]
        %v5819 = vld [vmem:[#allocation14 + $0x1ac] sm:$0xf]
        %v5820 = vld [vmem:[#allocation14 + $0x1b0] sm:$0xf]
        %v5821 = vld [vmem:[#allocation14 + $0x1b4] sm:$0xf]
        %v5822 = vld [vmem:[#allocation14 + $0x1b8] sm:$0xf]
        %v5823 = vld [vmem:[#allocation14 + $0x1bc] sm:$0xf]
        %v5824 = vld [vmem:[#allocation14 + $0x1c0] sm:$0xf]
        %v5825 = vld [vmem:[#allocation14 + $0x1c4] sm:$0xf]
        %v5826 = vld [vmem:[#allocation14 + $0x1c8] sm:$0xf]
        %v5827 = vld [vmem:[#allocation14 + $0x1cc] sm:$0xf]
        %v5828 = vld [vmem:[#allocation14 + $0x1d0] sm:$0xf]
        %v5829 = vld [vmem:[#allocation14 + $0x1d4] sm:$0xf]
        %v5830 = vld [vmem:[#allocation14 + $0x1d8] sm:$0xf]
        %v5831 = vld [vmem:[#allocation14 + $0x1dc] sm:$0xf]
        %v5832 = vld [vmem:[#allocation14 + $0x1e0] sm:$0xf]
        %v5833 = vld [vmem:[#allocation14 + $0x1e4] sm:$0xf]
        %v5834 = vld [vmem:[#allocation14 + $0x1e8] sm:$0xf]
        %v5835 = vld [vmem:[#allocation14 + $0x1ec] sm:$0xf]
        %v5836 = vld [vmem:[#allocation14 + $0x1f0] sm:$0xf]
        %v5837 = vld [vmem:[#allocation14 + $0x1f4] sm:$0xf]
        %v5838 = vld [vmem:[#allocation14 + $0x1f8] sm:$0xf]
        %v5839 = vld [vmem:[#allocation14 + $0x1fc] sm:$0xf]
        %v5840 = vld [vmem:[%s12] sm:$0x1]
        %v5842 = vlaneseq
        %v5843 = vshrl.u32 %v5842, 7
        %v5844 = vsub.s32 0, %v5843
        %v5845 = vrot.slane %v5840, %v5844
        %v5975 = vunpack.c.l.b16 %v5712
        %v5976 = vunpack.c.l.b16 %v5713
        %v5977 = vunpack.c.l.b16 %v5714
        %v5978 = vunpack.c.l.b16 %v5715
        %v5979 = vunpack.c.l.b16 %v5716
        %v5980 = vunpack.c.l.b16 %v5717
        %v5981 = vunpack.c.l.b16 %v5718
        %v5982 = vunpack.c.l.b16 %v5719
        %v5983 = vunpack.c.l.b16 %v5720
        %v5984 = vunpack.c.l.b16 %v5721
        %v5985 = vunpack.c.l.b16 %v5722
        %v5986 = vunpack.c.l.b16 %v5723
        %v5987 = vunpack.c.l.b16 %v5724
        %v5988 = vunpack.c.l.b16 %v5725
        %v5989 = vunpack.c.l.b16 %v5726
        %v5990 = vunpack.c.l.b16 %v5727
        %v5991 = vunpack.c.l.b16 %v5728
        %v5992 = vunpack.c.l.b16 %v5729
        %v5993 = vunpack.c.l.b16 %v5730
        %v5994 = vunpack.c.l.b16 %v5731
        %v5995 = vunpack.c.l.b16 %v5732
        %v5996 = vunpack.c.l.b16 %v5733
        %v5997 = vunpack.c.l.b16 %v5734
        %v5998 = vunpack.c.l.b16 %v5735
        %v5999 = vunpack.c.l.b16 %v5736
        %v6000 = vunpack.c.l.b16 %v5737
        %v6001 = vunpack.c.l.b16 %v5738
        %v6002 = vunpack.c.l.b16 %v5739
        %v6003 = vunpack.c.l.b16 %v5740
        %v6004 = vunpack.c.l.b16 %v5741
        %v6005 = vunpack.c.l.b16 %v5742
        %v6006 = vunpack.c.l.b16 %v5743
        %v6007 = vunpack.c.l.b16 %v5744
        %v6008 = vunpack.c.l.b16 %v5745
        %v6009 = vunpack.c.l.b16 %v5746
        %v6010 = vunpack.c.l.b16 %v5747
        %v6011 = vunpack.c.l.b16 %v5748
        %v6012 = vunpack.c.l.b16 %v5749
        %v6013 = vunpack.c.l.b16 %v5750
        %v6014 = vunpack.c.l.b16 %v5751
        %v6015 = vunpack.c.l.b16 %v5752
        %v6016 = vunpack.c.l.b16 %v5753
        %v6017 = vunpack.c.l.b16 %v5754
        %v6018 = vunpack.c.l.b16 %v5755
        %v6019 = vunpack.c.l.b16 %v5756
        %v6020 = vunpack.c.l.b16 %v5757
        %v6021 = vunpack.c.l.b16 %v5758
        %v6022 = vunpack.c.l.b16 %v5759
        %v6023 = vunpack.c.l.b16 %v5760
        %v6024 = vunpack.c.l.b16 %v5761
        %v6025 = vunpack.c.l.b16 %v5762
        %v6026 = vunpack.c.l.b16 %v5763
        %v6027 = vunpack.c.l.b16 %v5764
        %v6028 = vunpack.c.l.b16 %v5765
        %v6029 = vunpack.c.l.b16 %v5766
        %v6030 = vunpack.c.l.b16 %v5767
        %v6031 = vunpack.c.l.b16 %v5768
        %v6032 = vunpack.c.l.b16 %v5769
        %v6033 = vunpack.c.l.b16 %v5770
        %v6034 = vunpack.c.l.b16 %v5771
        %v6035 = vunpack.c.l.b16 %v5772
        %v6036 = vunpack.c.l.b16 %v5773
        %v6037 = vunpack.c.l.b16 %v5774
        %v6038 = vunpack.c.l.b16 %v5775
        %v6039 = vunpack.c.l.b16 %v5776
        %v6040 = vunpack.c.l.b16 %v5777
        %v6041 = vunpack.c.l.b16 %v5778
        %v6042 = vunpack.c.l.b16 %v5779
        %v6043 = vunpack.c.l.b16 %v5780
        %v6044 = vunpack.c.l.b16 %v5781
        %v6045 = vunpack.c.l.b16 %v5782
        %v6046 = vunpack.c.l.b16 %v5783
        %v6047 = vunpack.c.l.b16 %v5784
        %v6048 = vunpack.c.l.b16 %v5785
        %v6049 = vunpack.c.l.b16 %v5786
        %v6050 = vunpack.c.l.b16 %v5787
        %v6051 = vunpack.c.l.b16 %v5788
        %v6052 = vunpack.c.l.b16 %v5789
        %v6053 = vunpack.c.l.b16 %v5790
        %v6054 = vunpack.c.l.b16 %v5791
        %v6055 = vunpack.c.l.b16 %v5792
        %v6056 = vunpack.c.l.b16 %v5793
        %v6057 = vunpack.c.l.b16 %v5794
        %v6058 = vunpack.c.l.b16 %v5795
        %v6059 = vunpack.c.l.b16 %v5796
        %v6060 = vunpack.c.l.b16 %v5797
        %v6061 = vunpack.c.l.b16 %v5798
        %v6062 = vunpack.c.l.b16 %v5799
        %v6063 = vunpack.c.l.b16 %v5800
        %v6064 = vunpack.c.l.b16 %v5801
        %v6065 = vunpack.c.l.b16 %v5802
        %v6066 = vunpack.c.l.b16 %v5803
        %v6067 = vunpack.c.l.b16 %v5804
        %v6068 = vunpack.c.l.b16 %v5805
        %v6069 = vunpack.c.l.b16 %v5806
        %v6070 = vunpack.c.l.b16 %v5807
        %v6071 = vunpack.c.l.b16 %v5808
        %v6072 = vunpack.c.l.b16 %v5809
        %v6073 = vunpack.c.l.b16 %v5810
        %v6074 = vunpack.c.l.b16 %v5811
        %v6075 = vunpack.c.l.b16 %v5812
        %v6076 = vunpack.c.l.b16 %v5813
        %v6077 = vunpack.c.l.b16 %v5814
        %v6078 = vunpack.c.l.b16 %v5815
        %v6079 = vunpack.c.l.b16 %v5816
        %v6080 = vunpack.c.l.b16 %v5817
        %v6081 = vunpack.c.l.b16 %v5818
        %v6082 = vunpack.c.l.b16 %v5819
        %v6083 = vunpack.c.l.b16 %v5820
        %v6084 = vunpack.c.l.b16 %v5821
        %v6085 = vunpack.c.l.b16 %v5822
        %v6086 = vunpack.c.l.b16 %v5823
        %v6087 = vunpack.c.l.b16 %v5824
        %v6088 = vunpack.c.l.b16 %v5825
        %v6089 = vunpack.c.l.b16 %v5826
        %v6090 = vunpack.c.l.b16 %v5827
        %v6091 = vunpack.c.l.b16 %v5828
        %v6092 = vunpack.c.l.b16 %v5829
        %v6093 = vunpack.c.l.b16 %v5830
        %v6094 = vunpack.c.l.b16 %v5831
        %v6095 = vunpack.c.l.b16 %v5832
        %v6096 = vunpack.c.l.b16 %v5833
        %v6097 = vunpack.c.l.b16 %v5834
        %v6098 = vunpack.c.l.b16 %v5835
        %v6099 = vunpack.c.l.b16 %v5836
        %v6100 = vunpack.c.l.b16 %v5837
        %v6101 = vunpack.c.l.b16 %v5838
        %v6102 = vunpack.c.l.b16 %v5839
        %v6103 = vpack.c.b16 %v5976, %v5975
        %v6104 = vpack.c.b16 %v5978, %v5977
        %v6105 = vpack.c.b16 %v5980, %v5979
        %v6106 = vpack.c.b16 %v5982, %v5981
        %v6107 = vpack.c.b16 %v5984, %v5983
        %v6108 = vpack.c.b16 %v5986, %v5985
        %v6109 = vpack.c.b16 %v5988, %v5987
        %v6110 = vpack.c.b16 %v5990, %v5989
        %v6111 = vpack.c.b16 %v5992, %v5991
        %v6112 = vpack.c.b16 %v5994, %v5993
        %v6113 = vpack.c.b16 %v5996, %v5995
        %v6114 = vpack.c.b16 %v5998, %v5997
        %v6115 = vpack.c.b16 %v6000, %v5999
        %v6116 = vpack.c.b16 %v6002, %v6001
        %v6117 = vpack.c.b16 %v6004, %v6003
        %v6118 = vpack.c.b16 %v6006, %v6005
        %v6119 = vpack.c.b16 %v6008, %v6007
        %v6120 = vpack.c.b16 %v6010, %v6009
        %v6121 = vpack.c.b16 %v6012, %v6011
        %v6122 = vpack.c.b16 %v6014, %v6013
        %v6123 = vpack.c.b16 %v6016, %v6015
        %v6124 = vpack.c.b16 %v6018, %v6017
        %v6125 = vpack.c.b16 %v6020, %v6019
        %v6126 = vpack.c.b16 %v6022, %v6021
        %v6127 = vpack.c.b16 %v6024, %v6023
        %v6128 = vpack.c.b16 %v6026, %v6025
        %v6129 = vpack.c.b16 %v6028, %v6027
        %v6130 = vpack.c.b16 %v6030, %v6029
        %v6131 = vpack.c.b16 %v6032, %v6031
        %v6132 = vpack.c.b16 %v6034, %v6033
        %v6133 = vpack.c.b16 %v6036, %v6035
        %v6134 = vpack.c.b16 %v6038, %v6037
        %v6135 = vpack.c.b16 %v6040, %v6039
        %v6136 = vpack.c.b16 %v6042, %v6041
        %v6137 = vpack.c.b16 %v6044, %v6043
        %v6138 = vpack.c.b16 %v6046, %v6045
        %v6139 = vpack.c.b16 %v6048, %v6047
        %v6140 = vpack.c.b16 %v6050, %v6049
        %v6141 = vpack.c.b16 %v6052, %v6051
        %v6142 = vpack.c.b16 %v6054, %v6053
        %v6143 = vpack.c.b16 %v6056, %v6055
        %v6144 = vpack.c.b16 %v6058, %v6057
        %v6145 = vpack.c.b16 %v6060, %v6059
        %v6146 = vpack.c.b16 %v6062, %v6061
        %v6147 = vpack.c.b16 %v6064, %v6063
        %v6148 = vpack.c.b16 %v6066, %v6065
        %v6149 = vpack.c.b16 %v6068, %v6067
        %v6150 = vpack.c.b16 %v6070, %v6069
        %v6151 = vpack.c.b16 %v6072, %v6071
        %v6152 = vpack.c.b16 %v6074, %v6073
        %v6153 = vpack.c.b16 %v6076, %v6075
        %v6154 = vpack.c.b16 %v6078, %v6077
        %v6155 = vpack.c.b16 %v6080, %v6079
        %v6156 = vpack.c.b16 %v6082, %v6081
        %v6157 = vpack.c.b16 %v6084, %v6083
        %v6158 = vpack.c.b16 %v6086, %v6085
        %v6159 = vpack.c.b16 %v6088, %v6087
        %v6160 = vpack.c.b16 %v6090, %v6089
        %v6161 = vpack.c.b16 %v6092, %v6091
        %v6162 = vpack.c.b16 %v6094, %v6093
        %v6163 = vpack.c.b16 %v6096, %v6095
        %v6164 = vpack.c.b16 %v6098, %v6097
        %v6165 = vpack.c.b16 %v6100, %v6099
        %v6166 = vpack.c.b16 %v6102, %v6101
        %6231 = vmatprep.subr.bf16.mxu0 0
        %6232 = vmatpush1.bf16.msra.mxu0 %v6103
        %6233 = vmatprep.subr.bf16.mxu0 0
        %6234 = vmatpush1.bf16.msra.mxu0 %v6104
        %6235 = vmatprep.subr.bf16.mxu0 0
        %6236 = vmatpush1.bf16.msra.mxu0 %v6105
        %6237 = vmatprep.subr.bf16.mxu0 0
        %6238 = vmatpush1.bf16.msra.mxu0 %v6106
        %6239 = vmatprep.subr.bf16.mxu0 0
        %6240 = vmatpush1.bf16.msra.mxu0 %v6107
        %6241 = vmatprep.subr.bf16.mxu0 0
        %6242 = vmatpush1.bf16.msra.mxu0 %v6108
        %6243 = vmatprep.subr.bf16.mxu0 0
        %6244 = vmatpush1.bf16.msra.mxu0 %v6109
        %6245 = vmatprep.subr.bf16.mxu0 0
        %6246 = vmatpush1.bf16.msra.mxu0 %v6110
        %6247 = vmatprep.subr.bf16.mxu0 0
        %6248 = vmatpush1.bf16.msra.mxu0 %v6111
        %6249 = vmatprep.subr.bf16.mxu0 0
        %6250 = vmatpush1.bf16.msra.mxu0 %v6112
        %6251 = vmatprep.subr.bf16.mxu0 0
        %6252 = vmatpush1.bf16.msra.mxu0 %v6113
        %6253 = vmatprep.subr.bf16.mxu0 0
        %6254 = vmatpush1.bf16.msra.mxu0 %v6114
        %6255 = vmatprep.subr.bf16.mxu0 0
        %6256 = vmatpush1.bf16.msra.mxu0 %v6115
        %6257 = vmatprep.subr.bf16.mxu0 0
        %6258 = vmatpush1.bf16.msra.mxu0 %v6116
        %6259 = vmatprep.subr.bf16.mxu0 0
        %6260 = vmatpush1.bf16.msra.mxu0 %v6117
        %6261 = vmatprep.subr.bf16.mxu0 0
        %6262 = vmatpush1.bf16.msra.mxu0 %v6118
        %6263 = vmatprep.mubr.bf16.mxu0 %v5705
        %6264 = vmatmul.mubr.bf16.gmra.mrb[0].mxu0 %v5704
        %v6265 = vpop.f32.mrb[0].mxu0
        %v6266 = vadd.f32 %v5845, %v6265
        %v6267 = vpop.f32.mrb[0].mxu0
        %v6268 = vpop.f32.mrb[0].mxu0
        %v6269 = vadd.f32 %v5845, %v6268
        %v6270 = vpop.f32.mrb[0].mxu0
        %6271 = vdwg.mxu0
        %6272 = vmatprep.subr.bf16.mxu0 0
        %6273 = vmatpush1.bf16.msra.mxu0 %v6119
        %6274 = vmatprep.subr.bf16.mxu0 0
        %6275 = vmatpush1.bf16.msra.mxu0 %v6120
        %6276 = vmatprep.subr.bf16.mxu0 0
        %6277 = vmatpush1.bf16.msra.mxu0 %v6121
        %6278 = vmatprep.subr.bf16.mxu0 0
        %6279 = vmatpush1.bf16.msra.mxu0 %v6122
        %6280 = vmatprep.subr.bf16.mxu0 0
        %6281 = vmatpush1.bf16.msra.mxu0 %v6123
        %6282 = vmatprep.subr.bf16.mxu0 0
        %6283 = vmatpush1.bf16.msra.mxu0 %v6124
        %6284 = vmatprep.subr.bf16.mxu0 0
        %6285 = vmatpush1.bf16.msra.mxu0 %v6125
        %6286 = vmatprep.subr.bf16.mxu0 0
        %6287 = vmatpush1.bf16.msra.mxu0 %v6126
        %6288 = vmatprep.subr.bf16.mxu0 0
        %6289 = vmatpush1.bf16.msra.mxu0 %v6127
        %6290 = vmatprep.subr.bf16.mxu0 0
        %6291 = vmatpush1.bf16.msra.mxu0 %v6128
        %6292 = vmatprep.subr.bf16.mxu0 0
        %6293 = vmatpush1.bf16.msra.mxu0 %v6129
        %6294 = vmatprep.subr.bf16.mxu0 0
        %6295 = vmatpush1.bf16.msra.mxu0 %v6130
        %6296 = vmatprep.subr.bf16.mxu0 0
        %6297 = vmatpush1.bf16.msra.mxu0 %v6131
        %6298 = vmatprep.subr.bf16.mxu0 0
        %6299 = vmatpush1.bf16.msra.mxu0 %v6132
        %6300 = vmatprep.subr.bf16.mxu0 0
        %6301 = vmatpush1.bf16.msra.mxu0 %v6133
        %6302 = vmatprep.subr.bf16.mxu0 0
        %6303 = vmatpush1.bf16.msra.mxu0 %v6134
        %6304 = vmatprep.mubr.bf16.mxu0 %v5707
        %6305 = vmatmul.mubr.bf16.gmra.mrb[0].mxu0 %v5706
        %v6306 = vpop.f32.mrb[0].mxu0
        %v6307 = vadd.f32 %v6266, %v6306
        %v6308 = vpop.f32.mrb[0].mxu0
        %v6309 = vpop.f32.mrb[0].mxu0
        %v6310 = vadd.f32 %v6269, %v6309
        %v6311 = vpop.f32.mrb[0].mxu0
        %6312 = vdwg.mxu0
        %6313 = vmatprep.subr.bf16.mxu0 0
        %6314 = vmatpush1.bf16.msra.mxu0 %v6135
        %6315 = vmatprep.subr.bf16.mxu0 0
        %6316 = vmatpush1.bf16.msra.mxu0 %v6136
        %6317 = vmatprep.subr.bf16.mxu0 0
        %6318 = vmatpush1.bf16.msra.mxu0 %v6137
        %6319 = vmatprep.subr.bf16.mxu0 0
        %6320 = vmatpush1.bf16.msra.mxu0 %v6138
        %6321 = vmatprep.subr.bf16.mxu0 0
        %6322 = vmatpush1.bf16.msra.mxu0 %v6139
        %6323 = vmatprep.subr.bf16.mxu0 0
        %6324 = vmatpush1.bf16.msra.mxu0 %v6140
        %6325 = vmatprep.subr.bf16.mxu0 0
        %6326 = vmatpush1.bf16.msra.mxu0 %v6141
        %6327 = vmatprep.subr.bf16.mxu0 0
        %6328 = vmatpush1.bf16.msra.mxu0 %v6142
        %6329 = vmatprep.subr.bf16.mxu0 0
        %6330 = vmatpush1.bf16.msra.mxu0 %v6143
        %6331 = vmatprep.subr.bf16.mxu0 0
        %6332 = vmatpush1.bf16.msra.mxu0 %v6144
        %6333 = vmatprep.subr.bf16.mxu0 0
        %6334 = vmatpush1.bf16.msra.mxu0 %v6145
        %6335 = vmatprep.subr.bf16.mxu0 0
        %6336 = vmatpush1.bf16.msra.mxu0 %v6146
        %6337 = vmatprep.subr.bf16.mxu0 0
        %6338 = vmatpush1.bf16.msra.mxu0 %v6147
        %6339 = vmatprep.subr.bf16.mxu0 0
        %6340 = vmatpush1.bf16.msra.mxu0 %v6148
        %6341 = vmatprep.subr.bf16.mxu0 0
        %6342 = vmatpush1.bf16.msra.mxu0 %v6149
        %6343 = vmatprep.subr.bf16.mxu0 0
        %6344 = vmatpush1.bf16.msra.mxu0 %v6150
        %6345 = vmatprep.mubr.bf16.mxu0 %v5709
        %6346 = vmatmul.mubr.bf16.gmra.mrb[0].mxu0 %v5708
        %v6347 = vpop.f32.mrb[0].mxu0
        %v6348 = vadd.f32 %v6307, %v6347
        %v6349 = vpop.f32.mrb[0].mxu0
        %v6350 = vpop.f32.mrb[0].mxu0
        %v6351 = vadd.f32 %v6310, %v6350
        %v6352 = vpop.f32.mrb[0].mxu0
        %6353 = vdwg.mxu0
        %6354 = vmatprep.subr.bf16.mxu0 0
        %6355 = vmatpush1.bf16.msra.mxu0 %v6151
        %6356 = vmatprep.subr.bf16.mxu0 0
        %6357 = vmatpush1.bf16.msra.mxu0 %v6152
        %6358 = vmatprep.subr.bf16.mxu0 0
        %6359 = vmatpush1.bf16.msra.mxu0 %v6153
        %6360 = vmatprep.subr.bf16.mxu0 0
        %6361 = vmatpush1.bf16.msra.mxu0 %v6154
        %6362 = vmatprep.subr.bf16.mxu0 0
        %6363 = vmatpush1.bf16.msra.mxu0 %v6155
        %6364 = vmatprep.subr.bf16.mxu0 0
        %6365 = vmatpush1.bf16.msra.mxu0 %v6156
        %6366 = vmatprep.subr.bf16.mxu0 0
        %6367 = vmatpush1.bf16.msra.mxu0 %v6157
        %6368 = vmatprep.subr.bf16.mxu0 0
        %6369 = vmatpush1.bf16.msra.mxu0 %v6158
        %6370 = vmatprep.subr.bf16.mxu0 0
        %6371 = vmatpush1.bf16.msra.mxu0 %v6159
        %6372 = vmatprep.subr.bf16.mxu0 0
        %6373 = vmatpush1.bf16.msra.mxu0 %v6160
        %6374 = vmatprep.subr.bf16.mxu0 0
        %6375 = vmatpush1.bf16.msra.mxu0 %v6161
        %6376 = vmatprep.subr.bf16.mxu0 0
        %6377 = vmatpush1.bf16.msra.mxu0 %v6162
        %6378 = vmatprep.subr.bf16.mxu0 0
        %6379 = vmatpush1.bf16.msra.mxu0 %v6163
        %6380 = vmatprep.subr.bf16.mxu0 0
        %6381 = vmatpush1.bf16.msra.mxu0 %v6164
        %6382 = vmatprep.subr.bf16.mxu0 0
        %6383 = vmatpush1.bf16.msra.mxu0 %v6165
        %6384 = vmatprep.subr.bf16.mxu0 0
        %6385 = vmatpush1.bf16.msra.mxu0 %v6166
        %6386 = vmatprep.mubr.bf16.mxu0 %v5711
        %6387 = vmatmul.mubr.bf16.gmra.mrb[0].mxu0 %v5710
        %v6388 = vpop.f32.mrb[0].mxu0
        %v6389 = vadd.f32 %v6348, %v6388
        %v6390 = vpop.f32.mrb[0].mxu0
        %v6391 = vpop.f32.mrb[0].mxu0
        %v6392 = vadd.f32 %v6351, %v6391
        %v6393 = vpop.f32.mrb[0].mxu0
        %6394 = vdwg.mxu0
        %v6395 = vsub.f32 0.0, %v6389
        %v6396 = vsub.f32 0.0, %v6392
        %v6397 = vmul.f32 %v6395, 1.442695
        %v6398 = vpow.pop %v6397
        %v6399 = vmul.f32 %v6396, 1.442695
        %v6400 = vpow.pop %v6399
        %v6401 = vadd.f32 %v6398, 1.0
        %v6402 = vadd.f32 %v6400, 1.0
        %v6403 = vrcp.pop %v6401
        %v6404 = vrcp.pop %v6402
        %6405 = vst [vmem:[%s558] sm:$0xff] %v6403
        %6406 = vst [vmem:[%s558 + $0x8] sm:$0xff] %v6404
        %s6407 = sand.u32 %s320, 1
        %s6408 = scalar_lea.sflag [#allocation4], %s6407
        %s6409 = sand.u32 %s320, 1
        %s6410 = smul.addr %s6409, 16
        %s6411 = scalar_lea.vmem [#allocation16], %s6410
        // Predicated region
        $region105: #{tpu_custom_call.1} parent=71 // pred_check
          %p6412 = pneg %p330
        $region106: #{tpu_custom_call.1} parent=71 // pred_check_branch
          %6414 = sbr.rel (%p6412) target = $region108
        $region107: #{tpu_custom_call.1} parent=71 // pred_region
          %s6415 = smul.u32 2, %s34
          %s6417 = ssub.s32 256, 256
          %6418 = vsyncadd %s6408, %s6417
          %s6419 = smul.addr %s6415, 128
          %s6420 = scalar_lea.hbm %s13, %s6419
          %s6421 = sshll.u32 %s6411, 4
          %s6422 = int_to_ptr.vmem [resolvable:$true] %s6421
          %6427 = dma.vmem_to_hbm [thread:$0]  %s6422, 256, %s6420, %s6408, 128, 128, 8
        $region108: #{tpu_custom_call.1} parent=71 // pred_fallthru
          _
      $region72: #{tpu_custom_call.1} parent=5 // pred_fallthru
        _
      %p6428 = scmp.le.s32.totalorder 2, %s29
      // Predicated region
      $region109: #{tpu_custom_call.1} parent=5 // pred_check
        %p6429 = pneg %p6428
      $region110: #{tpu_custom_call.1} parent=5 // pred_check_branch
        %6431 = sbr.rel (%p6429) target = $region112
      $region111: #{tpu_custom_call.1} parent=5 // pred_region
        %s6432 = ssub.s32 %s29, 2
        // Predicated region
        $region113: #{tpu_custom_call.1} parent=111 // pred_check
          %p6433 = pneg %p336
        $region114: #{tpu_custom_call.1} parent=111 // pred_check_branch
          %6435 = sbr.rel (%p6433) target = $region116
        $region115: #{tpu_custom_call.1} parent=111 // pred_region
          %s6436 = sand.u32 %s321, 1
          %s6437 = scalar_lea.sflag [#allocation4], %s6436
          %s6438 = sand.u32 %s321, 1
          %s6439 = smul.addr %s6438, 16
          %s6440 = scalar_lea.vmem [#allocation16], %s6439
          %6441 = dma.done %s6437, 256
        $region116: #{tpu_custom_call.1} parent=111 // pred_fallthru
          _
      $region112: #{tpu_custom_call.1} parent=5 // pred_fallthru
        _
    $region6: #{tpu_custom_call.1} parent=1 // loop_footer
      %s33 = sadd.s32 1, %s29
    $region7: #{tpu_custom_call.1} parent=1 // loop_footer_branch
      %28 = sbr.rel target = $region3
    $region8: #{tpu_custom_call.1} parent=1 // loop_exit
      _
    %6442 = vsyncpa [#allocation3], 1
    %s6443 = scalar_lea.sflag [#allocation3], 1
    %6444 = vsyncpa %s6443, 1
    %6445 = vsyncpa [#allocation6], 1
    %6446 = vsyncpa [#allocation9], 1
    %6447 = vsyncpa [#allocation12], 1
    %6448 = vsyncpa [#allocation15], 1
    %6449 = vsyncpa [#allocation4], 1
    %s6450 = scalar_lea.sflag [#allocation4], 1
    %6451 = vsyncpa %s6450, 1

</llo_original>
